<compile_context>
chip_gen: v7x
topology: tpu7x:2x2x1
jax: 0.10.0
libtpu: 0.0.40
codegen_flags: <defaults>
</compile_context>

<pallas_src>
import functools

import jax
import jax.numpy as jnp
from jax.experimental import pallas as pl
from jax.experimental.pallas import tpu as pltpu

KH = KW = 4
C_IN = 3
C_OUT = 6
C_OUT_PAD = 8                      # sublane-dense output channel count
K_FLAT = C_IN * KH * KW            # 48


def _round_up(x, m):
    return (x + m - 1) // m * m


def conv2d_kernel(x_ref, w_ref, b_ref, o_ref, p_ref, *,
                  wo, h_block, wo_pad, compute_dtype):
    """One batch block.

    x_ref: (B_blk, Cin, H_pad, W)        VMEM  (H padded so every row block is full)
    w_ref: (8, 48)                        VMEM  (OIHW-flat weights, rows 6..7 zero)
    b_ref: (8, 1)                         VMEM  f32
    o_ref: (B_blk, 8, Ho_pad*Wo_pad)      VMEM
    p_ref: (48, h_block, Wo_pad)          VMEM scratch (im2col patches, one row block)
    """
    b_blk = x_ref.shape[0]
    n_row_blocks = o_ref.shape[2] // (h_block * wo_pad)
    rt = h_block + KH - 1             # input rows per block (KH-1 = 3 row halo)

    # Zero once so the padded patch lanes [wo, wo_pad) feed clean zeros to the MXU.
    p_ref[...] = jnp.zeros_like(p_ref)

    for b in range(b_blk):
        for rb in range(n_row_blocks):
            r0 = rb * h_block

            # ---- im2col for this row block, written straight into VMEM scratch.
            # One lane shift per (ci, kw) (Cin*KW = 12), reused by KH sublane taps.
            for ci in range(C_IN):
                chb = x_ref[b, ci, pl.ds(r0, rt), :]                 # (rt, W)
                for kw in range(KW):
                    sh = chb[:, kw:kw + wo]                          # (rt, wo) lane slice
                    for kh in range(KH):
                        k = (ci * KH + kh) * KW + kw                 # matches OIHW flatten
                        p_ref[k, :, :wo] = sh[kh:kh + h_block, :].astype(compute_dtype)

            # ---- single MXU GEMM per row block; lane-aligned flatten (wo_pad % 128 == 0).
            patches = p_ref[...].reshape(K_FLAT, h_block * wo_pad)
            acc = jnp.dot(w_ref[...], patches,
                          preferred_element_type=jnp.float32)        # (8, h_block*wo_pad) f32
            acc = acc + b_ref[...]                                   # (8,1) broadcast

            # ---- dense store: 8 sublanes x multiple-of-128 lanes, aligned offset.
            o_ref[b, :, pl.ds(r0 * wo_pad, h_block * wo_pad)] = acc.astype(o_ref.dtype)


def con_forward(x_nchw, weight_oihw, bias, *,
                compute_dtype=jnp.bfloat16, b_block=4, h_block=16):
    """y = Conv2d(3, 6, kernel_size=4)(x), NCHW in / NCHW out (like PyTorch).

    x_nchw:      (N, 3, H, W)   float32
    weight_oihw: (6, 3, 4, 4)   float32
    bias:        (6,)           float32
    returns:     (N, 6, H-3, W-3) float32
    """
    N, C, H, W = x_nchw.shape
    assert C == C_IN and H >= KH and W >= KW
    Ho, Wo = H - KH + 1, W - KW + 1

    h_block = max(8, (h_block // 8) * 8)       # multiple of 8 (16 keeps bf16 tiles aligned)
    Ho_pad = _round_up(Ho, h_block)
    Wo_pad = _round_up(Wo, 128)
    M_pad = Ho_pad * Wo_pad

    # Pad H so every output-row block has a full h_block + 3-row halo of input.
    H_pad = Ho_pad + KH - 1
    x_in = x_nchw if H_pad == H else jnp.pad(
        x_nchw, ((0, 0), (0, 0), (0, H_pad - H), (0, 0)))

    # Images per grid step: largest divisor of N that is <= b_block.
    B_blk = max(d for d in range(1, min(N, b_block) + 1) if N % d == 0)

    # OIHW flatten -> contraction order (ci, kh, kw); pad Cout 6->8; cast weights.
    w8 = jnp.zeros((C_OUT_PAD, K_FLAT), compute_dtype)
    w8 = w8.at[:C_OUT].set(weight_oihw.reshape(C_OUT, K_FLAT).astype(compute_dtype))
    b8 = jnp.zeros((C_OUT_PAD, 1), jnp.float32)
    b8 = b8.at[:C_OUT].set(bias.reshape(C_OUT, 1).astype(jnp.float32))

    kernel = functools.partial(
        conv2d_kernel, wo=Wo, h_block=h_block, wo_pad=Wo_pad,
        compute_dtype=compute_dtype)

    out = pl.pallas_call(
        kernel,
        out_shape=jax.ShapeDtypeStruct((N, C_OUT_PAD, M_pad), x_nchw.dtype),
        grid=(N // B_blk,),
        in_specs=[
            pl.BlockSpec((B_blk, C_IN, H_pad, W), lambda n: (n, 0, 0, 0)),
            pl.BlockSpec((C_OUT_PAD, K_FLAT), lambda n: (0, 0)),
            pl.BlockSpec((C_OUT_PAD, 1), lambda n: (0, 0)),
        ],
        out_specs=pl.BlockSpec((B_blk, C_OUT_PAD, M_pad), lambda n: (n, 0, 0)),
        scratch_shapes=[pltpu.VMEM((K_FLAT, h_block, Wo_pad), compute_dtype)],
        compiler_params=pltpu.CompilerParams(
            dimension_semantics=("parallel",)),
    )(x_in, w8, b8)

    # Contiguous reshape (free) + slice off the Cout / Ho / Wo padding.
    out = out.reshape(N, C_OUT_PAD, Ho_pad, Wo_pad)
    return out[:, :C_OUT, :Ho, :Wo]


if __name__ == "__main__":
    key = jax.random.PRNGKey(0)
    k_x, k_w, k_b = jax.random.split(key, 3)

    # Small deterministic inputs / params (PyTorch-style init bound 1/sqrt(fan_in)).
    # H = W = 24 -> Ho = Wo = 21, which exercises two output-row blocks.
    N, H, W = 2, 24, 24
    x = jax.random.normal(k_x, (N, C_IN, H, W), jnp.float32)
    fan_in = C_IN * KH * KW
    bound = 1.0 / (fan_in ** 0.5)
    weight = jax.random.uniform(k_w, (C_OUT, C_IN, KH, KW), jnp.float32,
                                minval=-bound, maxval=bound)
    bias = jax.random.uniform(k_b, (C_OUT,), jnp.float32,
                              minval=-bound, maxval=bound)

    # Reference: XLA conv in f32.
    y_ref = jax.lax.conv_general_dilated(
        x, weight, window_strides=(1, 1), padding="VALID",
        dimension_numbers=("NCHW", "OIHW", "NCHW"),
    ) + bias.reshape(1, C_OUT, 1, 1)

    # Default path: bf16 patches/weights, f32 accumulation.
    y_bf16 = jax.block_until_ready(con_forward(x, weight, bias))
    assert y_bf16.shape == (N, C_OUT, H - KH + 1, W - KW + 1)
    assert jnp.allclose(y_bf16, y_ref, atol=1e-1, rtol=5e-2), \
        "bf16 path mismatch vs lax.conv reference"

    # Full f32 path, tight tolerance.
    y_f32 = jax.block_until_ready(
        con_forward(x, weight, bias, compute_dtype=jnp.float32))
    assert jnp.allclose(y_f32, y_ref, atol=1e-4, rtol=1e-4), \
        "f32 path mismatch vs lax.conv reference"

    print("KERNEL_OK")
</pallas_src>

<mosaic_0001>
module attributes {stable_mosaic.version = 11 : i64} {
  func.func @conv2d_kernel(%arg0: i32, %arg1: memref<2x3x35x24xf32, #tpu.memory_space<vmem>>, %arg2: memref<8x48xbf16, #tpu.memory_space<vmem>>, %arg3: memref<8x1xf32, #tpu.memory_space<vmem>>, %arg4: memref<2x8x4096xf32, #tpu.memory_space<vmem>>, %arg5: memref<48x16x128xbf16, #tpu.memory_space<vmem>>) attributes {dimension_semantics = [#tpu.dimension_semantics<parallel>], iteration_bounds = array<i64: 1>, scalar_prefetch = 0 : i64, scratch_operands = 1 : i64, tpu.core_type = #tpu.core_type<tc>, window_params = [{transform_indices = @transform_0, window_bounds = array<i64: 2, 3, 35, 24>}, {pipeline_mode = #tpu.pipeline_mode<synchronous>, transform_indices = @transform_1, window_bounds = array<i64: 8, 48>}, {pipeline_mode = #tpu.pipeline_mode<synchronous>, transform_indices = @transform_2, window_bounds = array<i64: 8, 1>}, {transform_indices = @transform_3, window_bounds = array<i64: 2, 8, 4096>}]} {
    %cst = arith.constant 0.000000e+00 : bf16
    %0 = vector.broadcast %cst : bf16 to vector<48x16x128xbf16>
    %c0 = arith.constant 0 : index
    %c0_0 = arith.constant 0 : index
    %c0_1 = arith.constant 0 : index
    %1 = vector.load %arg5[%c0, %c0_0, %c0_1] : memref<48x16x128xbf16, #tpu.memory_space<vmem>>, vector<48x16x128xbf16>
    tpu.vector_store %arg5[%c0, %c0_0, %c0_1], %0 {strides = array<i32>} : memref<48x16x128xbf16, #tpu.memory_space<vmem>>, vector<48x16x128xbf16>,
    %c0_2 = arith.constant 0 : index
    %c0_3 = arith.constant 0 : index
    %c0_4 = arith.constant 0 : index
    %c0_5 = arith.constant 0 : index
    %2 = vector.load %arg1[%c0_2, %c0_3, %c0_4, %c0_5] : memref<2x3x35x24xf32, #tpu.memory_space<vmem>>, vector<1x1x19x24xf32>
    %3 = vector.shape_cast %2 : vector<1x1x19x24xf32> to vector<19x24xf32>
    %4 = vector.extract_strided_slice %3 {offsets = [0, 0], sizes = [19, 21], strides = [1, 1]} : vector<19x24xf32> to vector<19x21xf32>
    %5 = vector.extract_strided_slice %4 {offsets = [0, 0], sizes = [16, 21], strides = [1, 1]} : vector<19x21xf32> to vector<16x21xf32>
    %6 = arith.truncf %5 : vector<16x21xf32> to vector<16x21xbf16>
    %c0_6 = arith.constant 0 : index
    %c0_7 = arith.constant 0 : index
    %c0_8 = arith.constant 0 : index
    %7 = vector.load %arg5[%c0_6, %c0_7, %c0_8] : memref<48x16x128xbf16, #tpu.memory_space<vmem>>, vector<1x16x21xbf16>
    %8 = vector.shape_cast %7 : vector<1x16x21xbf16> to vector<16x21xbf16>
    %9 = vector.shape_cast %6 : vector<16x21xbf16> to vector<1x16x21xbf16>
    tpu.vector_store %arg5[%c0_6, %c0_7, %c0_8], %9 {strides = array<i32>} : memref<48x16x128xbf16, #tpu.memory_space<vmem>>, vector<1x16x21xbf16>,
    %10 = vector.extract_strided_slice %4 {offsets = [1, 0], sizes = [16, 21], strides = [1, 1]} : vector<19x21xf32> to vector<16x21xf32>
    %11 = arith.truncf %10 : vector<16x21xf32> to vector<16x21xbf16>
    %c4 = arith.constant 4 : index
    %c0_9 = arith.constant 0 : index
    %c0_10 = arith.constant 0 : index
    %12 = vector.load %arg5[%c4, %c0_9, %c0_10] : memref<48x16x128xbf16, #tpu.memory_space<vmem>>, vector<1x16x21xbf16>
    %13 = vector.shape_cast %12 : vector<1x16x21xbf16> to vector<16x21xbf16>
    %14 = vector.shape_cast %11 : vector<16x21xbf16> to vector<1x16x21xbf16>
    tpu.vector_store %arg5[%c4, %c0_9, %c0_10], %14 {strides = array<i32>} : memref<48x16x128xbf16, #tpu.memory_space<vmem>>, vector<1x16x21xbf16>,
    %15 = vector.extract_strided_slice %4 {offsets = [2, 0], sizes = [16, 21], strides = [1, 1]} : vector<19x21xf32> to vector<16x21xf32>
    %16 = arith.truncf %15 : vector<16x21xf32> to vector<16x21xbf16>
    %c8 = arith.constant 8 : index
    %c0_11 = arith.constant 0 : index
    %c0_12 = arith.constant 0 : index
    %17 = vector.load %arg5[%c8, %c0_11, %c0_12] : memref<48x16x128xbf16, #tpu.memory_space<vmem>>, vector<1x16x21xbf16>
    %18 = vector.shape_cast %17 : vector<1x16x21xbf16> to vector<16x21xbf16>
    %19 = vector.shape_cast %16 : vector<16x21xbf16> to vector<1x16x21xbf16>
    tpu.vector_store %arg5[%c8, %c0_11, %c0_12], %19 {strides = array<i32>} : memref<48x16x128xbf16, #tpu.memory_space<vmem>>, vector<1x16x21xbf16>,
    %20 = vector.extract_strided_slice %4 {offsets = [3, 0], sizes = [16, 21], strides = [1, 1]} : vector<19x21xf32> to vector<16x21xf32>
    %21 = arith.truncf %20 : vector<16x21xf32> to vector<16x21xbf16>
    %c12 = arith.constant 12 : index
    %c0_13 = arith.constant 0 : index
    %c0_14 = arith.constant 0 : index
    %22 = vector.load %arg5[%c12, %c0_13, %c0_14] : memref<48x16x128xbf16, #tpu.memory_space<vmem>>, vector<1x16x21xbf16>
    %23 = vector.shape_cast %22 : vector<1x16x21xbf16> to vector<16x21xbf16>
    %24 = vector.shape_cast %21 : vector<16x21xbf16> to vector<1x16x21xbf16>
    tpu.vector_store %arg5[%c12, %c0_13, %c0_14], %24 {strides = array<i32>} : memref<48x16x128xbf16, #tpu.memory_space<vmem>>, vector<1x16x21xbf16>,
    %25 = vector.extract_strided_slice %3 {offsets = [0, 1], sizes = [19, 21], strides = [1, 1]} : vector<19x24xf32> to vector<19x21xf32>
    %26 = vector.extract_strided_slice %25 {offsets = [0, 0], sizes = [16, 21], strides = [1, 1]} : vector<19x21xf32> to vector<16x21xf32>
    %27 = arith.truncf %26 : vector<16x21xf32> to vector<16x21xbf16>
    %c1 = arith.constant 1 : index
    %c0_15 = arith.constant 0 : index
    %c0_16 = arith.constant 0 : index
    %28 = vector.load %arg5[%c1, %c0_15, %c0_16] : memref<48x16x128xbf16, #tpu.memory_space<vmem>>, vector<1x16x21xbf16>
    %29 = vector.shape_cast %28 : vector<1x16x21xbf16> to vector<16x21xbf16>
    %30 = vector.shape_cast %27 : vector<16x21xbf16> to vector<1x16x21xbf16>
    tpu.vector_store %arg5[%c1, %c0_15, %c0_16], %30 {strides = array<i32>} : memref<48x16x128xbf16, #tpu.memory_space<vmem>>, vector<1x16x21xbf16>,
    %31 = vector.extract_strided_slice %25 {offsets = [1, 0], sizes = [16, 21], strides = [1, 1]} : vector<19x21xf32> to vector<16x21xf32>
    %32 = arith.truncf %31 : vector<16x21xf32> to vector<16x21xbf16>
    %c5 = arith.constant 5 : index
    %c0_17 = arith.constant 0 : index
    %c0_18 = arith.constant 0 : index
    %33 = vector.load %arg5[%c5, %c0_17, %c0_18] : memref<48x16x128xbf16, #tpu.memory_space<vmem>>, vector<1x16x21xbf16>
    %34 = vector.shape_cast %33 : vector<1x16x21xbf16> to vector<16x21xbf16>
    %35 = vector.shape_cast %32 : vector<16x21xbf16> to vector<1x16x21xbf16>
    tpu.vector_store %arg5[%c5, %c0_17, %c0_18], %35 {strides = array<i32>} : memref<48x16x128xbf16, #tpu.memory_space<vmem>>, vector<1x16x21xbf16>,
    %36 = vector.extract_strided_slice %25 {offsets = [2, 0], sizes = [16, 21], strides = [1, 1]} : vector<19x21xf32> to vector<16x21xf32>
    %37 = arith.truncf %36 : vector<16x21xf32> to vector<16x21xbf16>
    %c9 = arith.constant 9 : index
    %c0_19 = arith.constant 0 : index
    %c0_20 = arith.constant 0 : index
    %38 = vector.load %arg5[%c9, %c0_19, %c0_20] : memref<48x16x128xbf16, #tpu.memory_space<vmem>>, vector<1x16x21xbf16>
    %39 = vector.shape_cast %38 : vector<1x16x21xbf16> to vector<16x21xbf16>
    %40 = vector.shape_cast %37 : vector<16x21xbf16> to vector<1x16x21xbf16>
    tpu.vector_store %arg5[%c9, %c0_19, %c0_20], %40 {strides = array<i32>} : memref<48x16x128xbf16, #tpu.memory_space<vmem>>, vector<1x16x21xbf16>,
    %41 = vector.extract_strided_slice %25 {offsets = [3, 0], sizes = [16, 21], strides = [1, 1]} : vector<19x21xf32> to vector<16x21xf32>
    %42 = arith.truncf %41 : vector<16x21xf32> to vector<16x21xbf16>
    %c13 = arith.constant 13 : index
    %c0_21 = arith.constant 0 : index
    %c0_22 = arith.constant 0 : index
    %43 = vector.load %arg5[%c13, %c0_21, %c0_22] : memref<48x16x128xbf16, #tpu.memory_space<vmem>>, vector<1x16x21xbf16>
    %44 = vector.shape_cast %43 : vector<1x16x21xbf16> to vector<16x21xbf16>
    %45 = vector.shape_cast %42 : vector<16x21xbf16> to vector<1x16x21xbf16>
    tpu.vector_store %arg5[%c13, %c0_21, %c0_22], %45 {strides = array<i32>} : memref<48x16x128xbf16, #tpu.memory_space<vmem>>, vector<1x16x21xbf16>,
    %46 = vector.extract_strided_slice %3 {offsets = [0, 2], sizes = [19, 21], strides = [1, 1]} : vector<19x24xf32> to vector<19x21xf32>
    %47 = vector.extract_strided_slice %46 {offsets = [0, 0], sizes = [16, 21], strides = [1, 1]} : vector<19x21xf32> to vector<16x21xf32>
    %48 = arith.truncf %47 : vector<16x21xf32> to vector<16x21xbf16>
    %c2 = arith.constant 2 : index
    %c0_23 = arith.constant 0 : index
    %c0_24 = arith.constant 0 : index
    %49 = vector.load %arg5[%c2, %c0_23, %c0_24] : memref<48x16x128xbf16, #tpu.memory_space<vmem>>, vector<1x16x21xbf16>
    %50 = vector.shape_cast %49 : vector<1x16x21xbf16> to vector<16x21xbf16>
    %51 = vector.shape_cast %48 : vector<16x21xbf16> to vector<1x16x21xbf16>
    tpu.vector_store %arg5[%c2, %c0_23, %c0_24], %51 {strides = array<i32>} : memref<48x16x128xbf16, #tpu.memory_space<vmem>>, vector<1x16x21xbf16>,
    %52 = vector.extract_strided_slice %46 {offsets = [1, 0], sizes = [16, 21], strides = [1, 1]} : vector<19x21xf32> to vector<16x21xf32>
    %53 = arith.truncf %52 : vector<16x21xf32> to vector<16x21xbf16>
    %c6 = arith.constant 6 : index
    %c0_25 = arith.constant 0 : index
    %c0_26 = arith.constant 0 : index
    %54 = vector.load %arg5[%c6, %c0_25, %c0_26] : memref<48x16x128xbf16, #tpu.memory_space<vmem>>, vector<1x16x21xbf16>
    %55 = vector.shape_cast %54 : vector<1x16x21xbf16> to vector<16x21xbf16>
    %56 = vector.shape_cast %53 : vector<16x21xbf16> to vector<1x16x21xbf16>
    tpu.vector_store %arg5[%c6, %c0_25, %c0_26], %56 {strides = array<i32>} : memref<48x16x128xbf16, #tpu.memory_space<vmem>>, vector<1x16x21xbf16>,
    %57 = vector.extract_strided_slice %46 {offsets = [2, 0], sizes = [16, 21], strides = [1, 1]} : vector<19x21xf32> to vector<16x21xf32>
    %58 = arith.truncf %57 : vector<16x21xf32> to vector<16x21xbf16>
    %c10 = arith.constant 10 : index
    %c0_27 = arith.constant 0 : index
    %c0_28 = arith.constant 0 : index
    %59 = vector.load %arg5[%c10, %c0_27, %c0_28] : memref<48x16x128xbf16, #tpu.memory_space<vmem>>, vector<1x16x21xbf16>
    %60 = vector.shape_cast %59 : vector<1x16x21xbf16> to vector<16x21xbf16>
    %61 = vector.shape_cast %58 : vector<16x21xbf16> to vector<1x16x21xbf16>
    tpu.vector_store %arg5[%c10, %c0_27, %c0_28], %61 {strides = array<i32>} : memref<48x16x128xbf16, #tpu.memory_space<vmem>>, vector<1x16x21xbf16>,
    %62 = vector.extract_strided_slice %46 {offsets = [3, 0], sizes = [16, 21], strides = [1, 1]} : vector<19x21xf32> to vector<16x21xf32>
    %63 = arith.truncf %62 : vector<16x21xf32> to vector<16x21xbf16>
    %c14 = arith.constant 14 : index
    %c0_29 = arith.constant 0 : index
    %c0_30 = arith.constant 0 : index
    %64 = vector.load %arg5[%c14, %c0_29, %c0_30] : memref<48x16x128xbf16, #tpu.memory_space<vmem>>, vector<1x16x21xbf16>
    %65 = vector.shape_cast %64 : vector<1x16x21xbf16> to vector<16x21xbf16>
    %66 = vector.shape_cast %63 : vector<16x21xbf16> to vector<1x16x21xbf16>
    tpu.vector_store %arg5[%c14, %c0_29, %c0_30], %66 {strides = array<i32>} : memref<48x16x128xbf16, #tpu.memory_space<vmem>>, vector<1x16x21xbf16>,
    %67 = vector.extract_strided_slice %3 {offsets = [0, 3], sizes = [19, 21], strides = [1, 1]} : vector<19x24xf32> to vector<19x21xf32>
    %68 = vector.extract_strided_slice %67 {offsets = [0, 0], sizes = [16, 21], strides = [1, 1]} : vector<19x21xf32> to vector<16x21xf32>
    %69 = arith.truncf %68 : vector<16x21xf32> to vector<16x21xbf16>
    %c3 = arith.constant 3 : index
    %c0_31 = arith.constant 0 : index
    %c0_32 = arith.constant 0 : index
    %70 = vector.load %arg5[%c3, %c0_31, %c0_32] : memref<48x16x128xbf16, #tpu.memory_space<vmem>>, vector<1x16x21xbf16>
    %71 = vector.shape_cast %70 : vector<1x16x21xbf16> to vector<16x21xbf16>
    %72 = vector.shape_cast %69 : vector<16x21xbf16> to vector<1x16x21xbf16>
    tpu.vector_store %arg5[%c3, %c0_31, %c0_32], %72 {strides = array<i32>} : memref<48x16x128xbf16, #tpu.memory_space<vmem>>, vector<1x16x21xbf16>,
    %73 = vector.extract_strided_slice %67 {offsets = [1, 0], sizes = [16, 21], strides = [1, 1]} : vector<19x21xf32> to vector<16x21xf32>
    %74 = arith.truncf %73 : vector<16x21xf32> to vector<16x21xbf16>
    %c7 = arith.constant 7 : index
    %c0_33 = arith.constant 0 : index
    %c0_34 = arith.constant 0 : index
    %75 = vector.load %arg5[%c7, %c0_33, %c0_34] : memref<48x16x128xbf16, #tpu.memory_space<vmem>>, vector<1x16x21xbf16>
    %76 = vector.shape_cast %75 : vector<1x16x21xbf16> to vector<16x21xbf16>
    %77 = vector.shape_cast %74 : vector<16x21xbf16> to vector<1x16x21xbf16>
    tpu.vector_store %arg5[%c7, %c0_33, %c0_34], %77 {strides = array<i32>} : memref<48x16x128xbf16, #tpu.memory_space<vmem>>, vector<1x16x21xbf16>,
    %78 = vector.extract_strided_slice %67 {offsets = [2, 0], sizes = [16, 21], strides = [1, 1]} : vector<19x21xf32> to vector<16x21xf32>
    %79 = arith.truncf %78 : vector<16x21xf32> to vector<16x21xbf16>
    %c11 = arith.constant 11 : index
    %c0_35 = arith.constant 0 : index
    %c0_36 = arith.constant 0 : index
    %80 = vector.load %arg5[%c11, %c0_35, %c0_36] : memref<48x16x128xbf16, #tpu.memory_space<vmem>>, vector<1x16x21xbf16>
    %81 = vector.shape_cast %80 : vector<1x16x21xbf16> to vector<16x21xbf16>
    %82 = vector.shape_cast %79 : vector<16x21xbf16> to vector<1x16x21xbf16>
    tpu.vector_store %arg5[%c11, %c0_35, %c0_36], %82 {strides = array<i32>} : memref<48x16x128xbf16, #tpu.memory_space<vmem>>, vector<1x16x21xbf16>,
    %83 = vector.extract_strided_slice %67 {offsets = [3, 0], sizes = [16, 21], strides = [1, 1]} : vector<19x21xf32> to vector<16x21xf32>
    %84 = arith.truncf %83 : vector<16x21xf32> to vector<16x21xbf16>
    %c15 = arith.constant 15 : index
    %c0_37 = arith.constant 0 : index
    %c0_38 = arith.constant 0 : index
    %85 = vector.load %arg5[%c15, %c0_37, %c0_38] : memref<48x16x128xbf16, #tpu.memory_space<vmem>>, vector<1x16x21xbf16>
    %86 = vector.shape_cast %85 : vector<1x16x21xbf16> to vector<16x21xbf16>
    %87 = vector.shape_cast %84 : vector<16x21xbf16> to vector<1x16x21xbf16>
    tpu.vector_store %arg5[%c15, %c0_37, %c0_38], %87 {strides = array<i32>} : memref<48x16x128xbf16, #tpu.memory_space<vmem>>, vector<1x16x21xbf16>,
    %c0_39 = arith.constant 0 : index
    %c1_40 = arith.constant 1 : index
    %c0_41 = arith.constant 0 : index
    %c0_42 = arith.constant 0 : index
    %88 = vector.load %arg1[%c0_39, %c1_40, %c0_41, %c0_42] : memref<2x3x35x24xf32, #tpu.memory_space<vmem>>, vector<1x1x19x24xf32>
    %89 = vector.shape_cast %88 : vector<1x1x19x24xf32> to vector<19x24xf32>
    %90 = vector.extract_strided_slice %89 {offsets = [0, 0], sizes = [19, 21], strides = [1, 1]} : vector<19x24xf32> to vector<19x21xf32>
    %91 = vector.extract_strided_slice %90 {offsets = [0, 0], sizes = [16, 21], strides = [1, 1]} : vector<19x21xf32> to vector<16x21xf32>
    %92 = arith.truncf %91 : vector<16x21xf32> to vector<16x21xbf16>
    %c16 = arith.constant 16 : index
    %c0_43 = arith.constant 0 : index
    %c0_44 = arith.constant 0 : index
    %93 = vector.load %arg5[%c16, %c0_43, %c0_44] : memref<48x16x128xbf16, #tpu.memory_space<vmem>>, vector<1x16x21xbf16>
    %94 = vector.shape_cast %93 : vector<1x16x21xbf16> to vector<16x21xbf16>
    %95 = vector.shape_cast %92 : vector<16x21xbf16> to vector<1x16x21xbf16>
    tpu.vector_store %arg5[%c16, %c0_43, %c0_44], %95 {strides = array<i32>} : memref<48x16x128xbf16, #tpu.memory_space<vmem>>, vector<1x16x21xbf16>,
    %96 = vector.extract_strided_slice %90 {offsets = [1, 0], sizes = [16, 21], strides = [1, 1]} : vector<19x21xf32> to vector<16x21xf32>
    %97 = arith.truncf %96 : vector<16x21xf32> to vector<16x21xbf16>
    %c20 = arith.constant 20 : index
    %c0_45 = arith.constant 0 : index
    %c0_46 = arith.constant 0 : index
    %98 = vector.load %arg5[%c20, %c0_45, %c0_46] : memref<48x16x128xbf16, #tpu.memory_space<vmem>>, vector<1x16x21xbf16>
    %99 = vector.shape_cast %98 : vector<1x16x21xbf16> to vector<16x21xbf16>
    %100 = vector.shape_cast %97 : vector<16x21xbf16> to vector<1x16x21xbf16>
    tpu.vector_store %arg5[%c20, %c0_45, %c0_46], %100 {strides = array<i32>} : memref<48x16x128xbf16, #tpu.memory_space<vmem>>, vector<1x16x21xbf16>,
    %101 = vector.extract_strided_slice %90 {offsets = [2, 0], sizes = [16, 21], strides = [1, 1]} : vector<19x21xf32> to vector<16x21xf32>
    %102 = arith.truncf %101 : vector<16x21xf32> to vector<16x21xbf16>
    %c24 = arith.constant 24 : index
    %c0_47 = arith.constant 0 : index
    %c0_48 = arith.constant 0 : index
    %103 = vector.load %arg5[%c24, %c0_47, %c0_48] : memref<48x16x128xbf16, #tpu.memory_space<vmem>>, vector<1x16x21xbf16>
    %104 = vector.shape_cast %103 : vector<1x16x21xbf16> to vector<16x21xbf16>
    %105 = vector.shape_cast %102 : vector<16x21xbf16> to vector<1x16x21xbf16>
    tpu.vector_store %arg5[%c24, %c0_47, %c0_48], %105 {strides = array<i32>} : memref<48x16x128xbf16, #tpu.memory_space<vmem>>, vector<1x16x21xbf16>,
    %106 = vector.extract_strided_slice %90 {offsets = [3, 0], sizes = [16, 21], strides = [1, 1]} : vector<19x21xf32> to vector<16x21xf32>
    %107 = arith.truncf %106 : vector<16x21xf32> to vector<16x21xbf16>
    %c28 = arith.constant 28 : index
    %c0_49 = arith.constant 0 : index
    %c0_50 = arith.constant 0 : index
    %108 = vector.load %arg5[%c28, %c0_49, %c0_50] : memref<48x16x128xbf16, #tpu.memory_space<vmem>>, vector<1x16x21xbf16>
    %109 = vector.shape_cast %108 : vector<1x16x21xbf16> to vector<16x21xbf16>
    %110 = vector.shape_cast %107 : vector<16x21xbf16> to vector<1x16x21xbf16>
    tpu.vector_store %arg5[%c28, %c0_49, %c0_50], %110 {strides = array<i32>} : memref<48x16x128xbf16, #tpu.memory_space<vmem>>, vector<1x16x21xbf16>,
    %111 = vector.extract_strided_slice %89 {offsets = [0, 1], sizes = [19, 21], strides = [1, 1]} : vector<19x24xf32> to vector<19x21xf32>
    %112 = vector.extract_strided_slice %111 {offsets = [0, 0], sizes = [16, 21], strides = [1, 1]} : vector<19x21xf32> to vector<16x21xf32>
    %113 = arith.truncf %112 : vector<16x21xf32> to vector<16x21xbf16>
    %c17 = arith.constant 17 : index
    %c0_51 = arith.constant 0 : index
    %c0_52 = arith.constant 0 : index
    %114 = vector.load %arg5[%c17, %c0_51, %c0_52] : memref<48x16x128xbf16, #tpu.memory_space<vmem>>, vector<1x16x21xbf16>
    %115 = vector.shape_cast %114 : vector<1x16x21xbf16> to vector<16x21xbf16>
    %116 = vector.shape_cast %113 : vector<16x21xbf16> to vector<1x16x21xbf16>
    tpu.vector_store %arg5[%c17, %c0_51, %c0_52], %116 {strides = array<i32>} : memref<48x16x128xbf16, #tpu.memory_space<vmem>>, vector<1x16x21xbf16>,
    %117 = vector.extract_strided_slice %111 {offsets = [1, 0], sizes = [16, 21], strides = [1, 1]} : vector<19x21xf32> to vector<16x21xf32>
    %118 = arith.truncf %117 : vector<16x21xf32> to vector<16x21xbf16>
    %c21 = arith.constant 21 : index
    %c0_53 = arith.constant 0 : index
    %c0_54 = arith.constant 0 : index
    %119 = vector.load %arg5[%c21, %c0_53, %c0_54] : memref<48x16x128xbf16, #tpu.memory_space<vmem>>, vector<1x16x21xbf16>
    %120 = vector.shape_cast %119 : vector<1x16x21xbf16> to vector<16x21xbf16>
    %121 = vector.shape_cast %118 : vector<16x21xbf16> to vector<1x16x21xbf16>
    tpu.vector_store %arg5[%c21, %c0_53, %c0_54], %121 {strides = array<i32>} : memref<48x16x128xbf16, #tpu.memory_space<vmem>>, vector<1x16x21xbf16>,
    %122 = vector.extract_strided_slice %111 {offsets = [2, 0], sizes = [16, 21], strides = [1, 1]} : vector<19x21xf32> to vector<16x21xf32>
    %123 = arith.truncf %122 : vector<16x21xf32> to vector<16x21xbf16>
    %c25 = arith.constant 25 : index
    %c0_55 = arith.constant 0 : index
    %c0_56 = arith.constant 0 : index
    %124 = vector.load %arg5[%c25, %c0_55, %c0_56] : memref<48x16x128xbf16, #tpu.memory_space<vmem>>, vector<1x16x21xbf16>
    %125 = vector.shape_cast %124 : vector<1x16x21xbf16> to vector<16x21xbf16>
    %126 = vector.shape_cast %123 : vector<16x21xbf16> to vector<1x16x21xbf16>
    tpu.vector_store %arg5[%c25, %c0_55, %c0_56], %126 {strides = array<i32>} : memref<48x16x128xbf16, #tpu.memory_space<vmem>>, vector<1x16x21xbf16>,
    %127 = vector.extract_strided_slice %111 {offsets = [3, 0], sizes = [16, 21], strides = [1, 1]} : vector<19x21xf32> to vector<16x21xf32>
    %128 = arith.truncf %127 : vector<16x21xf32> to vector<16x21xbf16>
    %c29 = arith.constant 29 : index
    %c0_57 = arith.constant 0 : index
    %c0_58 = arith.constant 0 : index
    %129 = vector.load %arg5[%c29, %c0_57, %c0_58] : memref<48x16x128xbf16, #tpu.memory_space<vmem>>, vector<1x16x21xbf16>
    %130 = vector.shape_cast %129 : vector<1x16x21xbf16> to vector<16x21xbf16>
    %131 = vector.shape_cast %128 : vector<16x21xbf16> to vector<1x16x21xbf16>
    tpu.vector_store %arg5[%c29, %c0_57, %c0_58], %131 {strides = array<i32>} : memref<48x16x128xbf16, #tpu.memory_space<vmem>>, vector<1x16x21xbf16>,
    %132 = vector.extract_strided_slice %89 {offsets = [0, 2], sizes = [19, 21], strides = [1, 1]} : vector<19x24xf32> to vector<19x21xf32>
    %133 = vector.extract_strided_slice %132 {offsets = [0, 0], sizes = [16, 21], strides = [1, 1]} : vector<19x21xf32> to vector<16x21xf32>
    %134 = arith.truncf %133 : vector<16x21xf32> to vector<16x21xbf16>
    %c18 = arith.constant 18 : index
    %c0_59 = arith.constant 0 : index
    %c0_60 = arith.constant 0 : index
    %135 = vector.load %arg5[%c18, %c0_59, %c0_60] : memref<48x16x128xbf16, #tpu.memory_space<vmem>>, vector<1x16x21xbf16>
    %136 = vector.shape_cast %135 : vector<1x16x21xbf16> to vector<16x21xbf16>
    %137 = vector.shape_cast %134 : vector<16x21xbf16> to vector<1x16x21xbf16>
    tpu.vector_store %arg5[%c18, %c0_59, %c0_60], %137 {strides = array<i32>} : memref<48x16x128xbf16, #tpu.memory_space<vmem>>, vector<1x16x21xbf16>,
    %138 = vector.extract_strided_slice %132 {offsets = [1, 0], sizes = [16, 21], strides = [1, 1]} : vector<19x21xf32> to vector<16x21xf32>
    %139 = arith.truncf %138 : vector<16x21xf32> to vector<16x21xbf16>
    %c22 = arith.constant 22 : index
    %c0_61 = arith.constant 0 : index
    %c0_62 = arith.constant 0 : index
    %140 = vector.load %arg5[%c22, %c0_61, %c0_62] : memref<48x16x128xbf16, #tpu.memory_space<vmem>>, vector<1x16x21xbf16>
    %141 = vector.shape_cast %140 : vector<1x16x21xbf16> to vector<16x21xbf16>
    %142 = vector.shape_cast %139 : vector<16x21xbf16> to vector<1x16x21xbf16>
    tpu.vector_store %arg5[%c22, %c0_61, %c0_62], %142 {strides = array<i32>} : memref<48x16x128xbf16, #tpu.memory_space<vmem>>, vector<1x16x21xbf16>,
    %143 = vector.extract_strided_slice %132 {offsets = [2, 0], sizes = [16, 21], strides = [1, 1]} : vector<19x21xf32> to vector<16x21xf32>
    %144 = arith.truncf %143 : vector<16x21xf32> to vector<16x21xbf16>
    %c26 = arith.constant 26 : index
    %c0_63 = arith.constant 0 : index
    %c0_64 = arith.constant 0 : index
    %145 = vector.load %arg5[%c26, %c0_63, %c0_64] : memref<48x16x128xbf16, #tpu.memory_space<vmem>>, vector<1x16x21xbf16>
    %146 = vector.shape_cast %145 : vector<1x16x21xbf16> to vector<16x21xbf16>
    %147 = vector.shape_cast %144 : vector<16x21xbf16> to vector<1x16x21xbf16>
    tpu.vector_store %arg5[%c26, %c0_63, %c0_64], %147 {strides = array<i32>} : memref<48x16x128xbf16, #tpu.memory_space<vmem>>, vector<1x16x21xbf16>,
    %148 = vector.extract_strided_slice %132 {offsets = [3, 0], sizes = [16, 21], strides = [1, 1]} : vector<19x21xf32> to vector<16x21xf32>
    %149 = arith.truncf %148 : vector<16x21xf32> to vector<16x21xbf16>
    %c30 = arith.constant 30 : index
    %c0_65 = arith.constant 0 : index
    %c0_66 = arith.constant 0 : index
    %150 = vector.load %arg5[%c30, %c0_65, %c0_66] : memref<48x16x128xbf16, #tpu.memory_space<vmem>>, vector<1x16x21xbf16>
    %151 = vector.shape_cast %150 : vector<1x16x21xbf16> to vector<16x21xbf16>
    %152 = vector.shape_cast %149 : vector<16x21xbf16> to vector<1x16x21xbf16>
    tpu.vector_store %arg5[%c30, %c0_65, %c0_66], %152 {strides = array<i32>} : memref<48x16x128xbf16, #tpu.memory_space<vmem>>, vector<1x16x21xbf16>,
    %153 = vector.extract_strided_slice %89 {offsets = [0, 3], sizes = [19, 21], strides = [1, 1]} : vector<19x24xf32> to vector<19x21xf32>
    %154 = vector.extract_strided_slice %153 {offsets = [0, 0], sizes = [16, 21], strides = [1, 1]} : vector<19x21xf32> to vector<16x21xf32>
    %155 = arith.truncf %154 : vector<16x21xf32> to vector<16x21xbf16>
    %c19 = arith.constant 19 : index
    %c0_67 = arith.constant 0 : index
    %c0_68 = arith.constant 0 : index
    %156 = vector.load %arg5[%c19, %c0_67, %c0_68] : memref<48x16x128xbf16, #tpu.memory_space<vmem>>, vector<1x16x21xbf16>
    %157 = vector.shape_cast %156 : vector<1x16x21xbf16> to vector<16x21xbf16>
    %158 = vector.shape_cast %155 : vector<16x21xbf16> to vector<1x16x21xbf16>
    tpu.vector_store %arg5[%c19, %c0_67, %c0_68], %158 {strides = array<i32>} : memref<48x16x128xbf16, #tpu.memory_space<vmem>>, vector<1x16x21xbf16>,
    %159 = vector.extract_strided_slice %153 {offsets = [1, 0], sizes = [16, 21], strides = [1, 1]} : vector<19x21xf32> to vector<16x21xf32>
    %160 = arith.truncf %159 : vector<16x21xf32> to vector<16x21xbf16>
    %c23 = arith.constant 23 : index
    %c0_69 = arith.constant 0 : index
    %c0_70 = arith.constant 0 : index
    %161 = vector.load %arg5[%c23, %c0_69, %c0_70] : memref<48x16x128xbf16, #tpu.memory_space<vmem>>, vector<1x16x21xbf16>
    %162 = vector.shape_cast %161 : vector<1x16x21xbf16> to vector<16x21xbf16>
    %163 = vector.shape_cast %160 : vector<16x21xbf16> to vector<1x16x21xbf16>
    tpu.vector_store %arg5[%c23, %c0_69, %c0_70], %163 {strides = array<i32>} : memref<48x16x128xbf16, #tpu.memory_space<vmem>>, vector<1x16x21xbf16>,
    %164 = vector.extract_strided_slice %153 {offsets = [2, 0], sizes = [16, 21], strides = [1, 1]} : vector<19x21xf32> to vector<16x21xf32>
    %165 = arith.truncf %164 : vector<16x21xf32> to vector<16x21xbf16>
    %c27 = arith.constant 27 : index
    %c0_71 = arith.constant 0 : index
    %c0_72 = arith.constant 0 : index
    %166 = vector.load %arg5[%c27, %c0_71, %c0_72] : memref<48x16x128xbf16, #tpu.memory_space<vmem>>, vector<1x16x21xbf16>
    %167 = vector.shape_cast %166 : vector<1x16x21xbf16> to vector<16x21xbf16>
    %168 = vector.shape_cast %165 : vector<16x21xbf16> to vector<1x16x21xbf16>
    tpu.vector_store %arg5[%c27, %c0_71, %c0_72], %168 {strides = array<i32>} : memref<48x16x128xbf16, #tpu.memory_space<vmem>>, vector<1x16x21xbf16>,
    %169 = vector.extract_strided_slice %153 {offsets = [3, 0], sizes = [16, 21], strides = [1, 1]} : vector<19x21xf32> to vector<16x21xf32>
    %170 = arith.truncf %169 : vector<16x21xf32> to vector<16x21xbf16>
    %c31 = arith.constant 31 : index
    %c0_73 = arith.constant 0 : index
    %c0_74 = arith.constant 0 : index
    %171 = vector.load %arg5[%c31, %c0_73, %c0_74] : memref<48x16x128xbf16, #tpu.memory_space<vmem>>, vector<1x16x21xbf16>
    %172 = vector.shape_cast %171 : vector<1x16x21xbf16> to vector<16x21xbf16>
    %173 = vector.shape_cast %170 : vector<16x21xbf16> to vector<1x16x21xbf16>
    tpu.vector_store %arg5[%c31, %c0_73, %c0_74], %173 {strides = array<i32>} : memref<48x16x128xbf16, #tpu.memory_space<vmem>>, vector<1x16x21xbf16>,
    %c0_75 = arith.constant 0 : index
    %c2_76 = arith.constant 2 : index
    %c0_77 = arith.constant 0 : index
    %c0_78 = arith.constant 0 : index
    %174 = vector.load %arg1[%c0_75, %c2_76, %c0_77, %c0_78] : memref<2x3x35x24xf32, #tpu.memory_space<vmem>>, vector<1x1x19x24xf32>
    %175 = vector.shape_cast %174 : vector<1x1x19x24xf32> to vector<19x24xf32>
    %176 = vector.extract_strided_slice %175 {offsets = [0, 0], sizes = [19, 21], strides = [1, 1]} : vector<19x24xf32> to vector<19x21xf32>
    %177 = vector.extract_strided_slice %176 {offsets = [0, 0], sizes = [16, 21], strides = [1, 1]} : vector<19x21xf32> to vector<16x21xf32>
    %178 = arith.truncf %177 : vector<16x21xf32> to vector<16x21xbf16>
    %c32 = arith.constant 32 : index
    %c0_79 = arith.constant 0 : index
    %c0_80 = arith.constant 0 : index
    %179 = vector.load %arg5[%c32, %c0_79, %c0_80] : memref<48x16x128xbf16, #tpu.memory_space<vmem>>, vector<1x16x21xbf16>
    %180 = vector.shape_cast %179 : vector<1x16x21xbf16> to vector<16x21xbf16>
    %181 = vector.shape_cast %178 : vector<16x21xbf16> to vector<1x16x21xbf16>
    tpu.vector_store %arg5[%c32, %c0_79, %c0_80], %181 {strides = array<i32>} : memref<48x16x128xbf16, #tpu.memory_space<vmem>>, vector<1x16x21xbf16>,
    %182 = vector.extract_strided_slice %176 {offsets = [1, 0], sizes = [16, 21], strides = [1, 1]} : vector<19x21xf32> to vector<16x21xf32>
    %183 = arith.truncf %182 : vector<16x21xf32> to vector<16x21xbf16>
    %c36 = arith.constant 36 : index
    %c0_81 = arith.constant 0 : index
    %c0_82 = arith.constant 0 : index
    %184 = vector.load %arg5[%c36, %c0_81, %c0_82] : memref<48x16x128xbf16, #tpu.memory_space<vmem>>, vector<1x16x21xbf16>
    %185 = vector.shape_cast %184 : vector<1x16x21xbf16> to vector<16x21xbf16>
    %186 = vector.shape_cast %183 : vector<16x21xbf16> to vector<1x16x21xbf16>
    tpu.vector_store %arg5[%c36, %c0_81, %c0_82], %186 {strides = array<i32>} : memref<48x16x128xbf16, #tpu.memory_space<vmem>>, vector<1x16x21xbf16>,
    %187 = vector.extract_strided_slice %176 {offsets = [2, 0], sizes = [16, 21], strides = [1, 1]} : vector<19x21xf32> to vector<16x21xf32>
    %188 = arith.truncf %187 : vector<16x21xf32> to vector<16x21xbf16>
    %c40 = arith.constant 40 : index
    %c0_83 = arith.constant 0 : index
    %c0_84 = arith.constant 0 : index
    %189 = vector.load %arg5[%c40, %c0_83, %c0_84] : memref<48x16x128xbf16, #tpu.memory_space<vmem>>, vector<1x16x21xbf16>
    %190 = vector.shape_cast %189 : vector<1x16x21xbf16> to vector<16x21xbf16>
    %191 = vector.shape_cast %188 : vector<16x21xbf16> to vector<1x16x21xbf16>
    tpu.vector_store %arg5[%c40, %c0_83, %c0_84], %191 {strides = array<i32>} : memref<48x16x128xbf16, #tpu.memory_space<vmem>>, vector<1x16x21xbf16>,
    %192 = vector.extract_strided_slice %176 {offsets = [3, 0], sizes = [16, 21], strides = [1, 1]} : vector<19x21xf32> to vector<16x21xf32>
    %193 = arith.truncf %192 : vector<16x21xf32> to vector<16x21xbf16>
    %c44 = arith.constant 44 : index
    %c0_85 = arith.constant 0 : index
    %c0_86 = arith.constant 0 : index
    %194 = vector.load %arg5[%c44, %c0_85, %c0_86] : memref<48x16x128xbf16, #tpu.memory_space<vmem>>, vector<1x16x21xbf16>
    %195 = vector.shape_cast %194 : vector<1x16x21xbf16> to vector<16x21xbf16>
    %196 = vector.shape_cast %193 : vector<16x21xbf16> to vector<1x16x21xbf16>
    tpu.vector_store %arg5[%c44, %c0_85, %c0_86], %196 {strides = array<i32>} : memref<48x16x128xbf16, #tpu.memory_space<vmem>>, vector<1x16x21xbf16>,
    %197 = vector.extract_strided_slice %175 {offsets = [0, 1], sizes = [19, 21], strides = [1, 1]} : vector<19x24xf32> to vector<19x21xf32>
    %198 = vector.extract_strided_slice %197 {offsets = [0, 0], sizes = [16, 21], strides = [1, 1]} : vector<19x21xf32> to vector<16x21xf32>
    %199 = arith.truncf %198 : vector<16x21xf32> to vector<16x21xbf16>
    %c33 = arith.constant 33 : index
    %c0_87 = arith.constant 0 : index
    %c0_88 = arith.constant 0 : index
    %200 = vector.load %arg5[%c33, %c0_87, %c0_88] : memref<48x16x128xbf16, #tpu.memory_space<vmem>>, vector<1x16x21xbf16>
    %201 = vector.shape_cast %200 : vector<1x16x21xbf16> to vector<16x21xbf16>
    %202 = vector.shape_cast %199 : vector<16x21xbf16> to vector<1x16x21xbf16>
    tpu.vector_store %arg5[%c33, %c0_87, %c0_88], %202 {strides = array<i32>} : memref<48x16x128xbf16, #tpu.memory_space<vmem>>, vector<1x16x21xbf16>,
    %203 = vector.extract_strided_slice %197 {offsets = [1, 0], sizes = [16, 21], strides = [1, 1]} : vector<19x21xf32> to vector<16x21xf32>
    %204 = arith.truncf %203 : vector<16x21xf32> to vector<16x21xbf16>
    %c37 = arith.constant 37 : index
    %c0_89 = arith.constant 0 : index
    %c0_90 = arith.constant 0 : index
    %205 = vector.load %arg5[%c37, %c0_89, %c0_90] : memref<48x16x128xbf16, #tpu.memory_space<vmem>>, vector<1x16x21xbf16>
    %206 = vector.shape_cast %205 : vector<1x16x21xbf16> to vector<16x21xbf16>
    %207 = vector.shape_cast %204 : vector<16x21xbf16> to vector<1x16x21xbf16>
    tpu.vector_store %arg5[%c37, %c0_89, %c0_90], %207 {strides = array<i32>} : memref<48x16x128xbf16, #tpu.memory_space<vmem>>, vector<1x16x21xbf16>,
    %208 = vector.extract_strided_slice %197 {offsets = [2, 0], sizes = [16, 21], strides = [1, 1]} : vector<19x21xf32> to vector<16x21xf32>
    %209 = arith.truncf %208 : vector<16x21xf32> to vector<16x21xbf16>
    %c41 = arith.constant 41 : index
    %c0_91 = arith.constant 0 : index
    %c0_92 = arith.constant 0 : index
    %210 = vector.load %arg5[%c41, %c0_91, %c0_92] : memref<48x16x128xbf16, #tpu.memory_space<vmem>>, vector<1x16x21xbf16>
    %211 = vector.shape_cast %210 : vector<1x16x21xbf16> to vector<16x21xbf16>
    %212 = vector.shape_cast %209 : vector<16x21xbf16> to vector<1x16x21xbf16>
    tpu.vector_store %arg5[%c41, %c0_91, %c0_92], %212 {strides = array<i32>} : memref<48x16x128xbf16, #tpu.memory_space<vmem>>, vector<1x16x21xbf16>,
    %213 = vector.extract_strided_slice %197 {offsets = [3, 0], sizes = [16, 21], strides = [1, 1]} : vector<19x21xf32> to vector<16x21xf32>
    %214 = arith.truncf %213 : vector<16x21xf32> to vector<16x21xbf16>
    %c45 = arith.constant 45 : index
    %c0_93 = arith.constant 0 : index
    %c0_94 = arith.constant 0 : index
    %215 = vector.load %arg5[%c45, %c0_93, %c0_94] : memref<48x16x128xbf16, #tpu.memory_space<vmem>>, vector<1x16x21xbf16>
    %216 = vector.shape_cast %215 : vector<1x16x21xbf16> to vector<16x21xbf16>
    %217 = vector.shape_cast %214 : vector<16x21xbf16> to vector<1x16x21xbf16>
    tpu.vector_store %arg5[%c45, %c0_93, %c0_94], %217 {strides = array<i32>} : memref<48x16x128xbf16, #tpu.memory_space<vmem>>, vector<1x16x21xbf16>,
    %218 = vector.extract_strided_slice %175 {offsets = [0, 2], sizes = [19, 21], strides = [1, 1]} : vector<19x24xf32> to vector<19x21xf32>
    %219 = vector.extract_strided_slice %218 {offsets = [0, 0], sizes = [16, 21], strides = [1, 1]} : vector<19x21xf32> to vector<16x21xf32>
    %220 = arith.truncf %219 : vector<16x21xf32> to vector<16x21xbf16>
    %c34 = arith.constant 34 : index
    %c0_95 = arith.constant 0 : index
    %c0_96 = arith.constant 0 : index
    %221 = vector.load %arg5[%c34, %c0_95, %c0_96] : memref<48x16x128xbf16, #tpu.memory_space<vmem>>, vector<1x16x21xbf16>
    %222 = vector.shape_cast %221 : vector<1x16x21xbf16> to vector<16x21xbf16>
    %223 = vector.shape_cast %220 : vector<16x21xbf16> to vector<1x16x21xbf16>
    tpu.vector_store %arg5[%c34, %c0_95, %c0_96], %223 {strides = array<i32>} : memref<48x16x128xbf16, #tpu.memory_space<vmem>>, vector<1x16x21xbf16>,
    %224 = vector.extract_strided_slice %218 {offsets = [1, 0], sizes = [16, 21], strides = [1, 1]} : vector<19x21xf32> to vector<16x21xf32>
    %225 = arith.truncf %224 : vector<16x21xf32> to vector<16x21xbf16>
    %c38 = arith.constant 38 : index
    %c0_97 = arith.constant 0 : index
    %c0_98 = arith.constant 0 : index
    %226 = vector.load %arg5[%c38, %c0_97, %c0_98] : memref<48x16x128xbf16, #tpu.memory_space<vmem>>, vector<1x16x21xbf16>
    %227 = vector.shape_cast %226 : vector<1x16x21xbf16> to vector<16x21xbf16>
    %228 = vector.shape_cast %225 : vector<16x21xbf16> to vector<1x16x21xbf16>
    tpu.vector_store %arg5[%c38, %c0_97, %c0_98], %228 {strides = array<i32>} : memref<48x16x128xbf16, #tpu.memory_space<vmem>>, vector<1x16x21xbf16>,
    %229 = vector.extract_strided_slice %218 {offsets = [2, 0], sizes = [16, 21], strides = [1, 1]} : vector<19x21xf32> to vector<16x21xf32>
    %230 = arith.truncf %229 : vector<16x21xf32> to vector<16x21xbf16>
    %c42 = arith.constant 42 : index
    %c0_99 = arith.constant 0 : index
    %c0_100 = arith.constant 0 : index
    %231 = vector.load %arg5[%c42, %c0_99, %c0_100] : memref<48x16x128xbf16, #tpu.memory_space<vmem>>, vector<1x16x21xbf16>
    %232 = vector.shape_cast %231 : vector<1x16x21xbf16> to vector<16x21xbf16>
    %233 = vector.shape_cast %230 : vector<16x21xbf16> to vector<1x16x21xbf16>
    tpu.vector_store %arg5[%c42, %c0_99, %c0_100], %233 {strides = array<i32>} : memref<48x16x128xbf16, #tpu.memory_space<vmem>>, vector<1x16x21xbf16>,
    %234 = vector.extract_strided_slice %218 {offsets = [3, 0], sizes = [16, 21], strides = [1, 1]} : vector<19x21xf32> to vector<16x21xf32>
    %235 = arith.truncf %234 : vector<16x21xf32> to vector<16x21xbf16>
    %c46 = arith.constant 46 : index
    %c0_101 = arith.constant 0 : index
    %c0_102 = arith.constant 0 : index
    %236 = vector.load %arg5[%c46, %c0_101, %c0_102] : memref<48x16x128xbf16, #tpu.memory_space<vmem>>, vector<1x16x21xbf16>
    %237 = vector.shape_cast %236 : vector<1x16x21xbf16> to vector<16x21xbf16>
    %238 = vector.shape_cast %235 : vector<16x21xbf16> to vector<1x16x21xbf16>
    tpu.vector_store %arg5[%c46, %c0_101, %c0_102], %238 {strides = array<i32>} : memref<48x16x128xbf16, #tpu.memory_space<vmem>>, vector<1x16x21xbf16>,
    %239 = vector.extract_strided_slice %175 {offsets = [0, 3], sizes = [19, 21], strides = [1, 1]} : vector<19x24xf32> to vector<19x21xf32>
    %240 = vector.extract_strided_slice %239 {offsets = [0, 0], sizes = [16, 21], strides = [1, 1]} : vector<19x21xf32> to vector<16x21xf32>
    %241 = arith.truncf %240 : vector<16x21xf32> to vector<16x21xbf16>
    %c35 = arith.constant 35 : index
    %c0_103 = arith.constant 0 : index
    %c0_104 = arith.constant 0 : index
    %242 = vector.load %arg5[%c35, %c0_103, %c0_104] : memref<48x16x128xbf16, #tpu.memory_space<vmem>>, vector<1x16x21xbf16>
    %243 = vector.shape_cast %242 : vector<1x16x21xbf16> to vector<16x21xbf16>
    %244 = vector.shape_cast %241 : vector<16x21xbf16> to vector<1x16x21xbf16>
    tpu.vector_store %arg5[%c35, %c0_103, %c0_104], %244 {strides = array<i32>} : memref<48x16x128xbf16, #tpu.memory_space<vmem>>, vector<1x16x21xbf16>,
    %245 = vector.extract_strided_slice %239 {offsets = [1, 0], sizes = [16, 21], strides = [1, 1]} : vector<19x21xf32> to vector<16x21xf32>
    %246 = arith.truncf %245 : vector<16x21xf32> to vector<16x21xbf16>
    %c39 = arith.constant 39 : index
    %c0_105 = arith.constant 0 : index
    %c0_106 = arith.constant 0 : index
    %247 = vector.load %arg5[%c39, %c0_105, %c0_106] : memref<48x16x128xbf16, #tpu.memory_space<vmem>>, vector<1x16x21xbf16>
    %248 = vector.shape_cast %247 : vector<1x16x21xbf16> to vector<16x21xbf16>
    %249 = vector.shape_cast %246 : vector<16x21xbf16> to vector<1x16x21xbf16>
    tpu.vector_store %arg5[%c39, %c0_105, %c0_106], %249 {strides = array<i32>} : memref<48x16x128xbf16, #tpu.memory_space<vmem>>, vector<1x16x21xbf16>,
    %250 = vector.extract_strided_slice %239 {offsets = [2, 0], sizes = [16, 21], strides = [1, 1]} : vector<19x21xf32> to vector<16x21xf32>
    %251 = arith.truncf %250 : vector<16x21xf32> to vector<16x21xbf16>
    %c43 = arith.constant 43 : index
    %c0_107 = arith.constant 0 : index
    %c0_108 = arith.constant 0 : index
    %252 = vector.load %arg5[%c43, %c0_107, %c0_108] : memref<48x16x128xbf16, #tpu.memory_space<vmem>>, vector<1x16x21xbf16>
    %253 = vector.shape_cast %252 : vector<1x16x21xbf16> to vector<16x21xbf16>
    %254 = vector.shape_cast %251 : vector<16x21xbf16> to vector<1x16x21xbf16>
    tpu.vector_store %arg5[%c43, %c0_107, %c0_108], %254 {strides = array<i32>} : memref<48x16x128xbf16, #tpu.memory_space<vmem>>, vector<1x16x21xbf16>,
    %255 = vector.extract_strided_slice %239 {offsets = [3, 0], sizes = [16, 21], strides = [1, 1]} : vector<19x21xf32> to vector<16x21xf32>
    %256 = arith.truncf %255 : vector<16x21xf32> to vector<16x21xbf16>
    %c47 = arith.constant 47 : index
    %c0_109 = arith.constant 0 : index
    %c0_110 = arith.constant 0 : index
    %257 = vector.load %arg5[%c47, %c0_109, %c0_110] : memref<48x16x128xbf16, #tpu.memory_space<vmem>>, vector<1x16x21xbf16>
    %258 = vector.shape_cast %257 : vector<1x16x21xbf16> to vector<16x21xbf16>
    %259 = vector.shape_cast %256 : vector<16x21xbf16> to vector<1x16x21xbf16>
    tpu.vector_store %arg5[%c47, %c0_109, %c0_110], %259 {strides = array<i32>} : memref<48x16x128xbf16, #tpu.memory_space<vmem>>, vector<1x16x21xbf16>,
    %c0_111 = arith.constant 0 : index
    %c0_112 = arith.constant 0 : index
    %c0_113 = arith.constant 0 : index
    %260 = vector.load %arg5[%c0_111, %c0_112, %c0_113] : memref<48x16x128xbf16, #tpu.memory_space<vmem>>, vector<48x16x128xbf16>
    %261 = vector.shape_cast %260 : vector<48x16x128xbf16> to vector<48x2048xbf16>
    %c0_114 = arith.constant 0 : index
    %c0_115 = arith.constant 0 : index
    %262 = vector.load %arg2[%c0_114, %c0_115] : memref<8x48xbf16, #tpu.memory_space<vmem>>, vector<8x48xbf16>
    %cst_116 = arith.constant dense<0.000000e+00> : vector<8x2048xf32>
    %263 = tpu.matmul %262, %261, %cst_116 {dimension_numbers = #tpu.dot_dimension_numbers<[1], [0], [0], [1], [0, 0, 1, 1], [], []>} : vector<8x48xbf16>, vector<48x2048xbf16>, vector<8x2048xf32> -> vector<8x2048xf32>
    %c0_117 = arith.constant 0 : index
    %c0_118 = arith.constant 0 : index
    %264 = vector.load %arg3[%c0_117, %c0_118] : memref<8x1xf32, #tpu.memory_space<vmem>>, vector<8x1xf32>
    %265 = vector.broadcast %264 : vector<8x1xf32> to vector<8x2048xf32>
    %266 = arith.addf %263, %265 : vector<8x2048xf32>
    %c0_119 = arith.constant 0 : index
    %c0_120 = arith.constant 0 : index
    %c0_121 = arith.constant 0 : index
    %267 = vector.load %arg4[%c0_119, %c0_120, %c0_121] : memref<2x8x4096xf32, #tpu.memory_space<vmem>>, vector<1x8x2048xf32>
    %268 = vector.shape_cast %267 : vector<1x8x2048xf32> to vector<8x2048xf32>
    %269 = vector.shape_cast %266 : vector<8x2048xf32> to vector<1x8x2048xf32>
    tpu.vector_store %arg4[%c0_119, %c0_120, %c0_121], %269 {strides = array<i32>} : memref<2x8x4096xf32, #tpu.memory_space<vmem>>, vector<1x8x2048xf32>,
    %c0_122 = arith.constant 0 : index
    %c0_123 = arith.constant 0 : index
    %c16_124 = arith.constant 16 : index
    %c0_125 = arith.constant 0 : index
    %270 = vector.load %arg1[%c0_122, %c0_123, %c16_124, %c0_125] : memref<2x3x35x24xf32, #tpu.memory_space<vmem>>, vector<1x1x19x24xf32>
    %271 = vector.shape_cast %270 : vector<1x1x19x24xf32> to vector<19x24xf32>
    %272 = vector.extract_strided_slice %271 {offsets = [0, 0], sizes = [19, 21], strides = [1, 1]} : vector<19x24xf32> to vector<19x21xf32>
    %273 = vector.extract_strided_slice %272 {offsets = [0, 0], sizes = [16, 21], strides = [1, 1]} : vector<19x21xf32> to vector<16x21xf32>
    %274 = arith.truncf %273 : vector<16x21xf32> to vector<16x21xbf16>
    %c0_126 = arith.constant 0 : index
    %c0_127 = arith.constant 0 : index
    %c0_128 = arith.constant 0 : index
    %275 = vector.load %arg5[%c0_126, %c0_127, %c0_128] : memref<48x16x128xbf16, #tpu.memory_space<vmem>>, vector<1x16x21xbf16>
    %276 = vector.shape_cast %275 : vector<1x16x21xbf16> to vector<16x21xbf16>
    %277 = vector.shape_cast %274 : vector<16x21xbf16> to vector<1x16x21xbf16>
    tpu.vector_store %arg5[%c0_126, %c0_127, %c0_128], %277 {strides = array<i32>} : memref<48x16x128xbf16, #tpu.memory_space<vmem>>, vector<1x16x21xbf16>,
    %278 = vector.extract_strided_slice %272 {offsets = [1, 0], sizes = [16, 21], strides = [1, 1]} : vector<19x21xf32> to vector<16x21xf32>
    %279 = arith.truncf %278 : vector<16x21xf32> to vector<16x21xbf16>
    %c4_129 = arith.constant 4 : index
    %c0_130 = arith.constant 0 : index
    %c0_131 = arith.constant 0 : index
    %280 = vector.load %arg5[%c4_129, %c0_130, %c0_131] : memref<48x16x128xbf16, #tpu.memory_space<vmem>>, vector<1x16x21xbf16>
    %281 = vector.shape_cast %280 : vector<1x16x21xbf16> to vector<16x21xbf16>
    %282 = vector.shape_cast %279 : vector<16x21xbf16> to vector<1x16x21xbf16>
    tpu.vector_store %arg5[%c4_129, %c0_130, %c0_131], %282 {strides = array<i32>} : memref<48x16x128xbf16, #tpu.memory_space<vmem>>, vector<1x16x21xbf16>,
    %283 = vector.extract_strided_slice %272 {offsets = [2, 0], sizes = [16, 21], strides = [1, 1]} : vector<19x21xf32> to vector<16x21xf32>
    %284 = arith.truncf %283 : vector<16x21xf32> to vector<16x21xbf16>
    %c8_132 = arith.constant 8 : index
    %c0_133 = arith.constant 0 : index
    %c0_134 = arith.constant 0 : index
    %285 = vector.load %arg5[%c8_132, %c0_133, %c0_134] : memref<48x16x128xbf16, #tpu.memory_space<vmem>>, vector<1x16x21xbf16>
    %286 = vector.shape_cast %285 : vector<1x16x21xbf16> to vector<16x21xbf16>
    %287 = vector.shape_cast %284 : vector<16x21xbf16> to vector<1x16x21xbf16>
    tpu.vector_store %arg5[%c8_132, %c0_133, %c0_134], %287 {strides = array<i32>} : memref<48x16x128xbf16, #tpu.memory_space<vmem>>, vector<1x16x21xbf16>,
    %288 = vector.extract_strided_slice %272 {offsets = [3, 0], sizes = [16, 21], strides = [1, 1]} : vector<19x21xf32> to vector<16x21xf32>
    %289 = arith.truncf %288 : vector<16x21xf32> to vector<16x21xbf16>
    %c12_135 = arith.constant 12 : index
    %c0_136 = arith.constant 0 : index
    %c0_137 = arith.constant 0 : index
    %290 = vector.load %arg5[%c12_135, %c0_136, %c0_137] : memref<48x16x128xbf16, #tpu.memory_space<vmem>>, vector<1x16x21xbf16>
    %291 = vector.shape_cast %290 : vector<1x16x21xbf16> to vector<16x21xbf16>
    %292 = vector.shape_cast %289 : vector<16x21xbf16> to vector<1x16x21xbf16>
    tpu.vector_store %arg5[%c12_135, %c0_136, %c0_137], %292 {strides = array<i32>} : memref<48x16x128xbf16, #tpu.memory_space<vmem>>, vector<1x16x21xbf16>,
    %293 = vector.extract_strided_slice %271 {offsets = [0, 1], sizes = [19, 21], strides = [1, 1]} : vector<19x24xf32> to vector<19x21xf32>
    %294 = vector.extract_strided_slice %293 {offsets = [0, 0], sizes = [16, 21], strides = [1, 1]} : vector<19x21xf32> to vector<16x21xf32>
    %295 = arith.truncf %294 : vector<16x21xf32> to vector<16x21xbf16>
    %c1_138 = arith.constant 1 : index
    %c0_139 = arith.constant 0 : index
    %c0_140 = arith.constant 0 : index
    %296 = vector.load %arg5[%c1_138, %c0_139, %c0_140] : memref<48x16x128xbf16, #tpu.memory_space<vmem>>, vector<1x16x21xbf16>
    %297 = vector.shape_cast %296 : vector<1x16x21xbf16> to vector<16x21xbf16>
    %298 = vector.shape_cast %295 : vector<16x21xbf16> to vector<1x16x21xbf16>
    tpu.vector_store %arg5[%c1_138, %c0_139, %c0_140], %298 {strides = array<i32>} : memref<48x16x128xbf16, #tpu.memory_space<vmem>>, vector<1x16x21xbf16>,
    %299 = vector.extract_strided_slice %293 {offsets = [1, 0], sizes = [16, 21], strides = [1, 1]} : vector<19x21xf32> to vector<16x21xf32>
    %300 = arith.truncf %299 : vector<16x21xf32> to vector<16x21xbf16>
    %c5_141 = arith.constant 5 : index
    %c0_142 = arith.constant 0 : index
    %c0_143 = arith.constant 0 : index
    %301 = vector.load %arg5[%c5_141, %c0_142, %c0_143] : memref<48x16x128xbf16, #tpu.memory_space<vmem>>, vector<1x16x21xbf16>
    %302 = vector.shape_cast %301 : vector<1x16x21xbf16> to vector<16x21xbf16>
    %303 = vector.shape_cast %300 : vector<16x21xbf16> to vector<1x16x21xbf16>
    tpu.vector_store %arg5[%c5_141, %c0_142, %c0_143], %303 {strides = array<i32>} : memref<48x16x128xbf16, #tpu.memory_space<vmem>>, vector<1x16x21xbf16>,
    %304 = vector.extract_strided_slice %293 {offsets = [2, 0], sizes = [16, 21], strides = [1, 1]} : vector<19x21xf32> to vector<16x21xf32>
    %305 = arith.truncf %304 : vector<16x21xf32> to vector<16x21xbf16>
    %c9_144 = arith.constant 9 : index
    %c0_145 = arith.constant 0 : index
    %c0_146 = arith.constant 0 : index
    %306 = vector.load %arg5[%c9_144, %c0_145, %c0_146] : memref<48x16x128xbf16, #tpu.memory_space<vmem>>, vector<1x16x21xbf16>
    %307 = vector.shape_cast %306 : vector<1x16x21xbf16> to vector<16x21xbf16>
    %308 = vector.shape_cast %305 : vector<16x21xbf16> to vector<1x16x21xbf16>
    tpu.vector_store %arg5[%c9_144, %c0_145, %c0_146], %308 {strides = array<i32>} : memref<48x16x128xbf16, #tpu.memory_space<vmem>>, vector<1x16x21xbf16>,
    %309 = vector.extract_strided_slice %293 {offsets = [3, 0], sizes = [16, 21], strides = [1, 1]} : vector<19x21xf32> to vector<16x21xf32>
    %310 = arith.truncf %309 : vector<16x21xf32> to vector<16x21xbf16>
    %c13_147 = arith.constant 13 : index
    %c0_148 = arith.constant 0 : index
    %c0_149 = arith.constant 0 : index
    %311 = vector.load %arg5[%c13_147, %c0_148, %c0_149] : memref<48x16x128xbf16, #tpu.memory_space<vmem>>, vector<1x16x21xbf16>
    %312 = vector.shape_cast %311 : vector<1x16x21xbf16> to vector<16x21xbf16>
    %313 = vector.shape_cast %310 : vector<16x21xbf16> to vector<1x16x21xbf16>
    tpu.vector_store %arg5[%c13_147, %c0_148, %c0_149], %313 {strides = array<i32>} : memref<48x16x128xbf16, #tpu.memory_space<vmem>>, vector<1x16x21xbf16>,
    %314 = vector.extract_strided_slice %271 {offsets = [0, 2], sizes = [19, 21], strides = [1, 1]} : vector<19x24xf32> to vector<19x21xf32>
    %315 = vector.extract_strided_slice %314 {offsets = [0, 0], sizes = [16, 21], strides = [1, 1]} : vector<19x21xf32> to vector<16x21xf32>
    %316 = arith.truncf %315 : vector<16x21xf32> to vector<16x21xbf16>
    %c2_150 = arith.constant 2 : index
    %c0_151 = arith.constant 0 : index
    %c0_152 = arith.constant 0 : index
    %317 = vector.load %arg5[%c2_150, %c0_151, %c0_152] : memref<48x16x128xbf16, #tpu.memory_space<vmem>>, vector<1x16x21xbf16>
    %318 = vector.shape_cast %317 : vector<1x16x21xbf16> to vector<16x21xbf16>
    %319 = vector.shape_cast %316 : vector<16x21xbf16> to vector<1x16x21xbf16>
    tpu.vector_store %arg5[%c2_150, %c0_151, %c0_152], %319 {strides = array<i32>} : memref<48x16x128xbf16, #tpu.memory_space<vmem>>, vector<1x16x21xbf16>,
    %320 = vector.extract_strided_slice %314 {offsets = [1, 0], sizes = [16, 21], strides = [1, 1]} : vector<19x21xf32> to vector<16x21xf32>
    %321 = arith.truncf %320 : vector<16x21xf32> to vector<16x21xbf16>
    %c6_153 = arith.constant 6 : index
    %c0_154 = arith.constant 0 : index
    %c0_155 = arith.constant 0 : index
    %322 = vector.load %arg5[%c6_153, %c0_154, %c0_155] : memref<48x16x128xbf16, #tpu.memory_space<vmem>>, vector<1x16x21xbf16>
    %323 = vector.shape_cast %322 : vector<1x16x21xbf16> to vector<16x21xbf16>
    %324 = vector.shape_cast %321 : vector<16x21xbf16> to vector<1x16x21xbf16>
    tpu.vector_store %arg5[%c6_153, %c0_154, %c0_155], %324 {strides = array<i32>} : memref<48x16x128xbf16, #tpu.memory_space<vmem>>, vector<1x16x21xbf16>,
    %325 = vector.extract_strided_slice %314 {offsets = [2, 0], sizes = [16, 21], strides = [1, 1]} : vector<19x21xf32> to vector<16x21xf32>
    %326 = arith.truncf %325 : vector<16x21xf32> to vector<16x21xbf16>
    %c10_156 = arith.constant 10 : index
    %c0_157 = arith.constant 0 : index
    %c0_158 = arith.constant 0 : index
    %327 = vector.load %arg5[%c10_156, %c0_157, %c0_158] : memref<48x16x128xbf16, #tpu.memory_space<vmem>>, vector<1x16x21xbf16>
    %328 = vector.shape_cast %327 : vector<1x16x21xbf16> to vector<16x21xbf16>
    %329 = vector.shape_cast %326 : vector<16x21xbf16> to vector<1x16x21xbf16>
    tpu.vector_store %arg5[%c10_156, %c0_157, %c0_158], %329 {strides = array<i32>} : memref<48x16x128xbf16, #tpu.memory_space<vmem>>, vector<1x16x21xbf16>,
    %330 = vector.extract_strided_slice %314 {offsets = [3, 0], sizes = [16, 21], strides = [1, 1]} : vector<19x21xf32> to vector<16x21xf32>
    %331 = arith.truncf %330 : vector<16x21xf32> to vector<16x21xbf16>
    %c14_159 = arith.constant 14 : index
    %c0_160 = arith.constant 0 : index
    %c0_161 = arith.constant 0 : index
    %332 = vector.load %arg5[%c14_159, %c0_160, %c0_161] : memref<48x16x128xbf16, #tpu.memory_space<vmem>>, vector<1x16x21xbf16>
    %333 = vector.shape_cast %332 : vector<1x16x21xbf16> to vector<16x21xbf16>
    %334 = vector.shape_cast %331 : vector<16x21xbf16> to vector<1x16x21xbf16>
    tpu.vector_store %arg5[%c14_159, %c0_160, %c0_161], %334 {strides = array<i32>} : memref<48x16x128xbf16, #tpu.memory_space<vmem>>, vector<1x16x21xbf16>,
    %335 = vector.extract_strided_slice %271 {offsets = [0, 3], sizes = [19, 21], strides = [1, 1]} : vector<19x24xf32> to vector<19x21xf32>
    %336 = vector.extract_strided_slice %335 {offsets = [0, 0], sizes = [16, 21], strides = [1, 1]} : vector<19x21xf32> to vector<16x21xf32>
    %337 = arith.truncf %336 : vector<16x21xf32> to vector<16x21xbf16>
    %c3_162 = arith.constant 3 : index
    %c0_163 = arith.constant 0 : index
    %c0_164 = arith.constant 0 : index
    %338 = vector.load %arg5[%c3_162, %c0_163, %c0_164] : memref<48x16x128xbf16, #tpu.memory_space<vmem>>, vector<1x16x21xbf16>
    %339 = vector.shape_cast %338 : vector<1x16x21xbf16> to vector<16x21xbf16>
    %340 = vector.shape_cast %337 : vector<16x21xbf16> to vector<1x16x21xbf16>
    tpu.vector_store %arg5[%c3_162, %c0_163, %c0_164], %340 {strides = array<i32>} : memref<48x16x128xbf16, #tpu.memory_space<vmem>>, vector<1x16x21xbf16>,
    %341 = vector.extract_strided_slice %335 {offsets = [1, 0], sizes = [16, 21], strides = [1, 1]} : vector<19x21xf32> to vector<16x21xf32>
    %342 = arith.truncf %341 : vector<16x21xf32> to vector<16x21xbf16>
    %c7_165 = arith.constant 7 : index
    %c0_166 = arith.constant 0 : index
    %c0_167 = arith.constant 0 : index
    %343 = vector.load %arg5[%c7_165, %c0_166, %c0_167] : memref<48x16x128xbf16, #tpu.memory_space<vmem>>, vector<1x16x21xbf16>
    %344 = vector.shape_cast %343 : vector<1x16x21xbf16> to vector<16x21xbf16>
    %345 = vector.shape_cast %342 : vector<16x21xbf16> to vector<1x16x21xbf16>
    tpu.vector_store %arg5[%c7_165, %c0_166, %c0_167], %345 {strides = array<i32>} : memref<48x16x128xbf16, #tpu.memory_space<vmem>>, vector<1x16x21xbf16>,
    %346 = vector.extract_strided_slice %335 {offsets = [2, 0], sizes = [16, 21], strides = [1, 1]} : vector<19x21xf32> to vector<16x21xf32>
    %347 = arith.truncf %346 : vector<16x21xf32> to vector<16x21xbf16>
    %c11_168 = arith.constant 11 : index
    %c0_169 = arith.constant 0 : index
    %c0_170 = arith.constant 0 : index
    %348 = vector.load %arg5[%c11_168, %c0_169, %c0_170] : memref<48x16x128xbf16, #tpu.memory_space<vmem>>, vector<1x16x21xbf16>
    %349 = vector.shape_cast %348 : vector<1x16x21xbf16> to vector<16x21xbf16>
    %350 = vector.shape_cast %347 : vector<16x21xbf16> to vector<1x16x21xbf16>
    tpu.vector_store %arg5[%c11_168, %c0_169, %c0_170], %350 {strides = array<i32>} : memref<48x16x128xbf16, #tpu.memory_space<vmem>>, vector<1x16x21xbf16>,
    %351 = vector.extract_strided_slice %335 {offsets = [3, 0], sizes = [16, 21], strides = [1, 1]} : vector<19x21xf32> to vector<16x21xf32>
    %352 = arith.truncf %351 : vector<16x21xf32> to vector<16x21xbf16>
    %c15_171 = arith.constant 15 : index
    %c0_172 = arith.constant 0 : index
    %c0_173 = arith.constant 0 : index
    %353 = vector.load %arg5[%c15_171, %c0_172, %c0_173] : memref<48x16x128xbf16, #tpu.memory_space<vmem>>, vector<1x16x21xbf16>
    %354 = vector.shape_cast %353 : vector<1x16x21xbf16> to vector<16x21xbf16>
    %355 = vector.shape_cast %352 : vector<16x21xbf16> to vector<1x16x21xbf16>
    tpu.vector_store %arg5[%c15_171, %c0_172, %c0_173], %355 {strides = array<i32>} : memref<48x16x128xbf16, #tpu.memory_space<vmem>>, vector<1x16x21xbf16>,
    %c0_174 = arith.constant 0 : index
    %c1_175 = arith.constant 1 : index
    %c16_176 = arith.constant 16 : index
    %c0_177 = arith.constant 0 : index
    %356 = vector.load %arg1[%c0_174, %c1_175, %c16_176, %c0_177] : memref<2x3x35x24xf32, #tpu.memory_space<vmem>>, vector<1x1x19x24xf32>
    %357 = vector.shape_cast %356 : vector<1x1x19x24xf32> to vector<19x24xf32>
    %358 = vector.extract_strided_slice %357 {offsets = [0, 0], sizes = [19, 21], strides = [1, 1]} : vector<19x24xf32> to vector<19x21xf32>
    %359 = vector.extract_strided_slice %358 {offsets = [0, 0], sizes = [16, 21], strides = [1, 1]} : vector<19x21xf32> to vector<16x21xf32>
    %360 = arith.truncf %359 : vector<16x21xf32> to vector<16x21xbf16>
    %c16_178 = arith.constant 16 : index
    %c0_179 = arith.constant 0 : index
    %c0_180 = arith.constant 0 : index
    %361 = vector.load %arg5[%c16_178, %c0_179, %c0_180] : memref<48x16x128xbf16, #tpu.memory_space<vmem>>, vector<1x16x21xbf16>
    %362 = vector.shape_cast %361 : vector<1x16x21xbf16> to vector<16x21xbf16>
    %363 = vector.shape_cast %360 : vector<16x21xbf16> to vector<1x16x21xbf16>
    tpu.vector_store %arg5[%c16_178, %c0_179, %c0_180], %363 {strides = array<i32>} : memref<48x16x128xbf16, #tpu.memory_space<vmem>>, vector<1x16x21xbf16>,
    %364 = vector.extract_strided_slice %358 {offsets = [1, 0], sizes = [16, 21], strides = [1, 1]} : vector<19x21xf32> to vector<16x21xf32>
    %365 = arith.truncf %364 : vector<16x21xf32> to vector<16x21xbf16>
    %c20_181 = arith.constant 20 : index
    %c0_182 = arith.constant 0 : index
    %c0_183 = arith.constant 0 : index
    %366 = vector.load %arg5[%c20_181, %c0_182, %c0_183] : memref<48x16x128xbf16, #tpu.memory_space<vmem>>, vector<1x16x21xbf16>
    %367 = vector.shape_cast %366 : vector<1x16x21xbf16> to vector<16x21xbf16>
    %368 = vector.shape_cast %365 : vector<16x21xbf16> to vector<1x16x21xbf16>
    tpu.vector_store %arg5[%c20_181, %c0_182, %c0_183], %368 {strides = array<i32>} : memref<48x16x128xbf16, #tpu.memory_space<vmem>>, vector<1x16x21xbf16>,
    %369 = vector.extract_strided_slice %358 {offsets = [2, 0], sizes = [16, 21], strides = [1, 1]} : vector<19x21xf32> to vector<16x21xf32>
    %370 = arith.truncf %369 : vector<16x21xf32> to vector<16x21xbf16>
    %c24_184 = arith.constant 24 : index
    %c0_185 = arith.constant 0 : index
    %c0_186 = arith.constant 0 : index
    %371 = vector.load %arg5[%c24_184, %c0_185, %c0_186] : memref<48x16x128xbf16, #tpu.memory_space<vmem>>, vector<1x16x21xbf16>
    %372 = vector.shape_cast %371 : vector<1x16x21xbf16> to vector<16x21xbf16>
    %373 = vector.shape_cast %370 : vector<16x21xbf16> to vector<1x16x21xbf16>
    tpu.vector_store %arg5[%c24_184, %c0_185, %c0_186], %373 {strides = array<i32>} : memref<48x16x128xbf16, #tpu.memory_space<vmem>>, vector<1x16x21xbf16>,
    %374 = vector.extract_strided_slice %358 {offsets = [3, 0], sizes = [16, 21], strides = [1, 1]} : vector<19x21xf32> to vector<16x21xf32>
    %375 = arith.truncf %374 : vector<16x21xf32> to vector<16x21xbf16>
    %c28_187 = arith.constant 28 : index
    %c0_188 = arith.constant 0 : index
    %c0_189 = arith.constant 0 : index
    %376 = vector.load %arg5[%c28_187, %c0_188, %c0_189] : memref<48x16x128xbf16, #tpu.memory_space<vmem>>, vector<1x16x21xbf16>
    %377 = vector.shape_cast %376 : vector<1x16x21xbf16> to vector<16x21xbf16>
    %378 = vector.shape_cast %375 : vector<16x21xbf16> to vector<1x16x21xbf16>
    tpu.vector_store %arg5[%c28_187, %c0_188, %c0_189], %378 {strides = array<i32>} : memref<48x16x128xbf16, #tpu.memory_space<vmem>>, vector<1x16x21xbf16>,
    %379 = vector.extract_strided_slice %357 {offsets = [0, 1], sizes = [19, 21], strides = [1, 1]} : vector<19x24xf32> to vector<19x21xf32>
    %380 = vector.extract_strided_slice %379 {offsets = [0, 0], sizes = [16, 21], strides = [1, 1]} : vector<19x21xf32> to vector<16x21xf32>
    %381 = arith.truncf %380 : vector<16x21xf32> to vector<16x21xbf16>
    %c17_190 = arith.constant 17 : index
    %c0_191 = arith.constant 0 : index
    %c0_192 = arith.constant 0 : index
    %382 = vector.load %arg5[%c17_190, %c0_191, %c0_192] : memref<48x16x128xbf16, #tpu.memory_space<vmem>>, vector<1x16x21xbf16>
    %383 = vector.shape_cast %382 : vector<1x16x21xbf16> to vector<16x21xbf16>
    %384 = vector.shape_cast %381 : vector<16x21xbf16> to vector<1x16x21xbf16>
    tpu.vector_store %arg5[%c17_190, %c0_191, %c0_192], %384 {strides = array<i32>} : memref<48x16x128xbf16, #tpu.memory_space<vmem>>, vector<1x16x21xbf16>,
    %385 = vector.extract_strided_slice %379 {offsets = [1, 0], sizes = [16, 21], strides = [1, 1]} : vector<19x21xf32> to vector<16x21xf32>
    %386 = arith.truncf %385 : vector<16x21xf32> to vector<16x21xbf16>
    %c21_193 = arith.constant 21 : index
    %c0_194 = arith.constant 0 : index
    %c0_195 = arith.constant 0 : index
    %387 = vector.load %arg5[%c21_193, %c0_194, %c0_195] : memref<48x16x128xbf16, #tpu.memory_space<vmem>>, vector<1x16x21xbf16>
    %388 = vector.shape_cast %387 : vector<1x16x21xbf16> to vector<16x21xbf16>
    %389 = vector.shape_cast %386 : vector<16x21xbf16> to vector<1x16x21xbf16>
    tpu.vector_store %arg5[%c21_193, %c0_194, %c0_195], %389 {strides = array<i32>} : memref<48x16x128xbf16, #tpu.memory_space<vmem>>, vector<1x16x21xbf16>,
    %390 = vector.extract_strided_slice %379 {offsets = [2, 0], sizes = [16, 21], strides = [1, 1]} : vector<19x21xf32> to vector<16x21xf32>
    %391 = arith.truncf %390 : vector<16x21xf32> to vector<16x21xbf16>
    %c25_196 = arith.constant 25 : index
    %c0_197 = arith.constant 0 : index
    %c0_198 = arith.constant 0 : index
    %392 = vector.load %arg5[%c25_196, %c0_197, %c0_198] : memref<48x16x128xbf16, #tpu.memory_space<vmem>>, vector<1x16x21xbf16>
    %393 = vector.shape_cast %392 : vector<1x16x21xbf16> to vector<16x21xbf16>
    %394 = vector.shape_cast %391 : vector<16x21xbf16> to vector<1x16x21xbf16>
    tpu.vector_store %arg5[%c25_196, %c0_197, %c0_198], %394 {strides = array<i32>} : memref<48x16x128xbf16, #tpu.memory_space<vmem>>, vector<1x16x21xbf16>,
    %395 = vector.extract_strided_slice %379 {offsets = [3, 0], sizes = [16, 21], strides = [1, 1]} : vector<19x21xf32> to vector<16x21xf32>
    %396 = arith.truncf %395 : vector<16x21xf32> to vector<16x21xbf16>
    %c29_199 = arith.constant 29 : index
    %c0_200 = arith.constant 0 : index
    %c0_201 = arith.constant 0 : index
    %397 = vector.load %arg5[%c29_199, %c0_200, %c0_201] : memref<48x16x128xbf16, #tpu.memory_space<vmem>>, vector<1x16x21xbf16>
    %398 = vector.shape_cast %397 : vector<1x16x21xbf16> to vector<16x21xbf16>
    %399 = vector.shape_cast %396 : vector<16x21xbf16> to vector<1x16x21xbf16>
    tpu.vector_store %arg5[%c29_199, %c0_200, %c0_201], %399 {strides = array<i32>} : memref<48x16x128xbf16, #tpu.memory_space<vmem>>, vector<1x16x21xbf16>,
    %400 = vector.extract_strided_slice %357 {offsets = [0, 2], sizes = [19, 21], strides = [1, 1]} : vector<19x24xf32> to vector<19x21xf32>
    %401 = vector.extract_strided_slice %400 {offsets = [0, 0], sizes = [16, 21], strides = [1, 1]} : vector<19x21xf32> to vector<16x21xf32>
    %402 = arith.truncf %401 : vector<16x21xf32> to vector<16x21xbf16>
    %c18_202 = arith.constant 18 : index
    %c0_203 = arith.constant 0 : index
    %c0_204 = arith.constant 0 : index
    %403 = vector.load %arg5[%c18_202, %c0_203, %c0_204] : memref<48x16x128xbf16, #tpu.memory_space<vmem>>, vector<1x16x21xbf16>
    %404 = vector.shape_cast %403 : vector<1x16x21xbf16> to vector<16x21xbf16>
    %405 = vector.shape_cast %402 : vector<16x21xbf16> to vector<1x16x21xbf16>
    tpu.vector_store %arg5[%c18_202, %c0_203, %c0_204], %405 {strides = array<i32>} : memref<48x16x128xbf16, #tpu.memory_space<vmem>>, vector<1x16x21xbf16>,
    %406 = vector.extract_strided_slice %400 {offsets = [1, 0], sizes = [16, 21], strides = [1, 1]} : vector<19x21xf32> to vector<16x21xf32>
    %407 = arith.truncf %406 : vector<16x21xf32> to vector<16x21xbf16>
    %c22_205 = arith.constant 22 : index
    %c0_206 = arith.constant 0 : index
    %c0_207 = arith.constant 0 : index
    %408 = vector.load %arg5[%c22_205, %c0_206, %c0_207] : memref<48x16x128xbf16, #tpu.memory_space<vmem>>, vector<1x16x21xbf16>
    %409 = vector.shape_cast %408 : vector<1x16x21xbf16> to vector<16x21xbf16>
    %410 = vector.shape_cast %407 : vector<16x21xbf16> to vector<1x16x21xbf16>
    tpu.vector_store %arg5[%c22_205, %c0_206, %c0_207], %410 {strides = array<i32>} : memref<48x16x128xbf16, #tpu.memory_space<vmem>>, vector<1x16x21xbf16>,
    %411 = vector.extract_strided_slice %400 {offsets = [2, 0], sizes = [16, 21], strides = [1, 1]} : vector<19x21xf32> to vector<16x21xf32>
    %412 = arith.truncf %411 : vector<16x21xf32> to vector<16x21xbf16>
    %c26_208 = arith.constant 26 : index
    %c0_209 = arith.constant 0 : index
    %c0_210 = arith.constant 0 : index
    %413 = vector.load %arg5[%c26_208, %c0_209, %c0_210] : memref<48x16x128xbf16, #tpu.memory_space<vmem>>, vector<1x16x21xbf16>
    %414 = vector.shape_cast %413 : vector<1x16x21xbf16> to vector<16x21xbf16>
    %415 = vector.shape_cast %412 : vector<16x21xbf16> to vector<1x16x21xbf16>
    tpu.vector_store %arg5[%c26_208, %c0_209, %c0_210], %415 {strides = array<i32>} : memref<48x16x128xbf16, #tpu.memory_space<vmem>>, vector<1x16x21xbf16>,
    %416 = vector.extract_strided_slice %400 {offsets = [3, 0], sizes = [16, 21], strides = [1, 1]} : vector<19x21xf32> to vector<16x21xf32>
    %417 = arith.truncf %416 : vector<16x21xf32> to vector<16x21xbf16>
    %c30_211 = arith.constant 30 : index
    %c0_212 = arith.constant 0 : index
    %c0_213 = arith.constant 0 : index
    %418 = vector.load %arg5[%c30_211, %c0_212, %c0_213] : memref<48x16x128xbf16, #tpu.memory_space<vmem>>, vector<1x16x21xbf16>
    %419 = vector.shape_cast %418 : vector<1x16x21xbf16> to vector<16x21xbf16>
    %420 = vector.shape_cast %417 : vector<16x21xbf16> to vector<1x16x21xbf16>
    tpu.vector_store %arg5[%c30_211, %c0_212, %c0_213], %420 {strides = array<i32>} : memref<48x16x128xbf16, #tpu.memory_space<vmem>>, vector<1x16x21xbf16>,
    %421 = vector.extract_strided_slice %357 {offsets = [0, 3], sizes = [19, 21], strides = [1, 1]} : vector<19x24xf32> to vector<19x21xf32>
    %422 = vector.extract_strided_slice %421 {offsets = [0, 0], sizes = [16, 21], strides = [1, 1]} : vector<19x21xf32> to vector<16x21xf32>
    %423 = arith.truncf %422 : vector<16x21xf32> to vector<16x21xbf16>
    %c19_214 = arith.constant 19 : index
    %c0_215 = arith.constant 0 : index
    %c0_216 = arith.constant 0 : index
    %424 = vector.load %arg5[%c19_214, %c0_215, %c0_216] : memref<48x16x128xbf16, #tpu.memory_space<vmem>>, vector<1x16x21xbf16>
    %425 = vector.shape_cast %424 : vector<1x16x21xbf16> to vector<16x21xbf16>
    %426 = vector.shape_cast %423 : vector<16x21xbf16> to vector<1x16x21xbf16>
    tpu.vector_store %arg5[%c19_214, %c0_215, %c0_216], %426 {strides = array<i32>} : memref<48x16x128xbf16, #tpu.memory_space<vmem>>, vector<1x16x21xbf16>,
    %427 = vector.extract_strided_slice %421 {offsets = [1, 0], sizes = [16, 21], strides = [1, 1]} : vector<19x21xf32> to vector<16x21xf32>
    %428 = arith.truncf %427 : vector<16x21xf32> to vector<16x21xbf16>
    %c23_217 = arith.constant 23 : index
    %c0_218 = arith.constant 0 : index
    %c0_219 = arith.constant 0 : index
    %429 = vector.load %arg5[%c23_217, %c0_218, %c0_219] : memref<48x16x128xbf16, #tpu.memory_space<vmem>>, vector<1x16x21xbf16>
    %430 = vector.shape_cast %429 : vector<1x16x21xbf16> to vector<16x21xbf16>
    %431 = vector.shape_cast %428 : vector<16x21xbf16> to vector<1x16x21xbf16>
    tpu.vector_store %arg5[%c23_217, %c0_218, %c0_219], %431 {strides = array<i32>} : memref<48x16x128xbf16, #tpu.memory_space<vmem>>, vector<1x16x21xbf16>,
    %432 = vector.extract_strided_slice %421 {offsets = [2, 0], sizes = [16, 21], strides = [1, 1]} : vector<19x21xf32> to vector<16x21xf32>
    %433 = arith.truncf %432 : vector<16x21xf32> to vector<16x21xbf16>
    %c27_220 = arith.constant 27 : index
    %c0_221 = arith.constant 0 : index
    %c0_222 = arith.constant 0 : index
    %434 = vector.load %arg5[%c27_220, %c0_221, %c0_222] : memref<48x16x128xbf16, #tpu.memory_space<vmem>>, vector<1x16x21xbf16>
    %435 = vector.shape_cast %434 : vector<1x16x21xbf16> to vector<16x21xbf16>
    %436 = vector.shape_cast %433 : vector<16x21xbf16> to vector<1x16x21xbf16>
    tpu.vector_store %arg5[%c27_220, %c0_221, %c0_222], %436 {strides = array<i32>} : memref<48x16x128xbf16, #tpu.memory_space<vmem>>, vector<1x16x21xbf16>,
    %437 = vector.extract_strided_slice %421 {offsets = [3, 0], sizes = [16, 21], strides = [1, 1]} : vector<19x21xf32> to vector<16x21xf32>
    %438 = arith.truncf %437 : vector<16x21xf32> to vector<16x21xbf16>
    %c31_223 = arith.constant 31 : index
    %c0_224 = arith.constant 0 : index
    %c0_225 = arith.constant 0 : index
    %439 = vector.load %arg5[%c31_223, %c0_224, %c0_225] : memref<48x16x128xbf16, #tpu.memory_space<vmem>>, vector<1x16x21xbf16>
    %440 = vector.shape_cast %439 : vector<1x16x21xbf16> to vector<16x21xbf16>
    %441 = vector.shape_cast %438 : vector<16x21xbf16> to vector<1x16x21xbf16>
    tpu.vector_store %arg5[%c31_223, %c0_224, %c0_225], %441 {strides = array<i32>} : memref<48x16x128xbf16, #tpu.memory_space<vmem>>, vector<1x16x21xbf16>,
    %c0_226 = arith.constant 0 : index
    %c2_227 = arith.constant 2 : index
    %c16_228 = arith.constant 16 : index
    %c0_229 = arith.constant 0 : index
    %442 = vector.load %arg1[%c0_226, %c2_227, %c16_228, %c0_229] : memref<2x3x35x24xf32, #tpu.memory_space<vmem>>, vector<1x1x19x24xf32>
    %443 = vector.shape_cast %442 : vector<1x1x19x24xf32> to vector<19x24xf32>
    %444 = vector.extract_strided_slice %443 {offsets = [0, 0], sizes = [19, 21], strides = [1, 1]} : vector<19x24xf32> to vector<19x21xf32>
    %445 = vector.extract_strided_slice %444 {offsets = [0, 0], sizes = [16, 21], strides = [1, 1]} : vector<19x21xf32> to vector<16x21xf32>
    %446 = arith.truncf %445 : vector<16x21xf32> to vector<16x21xbf16>
    %c32_230 = arith.constant 32 : index
    %c0_231 = arith.constant 0 : index
    %c0_232 = arith.constant 0 : index
    %447 = vector.load %arg5[%c32_230, %c0_231, %c0_232] : memref<48x16x128xbf16, #tpu.memory_space<vmem>>, vector<1x16x21xbf16>
    %448 = vector.shape_cast %447 : vector<1x16x21xbf16> to vector<16x21xbf16>
    %449 = vector.shape_cast %446 : vector<16x21xbf16> to vector<1x16x21xbf16>
    tpu.vector_store %arg5[%c32_230, %c0_231, %c0_232], %449 {strides = array<i32>} : memref<48x16x128xbf16, #tpu.memory_space<vmem>>, vector<1x16x21xbf16>,
    %450 = vector.extract_strided_slice %444 {offsets = [1, 0], sizes = [16, 21], strides = [1, 1]} : vector<19x21xf32> to vector<16x21xf32>
    %451 = arith.truncf %450 : vector<16x21xf32> to vector<16x21xbf16>
    %c36_233 = arith.constant 36 : index
    %c0_234 = arith.constant 0 : index
    %c0_235 = arith.constant 0 : index
    %452 = vector.load %arg5[%c36_233, %c0_234, %c0_235] : memref<48x16x128xbf16, #tpu.memory_space<vmem>>, vector<1x16x21xbf16>
    %453 = vector.shape_cast %452 : vector<1x16x21xbf16> to vector<16x21xbf16>
    %454 = vector.shape_cast %451 : vector<16x21xbf16> to vector<1x16x21xbf16>
    tpu.vector_store %arg5[%c36_233, %c0_234, %c0_235], %454 {strides = array<i32>} : memref<48x16x128xbf16, #tpu.memory_space<vmem>>, vector<1x16x21xbf16>,
    %455 = vector.extract_strided_slice %444 {offsets = [2, 0], sizes = [16, 21], strides = [1, 1]} : vector<19x21xf32> to vector<16x21xf32>
    %456 = arith.truncf %455 : vector<16x21xf32> to vector<16x21xbf16>
    %c40_236 = arith.constant 40 : index
    %c0_237 = arith.constant 0 : index
    %c0_238 = arith.constant 0 : index
    %457 = vector.load %arg5[%c40_236, %c0_237, %c0_238] : memref<48x16x128xbf16, #tpu.memory_space<vmem>>, vector<1x16x21xbf16>
    %458 = vector.shape_cast %457 : vector<1x16x21xbf16> to vector<16x21xbf16>
    %459 = vector.shape_cast %456 : vector<16x21xbf16> to vector<1x16x21xbf16>
    tpu.vector_store %arg5[%c40_236, %c0_237, %c0_238], %459 {strides = array<i32>} : memref<48x16x128xbf16, #tpu.memory_space<vmem>>, vector<1x16x21xbf16>,
    %460 = vector.extract_strided_slice %444 {offsets = [3, 0], sizes = [16, 21], strides = [1, 1]} : vector<19x21xf32> to vector<16x21xf32>
    %461 = arith.truncf %460 : vector<16x21xf32> to vector<16x21xbf16>
    %c44_239 = arith.constant 44 : index
    %c0_240 = arith.constant 0 : index
    %c0_241 = arith.constant 0 : index
    %462 = vector.load %arg5[%c44_239, %c0_240, %c0_241] : memref<48x16x128xbf16, #tpu.memory_space<vmem>>, vector<1x16x21xbf16>
    %463 = vector.shape_cast %462 : vector<1x16x21xbf16> to vector<16x21xbf16>
    %464 = vector.shape_cast %461 : vector<16x21xbf16> to vector<1x16x21xbf16>
    tpu.vector_store %arg5[%c44_239, %c0_240, %c0_241], %464 {strides = array<i32>} : memref<48x16x128xbf16, #tpu.memory_space<vmem>>, vector<1x16x21xbf16>,
    %465 = vector.extract_strided_slice %443 {offsets = [0, 1], sizes = [19, 21], strides = [1, 1]} : vector<19x24xf32> to vector<19x21xf32>
    %466 = vector.extract_strided_slice %465 {offsets = [0, 0], sizes = [16, 21], strides = [1, 1]} : vector<19x21xf32> to vector<16x21xf32>
    %467 = arith.truncf %466 : vector<16x21xf32> to vector<16x21xbf16>
    %c33_242 = arith.constant 33 : index
    %c0_243 = arith.constant 0 : index
    %c0_244 = arith.constant 0 : index
    %468 = vector.load %arg5[%c33_242, %c0_243, %c0_244] : memref<48x16x128xbf16, #tpu.memory_space<vmem>>, vector<1x16x21xbf16>
    %469 = vector.shape_cast %468 : vector<1x16x21xbf16> to vector<16x21xbf16>
    %470 = vector.shape_cast %467 : vector<16x21xbf16> to vector<1x16x21xbf16>
    tpu.vector_store %arg5[%c33_242, %c0_243, %c0_244], %470 {strides = array<i32>} : memref<48x16x128xbf16, #tpu.memory_space<vmem>>, vector<1x16x21xbf16>,
    %471 = vector.extract_strided_slice %465 {offsets = [1, 0], sizes = [16, 21], strides = [1, 1]} : vector<19x21xf32> to vector<16x21xf32>
    %472 = arith.truncf %471 : vector<16x21xf32> to vector<16x21xbf16>
    %c37_245 = arith.constant 37 : index
    %c0_246 = arith.constant 0 : index
    %c0_247 = arith.constant 0 : index
    %473 = vector.load %arg5[%c37_245, %c0_246, %c0_247] : memref<48x16x128xbf16, #tpu.memory_space<vmem>>, vector<1x16x21xbf16>
    %474 = vector.shape_cast %473 : vector<1x16x21xbf16> to vector<16x21xbf16>
    %475 = vector.shape_cast %472 : vector<16x21xbf16> to vector<1x16x21xbf16>
    tpu.vector_store %arg5[%c37_245, %c0_246, %c0_247], %475 {strides = array<i32>} : memref<48x16x128xbf16, #tpu.memory_space<vmem>>, vector<1x16x21xbf16>,
    %476 = vector.extract_strided_slice %465 {offsets = [2, 0], sizes = [16, 21], strides = [1, 1]} : vector<19x21xf32> to vector<16x21xf32>
    %477 = arith.truncf %476 : vector<16x21xf32> to vector<16x21xbf16>
    %c41_248 = arith.constant 41 : index
    %c0_249 = arith.constant 0 : index
    %c0_250 = arith.constant 0 : index
    %478 = vector.load %arg5[%c41_248, %c0_249, %c0_250] : memref<48x16x128xbf16, #tpu.memory_space<vmem>>, vector<1x16x21xbf16>
    %479 = vector.shape_cast %478 : vector<1x16x21xbf16> to vector<16x21xbf16>
    %480 = vector.shape_cast %477 : vector<16x21xbf16> to vector<1x16x21xbf16>
    tpu.vector_store %arg5[%c41_248, %c0_249, %c0_250], %480 {strides = array<i32>} : memref<48x16x128xbf16, #tpu.memory_space<vmem>>, vector<1x16x21xbf16>,
    %481 = vector.extract_strided_slice %465 {offsets = [3, 0], sizes = [16, 21], strides = [1, 1]} : vector<19x21xf32> to vector<16x21xf32>
    %482 = arith.truncf %481 : vector<16x21xf32> to vector<16x21xbf16>
    %c45_251 = arith.constant 45 : index
    %c0_252 = arith.constant 0 : index
    %c0_253 = arith.constant 0 : index
    %483 = vector.load %arg5[%c45_251, %c0_252, %c0_253] : memref<48x16x128xbf16, #tpu.memory_space<vmem>>, vector<1x16x21xbf16>
    %484 = vector.shape_cast %483 : vector<1x16x21xbf16> to vector<16x21xbf16>
    %485 = vector.shape_cast %482 : vector<16x21xbf16> to vector<1x16x21xbf16>
    tpu.vector_store %arg5[%c45_251, %c0_252, %c0_253], %485 {strides = array<i32>} : memref<48x16x128xbf16, #tpu.memory_space<vmem>>, vector<1x16x21xbf16>,
    %486 = vector.extract_strided_slice %443 {offsets = [0, 2], sizes = [19, 21], strides = [1, 1]} : vector<19x24xf32> to vector<19x21xf32>
    %487 = vector.extract_strided_slice %486 {offsets = [0, 0], sizes = [16, 21], strides = [1, 1]} : vector<19x21xf32> to vector<16x21xf32>
    %488 = arith.truncf %487 : vector<16x21xf32> to vector<16x21xbf16>
    %c34_254 = arith.constant 34 : index
    %c0_255 = arith.constant 0 : index
    %c0_256 = arith.constant 0 : index
    %489 = vector.load %arg5[%c34_254, %c0_255, %c0_256] : memref<48x16x128xbf16, #tpu.memory_space<vmem>>, vector<1x16x21xbf16>
    %490 = vector.shape_cast %489 : vector<1x16x21xbf16> to vector<16x21xbf16>
    %491 = vector.shape_cast %488 : vector<16x21xbf16> to vector<1x16x21xbf16>
    tpu.vector_store %arg5[%c34_254, %c0_255, %c0_256], %491 {strides = array<i32>} : memref<48x16x128xbf16, #tpu.memory_space<vmem>>, vector<1x16x21xbf16>,
    %492 = vector.extract_strided_slice %486 {offsets = [1, 0], sizes = [16, 21], strides = [1, 1]} : vector<19x21xf32> to vector<16x21xf32>
    %493 = arith.truncf %492 : vector<16x21xf32> to vector<16x21xbf16>
    %c38_257 = arith.constant 38 : index
    %c0_258 = arith.constant 0 : index
    %c0_259 = arith.constant 0 : index
    %494 = vector.load %arg5[%c38_257, %c0_258, %c0_259] : memref<48x16x128xbf16, #tpu.memory_space<vmem>>, vector<1x16x21xbf16>
    %495 = vector.shape_cast %494 : vector<1x16x21xbf16> to vector<16x21xbf16>
    %496 = vector.shape_cast %493 : vector<16x21xbf16> to vector<1x16x21xbf16>
    tpu.vector_store %arg5[%c38_257, %c0_258, %c0_259], %496 {strides = array<i32>} : memref<48x16x128xbf16, #tpu.memory_space<vmem>>, vector<1x16x21xbf16>,
    %497 = vector.extract_strided_slice %486 {offsets = [2, 0], sizes = [16, 21], strides = [1, 1]} : vector<19x21xf32> to vector<16x21xf32>
    %498 = arith.truncf %497 : vector<16x21xf32> to vector<16x21xbf16>
    %c42_260 = arith.constant 42 : index
    %c0_261 = arith.constant 0 : index
    %c0_262 = arith.constant 0 : index
    %499 = vector.load %arg5[%c42_260, %c0_261, %c0_262] : memref<48x16x128xbf16, #tpu.memory_space<vmem>>, vector<1x16x21xbf16>
    %500 = vector.shape_cast %499 : vector<1x16x21xbf16> to vector<16x21xbf16>
    %501 = vector.shape_cast %498 : vector<16x21xbf16> to vector<1x16x21xbf16>
    tpu.vector_store %arg5[%c42_260, %c0_261, %c0_262], %501 {strides = array<i32>} : memref<48x16x128xbf16, #tpu.memory_space<vmem>>, vector<1x16x21xbf16>,
    %502 = vector.extract_strided_slice %486 {offsets = [3, 0], sizes = [16, 21], strides = [1, 1]} : vector<19x21xf32> to vector<16x21xf32>
    %503 = arith.truncf %502 : vector<16x21xf32> to vector<16x21xbf16>
    %c46_263 = arith.constant 46 : index
    %c0_264 = arith.constant 0 : index
    %c0_265 = arith.constant 0 : index
    %504 = vector.load %arg5[%c46_263, %c0_264, %c0_265] : memref<48x16x128xbf16, #tpu.memory_space<vmem>>, vector<1x16x21xbf16>
    %505 = vector.shape_cast %504 : vector<1x16x21xbf16> to vector<16x21xbf16>
    %506 = vector.shape_cast %503 : vector<16x21xbf16> to vector<1x16x21xbf16>
    tpu.vector_store %arg5[%c46_263, %c0_264, %c0_265], %506 {strides = array<i32>} : memref<48x16x128xbf16, #tpu.memory_space<vmem>>, vector<1x16x21xbf16>,
    %507 = vector.extract_strided_slice %443 {offsets = [0, 3], sizes = [19, 21], strides = [1, 1]} : vector<19x24xf32> to vector<19x21xf32>
    %508 = vector.extract_strided_slice %507 {offsets = [0, 0], sizes = [16, 21], strides = [1, 1]} : vector<19x21xf32> to vector<16x21xf32>
    %509 = arith.truncf %508 : vector<16x21xf32> to vector<16x21xbf16>
    %c35_266 = arith.constant 35 : index
    %c0_267 = arith.constant 0 : index
    %c0_268 = arith.constant 0 : index
    %510 = vector.load %arg5[%c35_266, %c0_267, %c0_268] : memref<48x16x128xbf16, #tpu.memory_space<vmem>>, vector<1x16x21xbf16>
    %511 = vector.shape_cast %510 : vector<1x16x21xbf16> to vector<16x21xbf16>
    %512 = vector.shape_cast %509 : vector<16x21xbf16> to vector<1x16x21xbf16>
    tpu.vector_store %arg5[%c35_266, %c0_267, %c0_268], %512 {strides = array<i32>} : memref<48x16x128xbf16, #tpu.memory_space<vmem>>, vector<1x16x21xbf16>,
    %513 = vector.extract_strided_slice %507 {offsets = [1, 0], sizes = [16, 21], strides = [1, 1]} : vector<19x21xf32> to vector<16x21xf32>
    %514 = arith.truncf %513 : vector<16x21xf32> to vector<16x21xbf16>
    %c39_269 = arith.constant 39 : index
    %c0_270 = arith.constant 0 : index
    %c0_271 = arith.constant 0 : index
    %515 = vector.load %arg5[%c39_269, %c0_270, %c0_271] : memref<48x16x128xbf16, #tpu.memory_space<vmem>>, vector<1x16x21xbf16>
    %516 = vector.shape_cast %515 : vector<1x16x21xbf16> to vector<16x21xbf16>
    %517 = vector.shape_cast %514 : vector<16x21xbf16> to vector<1x16x21xbf16>
    tpu.vector_store %arg5[%c39_269, %c0_270, %c0_271], %517 {strides = array<i32>} : memref<48x16x128xbf16, #tpu.memory_space<vmem>>, vector<1x16x21xbf16>,
    %518 = vector.extract_strided_slice %507 {offsets = [2, 0], sizes = [16, 21], strides = [1, 1]} : vector<19x21xf32> to vector<16x21xf32>
    %519 = arith.truncf %518 : vector<16x21xf32> to vector<16x21xbf16>
    %c43_272 = arith.constant 43 : index
    %c0_273 = arith.constant 0 : index
    %c0_274 = arith.constant 0 : index
    %520 = vector.load %arg5[%c43_272, %c0_273, %c0_274] : memref<48x16x128xbf16, #tpu.memory_space<vmem>>, vector<1x16x21xbf16>
    %521 = vector.shape_cast %520 : vector<1x16x21xbf16> to vector<16x21xbf16>
    %522 = vector.shape_cast %519 : vector<16x21xbf16> to vector<1x16x21xbf16>
    tpu.vector_store %arg5[%c43_272, %c0_273, %c0_274], %522 {strides = array<i32>} : memref<48x16x128xbf16, #tpu.memory_space<vmem>>, vector<1x16x21xbf16>,
    %523 = vector.extract_strided_slice %507 {offsets = [3, 0], sizes = [16, 21], strides = [1, 1]} : vector<19x21xf32> to vector<16x21xf32>
    %524 = arith.truncf %523 : vector<16x21xf32> to vector<16x21xbf16>
    %c47_275 = arith.constant 47 : index
    %c0_276 = arith.constant 0 : index
    %c0_277 = arith.constant 0 : index
    %525 = vector.load %arg5[%c47_275, %c0_276, %c0_277] : memref<48x16x128xbf16, #tpu.memory_space<vmem>>, vector<1x16x21xbf16>
    %526 = vector.shape_cast %525 : vector<1x16x21xbf16> to vector<16x21xbf16>
    %527 = vector.shape_cast %524 : vector<16x21xbf16> to vector<1x16x21xbf16>
    tpu.vector_store %arg5[%c47_275, %c0_276, %c0_277], %527 {strides = array<i32>} : memref<48x16x128xbf16, #tpu.memory_space<vmem>>, vector<1x16x21xbf16>,
    %c0_278 = arith.constant 0 : index
    %c0_279 = arith.constant 0 : index
    %c0_280 = arith.constant 0 : index
    %528 = vector.load %arg5[%c0_278, %c0_279, %c0_280] : memref<48x16x128xbf16, #tpu.memory_space<vmem>>, vector<48x16x128xbf16>
    %529 = vector.shape_cast %528 : vector<48x16x128xbf16> to vector<48x2048xbf16>
    %c0_281 = arith.constant 0 : index
    %c0_282 = arith.constant 0 : index
    %530 = vector.load %arg2[%c0_281, %c0_282] : memref<8x48xbf16, #tpu.memory_space<vmem>>, vector<8x48xbf16>
    %cst_283 = arith.constant dense<0.000000e+00> : vector<8x2048xf32>
    %531 = tpu.matmul %530, %529, %cst_283 {dimension_numbers = #tpu.dot_dimension_numbers<[1], [0], [0], [1], [0, 0, 1, 1], [], []>} : vector<8x48xbf16>, vector<48x2048xbf16>, vector<8x2048xf32> -> vector<8x2048xf32>
    %c0_284 = arith.constant 0 : index
    %c0_285 = arith.constant 0 : index
    %532 = vector.load %arg3[%c0_284, %c0_285] : memref<8x1xf32, #tpu.memory_space<vmem>>, vector<8x1xf32>
    %533 = vector.broadcast %532 : vector<8x1xf32> to vector<8x2048xf32>
    %534 = arith.addf %531, %533 : vector<8x2048xf32>
    %c0_286 = arith.constant 0 : index
    %c0_287 = arith.constant 0 : index
    %c2048 = arith.constant 2048 : index
    %535 = vector.load %arg4[%c0_286, %c0_287, %c2048] : memref<2x8x4096xf32, #tpu.memory_space<vmem>>, vector<1x8x2048xf32>
    %536 = vector.shape_cast %535 : vector<1x8x2048xf32> to vector<8x2048xf32>
    %537 = vector.shape_cast %534 : vector<8x2048xf32> to vector<1x8x2048xf32>
    tpu.vector_store %arg4[%c0_286, %c0_287, %c2048], %537 {strides = array<i32>} : memref<2x8x4096xf32, #tpu.memory_space<vmem>>, vector<1x8x2048xf32>,
    %c1_288 = arith.constant 1 : index
    %c0_289 = arith.constant 0 : index
    %c0_290 = arith.constant 0 : index
    %c0_291 = arith.constant 0 : index
    %538 = vector.load %arg1[%c1_288, %c0_289, %c0_290, %c0_291] : memref<2x3x35x24xf32, #tpu.memory_space<vmem>>, vector<1x1x19x24xf32>
    %539 = vector.shape_cast %538 : vector<1x1x19x24xf32> to vector<19x24xf32>
    %540 = vector.extract_strided_slice %539 {offsets = [0, 0], sizes = [19, 21], strides = [1, 1]} : vector<19x24xf32> to vector<19x21xf32>
    %541 = vector.extract_strided_slice %540 {offsets = [0, 0], sizes = [16, 21], strides = [1, 1]} : vector<19x21xf32> to vector<16x21xf32>
    %542 = arith.truncf %541 : vector<16x21xf32> to vector<16x21xbf16>
    %c0_292 = arith.constant 0 : index
    %c0_293 = arith.constant 0 : index
    %c0_294 = arith.constant 0 : index
    %543 = vector.load %arg5[%c0_292, %c0_293, %c0_294] : memref<48x16x128xbf16, #tpu.memory_space<vmem>>, vector<1x16x21xbf16>
    %544 = vector.shape_cast %543 : vector<1x16x21xbf16> to vector<16x21xbf16>
    %545 = vector.shape_cast %542 : vector<16x21xbf16> to vector<1x16x21xbf16>
    tpu.vector_store %arg5[%c0_292, %c0_293, %c0_294], %545 {strides = array<i32>} : memref<48x16x128xbf16, #tpu.memory_space<vmem>>, vector<1x16x21xbf16>,
    %546 = vector.extract_strided_slice %540 {offsets = [1, 0], sizes = [16, 21], strides = [1, 1]} : vector<19x21xf32> to vector<16x21xf32>
    %547 = arith.truncf %546 : vector<16x21xf32> to vector<16x21xbf16>
    %c4_295 = arith.constant 4 : index
    %c0_296 = arith.constant 0 : index
    %c0_297 = arith.constant 0 : index
    %548 = vector.load %arg5[%c4_295, %c0_296, %c0_297] : memref<48x16x128xbf16, #tpu.memory_space<vmem>>, vector<1x16x21xbf16>
    %549 = vector.shape_cast %548 : vector<1x16x21xbf16> to vector<16x21xbf16>
    %550 = vector.shape_cast %547 : vector<16x21xbf16> to vector<1x16x21xbf16>
    tpu.vector_store %arg5[%c4_295, %c0_296, %c0_297], %550 {strides = array<i32>} : memref<48x16x128xbf16, #tpu.memory_space<vmem>>, vector<1x16x21xbf16>,
    %551 = vector.extract_strided_slice %540 {offsets = [2, 0], sizes = [16, 21], strides = [1, 1]} : vector<19x21xf32> to vector<16x21xf32>
    %552 = arith.truncf %551 : vector<16x21xf32> to vector<16x21xbf16>
    %c8_298 = arith.constant 8 : index
    %c0_299 = arith.constant 0 : index
    %c0_300 = arith.constant 0 : index
    %553 = vector.load %arg5[%c8_298, %c0_299, %c0_300] : memref<48x16x128xbf16, #tpu.memory_space<vmem>>, vector<1x16x21xbf16>
    %554 = vector.shape_cast %553 : vector<1x16x21xbf16> to vector<16x21xbf16>
    %555 = vector.shape_cast %552 : vector<16x21xbf16> to vector<1x16x21xbf16>
    tpu.vector_store %arg5[%c8_298, %c0_299, %c0_300], %555 {strides = array<i32>} : memref<48x16x128xbf16, #tpu.memory_space<vmem>>, vector<1x16x21xbf16>,
    %556 = vector.extract_strided_slice %540 {offsets = [3, 0], sizes = [16, 21], strides = [1, 1]} : vector<19x21xf32> to vector<16x21xf32>
    %557 = arith.truncf %556 : vector<16x21xf32> to vector<16x21xbf16>
    %c12_301 = arith.constant 12 : index
    %c0_302 = arith.constant 0 : index
    %c0_303 = arith.constant 0 : index
    %558 = vector.load %arg5[%c12_301, %c0_302, %c0_303] : memref<48x16x128xbf16, #tpu.memory_space<vmem>>, vector<1x16x21xbf16>
    %559 = vector.shape_cast %558 : vector<1x16x21xbf16> to vector<16x21xbf16>
    %560 = vector.shape_cast %557 : vector<16x21xbf16> to vector<1x16x21xbf16>
    tpu.vector_store %arg5[%c12_301, %c0_302, %c0_303], %560 {strides = array<i32>} : memref<48x16x128xbf16, #tpu.memory_space<vmem>>, vector<1x16x21xbf16>,
    %561 = vector.extract_strided_slice %539 {offsets = [0, 1], sizes = [19, 21], strides = [1, 1]} : vector<19x24xf32> to vector<19x21xf32>
    %562 = vector.extract_strided_slice %561 {offsets = [0, 0], sizes = [16, 21], strides = [1, 1]} : vector<19x21xf32> to vector<16x21xf32>
    %563 = arith.truncf %562 : vector<16x21xf32> to vector<16x21xbf16>
    %c1_304 = arith.constant 1 : index
    %c0_305 = arith.constant 0 : index
    %c0_306 = arith.constant 0 : index
    %564 = vector.load %arg5[%c1_304, %c0_305, %c0_306] : memref<48x16x128xbf16, #tpu.memory_space<vmem>>, vector<1x16x21xbf16>
    %565 = vector.shape_cast %564 : vector<1x16x21xbf16> to vector<16x21xbf16>
    %566 = vector.shape_cast %563 : vector<16x21xbf16> to vector<1x16x21xbf16>
    tpu.vector_store %arg5[%c1_304, %c0_305, %c0_306], %566 {strides = array<i32>} : memref<48x16x128xbf16, #tpu.memory_space<vmem>>, vector<1x16x21xbf16>,
    %567 = vector.extract_strided_slice %561 {offsets = [1, 0], sizes = [16, 21], strides = [1, 1]} : vector<19x21xf32> to vector<16x21xf32>
    %568 = arith.truncf %567 : vector<16x21xf32> to vector<16x21xbf16>
    %c5_307 = arith.constant 5 : index
    %c0_308 = arith.constant 0 : index
    %c0_309 = arith.constant 0 : index
    %569 = vector.load %arg5[%c5_307, %c0_308, %c0_309] : memref<48x16x128xbf16, #tpu.memory_space<vmem>>, vector<1x16x21xbf16>
    %570 = vector.shape_cast %569 : vector<1x16x21xbf16> to vector<16x21xbf16>
    %571 = vector.shape_cast %568 : vector<16x21xbf16> to vector<1x16x21xbf16>
    tpu.vector_store %arg5[%c5_307, %c0_308, %c0_309], %571 {strides = array<i32>} : memref<48x16x128xbf16, #tpu.memory_space<vmem>>, vector<1x16x21xbf16>,
    %572 = vector.extract_strided_slice %561 {offsets = [2, 0], sizes = [16, 21], strides = [1, 1]} : vector<19x21xf32> to vector<16x21xf32>
    %573 = arith.truncf %572 : vector<16x21xf32> to vector<16x21xbf16>
    %c9_310 = arith.constant 9 : index
    %c0_311 = arith.constant 0 : index
    %c0_312 = arith.constant 0 : index
    %574 = vector.load %arg5[%c9_310, %c0_311, %c0_312] : memref<48x16x128xbf16, #tpu.memory_space<vmem>>, vector<1x16x21xbf16>
    %575 = vector.shape_cast %574 : vector<1x16x21xbf16> to vector<16x21xbf16>
    %576 = vector.shape_cast %573 : vector<16x21xbf16> to vector<1x16x21xbf16>
    tpu.vector_store %arg5[%c9_310, %c0_311, %c0_312], %576 {strides = array<i32>} : memref<48x16x128xbf16, #tpu.memory_space<vmem>>, vector<1x16x21xbf16>,
    %577 = vector.extract_strided_slice %561 {offsets = [3, 0], sizes = [16, 21], strides = [1, 1]} : vector<19x21xf32> to vector<16x21xf32>
    %578 = arith.truncf %577 : vector<16x21xf32> to vector<16x21xbf16>
    %c13_313 = arith.constant 13 : index
    %c0_314 = arith.constant 0 : index
    %c0_315 = arith.constant 0 : index
    %579 = vector.load %arg5[%c13_313, %c0_314, %c0_315] : memref<48x16x128xbf16, #tpu.memory_space<vmem>>, vector<1x16x21xbf16>
    %580 = vector.shape_cast %579 : vector<1x16x21xbf16> to vector<16x21xbf16>
    %581 = vector.shape_cast %578 : vector<16x21xbf16> to vector<1x16x21xbf16>
    tpu.vector_store %arg5[%c13_313, %c0_314, %c0_315], %581 {strides = array<i32>} : memref<48x16x128xbf16, #tpu.memory_space<vmem>>, vector<1x16x21xbf16>,
    %582 = vector.extract_strided_slice %539 {offsets = [0, 2], sizes = [19, 21], strides = [1, 1]} : vector<19x24xf32> to vector<19x21xf32>
    %583 = vector.extract_strided_slice %582 {offsets = [0, 0], sizes = [16, 21], strides = [1, 1]} : vector<19x21xf32> to vector<16x21xf32>
    %584 = arith.truncf %583 : vector<16x21xf32> to vector<16x21xbf16>
    %c2_316 = arith.constant 2 : index
    %c0_317 = arith.constant 0 : index
    %c0_318 = arith.constant 0 : index
    %585 = vector.load %arg5[%c2_316, %c0_317, %c0_318] : memref<48x16x128xbf16, #tpu.memory_space<vmem>>, vector<1x16x21xbf16>
    %586 = vector.shape_cast %585 : vector<1x16x21xbf16> to vector<16x21xbf16>
    %587 = vector.shape_cast %584 : vector<16x21xbf16> to vector<1x16x21xbf16>
    tpu.vector_store %arg5[%c2_316, %c0_317, %c0_318], %587 {strides = array<i32>} : memref<48x16x128xbf16, #tpu.memory_space<vmem>>, vector<1x16x21xbf16>,
    %588 = vector.extract_strided_slice %582 {offsets = [1, 0], sizes = [16, 21], strides = [1, 1]} : vector<19x21xf32> to vector<16x21xf32>
    %589 = arith.truncf %588 : vector<16x21xf32> to vector<16x21xbf16>
    %c6_319 = arith.constant 6 : index
    %c0_320 = arith.constant 0 : index
    %c0_321 = arith.constant 0 : index
    %590 = vector.load %arg5[%c6_319, %c0_320, %c0_321] : memref<48x16x128xbf16, #tpu.memory_space<vmem>>, vector<1x16x21xbf16>
    %591 = vector.shape_cast %590 : vector<1x16x21xbf16> to vector<16x21xbf16>
    %592 = vector.shape_cast %589 : vector<16x21xbf16> to vector<1x16x21xbf16>
    tpu.vector_store %arg5[%c6_319, %c0_320, %c0_321], %592 {strides = array<i32>} : memref<48x16x128xbf16, #tpu.memory_space<vmem>>, vector<1x16x21xbf16>,
    %593 = vector.extract_strided_slice %582 {offsets = [2, 0], sizes = [16, 21], strides = [1, 1]} : vector<19x21xf32> to vector<16x21xf32>
    %594 = arith.truncf %593 : vector<16x21xf32> to vector<16x21xbf16>
    %c10_322 = arith.constant 10 : index
    %c0_323 = arith.constant 0 : index
    %c0_324 = arith.constant 0 : index
    %595 = vector.load %arg5[%c10_322, %c0_323, %c0_324] : memref<48x16x128xbf16, #tpu.memory_space<vmem>>, vector<1x16x21xbf16>
    %596 = vector.shape_cast %595 : vector<1x16x21xbf16> to vector<16x21xbf16>
    %597 = vector.shape_cast %594 : vector<16x21xbf16> to vector<1x16x21xbf16>
    tpu.vector_store %arg5[%c10_322, %c0_323, %c0_324], %597 {strides = array<i32>} : memref<48x16x128xbf16, #tpu.memory_space<vmem>>, vector<1x16x21xbf16>,
    %598 = vector.extract_strided_slice %582 {offsets = [3, 0], sizes = [16, 21], strides = [1, 1]} : vector<19x21xf32> to vector<16x21xf32>
    %599 = arith.truncf %598 : vector<16x21xf32> to vector<16x21xbf16>
    %c14_325 = arith.constant 14 : index
    %c0_326 = arith.constant 0 : index
    %c0_327 = arith.constant 0 : index
    %600 = vector.load %arg5[%c14_325, %c0_326, %c0_327] : memref<48x16x128xbf16, #tpu.memory_space<vmem>>, vector<1x16x21xbf16>
    %601 = vector.shape_cast %600 : vector<1x16x21xbf16> to vector<16x21xbf16>
    %602 = vector.shape_cast %599 : vector<16x21xbf16> to vector<1x16x21xbf16>
    tpu.vector_store %arg5[%c14_325, %c0_326, %c0_327], %602 {strides = array<i32>} : memref<48x16x128xbf16, #tpu.memory_space<vmem>>, vector<1x16x21xbf16>,
    %603 = vector.extract_strided_slice %539 {offsets = [0, 3], sizes = [19, 21], strides = [1, 1]} : vector<19x24xf32> to vector<19x21xf32>
    %604 = vector.extract_strided_slice %603 {offsets = [0, 0], sizes = [16, 21], strides = [1, 1]} : vector<19x21xf32> to vector<16x21xf32>
    %605 = arith.truncf %604 : vector<16x21xf32> to vector<16x21xbf16>
    %c3_328 = arith.constant 3 : index
    %c0_329 = arith.constant 0 : index
    %c0_330 = arith.constant 0 : index
    %606 = vector.load %arg5[%c3_328, %c0_329, %c0_330] : memref<48x16x128xbf16, #tpu.memory_space<vmem>>, vector<1x16x21xbf16>
    %607 = vector.shape_cast %606 : vector<1x16x21xbf16> to vector<16x21xbf16>
    %608 = vector.shape_cast %605 : vector<16x21xbf16> to vector<1x16x21xbf16>
    tpu.vector_store %arg5[%c3_328, %c0_329, %c0_330], %608 {strides = array<i32>} : memref<48x16x128xbf16, #tpu.memory_space<vmem>>, vector<1x16x21xbf16>,
    %609 = vector.extract_strided_slice %603 {offsets = [1, 0], sizes = [16, 21], strides = [1, 1]} : vector<19x21xf32> to vector<16x21xf32>
    %610 = arith.truncf %609 : vector<16x21xf32> to vector<16x21xbf16>
    %c7_331 = arith.constant 7 : index
    %c0_332 = arith.constant 0 : index
    %c0_333 = arith.constant 0 : index
    %611 = vector.load %arg5[%c7_331, %c0_332, %c0_333] : memref<48x16x128xbf16, #tpu.memory_space<vmem>>, vector<1x16x21xbf16>
    %612 = vector.shape_cast %611 : vector<1x16x21xbf16> to vector<16x21xbf16>
    %613 = vector.shape_cast %610 : vector<16x21xbf16> to vector<1x16x21xbf16>
    tpu.vector_store %arg5[%c7_331, %c0_332, %c0_333], %613 {strides = array<i32>} : memref<48x16x128xbf16, #tpu.memory_space<vmem>>, vector<1x16x21xbf16>,
    %614 = vector.extract_strided_slice %603 {offsets = [2, 0], sizes = [16, 21], strides = [1, 1]} : vector<19x21xf32> to vector<16x21xf32>
    %615 = arith.truncf %614 : vector<16x21xf32> to vector<16x21xbf16>
    %c11_334 = arith.constant 11 : index
    %c0_335 = arith.constant 0 : index
    %c0_336 = arith.constant 0 : index
    %616 = vector.load %arg5[%c11_334, %c0_335, %c0_336] : memref<48x16x128xbf16, #tpu.memory_space<vmem>>, vector<1x16x21xbf16>
    %617 = vector.shape_cast %616 : vector<1x16x21xbf16> to vector<16x21xbf16>
    %618 = vector.shape_cast %615 : vector<16x21xbf16> to vector<1x16x21xbf16>
    tpu.vector_store %arg5[%c11_334, %c0_335, %c0_336], %618 {strides = array<i32>} : memref<48x16x128xbf16, #tpu.memory_space<vmem>>, vector<1x16x21xbf16>,
    %619 = vector.extract_strided_slice %603 {offsets = [3, 0], sizes = [16, 21], strides = [1, 1]} : vector<19x21xf32> to vector<16x21xf32>
    %620 = arith.truncf %619 : vector<16x21xf32> to vector<16x21xbf16>
    %c15_337 = arith.constant 15 : index
    %c0_338 = arith.constant 0 : index
    %c0_339 = arith.constant 0 : index
    %621 = vector.load %arg5[%c15_337, %c0_338, %c0_339] : memref<48x16x128xbf16, #tpu.memory_space<vmem>>, vector<1x16x21xbf16>
    %622 = vector.shape_cast %621 : vector<1x16x21xbf16> to vector<16x21xbf16>
    %623 = vector.shape_cast %620 : vector<16x21xbf16> to vector<1x16x21xbf16>
    tpu.vector_store %arg5[%c15_337, %c0_338, %c0_339], %623 {strides = array<i32>} : memref<48x16x128xbf16, #tpu.memory_space<vmem>>, vector<1x16x21xbf16>,
    %c1_340 = arith.constant 1 : index
    %c1_341 = arith.constant 1 : index
    %c0_342 = arith.constant 0 : index
    %c0_343 = arith.constant 0 : index
    %624 = vector.load %arg1[%c1_340, %c1_341, %c0_342, %c0_343] : memref<2x3x35x24xf32, #tpu.memory_space<vmem>>, vector<1x1x19x24xf32>
    %625 = vector.shape_cast %624 : vector<1x1x19x24xf32> to vector<19x24xf32>
    %626 = vector.extract_strided_slice %625 {offsets = [0, 0], sizes = [19, 21], strides = [1, 1]} : vector<19x24xf32> to vector<19x21xf32>
    %627 = vector.extract_strided_slice %626 {offsets = [0, 0], sizes = [16, 21], strides = [1, 1]} : vector<19x21xf32> to vector<16x21xf32>
    %628 = arith.truncf %627 : vector<16x21xf32> to vector<16x21xbf16>
    %c16_344 = arith.constant 16 : index
    %c0_345 = arith.constant 0 : index
    %c0_346 = arith.constant 0 : index
    %629 = vector.load %arg5[%c16_344, %c0_345, %c0_346] : memref<48x16x128xbf16, #tpu.memory_space<vmem>>, vector<1x16x21xbf16>
    %630 = vector.shape_cast %629 : vector<1x16x21xbf16> to vector<16x21xbf16>
    %631 = vector.shape_cast %628 : vector<16x21xbf16> to vector<1x16x21xbf16>
    tpu.vector_store %arg5[%c16_344, %c0_345, %c0_346], %631 {strides = array<i32>} : memref<48x16x128xbf16, #tpu.memory_space<vmem>>, vector<1x16x21xbf16>,
    %632 = vector.extract_strided_slice %626 {offsets = [1, 0], sizes = [16, 21], strides = [1, 1]} : vector<19x21xf32> to vector<16x21xf32>
    %633 = arith.truncf %632 : vector<16x21xf32> to vector<16x21xbf16>
    %c20_347 = arith.constant 20 : index
    %c0_348 = arith.constant 0 : index
    %c0_349 = arith.constant 0 : index
    %634 = vector.load %arg5[%c20_347, %c0_348, %c0_349] : memref<48x16x128xbf16, #tpu.memory_space<vmem>>, vector<1x16x21xbf16>
    %635 = vector.shape_cast %634 : vector<1x16x21xbf16> to vector<16x21xbf16>
    %636 = vector.shape_cast %633 : vector<16x21xbf16> to vector<1x16x21xbf16>
    tpu.vector_store %arg5[%c20_347, %c0_348, %c0_349], %636 {strides = array<i32>} : memref<48x16x128xbf16, #tpu.memory_space<vmem>>, vector<1x16x21xbf16>,
    %637 = vector.extract_strided_slice %626 {offsets = [2, 0], sizes = [16, 21], strides = [1, 1]} : vector<19x21xf32> to vector<16x21xf32>
    %638 = arith.truncf %637 : vector<16x21xf32> to vector<16x21xbf16>
    %c24_350 = arith.constant 24 : index
    %c0_351 = arith.constant 0 : index
    %c0_352 = arith.constant 0 : index
    %639 = vector.load %arg5[%c24_350, %c0_351, %c0_352] : memref<48x16x128xbf16, #tpu.memory_space<vmem>>, vector<1x16x21xbf16>
    %640 = vector.shape_cast %639 : vector<1x16x21xbf16> to vector<16x21xbf16>
    %641 = vector.shape_cast %638 : vector<16x21xbf16> to vector<1x16x21xbf16>
    tpu.vector_store %arg5[%c24_350, %c0_351, %c0_352], %641 {strides = array<i32>} : memref<48x16x128xbf16, #tpu.memory_space<vmem>>, vector<1x16x21xbf16>,
    %642 = vector.extract_strided_slice %626 {offsets = [3, 0], sizes = [16, 21], strides = [1, 1]} : vector<19x21xf32> to vector<16x21xf32>
    %643 = arith.truncf %642 : vector<16x21xf32> to vector<16x21xbf16>
    %c28_353 = arith.constant 28 : index
    %c0_354 = arith.constant 0 : index
    %c0_355 = arith.constant 0 : index
    %644 = vector.load %arg5[%c28_353, %c0_354, %c0_355] : memref<48x16x128xbf16, #tpu.memory_space<vmem>>, vector<1x16x21xbf16>
    %645 = vector.shape_cast %644 : vector<1x16x21xbf16> to vector<16x21xbf16>
    %646 = vector.shape_cast %643 : vector<16x21xbf16> to vector<1x16x21xbf16>
    tpu.vector_store %arg5[%c28_353, %c0_354, %c0_355], %646 {strides = array<i32>} : memref<48x16x128xbf16, #tpu.memory_space<vmem>>, vector<1x16x21xbf16>,
    %647 = vector.extract_strided_slice %625 {offsets = [0, 1], sizes = [19, 21], strides = [1, 1]} : vector<19x24xf32> to vector<19x21xf32>
    %648 = vector.extract_strided_slice %647 {offsets = [0, 0], sizes = [16, 21], strides = [1, 1]} : vector<19x21xf32> to vector<16x21xf32>
    %649 = arith.truncf %648 : vector<16x21xf32> to vector<16x21xbf16>
    %c17_356 = arith.constant 17 : index
    %c0_357 = arith.constant 0 : index
    %c0_358 = arith.constant 0 : index
    %650 = vector.load %arg5[%c17_356, %c0_357, %c0_358] : memref<48x16x128xbf16, #tpu.memory_space<vmem>>, vector<1x16x21xbf16>
    %651 = vector.shape_cast %650 : vector<1x16x21xbf16> to vector<16x21xbf16>
    %652 = vector.shape_cast %649 : vector<16x21xbf16> to vector<1x16x21xbf16>
    tpu.vector_store %arg5[%c17_356, %c0_357, %c0_358], %652 {strides = array<i32>} : memref<48x16x128xbf16, #tpu.memory_space<vmem>>, vector<1x16x21xbf16>,
    %653 = vector.extract_strided_slice %647 {offsets = [1, 0], sizes = [16, 21], strides = [1, 1]} : vector<19x21xf32> to vector<16x21xf32>
    %654 = arith.truncf %653 : vector<16x21xf32> to vector<16x21xbf16>
    %c21_359 = arith.constant 21 : index
    %c0_360 = arith.constant 0 : index
    %c0_361 = arith.constant 0 : index
    %655 = vector.load %arg5[%c21_359, %c0_360, %c0_361] : memref<48x16x128xbf16, #tpu.memory_space<vmem>>, vector<1x16x21xbf16>
    %656 = vector.shape_cast %655 : vector<1x16x21xbf16> to vector<16x21xbf16>
    %657 = vector.shape_cast %654 : vector<16x21xbf16> to vector<1x16x21xbf16>
    tpu.vector_store %arg5[%c21_359, %c0_360, %c0_361], %657 {strides = array<i32>} : memref<48x16x128xbf16, #tpu.memory_space<vmem>>, vector<1x16x21xbf16>,
    %658 = vector.extract_strided_slice %647 {offsets = [2, 0], sizes = [16, 21], strides = [1, 1]} : vector<19x21xf32> to vector<16x21xf32>
    %659 = arith.truncf %658 : vector<16x21xf32> to vector<16x21xbf16>
    %c25_362 = arith.constant 25 : index
    %c0_363 = arith.constant 0 : index
    %c0_364 = arith.constant 0 : index
    %660 = vector.load %arg5[%c25_362, %c0_363, %c0_364] : memref<48x16x128xbf16, #tpu.memory_space<vmem>>, vector<1x16x21xbf16>
    %661 = vector.shape_cast %660 : vector<1x16x21xbf16> to vector<16x21xbf16>
    %662 = vector.shape_cast %659 : vector<16x21xbf16> to vector<1x16x21xbf16>
    tpu.vector_store %arg5[%c25_362, %c0_363, %c0_364], %662 {strides = array<i32>} : memref<48x16x128xbf16, #tpu.memory_space<vmem>>, vector<1x16x21xbf16>,
    %663 = vector.extract_strided_slice %647 {offsets = [3, 0], sizes = [16, 21], strides = [1, 1]} : vector<19x21xf32> to vector<16x21xf32>
    %664 = arith.truncf %663 : vector<16x21xf32> to vector<16x21xbf16>
    %c29_365 = arith.constant 29 : index
    %c0_366 = arith.constant 0 : index
    %c0_367 = arith.constant 0 : index
    %665 = vector.load %arg5[%c29_365, %c0_366, %c0_367] : memref<48x16x128xbf16, #tpu.memory_space<vmem>>, vector<1x16x21xbf16>
    %666 = vector.shape_cast %665 : vector<1x16x21xbf16> to vector<16x21xbf16>
    %667 = vector.shape_cast %664 : vector<16x21xbf16> to vector<1x16x21xbf16>
    tpu.vector_store %arg5[%c29_365, %c0_366, %c0_367], %667 {strides = array<i32>} : memref<48x16x128xbf16, #tpu.memory_space<vmem>>, vector<1x16x21xbf16>,
    %668 = vector.extract_strided_slice %625 {offsets = [0, 2], sizes = [19, 21], strides = [1, 1]} : vector<19x24xf32> to vector<19x21xf32>
    %669 = vector.extract_strided_slice %668 {offsets = [0, 0], sizes = [16, 21], strides = [1, 1]} : vector<19x21xf32> to vector<16x21xf32>
    %670 = arith.truncf %669 : vector<16x21xf32> to vector<16x21xbf16>
    %c18_368 = arith.constant 18 : index
    %c0_369 = arith.constant 0 : index
    %c0_370 = arith.constant 0 : index
    %671 = vector.load %arg5[%c18_368, %c0_369, %c0_370] : memref<48x16x128xbf16, #tpu.memory_space<vmem>>, vector<1x16x21xbf16>
    %672 = vector.shape_cast %671 : vector<1x16x21xbf16> to vector<16x21xbf16>
    %673 = vector.shape_cast %670 : vector<16x21xbf16> to vector<1x16x21xbf16>
    tpu.vector_store %arg5[%c18_368, %c0_369, %c0_370], %673 {strides = array<i32>} : memref<48x16x128xbf16, #tpu.memory_space<vmem>>, vector<1x16x21xbf16>,
    %674 = vector.extract_strided_slice %668 {offsets = [1, 0], sizes = [16, 21], strides = [1, 1]} : vector<19x21xf32> to vector<16x21xf32>
    %675 = arith.truncf %674 : vector<16x21xf32> to vector<16x21xbf16>
    %c22_371 = arith.constant 22 : index
    %c0_372 = arith.constant 0 : index
    %c0_373 = arith.constant 0 : index
    %676 = vector.load %arg5[%c22_371, %c0_372, %c0_373] : memref<48x16x128xbf16, #tpu.memory_space<vmem>>, vector<1x16x21xbf16>
    %677 = vector.shape_cast %676 : vector<1x16x21xbf16> to vector<16x21xbf16>
    %678 = vector.shape_cast %675 : vector<16x21xbf16> to vector<1x16x21xbf16>
    tpu.vector_store %arg5[%c22_371, %c0_372, %c0_373], %678 {strides = array<i32>} : memref<48x16x128xbf16, #tpu.memory_space<vmem>>, vector<1x16x21xbf16>,
    %679 = vector.extract_strided_slice %668 {offsets = [2, 0], sizes = [16, 21], strides = [1, 1]} : vector<19x21xf32> to vector<16x21xf32>
    %680 = arith.truncf %679 : vector<16x21xf32> to vector<16x21xbf16>
    %c26_374 = arith.constant 26 : index
    %c0_375 = arith.constant 0 : index
    %c0_376 = arith.constant 0 : index
    %681 = vector.load %arg5[%c26_374, %c0_375, %c0_376] : memref<48x16x128xbf16, #tpu.memory_space<vmem>>, vector<1x16x21xbf16>
    %682 = vector.shape_cast %681 : vector<1x16x21xbf16> to vector<16x21xbf16>
    %683 = vector.shape_cast %680 : vector<16x21xbf16> to vector<1x16x21xbf16>
    tpu.vector_store %arg5[%c26_374, %c0_375, %c0_376], %683 {strides = array<i32>} : memref<48x16x128xbf16, #tpu.memory_space<vmem>>, vector<1x16x21xbf16>,
    %684 = vector.extract_strided_slice %668 {offsets = [3, 0], sizes = [16, 21], strides = [1, 1]} : vector<19x21xf32> to vector<16x21xf32>
    %685 = arith.truncf %684 : vector<16x21xf32> to vector<16x21xbf16>
    %c30_377 = arith.constant 30 : index
    %c0_378 = arith.constant 0 : index
    %c0_379 = arith.constant 0 : index
    %686 = vector.load %arg5[%c30_377, %c0_378, %c0_379] : memref<48x16x128xbf16, #tpu.memory_space<vmem>>, vector<1x16x21xbf16>
    %687 = vector.shape_cast %686 : vector<1x16x21xbf16> to vector<16x21xbf16>
    %688 = vector.shape_cast %685 : vector<16x21xbf16> to vector<1x16x21xbf16>
    tpu.vector_store %arg5[%c30_377, %c0_378, %c0_379], %688 {strides = array<i32>} : memref<48x16x128xbf16, #tpu.memory_space<vmem>>, vector<1x16x21xbf16>,
    %689 = vector.extract_strided_slice %625 {offsets = [0, 3], sizes = [19, 21], strides = [1, 1]} : vector<19x24xf32> to vector<19x21xf32>
    %690 = vector.extract_strided_slice %689 {offsets = [0, 0], sizes = [16, 21], strides = [1, 1]} : vector<19x21xf32> to vector<16x21xf32>
    %691 = arith.truncf %690 : vector<16x21xf32> to vector<16x21xbf16>
    %c19_380 = arith.constant 19 : index
    %c0_381 = arith.constant 0 : index
    %c0_382 = arith.constant 0 : index
    %692 = vector.load %arg5[%c19_380, %c0_381, %c0_382] : memref<48x16x128xbf16, #tpu.memory_space<vmem>>, vector<1x16x21xbf16>
    %693 = vector.shape_cast %692 : vector<1x16x21xbf16> to vector<16x21xbf16>
    %694 = vector.shape_cast %691 : vector<16x21xbf16> to vector<1x16x21xbf16>
    tpu.vector_store %arg5[%c19_380, %c0_381, %c0_382], %694 {strides = array<i32>} : memref<48x16x128xbf16, #tpu.memory_space<vmem>>, vector<1x16x21xbf16>,
    %695 = vector.extract_strided_slice %689 {offsets = [1, 0], sizes = [16, 21], strides = [1, 1]} : vector<19x21xf32> to vector<16x21xf32>
    %696 = arith.truncf %695 : vector<16x21xf32> to vector<16x21xbf16>
    %c23_383 = arith.constant 23 : index
    %c0_384 = arith.constant 0 : index
    %c0_385 = arith.constant 0 : index
    %697 = vector.load %arg5[%c23_383, %c0_384, %c0_385] : memref<48x16x128xbf16, #tpu.memory_space<vmem>>, vector<1x16x21xbf16>
    %698 = vector.shape_cast %697 : vector<1x16x21xbf16> to vector<16x21xbf16>
    %699 = vector.shape_cast %696 : vector<16x21xbf16> to vector<1x16x21xbf16>
    tpu.vector_store %arg5[%c23_383, %c0_384, %c0_385], %699 {strides = array<i32>} : memref<48x16x128xbf16, #tpu.memory_space<vmem>>, vector<1x16x21xbf16>,
    %700 = vector.extract_strided_slice %689 {offsets = [2, 0], sizes = [16, 21], strides = [1, 1]} : vector<19x21xf32> to vector<16x21xf32>
    %701 = arith.truncf %700 : vector<16x21xf32> to vector<16x21xbf16>
    %c27_386 = arith.constant 27 : index
    %c0_387 = arith.constant 0 : index
    %c0_388 = arith.constant 0 : index
    %702 = vector.load %arg5[%c27_386, %c0_387, %c0_388] : memref<48x16x128xbf16, #tpu.memory_space<vmem>>, vector<1x16x21xbf16>
    %703 = vector.shape_cast %702 : vector<1x16x21xbf16> to vector<16x21xbf16>
    %704 = vector.shape_cast %701 : vector<16x21xbf16> to vector<1x16x21xbf16>
    tpu.vector_store %arg5[%c27_386, %c0_387, %c0_388], %704 {strides = array<i32>} : memref<48x16x128xbf16, #tpu.memory_space<vmem>>, vector<1x16x21xbf16>,
    %705 = vector.extract_strided_slice %689 {offsets = [3, 0], sizes = [16, 21], strides = [1, 1]} : vector<19x21xf32> to vector<16x21xf32>
    %706 = arith.truncf %705 : vector<16x21xf32> to vector<16x21xbf16>
    %c31_389 = arith.constant 31 : index
    %c0_390 = arith.constant 0 : index
    %c0_391 = arith.constant 0 : index
    %707 = vector.load %arg5[%c31_389, %c0_390, %c0_391] : memref<48x16x128xbf16, #tpu.memory_space<vmem>>, vector<1x16x21xbf16>
    %708 = vector.shape_cast %707 : vector<1x16x21xbf16> to vector<16x21xbf16>
    %709 = vector.shape_cast %706 : vector<16x21xbf16> to vector<1x16x21xbf16>
    tpu.vector_store %arg5[%c31_389, %c0_390, %c0_391], %709 {strides = array<i32>} : memref<48x16x128xbf16, #tpu.memory_space<vmem>>, vector<1x16x21xbf16>,
    %c1_392 = arith.constant 1 : index
    %c2_393 = arith.constant 2 : index
    %c0_394 = arith.constant 0 : index
    %c0_395 = arith.constant 0 : index
    %710 = vector.load %arg1[%c1_392, %c2_393, %c0_394, %c0_395] : memref<2x3x35x24xf32, #tpu.memory_space<vmem>>, vector<1x1x19x24xf32>
    %711 = vector.shape_cast %710 : vector<1x1x19x24xf32> to vector<19x24xf32>
    %712 = vector.extract_strided_slice %711 {offsets = [0, 0], sizes = [19, 21], strides = [1, 1]} : vector<19x24xf32> to vector<19x21xf32>
    %713 = vector.extract_strided_slice %712 {offsets = [0, 0], sizes = [16, 21], strides = [1, 1]} : vector<19x21xf32> to vector<16x21xf32>
    %714 = arith.truncf %713 : vector<16x21xf32> to vector<16x21xbf16>
    %c32_396 = arith.constant 32 : index
    %c0_397 = arith.constant 0 : index
    %c0_398 = arith.constant 0 : index
    %715 = vector.load %arg5[%c32_396, %c0_397, %c0_398] : memref<48x16x128xbf16, #tpu.memory_space<vmem>>, vector<1x16x21xbf16>
    %716 = vector.shape_cast %715 : vector<1x16x21xbf16> to vector<16x21xbf16>
    %717 = vector.shape_cast %714 : vector<16x21xbf16> to vector<1x16x21xbf16>
    tpu.vector_store %arg5[%c32_396, %c0_397, %c0_398], %717 {strides = array<i32>} : memref<48x16x128xbf16, #tpu.memory_space<vmem>>, vector<1x16x21xbf16>,
    %718 = vector.extract_strided_slice %712 {offsets = [1, 0], sizes = [16, 21], strides = [1, 1]} : vector<19x21xf32> to vector<16x21xf32>
    %719 = arith.truncf %718 : vector<16x21xf32> to vector<16x21xbf16>
    %c36_399 = arith.constant 36 : index
    %c0_400 = arith.constant 0 : index
    %c0_401 = arith.constant 0 : index
    %720 = vector.load %arg5[%c36_399, %c0_400, %c0_401] : memref<48x16x128xbf16, #tpu.memory_space<vmem>>, vector<1x16x21xbf16>
    %721 = vector.shape_cast %720 : vector<1x16x21xbf16> to vector<16x21xbf16>
    %722 = vector.shape_cast %719 : vector<16x21xbf16> to vector<1x16x21xbf16>
    tpu.vector_store %arg5[%c36_399, %c0_400, %c0_401], %722 {strides = array<i32>} : memref<48x16x128xbf16, #tpu.memory_space<vmem>>, vector<1x16x21xbf16>,
    %723 = vector.extract_strided_slice %712 {offsets = [2, 0], sizes = [16, 21], strides = [1, 1]} : vector<19x21xf32> to vector<16x21xf32>
    %724 = arith.truncf %723 : vector<16x21xf32> to vector<16x21xbf16>
    %c40_402 = arith.constant 40 : index
    %c0_403 = arith.constant 0 : index
    %c0_404 = arith.constant 0 : index
    %725 = vector.load %arg5[%c40_402, %c0_403, %c0_404] : memref<48x16x128xbf16, #tpu.memory_space<vmem>>, vector<1x16x21xbf16>
    %726 = vector.shape_cast %725 : vector<1x16x21xbf16> to vector<16x21xbf16>
    %727 = vector.shape_cast %724 : vector<16x21xbf16> to vector<1x16x21xbf16>
    tpu.vector_store %arg5[%c40_402, %c0_403, %c0_404], %727 {strides = array<i32>} : memref<48x16x128xbf16, #tpu.memory_space<vmem>>, vector<1x16x21xbf16>,
    %728 = vector.extract_strided_slice %712 {offsets = [3, 0], sizes = [16, 21], strides = [1, 1]} : vector<19x21xf32> to vector<16x21xf32>
    %729 = arith.truncf %728 : vector<16x21xf32> to vector<16x21xbf16>
    %c44_405 = arith.constant 44 : index
    %c0_406 = arith.constant 0 : index
    %c0_407 = arith.constant 0 : index
    %730 = vector.load %arg5[%c44_405, %c0_406, %c0_407] : memref<48x16x128xbf16, #tpu.memory_space<vmem>>, vector<1x16x21xbf16>
    %731 = vector.shape_cast %730 : vector<1x16x21xbf16> to vector<16x21xbf16>
    %732 = vector.shape_cast %729 : vector<16x21xbf16> to vector<1x16x21xbf16>
    tpu.vector_store %arg5[%c44_405, %c0_406, %c0_407], %732 {strides = array<i32>} : memref<48x16x128xbf16, #tpu.memory_space<vmem>>, vector<1x16x21xbf16>,
    %733 = vector.extract_strided_slice %711 {offsets = [0, 1], sizes = [19, 21], strides = [1, 1]} : vector<19x24xf32> to vector<19x21xf32>
    %734 = vector.extract_strided_slice %733 {offsets = [0, 0], sizes = [16, 21], strides = [1, 1]} : vector<19x21xf32> to vector<16x21xf32>
    %735 = arith.truncf %734 : vector<16x21xf32> to vector<16x21xbf16>
    %c33_408 = arith.constant 33 : index
    %c0_409 = arith.constant 0 : index
    %c0_410 = arith.constant 0 : index
    %736 = vector.load %arg5[%c33_408, %c0_409, %c0_410] : memref<48x16x128xbf16, #tpu.memory_space<vmem>>, vector<1x16x21xbf16>
    %737 = vector.shape_cast %736 : vector<1x16x21xbf16> to vector<16x21xbf16>
    %738 = vector.shape_cast %735 : vector<16x21xbf16> to vector<1x16x21xbf16>
    tpu.vector_store %arg5[%c33_408, %c0_409, %c0_410], %738 {strides = array<i32>} : memref<48x16x128xbf16, #tpu.memory_space<vmem>>, vector<1x16x21xbf16>,
    %739 = vector.extract_strided_slice %733 {offsets = [1, 0], sizes = [16, 21], strides = [1, 1]} : vector<19x21xf32> to vector<16x21xf32>
    %740 = arith.truncf %739 : vector<16x21xf32> to vector<16x21xbf16>
    %c37_411 = arith.constant 37 : index
    %c0_412 = arith.constant 0 : index
    %c0_413 = arith.constant 0 : index
    %741 = vector.load %arg5[%c37_411, %c0_412, %c0_413] : memref<48x16x128xbf16, #tpu.memory_space<vmem>>, vector<1x16x21xbf16>
    %742 = vector.shape_cast %741 : vector<1x16x21xbf16> to vector<16x21xbf16>
    %743 = vector.shape_cast %740 : vector<16x21xbf16> to vector<1x16x21xbf16>
    tpu.vector_store %arg5[%c37_411, %c0_412, %c0_413], %743 {strides = array<i32>} : memref<48x16x128xbf16, #tpu.memory_space<vmem>>, vector<1x16x21xbf16>,
    %744 = vector.extract_strided_slice %733 {offsets = [2, 0], sizes = [16, 21], strides = [1, 1]} : vector<19x21xf32> to vector<16x21xf32>
    %745 = arith.truncf %744 : vector<16x21xf32> to vector<16x21xbf16>
    %c41_414 = arith.constant 41 : index
    %c0_415 = arith.constant 0 : index
    %c0_416 = arith.constant 0 : index
    %746 = vector.load %arg5[%c41_414, %c0_415, %c0_416] : memref<48x16x128xbf16, #tpu.memory_space<vmem>>, vector<1x16x21xbf16>
    %747 = vector.shape_cast %746 : vector<1x16x21xbf16> to vector<16x21xbf16>
    %748 = vector.shape_cast %745 : vector<16x21xbf16> to vector<1x16x21xbf16>
    tpu.vector_store %arg5[%c41_414, %c0_415, %c0_416], %748 {strides = array<i32>} : memref<48x16x128xbf16, #tpu.memory_space<vmem>>, vector<1x16x21xbf16>,
    %749 = vector.extract_strided_slice %733 {offsets = [3, 0], sizes = [16, 21], strides = [1, 1]} : vector<19x21xf32> to vector<16x21xf32>
    %750 = arith.truncf %749 : vector<16x21xf32> to vector<16x21xbf16>
    %c45_417 = arith.constant 45 : index
    %c0_418 = arith.constant 0 : index
    %c0_419 = arith.constant 0 : index
    %751 = vector.load %arg5[%c45_417, %c0_418, %c0_419] : memref<48x16x128xbf16, #tpu.memory_space<vmem>>, vector<1x16x21xbf16>
    %752 = vector.shape_cast %751 : vector<1x16x21xbf16> to vector<16x21xbf16>
    %753 = vector.shape_cast %750 : vector<16x21xbf16> to vector<1x16x21xbf16>
    tpu.vector_store %arg5[%c45_417, %c0_418, %c0_419], %753 {strides = array<i32>} : memref<48x16x128xbf16, #tpu.memory_space<vmem>>, vector<1x16x21xbf16>,
    %754 = vector.extract_strided_slice %711 {offsets = [0, 2], sizes = [19, 21], strides = [1, 1]} : vector<19x24xf32> to vector<19x21xf32>
    %755 = vector.extract_strided_slice %754 {offsets = [0, 0], sizes = [16, 21], strides = [1, 1]} : vector<19x21xf32> to vector<16x21xf32>
    %756 = arith.truncf %755 : vector<16x21xf32> to vector<16x21xbf16>
    %c34_420 = arith.constant 34 : index
    %c0_421 = arith.constant 0 : index
    %c0_422 = arith.constant 0 : index
    %757 = vector.load %arg5[%c34_420, %c0_421, %c0_422] : memref<48x16x128xbf16, #tpu.memory_space<vmem>>, vector<1x16x21xbf16>
    %758 = vector.shape_cast %757 : vector<1x16x21xbf16> to vector<16x21xbf16>
    %759 = vector.shape_cast %756 : vector<16x21xbf16> to vector<1x16x21xbf16>
    tpu.vector_store %arg5[%c34_420, %c0_421, %c0_422], %759 {strides = array<i32>} : memref<48x16x128xbf16, #tpu.memory_space<vmem>>, vector<1x16x21xbf16>,
    %760 = vector.extract_strided_slice %754 {offsets = [1, 0], sizes = [16, 21], strides = [1, 1]} : vector<19x21xf32> to vector<16x21xf32>
    %761 = arith.truncf %760 : vector<16x21xf32> to vector<16x21xbf16>
    %c38_423 = arith.constant 38 : index
    %c0_424 = arith.constant 0 : index
    %c0_425 = arith.constant 0 : index
    %762 = vector.load %arg5[%c38_423, %c0_424, %c0_425] : memref<48x16x128xbf16, #tpu.memory_space<vmem>>, vector<1x16x21xbf16>
    %763 = vector.shape_cast %762 : vector<1x16x21xbf16> to vector<16x21xbf16>
    %764 = vector.shape_cast %761 : vector<16x21xbf16> to vector<1x16x21xbf16>
    tpu.vector_store %arg5[%c38_423, %c0_424, %c0_425], %764 {strides = array<i32>} : memref<48x16x128xbf16, #tpu.memory_space<vmem>>, vector<1x16x21xbf16>,
    %765 = vector.extract_strided_slice %754 {offsets = [2, 0], sizes = [16, 21], strides = [1, 1]} : vector<19x21xf32> to vector<16x21xf32>
    %766 = arith.truncf %765 : vector<16x21xf32> to vector<16x21xbf16>
    %c42_426 = arith.constant 42 : index
    %c0_427 = arith.constant 0 : index
    %c0_428 = arith.constant 0 : index
    %767 = vector.load %arg5[%c42_426, %c0_427, %c0_428] : memref<48x16x128xbf16, #tpu.memory_space<vmem>>, vector<1x16x21xbf16>
    %768 = vector.shape_cast %767 : vector<1x16x21xbf16> to vector<16x21xbf16>
    %769 = vector.shape_cast %766 : vector<16x21xbf16> to vector<1x16x21xbf16>
    tpu.vector_store %arg5[%c42_426, %c0_427, %c0_428], %769 {strides = array<i32>} : memref<48x16x128xbf16, #tpu.memory_space<vmem>>, vector<1x16x21xbf16>,
    %770 = vector.extract_strided_slice %754 {offsets = [3, 0], sizes = [16, 21], strides = [1, 1]} : vector<19x21xf32> to vector<16x21xf32>
    %771 = arith.truncf %770 : vector<16x21xf32> to vector<16x21xbf16>
    %c46_429 = arith.constant 46 : index
    %c0_430 = arith.constant 0 : index
    %c0_431 = arith.constant 0 : index
    %772 = vector.load %arg5[%c46_429, %c0_430, %c0_431] : memref<48x16x128xbf16, #tpu.memory_space<vmem>>, vector<1x16x21xbf16>
    %773 = vector.shape_cast %772 : vector<1x16x21xbf16> to vector<16x21xbf16>
    %774 = vector.shape_cast %771 : vector<16x21xbf16> to vector<1x16x21xbf16>
    tpu.vector_store %arg5[%c46_429, %c0_430, %c0_431], %774 {strides = array<i32>} : memref<48x16x128xbf16, #tpu.memory_space<vmem>>, vector<1x16x21xbf16>,
    %775 = vector.extract_strided_slice %711 {offsets = [0, 3], sizes = [19, 21], strides = [1, 1]} : vector<19x24xf32> to vector<19x21xf32>
    %776 = vector.extract_strided_slice %775 {offsets = [0, 0], sizes = [16, 21], strides = [1, 1]} : vector<19x21xf32> to vector<16x21xf32>
    %777 = arith.truncf %776 : vector<16x21xf32> to vector<16x21xbf16>
    %c35_432 = arith.constant 35 : index
    %c0_433 = arith.constant 0 : index
    %c0_434 = arith.constant 0 : index
    %778 = vector.load %arg5[%c35_432, %c0_433, %c0_434] : memref<48x16x128xbf16, #tpu.memory_space<vmem>>, vector<1x16x21xbf16>
    %779 = vector.shape_cast %778 : vector<1x16x21xbf16> to vector<16x21xbf16>
    %780 = vector.shape_cast %777 : vector<16x21xbf16> to vector<1x16x21xbf16>
    tpu.vector_store %arg5[%c35_432, %c0_433, %c0_434], %780 {strides = array<i32>} : memref<48x16x128xbf16, #tpu.memory_space<vmem>>, vector<1x16x21xbf16>,
    %781 = vector.extract_strided_slice %775 {offsets = [1, 0], sizes = [16, 21], strides = [1, 1]} : vector<19x21xf32> to vector<16x21xf32>
    %782 = arith.truncf %781 : vector<16x21xf32> to vector<16x21xbf16>
    %c39_435 = arith.constant 39 : index
    %c0_436 = arith.constant 0 : index
    %c0_437 = arith.constant 0 : index
    %783 = vector.load %arg5[%c39_435, %c0_436, %c0_437] : memref<48x16x128xbf16, #tpu.memory_space<vmem>>, vector<1x16x21xbf16>
    %784 = vector.shape_cast %783 : vector<1x16x21xbf16> to vector<16x21xbf16>
    %785 = vector.shape_cast %782 : vector<16x21xbf16> to vector<1x16x21xbf16>
    tpu.vector_store %arg5[%c39_435, %c0_436, %c0_437], %785 {strides = array<i32>} : memref<48x16x128xbf16, #tpu.memory_space<vmem>>, vector<1x16x21xbf16>,
    %786 = vector.extract_strided_slice %775 {offsets = [2, 0], sizes = [16, 21], strides = [1, 1]} : vector<19x21xf32> to vector<16x21xf32>
    %787 = arith.truncf %786 : vector<16x21xf32> to vector<16x21xbf16>
    %c43_438 = arith.constant 43 : index
    %c0_439 = arith.constant 0 : index
    %c0_440 = arith.constant 0 : index
    %788 = vector.load %arg5[%c43_438, %c0_439, %c0_440] : memref<48x16x128xbf16, #tpu.memory_space<vmem>>, vector<1x16x21xbf16>
    %789 = vector.shape_cast %788 : vector<1x16x21xbf16> to vector<16x21xbf16>
    %790 = vector.shape_cast %787 : vector<16x21xbf16> to vector<1x16x21xbf16>
    tpu.vector_store %arg5[%c43_438, %c0_439, %c0_440], %790 {strides = array<i32>} : memref<48x16x128xbf16, #tpu.memory_space<vmem>>, vector<1x16x21xbf16>,
    %791 = vector.extract_strided_slice %775 {offsets = [3, 0], sizes = [16, 21], strides = [1, 1]} : vector<19x21xf32> to vector<16x21xf32>
    %792 = arith.truncf %791 : vector<16x21xf32> to vector<16x21xbf16>
    %c47_441 = arith.constant 47 : index
    %c0_442 = arith.constant 0 : index
    %c0_443 = arith.constant 0 : index
    %793 = vector.load %arg5[%c47_441, %c0_442, %c0_443] : memref<48x16x128xbf16, #tpu.memory_space<vmem>>, vector<1x16x21xbf16>
    %794 = vector.shape_cast %793 : vector<1x16x21xbf16> to vector<16x21xbf16>
    %795 = vector.shape_cast %792 : vector<16x21xbf16> to vector<1x16x21xbf16>
    tpu.vector_store %arg5[%c47_441, %c0_442, %c0_443], %795 {strides = array<i32>} : memref<48x16x128xbf16, #tpu.memory_space<vmem>>, vector<1x16x21xbf16>,
    %c0_444 = arith.constant 0 : index
    %c0_445 = arith.constant 0 : index
    %c0_446 = arith.constant 0 : index
    %796 = vector.load %arg5[%c0_444, %c0_445, %c0_446] : memref<48x16x128xbf16, #tpu.memory_space<vmem>>, vector<48x16x128xbf16>
    %797 = vector.shape_cast %796 : vector<48x16x128xbf16> to vector<48x2048xbf16>
    %c0_447 = arith.constant 0 : index
    %c0_448 = arith.constant 0 : index
    %798 = vector.load %arg2[%c0_447, %c0_448] : memref<8x48xbf16, #tpu.memory_space<vmem>>, vector<8x48xbf16>
    %cst_449 = arith.constant dense<0.000000e+00> : vector<8x2048xf32>
    %799 = tpu.matmul %798, %797, %cst_449 {dimension_numbers = #tpu.dot_dimension_numbers<[1], [0], [0], [1], [0, 0, 1, 1], [], []>} : vector<8x48xbf16>, vector<48x2048xbf16>, vector<8x2048xf32> -> vector<8x2048xf32>
    %c0_450 = arith.constant 0 : index
    %c0_451 = arith.constant 0 : index
    %800 = vector.load %arg3[%c0_450, %c0_451] : memref<8x1xf32, #tpu.memory_space<vmem>>, vector<8x1xf32>
    %801 = vector.broadcast %800 : vector<8x1xf32> to vector<8x2048xf32>
    %802 = arith.addf %799, %801 : vector<8x2048xf32>
    %c1_452 = arith.constant 1 : index
    %c0_453 = arith.constant 0 : index
    %c0_454 = arith.constant 0 : index
    %803 = vector.load %arg4[%c1_452, %c0_453, %c0_454] : memref<2x8x4096xf32, #tpu.memory_space<vmem>>, vector<1x8x2048xf32>
    %804 = vector.shape_cast %803 : vector<1x8x2048xf32> to vector<8x2048xf32>
    %805 = vector.shape_cast %802 : vector<8x2048xf32> to vector<1x8x2048xf32>
    tpu.vector_store %arg4[%c1_452, %c0_453, %c0_454], %805 {strides = array<i32>} : memref<2x8x4096xf32, #tpu.memory_space<vmem>>, vector<1x8x2048xf32>,
    %c1_455 = arith.constant 1 : index
    %c0_456 = arith.constant 0 : index
    %c16_457 = arith.constant 16 : index
    %c0_458 = arith.constant 0 : index
    %806 = vector.load %arg1[%c1_455, %c0_456, %c16_457, %c0_458] : memref<2x3x35x24xf32, #tpu.memory_space<vmem>>, vector<1x1x19x24xf32>
    %807 = vector.shape_cast %806 : vector<1x1x19x24xf32> to vector<19x24xf32>
    %808 = vector.extract_strided_slice %807 {offsets = [0, 0], sizes = [19, 21], strides = [1, 1]} : vector<19x24xf32> to vector<19x21xf32>
    %809 = vector.extract_strided_slice %808 {offsets = [0, 0], sizes = [16, 21], strides = [1, 1]} : vector<19x21xf32> to vector<16x21xf32>
    %810 = arith.truncf %809 : vector<16x21xf32> to vector<16x21xbf16>
    %c0_459 = arith.constant 0 : index
    %c0_460 = arith.constant 0 : index
    %c0_461 = arith.constant 0 : index
    %811 = vector.load %arg5[%c0_459, %c0_460, %c0_461] : memref<48x16x128xbf16, #tpu.memory_space<vmem>>, vector<1x16x21xbf16>
    %812 = vector.shape_cast %811 : vector<1x16x21xbf16> to vector<16x21xbf16>
    %813 = vector.shape_cast %810 : vector<16x21xbf16> to vector<1x16x21xbf16>
    tpu.vector_store %arg5[%c0_459, %c0_460, %c0_461], %813 {strides = array<i32>} : memref<48x16x128xbf16, #tpu.memory_space<vmem>>, vector<1x16x21xbf16>,
    %814 = vector.extract_strided_slice %808 {offsets = [1, 0], sizes = [16, 21], strides = [1, 1]} : vector<19x21xf32> to vector<16x21xf32>
    %815 = arith.truncf %814 : vector<16x21xf32> to vector<16x21xbf16>
    %c4_462 = arith.constant 4 : index
    %c0_463 = arith.constant 0 : index
    %c0_464 = arith.constant 0 : index
    %816 = vector.load %arg5[%c4_462, %c0_463, %c0_464] : memref<48x16x128xbf16, #tpu.memory_space<vmem>>, vector<1x16x21xbf16>
    %817 = vector.shape_cast %816 : vector<1x16x21xbf16> to vector<16x21xbf16>
    %818 = vector.shape_cast %815 : vector<16x21xbf16> to vector<1x16x21xbf16>
    tpu.vector_store %arg5[%c4_462, %c0_463, %c0_464], %818 {strides = array<i32>} : memref<48x16x128xbf16, #tpu.memory_space<vmem>>, vector<1x16x21xbf16>,
    %819 = vector.extract_strided_slice %808 {offsets = [2, 0], sizes = [16, 21], strides = [1, 1]} : vector<19x21xf32> to vector<16x21xf32>
    %820 = arith.truncf %819 : vector<16x21xf32> to vector<16x21xbf16>
    %c8_465 = arith.constant 8 : index
    %c0_466 = arith.constant 0 : index
    %c0_467 = arith.constant 0 : index
    %821 = vector.load %arg5[%c8_465, %c0_466, %c0_467] : memref<48x16x128xbf16, #tpu.memory_space<vmem>>, vector<1x16x21xbf16>
    %822 = vector.shape_cast %821 : vector<1x16x21xbf16> to vector<16x21xbf16>
    %823 = vector.shape_cast %820 : vector<16x21xbf16> to vector<1x16x21xbf16>
    tpu.vector_store %arg5[%c8_465, %c0_466, %c0_467], %823 {strides = array<i32>} : memref<48x16x128xbf16, #tpu.memory_space<vmem>>, vector<1x16x21xbf16>,
    %824 = vector.extract_strided_slice %808 {offsets = [3, 0], sizes = [16, 21], strides = [1, 1]} : vector<19x21xf32> to vector<16x21xf32>
    %825 = arith.truncf %824 : vector<16x21xf32> to vector<16x21xbf16>
    %c12_468 = arith.constant 12 : index
    %c0_469 = arith.constant 0 : index
    %c0_470 = arith.constant 0 : index
    %826 = vector.load %arg5[%c12_468, %c0_469, %c0_470] : memref<48x16x128xbf16, #tpu.memory_space<vmem>>, vector<1x16x21xbf16>
    %827 = vector.shape_cast %826 : vector<1x16x21xbf16> to vector<16x21xbf16>
    %828 = vector.shape_cast %825 : vector<16x21xbf16> to vector<1x16x21xbf16>
    tpu.vector_store %arg5[%c12_468, %c0_469, %c0_470], %828 {strides = array<i32>} : memref<48x16x128xbf16, #tpu.memory_space<vmem>>, vector<1x16x21xbf16>,
    %829 = vector.extract_strided_slice %807 {offsets = [0, 1], sizes = [19, 21], strides = [1, 1]} : vector<19x24xf32> to vector<19x21xf32>
    %830 = vector.extract_strided_slice %829 {offsets = [0, 0], sizes = [16, 21], strides = [1, 1]} : vector<19x21xf32> to vector<16x21xf32>
    %831 = arith.truncf %830 : vector<16x21xf32> to vector<16x21xbf16>
    %c1_471 = arith.constant 1 : index
    %c0_472 = arith.constant 0 : index
    %c0_473 = arith.constant 0 : index
    %832 = vector.load %arg5[%c1_471, %c0_472, %c0_473] : memref<48x16x128xbf16, #tpu.memory_space<vmem>>, vector<1x16x21xbf16>
    %833 = vector.shape_cast %832 : vector<1x16x21xbf16> to vector<16x21xbf16>
    %834 = vector.shape_cast %831 : vector<16x21xbf16> to vector<1x16x21xbf16>
    tpu.vector_store %arg5[%c1_471, %c0_472, %c0_473], %834 {strides = array<i32>} : memref<48x16x128xbf16, #tpu.memory_space<vmem>>, vector<1x16x21xbf16>,
    %835 = vector.extract_strided_slice %829 {offsets = [1, 0], sizes = [16, 21], strides = [1, 1]} : vector<19x21xf32> to vector<16x21xf32>
    %836 = arith.truncf %835 : vector<16x21xf32> to vector<16x21xbf16>
    %c5_474 = arith.constant 5 : index
    %c0_475 = arith.constant 0 : index
    %c0_476 = arith.constant 0 : index
    %837 = vector.load %arg5[%c5_474, %c0_475, %c0_476] : memref<48x16x128xbf16, #tpu.memory_space<vmem>>, vector<1x16x21xbf16>
    %838 = vector.shape_cast %837 : vector<1x16x21xbf16> to vector<16x21xbf16>
    %839 = vector.shape_cast %836 : vector<16x21xbf16> to vector<1x16x21xbf16>
    tpu.vector_store %arg5[%c5_474, %c0_475, %c0_476], %839 {strides = array<i32>} : memref<48x16x128xbf16, #tpu.memory_space<vmem>>, vector<1x16x21xbf16>,
    %840 = vector.extract_strided_slice %829 {offsets = [2, 0], sizes = [16, 21], strides = [1, 1]} : vector<19x21xf32> to vector<16x21xf32>
    %841 = arith.truncf %840 : vector<16x21xf32> to vector<16x21xbf16>
    %c9_477 = arith.constant 9 : index
    %c0_478 = arith.constant 0 : index
    %c0_479 = arith.constant 0 : index
    %842 = vector.load %arg5[%c9_477, %c0_478, %c0_479] : memref<48x16x128xbf16, #tpu.memory_space<vmem>>, vector<1x16x21xbf16>
    %843 = vector.shape_cast %842 : vector<1x16x21xbf16> to vector<16x21xbf16>
    %844 = vector.shape_cast %841 : vector<16x21xbf16> to vector<1x16x21xbf16>
    tpu.vector_store %arg5[%c9_477, %c0_478, %c0_479], %844 {strides = array<i32>} : memref<48x16x128xbf16, #tpu.memory_space<vmem>>, vector<1x16x21xbf16>,
    %845 = vector.extract_strided_slice %829 {offsets = [3, 0], sizes = [16, 21], strides = [1, 1]} : vector<19x21xf32> to vector<16x21xf32>
    %846 = arith.truncf %845 : vector<16x21xf32> to vector<16x21xbf16>
    %c13_480 = arith.constant 13 : index
    %c0_481 = arith.constant 0 : index
    %c0_482 = arith.constant 0 : index
    %847 = vector.load %arg5[%c13_480, %c0_481, %c0_482] : memref<48x16x128xbf16, #tpu.memory_space<vmem>>, vector<1x16x21xbf16>
    %848 = vector.shape_cast %847 : vector<1x16x21xbf16> to vector<16x21xbf16>
    %849 = vector.shape_cast %846 : vector<16x21xbf16> to vector<1x16x21xbf16>
    tpu.vector_store %arg5[%c13_480, %c0_481, %c0_482], %849 {strides = array<i32>} : memref<48x16x128xbf16, #tpu.memory_space<vmem>>, vector<1x16x21xbf16>,
    %850 = vector.extract_strided_slice %807 {offsets = [0, 2], sizes = [19, 21], strides = [1, 1]} : vector<19x24xf32> to vector<19x21xf32>
    %851 = vector.extract_strided_slice %850 {offsets = [0, 0], sizes = [16, 21], strides = [1, 1]} : vector<19x21xf32> to vector<16x21xf32>
    %852 = arith.truncf %851 : vector<16x21xf32> to vector<16x21xbf16>
    %c2_483 = arith.constant 2 : index
    %c0_484 = arith.constant 0 : index
    %c0_485 = arith.constant 0 : index
    %853 = vector.load %arg5[%c2_483, %c0_484, %c0_485] : memref<48x16x128xbf16, #tpu.memory_space<vmem>>, vector<1x16x21xbf16>
    %854 = vector.shape_cast %853 : vector<1x16x21xbf16> to vector<16x21xbf16>
    %855 = vector.shape_cast %852 : vector<16x21xbf16> to vector<1x16x21xbf16>
    tpu.vector_store %arg5[%c2_483, %c0_484, %c0_485], %855 {strides = array<i32>} : memref<48x16x128xbf16, #tpu.memory_space<vmem>>, vector<1x16x21xbf16>,
    %856 = vector.extract_strided_slice %850 {offsets = [1, 0], sizes = [16, 21], strides = [1, 1]} : vector<19x21xf32> to vector<16x21xf32>
    %857 = arith.truncf %856 : vector<16x21xf32> to vector<16x21xbf16>
    %c6_486 = arith.constant 6 : index
    %c0_487 = arith.constant 0 : index
    %c0_488 = arith.constant 0 : index
    %858 = vector.load %arg5[%c6_486, %c0_487, %c0_488] : memref<48x16x128xbf16, #tpu.memory_space<vmem>>, vector<1x16x21xbf16>
    %859 = vector.shape_cast %858 : vector<1x16x21xbf16> to vector<16x21xbf16>
    %860 = vector.shape_cast %857 : vector<16x21xbf16> to vector<1x16x21xbf16>
    tpu.vector_store %arg5[%c6_486, %c0_487, %c0_488], %860 {strides = array<i32>} : memref<48x16x128xbf16, #tpu.memory_space<vmem>>, vector<1x16x21xbf16>,
    %861 = vector.extract_strided_slice %850 {offsets = [2, 0], sizes = [16, 21], strides = [1, 1]} : vector<19x21xf32> to vector<16x21xf32>
    %862 = arith.truncf %861 : vector<16x21xf32> to vector<16x21xbf16>
    %c10_489 = arith.constant 10 : index
    %c0_490 = arith.constant 0 : index
    %c0_491 = arith.constant 0 : index
    %863 = vector.load %arg5[%c10_489, %c0_490, %c0_491] : memref<48x16x128xbf16, #tpu.memory_space<vmem>>, vector<1x16x21xbf16>
    %864 = vector.shape_cast %863 : vector<1x16x21xbf16> to vector<16x21xbf16>
    %865 = vector.shape_cast %862 : vector<16x21xbf16> to vector<1x16x21xbf16>
    tpu.vector_store %arg5[%c10_489, %c0_490, %c0_491], %865 {strides = array<i32>} : memref<48x16x128xbf16, #tpu.memory_space<vmem>>, vector<1x16x21xbf16>,
    %866 = vector.extract_strided_slice %850 {offsets = [3, 0], sizes = [16, 21], strides = [1, 1]} : vector<19x21xf32> to vector<16x21xf32>
    %867 = arith.truncf %866 : vector<16x21xf32> to vector<16x21xbf16>
    %c14_492 = arith.constant 14 : index
    %c0_493 = arith.constant 0 : index
    %c0_494 = arith.constant 0 : index
    %868 = vector.load %arg5[%c14_492, %c0_493, %c0_494] : memref<48x16x128xbf16, #tpu.memory_space<vmem>>, vector<1x16x21xbf16>
    %869 = vector.shape_cast %868 : vector<1x16x21xbf16> to vector<16x21xbf16>
    %870 = vector.shape_cast %867 : vector<16x21xbf16> to vector<1x16x21xbf16>
    tpu.vector_store %arg5[%c14_492, %c0_493, %c0_494], %870 {strides = array<i32>} : memref<48x16x128xbf16, #tpu.memory_space<vmem>>, vector<1x16x21xbf16>,
    %871 = vector.extract_strided_slice %807 {offsets = [0, 3], sizes = [19, 21], strides = [1, 1]} : vector<19x24xf32> to vector<19x21xf32>
    %872 = vector.extract_strided_slice %871 {offsets = [0, 0], sizes = [16, 21], strides = [1, 1]} : vector<19x21xf32> to vector<16x21xf32>
    %873 = arith.truncf %872 : vector<16x21xf32> to vector<16x21xbf16>
    %c3_495 = arith.constant 3 : index
    %c0_496 = arith.constant 0 : index
    %c0_497 = arith.constant 0 : index
    %874 = vector.load %arg5[%c3_495, %c0_496, %c0_497] : memref<48x16x128xbf16, #tpu.memory_space<vmem>>, vector<1x16x21xbf16>
    %875 = vector.shape_cast %874 : vector<1x16x21xbf16> to vector<16x21xbf16>
    %876 = vector.shape_cast %873 : vector<16x21xbf16> to vector<1x16x21xbf16>
    tpu.vector_store %arg5[%c3_495, %c0_496, %c0_497], %876 {strides = array<i32>} : memref<48x16x128xbf16, #tpu.memory_space<vmem>>, vector<1x16x21xbf16>,
    %877 = vector.extract_strided_slice %871 {offsets = [1, 0], sizes = [16, 21], strides = [1, 1]} : vector<19x21xf32> to vector<16x21xf32>
    %878 = arith.truncf %877 : vector<16x21xf32> to vector<16x21xbf16>
    %c7_498 = arith.constant 7 : index
    %c0_499 = arith.constant 0 : index
    %c0_500 = arith.constant 0 : index
    %879 = vector.load %arg5[%c7_498, %c0_499, %c0_500] : memref<48x16x128xbf16, #tpu.memory_space<vmem>>, vector<1x16x21xbf16>
    %880 = vector.shape_cast %879 : vector<1x16x21xbf16> to vector<16x21xbf16>
    %881 = vector.shape_cast %878 : vector<16x21xbf16> to vector<1x16x21xbf16>
    tpu.vector_store %arg5[%c7_498, %c0_499, %c0_500], %881 {strides = array<i32>} : memref<48x16x128xbf16, #tpu.memory_space<vmem>>, vector<1x16x21xbf16>,
    %882 = vector.extract_strided_slice %871 {offsets = [2, 0], sizes = [16, 21], strides = [1, 1]} : vector<19x21xf32> to vector<16x21xf32>
    %883 = arith.truncf %882 : vector<16x21xf32> to vector<16x21xbf16>
    %c11_501 = arith.constant 11 : index
    %c0_502 = arith.constant 0 : index
    %c0_503 = arith.constant 0 : index
    %884 = vector.load %arg5[%c11_501, %c0_502, %c0_503] : memref<48x16x128xbf16, #tpu.memory_space<vmem>>, vector<1x16x21xbf16>
    %885 = vector.shape_cast %884 : vector<1x16x21xbf16> to vector<16x21xbf16>
    %886 = vector.shape_cast %883 : vector<16x21xbf16> to vector<1x16x21xbf16>
    tpu.vector_store %arg5[%c11_501, %c0_502, %c0_503], %886 {strides = array<i32>} : memref<48x16x128xbf16, #tpu.memory_space<vmem>>, vector<1x16x21xbf16>,
    %887 = vector.extract_strided_slice %871 {offsets = [3, 0], sizes = [16, 21], strides = [1, 1]} : vector<19x21xf32> to vector<16x21xf32>
    %888 = arith.truncf %887 : vector<16x21xf32> to vector<16x21xbf16>
    %c15_504 = arith.constant 15 : index
    %c0_505 = arith.constant 0 : index
    %c0_506 = arith.constant 0 : index
    %889 = vector.load %arg5[%c15_504, %c0_505, %c0_506] : memref<48x16x128xbf16, #tpu.memory_space<vmem>>, vector<1x16x21xbf16>
    %890 = vector.shape_cast %889 : vector<1x16x21xbf16> to vector<16x21xbf16>
    %891 = vector.shape_cast %888 : vector<16x21xbf16> to vector<1x16x21xbf16>
    tpu.vector_store %arg5[%c15_504, %c0_505, %c0_506], %891 {strides = array<i32>} : memref<48x16x128xbf16, #tpu.memory_space<vmem>>, vector<1x16x21xbf16>,
    %c1_507 = arith.constant 1 : index
    %c1_508 = arith.constant 1 : index
    %c16_509 = arith.constant 16 : index
    %c0_510 = arith.constant 0 : index
    %892 = vector.load %arg1[%c1_507, %c1_508, %c16_509, %c0_510] : memref<2x3x35x24xf32, #tpu.memory_space<vmem>>, vector<1x1x19x24xf32>
    %893 = vector.shape_cast %892 : vector<1x1x19x24xf32> to vector<19x24xf32>
    %894 = vector.extract_strided_slice %893 {offsets = [0, 0], sizes = [19, 21], strides = [1, 1]} : vector<19x24xf32> to vector<19x21xf32>
    %895 = vector.extract_strided_slice %894 {offsets = [0, 0], sizes = [16, 21], strides = [1, 1]} : vector<19x21xf32> to vector<16x21xf32>
    %896 = arith.truncf %895 : vector<16x21xf32> to vector<16x21xbf16>
    %c16_511 = arith.constant 16 : index
    %c0_512 = arith.constant 0 : index
    %c0_513 = arith.constant 0 : index
    %897 = vector.load %arg5[%c16_511, %c0_512, %c0_513] : memref<48x16x128xbf16, #tpu.memory_space<vmem>>, vector<1x16x21xbf16>
    %898 = vector.shape_cast %897 : vector<1x16x21xbf16> to vector<16x21xbf16>
    %899 = vector.shape_cast %896 : vector<16x21xbf16> to vector<1x16x21xbf16>
    tpu.vector_store %arg5[%c16_511, %c0_512, %c0_513], %899 {strides = array<i32>} : memref<48x16x128xbf16, #tpu.memory_space<vmem>>, vector<1x16x21xbf16>,
    %900 = vector.extract_strided_slice %894 {offsets = [1, 0], sizes = [16, 21], strides = [1, 1]} : vector<19x21xf32> to vector<16x21xf32>
    %901 = arith.truncf %900 : vector<16x21xf32> to vector<16x21xbf16>
    %c20_514 = arith.constant 20 : index
    %c0_515 = arith.constant 0 : index
    %c0_516 = arith.constant 0 : index
    %902 = vector.load %arg5[%c20_514, %c0_515, %c0_516] : memref<48x16x128xbf16, #tpu.memory_space<vmem>>, vector<1x16x21xbf16>
    %903 = vector.shape_cast %902 : vector<1x16x21xbf16> to vector<16x21xbf16>
    %904 = vector.shape_cast %901 : vector<16x21xbf16> to vector<1x16x21xbf16>
    tpu.vector_store %arg5[%c20_514, %c0_515, %c0_516], %904 {strides = array<i32>} : memref<48x16x128xbf16, #tpu.memory_space<vmem>>, vector<1x16x21xbf16>,
    %905 = vector.extract_strided_slice %894 {offsets = [2, 0], sizes = [16, 21], strides = [1, 1]} : vector<19x21xf32> to vector<16x21xf32>
    %906 = arith.truncf %905 : vector<16x21xf32> to vector<16x21xbf16>
    %c24_517 = arith.constant 24 : index
    %c0_518 = arith.constant 0 : index
    %c0_519 = arith.constant 0 : index
    %907 = vector.load %arg5[%c24_517, %c0_518, %c0_519] : memref<48x16x128xbf16, #tpu.memory_space<vmem>>, vector<1x16x21xbf16>
    %908 = vector.shape_cast %907 : vector<1x16x21xbf16> to vector<16x21xbf16>
    %909 = vector.shape_cast %906 : vector<16x21xbf16> to vector<1x16x21xbf16>
    tpu.vector_store %arg5[%c24_517, %c0_518, %c0_519], %909 {strides = array<i32>} : memref<48x16x128xbf16, #tpu.memory_space<vmem>>, vector<1x16x21xbf16>,
    %910 = vector.extract_strided_slice %894 {offsets = [3, 0], sizes = [16, 21], strides = [1, 1]} : vector<19x21xf32> to vector<16x21xf32>
    %911 = arith.truncf %910 : vector<16x21xf32> to vector<16x21xbf16>
    %c28_520 = arith.constant 28 : index
    %c0_521 = arith.constant 0 : index
    %c0_522 = arith.constant 0 : index
    %912 = vector.load %arg5[%c28_520, %c0_521, %c0_522] : memref<48x16x128xbf16, #tpu.memory_space<vmem>>, vector<1x16x21xbf16>
    %913 = vector.shape_cast %912 : vector<1x16x21xbf16> to vector<16x21xbf16>
    %914 = vector.shape_cast %911 : vector<16x21xbf16> to vector<1x16x21xbf16>
    tpu.vector_store %arg5[%c28_520, %c0_521, %c0_522], %914 {strides = array<i32>} : memref<48x16x128xbf16, #tpu.memory_space<vmem>>, vector<1x16x21xbf16>,
    %915 = vector.extract_strided_slice %893 {offsets = [0, 1], sizes = [19, 21], strides = [1, 1]} : vector<19x24xf32> to vector<19x21xf32>
    %916 = vector.extract_strided_slice %915 {offsets = [0, 0], sizes = [16, 21], strides = [1, 1]} : vector<19x21xf32> to vector<16x21xf32>
    %917 = arith.truncf %916 : vector<16x21xf32> to vector<16x21xbf16>
    %c17_523 = arith.constant 17 : index
    %c0_524 = arith.constant 0 : index
    %c0_525 = arith.constant 0 : index
    %918 = vector.load %arg5[%c17_523, %c0_524, %c0_525] : memref<48x16x128xbf16, #tpu.memory_space<vmem>>, vector<1x16x21xbf16>
    %919 = vector.shape_cast %918 : vector<1x16x21xbf16> to vector<16x21xbf16>
    %920 = vector.shape_cast %917 : vector<16x21xbf16> to vector<1x16x21xbf16>
    tpu.vector_store %arg5[%c17_523, %c0_524, %c0_525], %920 {strides = array<i32>} : memref<48x16x128xbf16, #tpu.memory_space<vmem>>, vector<1x16x21xbf16>,
    %921 = vector.extract_strided_slice %915 {offsets = [1, 0], sizes = [16, 21], strides = [1, 1]} : vector<19x21xf32> to vector<16x21xf32>
    %922 = arith.truncf %921 : vector<16x21xf32> to vector<16x21xbf16>
    %c21_526 = arith.constant 21 : index
    %c0_527 = arith.constant 0 : index
    %c0_528 = arith.constant 0 : index
    %923 = vector.load %arg5[%c21_526, %c0_527, %c0_528] : memref<48x16x128xbf16, #tpu.memory_space<vmem>>, vector<1x16x21xbf16>
    %924 = vector.shape_cast %923 : vector<1x16x21xbf16> to vector<16x21xbf16>
    %925 = vector.shape_cast %922 : vector<16x21xbf16> to vector<1x16x21xbf16>
    tpu.vector_store %arg5[%c21_526, %c0_527, %c0_528], %925 {strides = array<i32>} : memref<48x16x128xbf16, #tpu.memory_space<vmem>>, vector<1x16x21xbf16>,
    %926 = vector.extract_strided_slice %915 {offsets = [2, 0], sizes = [16, 21], strides = [1, 1]} : vector<19x21xf32> to vector<16x21xf32>
    %927 = arith.truncf %926 : vector<16x21xf32> to vector<16x21xbf16>
    %c25_529 = arith.constant 25 : index
    %c0_530 = arith.constant 0 : index
    %c0_531 = arith.constant 0 : index
    %928 = vector.load %arg5[%c25_529, %c0_530, %c0_531] : memref<48x16x128xbf16, #tpu.memory_space<vmem>>, vector<1x16x21xbf16>
    %929 = vector.shape_cast %928 : vector<1x16x21xbf16> to vector<16x21xbf16>
    %930 = vector.shape_cast %927 : vector<16x21xbf16> to vector<1x16x21xbf16>
    tpu.vector_store %arg5[%c25_529, %c0_530, %c0_531], %930 {strides = array<i32>} : memref<48x16x128xbf16, #tpu.memory_space<vmem>>, vector<1x16x21xbf16>,
    %931 = vector.extract_strided_slice %915 {offsets = [3, 0], sizes = [16, 21], strides = [1, 1]} : vector<19x21xf32> to vector<16x21xf32>
    %932 = arith.truncf %931 : vector<16x21xf32> to vector<16x21xbf16>
    %c29_532 = arith.constant 29 : index
    %c0_533 = arith.constant 0 : index
    %c0_534 = arith.constant 0 : index
    %933 = vector.load %arg5[%c29_532, %c0_533, %c0_534] : memref<48x16x128xbf16, #tpu.memory_space<vmem>>, vector<1x16x21xbf16>
    %934 = vector.shape_cast %933 : vector<1x16x21xbf16> to vector<16x21xbf16>
    %935 = vector.shape_cast %932 : vector<16x21xbf16> to vector<1x16x21xbf16>
    tpu.vector_store %arg5[%c29_532, %c0_533, %c0_534], %935 {strides = array<i32>} : memref<48x16x128xbf16, #tpu.memory_space<vmem>>, vector<1x16x21xbf16>,
    %936 = vector.extract_strided_slice %893 {offsets = [0, 2], sizes = [19, 21], strides = [1, 1]} : vector<19x24xf32> to vector<19x21xf32>
    %937 = vector.extract_strided_slice %936 {offsets = [0, 0], sizes = [16, 21], strides = [1, 1]} : vector<19x21xf32> to vector<16x21xf32>
    %938 = arith.truncf %937 : vector<16x21xf32> to vector<16x21xbf16>
    %c18_535 = arith.constant 18 : index
    %c0_536 = arith.constant 0 : index
    %c0_537 = arith.constant 0 : index
    %939 = vector.load %arg5[%c18_535, %c0_536, %c0_537] : memref<48x16x128xbf16, #tpu.memory_space<vmem>>, vector<1x16x21xbf16>
    %940 = vector.shape_cast %939 : vector<1x16x21xbf16> to vector<16x21xbf16>
    %941 = vector.shape_cast %938 : vector<16x21xbf16> to vector<1x16x21xbf16>
    tpu.vector_store %arg5[%c18_535, %c0_536, %c0_537], %941 {strides = array<i32>} : memref<48x16x128xbf16, #tpu.memory_space<vmem>>, vector<1x16x21xbf16>,
    %942 = vector.extract_strided_slice %936 {offsets = [1, 0], sizes = [16, 21], strides = [1, 1]} : vector<19x21xf32> to vector<16x21xf32>
    %943 = arith.truncf %942 : vector<16x21xf32> to vector<16x21xbf16>
    %c22_538 = arith.constant 22 : index
    %c0_539 = arith.constant 0 : index
    %c0_540 = arith.constant 0 : index
    %944 = vector.load %arg5[%c22_538, %c0_539, %c0_540] : memref<48x16x128xbf16, #tpu.memory_space<vmem>>, vector<1x16x21xbf16>
    %945 = vector.shape_cast %944 : vector<1x16x21xbf16> to vector<16x21xbf16>
    %946 = vector.shape_cast %943 : vector<16x21xbf16> to vector<1x16x21xbf16>
    tpu.vector_store %arg5[%c22_538, %c0_539, %c0_540], %946 {strides = array<i32>} : memref<48x16x128xbf16, #tpu.memory_space<vmem>>, vector<1x16x21xbf16>,
    %947 = vector.extract_strided_slice %936 {offsets = [2, 0], sizes = [16, 21], strides = [1, 1]} : vector<19x21xf32> to vector<16x21xf32>
    %948 = arith.truncf %947 : vector<16x21xf32> to vector<16x21xbf16>
    %c26_541 = arith.constant 26 : index
    %c0_542 = arith.constant 0 : index
    %c0_543 = arith.constant 0 : index
    %949 = vector.load %arg5[%c26_541, %c0_542, %c0_543] : memref<48x16x128xbf16, #tpu.memory_space<vmem>>, vector<1x16x21xbf16>
    %950 = vector.shape_cast %949 : vector<1x16x21xbf16> to vector<16x21xbf16>
    %951 = vector.shape_cast %948 : vector<16x21xbf16> to vector<1x16x21xbf16>
    tpu.vector_store %arg5[%c26_541, %c0_542, %c0_543], %951 {strides = array<i32>} : memref<48x16x128xbf16, #tpu.memory_space<vmem>>, vector<1x16x21xbf16>,
    %952 = vector.extract_strided_slice %936 {offsets = [3, 0], sizes = [16, 21], strides = [1, 1]} : vector<19x21xf32> to vector<16x21xf32>
    %953 = arith.truncf %952 : vector<16x21xf32> to vector<16x21xbf16>
    %c30_544 = arith.constant 30 : index
    %c0_545 = arith.constant 0 : index
    %c0_546 = arith.constant 0 : index
    %954 = vector.load %arg5[%c30_544, %c0_545, %c0_546] : memref<48x16x128xbf16, #tpu.memory_space<vmem>>, vector<1x16x21xbf16>
    %955 = vector.shape_cast %954 : vector<1x16x21xbf16> to vector<16x21xbf16>
    %956 = vector.shape_cast %953 : vector<16x21xbf16> to vector<1x16x21xbf16>
    tpu.vector_store %arg5[%c30_544, %c0_545, %c0_546], %956 {strides = array<i32>} : memref<48x16x128xbf16, #tpu.memory_space<vmem>>, vector<1x16x21xbf16>,
    %957 = vector.extract_strided_slice %893 {offsets = [0, 3], sizes = [19, 21], strides = [1, 1]} : vector<19x24xf32> to vector<19x21xf32>
    %958 = vector.extract_strided_slice %957 {offsets = [0, 0], sizes = [16, 21], strides = [1, 1]} : vector<19x21xf32> to vector<16x21xf32>
    %959 = arith.truncf %958 : vector<16x21xf32> to vector<16x21xbf16>
    %c19_547 = arith.constant 19 : index
    %c0_548 = arith.constant 0 : index
    %c0_549 = arith.constant 0 : index
    %960 = vector.load %arg5[%c19_547, %c0_548, %c0_549] : memref<48x16x128xbf16, #tpu.memory_space<vmem>>, vector<1x16x21xbf16>
    %961 = vector.shape_cast %960 : vector<1x16x21xbf16> to vector<16x21xbf16>
    %962 = vector.shape_cast %959 : vector<16x21xbf16> to vector<1x16x21xbf16>
    tpu.vector_store %arg5[%c19_547, %c0_548, %c0_549], %962 {strides = array<i32>} : memref<48x16x128xbf16, #tpu.memory_space<vmem>>, vector<1x16x21xbf16>,
    %963 = vector.extract_strided_slice %957 {offsets = [1, 0], sizes = [16, 21], strides = [1, 1]} : vector<19x21xf32> to vector<16x21xf32>
    %964 = arith.truncf %963 : vector<16x21xf32> to vector<16x21xbf16>
    %c23_550 = arith.constant 23 : index
    %c0_551 = arith.constant 0 : index
    %c0_552 = arith.constant 0 : index
    %965 = vector.load %arg5[%c23_550, %c0_551, %c0_552] : memref<48x16x128xbf16, #tpu.memory_space<vmem>>, vector<1x16x21xbf16>
    %966 = vector.shape_cast %965 : vector<1x16x21xbf16> to vector<16x21xbf16>
    %967 = vector.shape_cast %964 : vector<16x21xbf16> to vector<1x16x21xbf16>
    tpu.vector_store %arg5[%c23_550, %c0_551, %c0_552], %967 {strides = array<i32>} : memref<48x16x128xbf16, #tpu.memory_space<vmem>>, vector<1x16x21xbf16>,
    %968 = vector.extract_strided_slice %957 {offsets = [2, 0], sizes = [16, 21], strides = [1, 1]} : vector<19x21xf32> to vector<16x21xf32>
    %969 = arith.truncf %968 : vector<16x21xf32> to vector<16x21xbf16>
    %c27_553 = arith.constant 27 : index
    %c0_554 = arith.constant 0 : index
    %c0_555 = arith.constant 0 : index
    %970 = vector.load %arg5[%c27_553, %c0_554, %c0_555] : memref<48x16x128xbf16, #tpu.memory_space<vmem>>, vector<1x16x21xbf16>
    %971 = vector.shape_cast %970 : vector<1x16x21xbf16> to vector<16x21xbf16>
    %972 = vector.shape_cast %969 : vector<16x21xbf16> to vector<1x16x21xbf16>
    tpu.vector_store %arg5[%c27_553, %c0_554, %c0_555], %972 {strides = array<i32>} : memref<48x16x128xbf16, #tpu.memory_space<vmem>>, vector<1x16x21xbf16>,
    %973 = vector.extract_strided_slice %957 {offsets = [3, 0], sizes = [16, 21], strides = [1, 1]} : vector<19x21xf32> to vector<16x21xf32>
    %974 = arith.truncf %973 : vector<16x21xf32> to vector<16x21xbf16>
    %c31_556 = arith.constant 31 : index
    %c0_557 = arith.constant 0 : index
    %c0_558 = arith.constant 0 : index
    %975 = vector.load %arg5[%c31_556, %c0_557, %c0_558] : memref<48x16x128xbf16, #tpu.memory_space<vmem>>, vector<1x16x21xbf16>
    %976 = vector.shape_cast %975 : vector<1x16x21xbf16> to vector<16x21xbf16>
    %977 = vector.shape_cast %974 : vector<16x21xbf16> to vector<1x16x21xbf16>
    tpu.vector_store %arg5[%c31_556, %c0_557, %c0_558], %977 {strides = array<i32>} : memref<48x16x128xbf16, #tpu.memory_space<vmem>>, vector<1x16x21xbf16>,
    %c1_559 = arith.constant 1 : index
    %c2_560 = arith.constant 2 : index
    %c16_561 = arith.constant 16 : index
    %c0_562 = arith.constant 0 : index
    %978 = vector.load %arg1[%c1_559, %c2_560, %c16_561, %c0_562] : memref<2x3x35x24xf32, #tpu.memory_space<vmem>>, vector<1x1x19x24xf32>
    %979 = vector.shape_cast %978 : vector<1x1x19x24xf32> to vector<19x24xf32>
    %980 = vector.extract_strided_slice %979 {offsets = [0, 0], sizes = [19, 21], strides = [1, 1]} : vector<19x24xf32> to vector<19x21xf32>
    %981 = vector.extract_strided_slice %980 {offsets = [0, 0], sizes = [16, 21], strides = [1, 1]} : vector<19x21xf32> to vector<16x21xf32>
    %982 = arith.truncf %981 : vector<16x21xf32> to vector<16x21xbf16>
    %c32_563 = arith.constant 32 : index
    %c0_564 = arith.constant 0 : index
    %c0_565 = arith.constant 0 : index
    %983 = vector.load %arg5[%c32_563, %c0_564, %c0_565] : memref<48x16x128xbf16, #tpu.memory_space<vmem>>, vector<1x16x21xbf16>
    %984 = vector.shape_cast %983 : vector<1x16x21xbf16> to vector<16x21xbf16>
    %985 = vector.shape_cast %982 : vector<16x21xbf16> to vector<1x16x21xbf16>
    tpu.vector_store %arg5[%c32_563, %c0_564, %c0_565], %985 {strides = array<i32>} : memref<48x16x128xbf16, #tpu.memory_space<vmem>>, vector<1x16x21xbf16>,
    %986 = vector.extract_strided_slice %980 {offsets = [1, 0], sizes = [16, 21], strides = [1, 1]} : vector<19x21xf32> to vector<16x21xf32>
    %987 = arith.truncf %986 : vector<16x21xf32> to vector<16x21xbf16>
    %c36_566 = arith.constant 36 : index
    %c0_567 = arith.constant 0 : index
    %c0_568 = arith.constant 0 : index
    %988 = vector.load %arg5[%c36_566, %c0_567, %c0_568] : memref<48x16x128xbf16, #tpu.memory_space<vmem>>, vector<1x16x21xbf16>
    %989 = vector.shape_cast %988 : vector<1x16x21xbf16> to vector<16x21xbf16>
    %990 = vector.shape_cast %987 : vector<16x21xbf16> to vector<1x16x21xbf16>
    tpu.vector_store %arg5[%c36_566, %c0_567, %c0_568], %990 {strides = array<i32>} : memref<48x16x128xbf16, #tpu.memory_space<vmem>>, vector<1x16x21xbf16>,
    %991 = vector.extract_strided_slice %980 {offsets = [2, 0], sizes = [16, 21], strides = [1, 1]} : vector<19x21xf32> to vector<16x21xf32>
    %992 = arith.truncf %991 : vector<16x21xf32> to vector<16x21xbf16>
    %c40_569 = arith.constant 40 : index
    %c0_570 = arith.constant 0 : index
    %c0_571 = arith.constant 0 : index
    %993 = vector.load %arg5[%c40_569, %c0_570, %c0_571] : memref<48x16x128xbf16, #tpu.memory_space<vmem>>, vector<1x16x21xbf16>
    %994 = vector.shape_cast %993 : vector<1x16x21xbf16> to vector<16x21xbf16>
    %995 = vector.shape_cast %992 : vector<16x21xbf16> to vector<1x16x21xbf16>
    tpu.vector_store %arg5[%c40_569, %c0_570, %c0_571], %995 {strides = array<i32>} : memref<48x16x128xbf16, #tpu.memory_space<vmem>>, vector<1x16x21xbf16>,
    %996 = vector.extract_strided_slice %980 {offsets = [3, 0], sizes = [16, 21], strides = [1, 1]} : vector<19x21xf32> to vector<16x21xf32>
    %997 = arith.truncf %996 : vector<16x21xf32> to vector<16x21xbf16>
    %c44_572 = arith.constant 44 : index
    %c0_573 = arith.constant 0 : index
    %c0_574 = arith.constant 0 : index
    %998 = vector.load %arg5[%c44_572, %c0_573, %c0_574] : memref<48x16x128xbf16, #tpu.memory_space<vmem>>, vector<1x16x21xbf16>
    %999 = vector.shape_cast %998 : vector<1x16x21xbf16> to vector<16x21xbf16>
    %1000 = vector.shape_cast %997 : vector<16x21xbf16> to vector<1x16x21xbf16>
    tpu.vector_store %arg5[%c44_572, %c0_573, %c0_574], %1000 {strides = array<i32>} : memref<48x16x128xbf16, #tpu.memory_space<vmem>>, vector<1x16x21xbf16>,
    %1001 = vector.extract_strided_slice %979 {offsets = [0, 1], sizes = [19, 21], strides = [1, 1]} : vector<19x24xf32> to vector<19x21xf32>
    %1002 = vector.extract_strided_slice %1001 {offsets = [0, 0], sizes = [16, 21], strides = [1, 1]} : vector<19x21xf32> to vector<16x21xf32>
    %1003 = arith.truncf %1002 : vector<16x21xf32> to vector<16x21xbf16>
    %c33_575 = arith.constant 33 : index
    %c0_576 = arith.constant 0 : index
    %c0_577 = arith.constant 0 : index
    %1004 = vector.load %arg5[%c33_575, %c0_576, %c0_577] : memref<48x16x128xbf16, #tpu.memory_space<vmem>>, vector<1x16x21xbf16>
    %1005 = vector.shape_cast %1004 : vector<1x16x21xbf16> to vector<16x21xbf16>
    %1006 = vector.shape_cast %1003 : vector<16x21xbf16> to vector<1x16x21xbf16>
    tpu.vector_store %arg5[%c33_575, %c0_576, %c0_577], %1006 {strides = array<i32>} : memref<48x16x128xbf16, #tpu.memory_space<vmem>>, vector<1x16x21xbf16>,
    %1007 = vector.extract_strided_slice %1001 {offsets = [1, 0], sizes = [16, 21], strides = [1, 1]} : vector<19x21xf32> to vector<16x21xf32>
    %1008 = arith.truncf %1007 : vector<16x21xf32> to vector<16x21xbf16>
    %c37_578 = arith.constant 37 : index
    %c0_579 = arith.constant 0 : index
    %c0_580 = arith.constant 0 : index
    %1009 = vector.load %arg5[%c37_578, %c0_579, %c0_580] : memref<48x16x128xbf16, #tpu.memory_space<vmem>>, vector<1x16x21xbf16>
    %1010 = vector.shape_cast %1009 : vector<1x16x21xbf16> to vector<16x21xbf16>
    %1011 = vector.shape_cast %1008 : vector<16x21xbf16> to vector<1x16x21xbf16>
    tpu.vector_store %arg5[%c37_578, %c0_579, %c0_580], %1011 {strides = array<i32>} : memref<48x16x128xbf16, #tpu.memory_space<vmem>>, vector<1x16x21xbf16>,
    %1012 = vector.extract_strided_slice %1001 {offsets = [2, 0], sizes = [16, 21], strides = [1, 1]} : vector<19x21xf32> to vector<16x21xf32>
    %1013 = arith.truncf %1012 : vector<16x21xf32> to vector<16x21xbf16>
    %c41_581 = arith.constant 41 : index
    %c0_582 = arith.constant 0 : index
    %c0_583 = arith.constant 0 : index
    %1014 = vector.load %arg5[%c41_581, %c0_582, %c0_583] : memref<48x16x128xbf16, #tpu.memory_space<vmem>>, vector<1x16x21xbf16>
    %1015 = vector.shape_cast %1014 : vector<1x16x21xbf16> to vector<16x21xbf16>
    %1016 = vector.shape_cast %1013 : vector<16x21xbf16> to vector<1x16x21xbf16>
    tpu.vector_store %arg5[%c41_581, %c0_582, %c0_583], %1016 {strides = array<i32>} : memref<48x16x128xbf16, #tpu.memory_space<vmem>>, vector<1x16x21xbf16>,
    %1017 = vector.extract_strided_slice %1001 {offsets = [3, 0], sizes = [16, 21], strides = [1, 1]} : vector<19x21xf32> to vector<16x21xf32>
    %1018 = arith.truncf %1017 : vector<16x21xf32> to vector<16x21xbf16>
    %c45_584 = arith.constant 45 : index
    %c0_585 = arith.constant 0 : index
    %c0_586 = arith.constant 0 : index
    %1019 = vector.load %arg5[%c45_584, %c0_585, %c0_586] : memref<48x16x128xbf16, #tpu.memory_space<vmem>>, vector<1x16x21xbf16>
    %1020 = vector.shape_cast %1019 : vector<1x16x21xbf16> to vector<16x21xbf16>
    %1021 = vector.shape_cast %1018 : vector<16x21xbf16> to vector<1x16x21xbf16>
    tpu.vector_store %arg5[%c45_584, %c0_585, %c0_586], %1021 {strides = array<i32>} : memref<48x16x128xbf16, #tpu.memory_space<vmem>>, vector<1x16x21xbf16>,
    %1022 = vector.extract_strided_slice %979 {offsets = [0, 2], sizes = [19, 21], strides = [1, 1]} : vector<19x24xf32> to vector<19x21xf32>
    %1023 = vector.extract_strided_slice %1022 {offsets = [0, 0], sizes = [16, 21], strides = [1, 1]} : vector<19x21xf32> to vector<16x21xf32>
    %1024 = arith.truncf %1023 : vector<16x21xf32> to vector<16x21xbf16>
    %c34_587 = arith.constant 34 : index
    %c0_588 = arith.constant 0 : index
    %c0_589 = arith.constant 0 : index
    %1025 = vector.load %arg5[%c34_587, %c0_588, %c0_589] : memref<48x16x128xbf16, #tpu.memory_space<vmem>>, vector<1x16x21xbf16>
    %1026 = vector.shape_cast %1025 : vector<1x16x21xbf16> to vector<16x21xbf16>
    %1027 = vector.shape_cast %1024 : vector<16x21xbf16> to vector<1x16x21xbf16>
    tpu.vector_store %arg5[%c34_587, %c0_588, %c0_589], %1027 {strides = array<i32>} : memref<48x16x128xbf16, #tpu.memory_space<vmem>>, vector<1x16x21xbf16>,
    %1028 = vector.extract_strided_slice %1022 {offsets = [1, 0], sizes = [16, 21], strides = [1, 1]} : vector<19x21xf32> to vector<16x21xf32>
    %1029 = arith.truncf %1028 : vector<16x21xf32> to vector<16x21xbf16>
    %c38_590 = arith.constant 38 : index
    %c0_591 = arith.constant 0 : index
    %c0_592 = arith.constant 0 : index
    %1030 = vector.load %arg5[%c38_590, %c0_591, %c0_592] : memref<48x16x128xbf16, #tpu.memory_space<vmem>>, vector<1x16x21xbf16>
    %1031 = vector.shape_cast %1030 : vector<1x16x21xbf16> to vector<16x21xbf16>
    %1032 = vector.shape_cast %1029 : vector<16x21xbf16> to vector<1x16x21xbf16>
    tpu.vector_store %arg5[%c38_590, %c0_591, %c0_592], %1032 {strides = array<i32>} : memref<48x16x128xbf16, #tpu.memory_space<vmem>>, vector<1x16x21xbf16>,
    %1033 = vector.extract_strided_slice %1022 {offsets = [2, 0], sizes = [16, 21], strides = [1, 1]} : vector<19x21xf32> to vector<16x21xf32>
    %1034 = arith.truncf %1033 : vector<16x21xf32> to vector<16x21xbf16>
    %c42_593 = arith.constant 42 : index
    %c0_594 = arith.constant 0 : index
    %c0_595 = arith.constant 0 : index
    %1035 = vector.load %arg5[%c42_593, %c0_594, %c0_595] : memref<48x16x128xbf16, #tpu.memory_space<vmem>>, vector<1x16x21xbf16>
    %1036 = vector.shape_cast %1035 : vector<1x16x21xbf16> to vector<16x21xbf16>
    %1037 = vector.shape_cast %1034 : vector<16x21xbf16> to vector<1x16x21xbf16>
    tpu.vector_store %arg5[%c42_593, %c0_594, %c0_595], %1037 {strides = array<i32>} : memref<48x16x128xbf16, #tpu.memory_space<vmem>>, vector<1x16x21xbf16>,
    %1038 = vector.extract_strided_slice %1022 {offsets = [3, 0], sizes = [16, 21], strides = [1, 1]} : vector<19x21xf32> to vector<16x21xf32>
    %1039 = arith.truncf %1038 : vector<16x21xf32> to vector<16x21xbf16>
    %c46_596 = arith.constant 46 : index
    %c0_597 = arith.constant 0 : index
    %c0_598 = arith.constant 0 : index
    %1040 = vector.load %arg5[%c46_596, %c0_597, %c0_598] : memref<48x16x128xbf16, #tpu.memory_space<vmem>>, vector<1x16x21xbf16>
    %1041 = vector.shape_cast %1040 : vector<1x16x21xbf16> to vector<16x21xbf16>
    %1042 = vector.shape_cast %1039 : vector<16x21xbf16> to vector<1x16x21xbf16>
    tpu.vector_store %arg5[%c46_596, %c0_597, %c0_598], %1042 {strides = array<i32>} : memref<48x16x128xbf16, #tpu.memory_space<vmem>>, vector<1x16x21xbf16>,
    %1043 = vector.extract_strided_slice %979 {offsets = [0, 3], sizes = [19, 21], strides = [1, 1]} : vector<19x24xf32> to vector<19x21xf32>
    %1044 = vector.extract_strided_slice %1043 {offsets = [0, 0], sizes = [16, 21], strides = [1, 1]} : vector<19x21xf32> to vector<16x21xf32>
    %1045 = arith.truncf %1044 : vector<16x21xf32> to vector<16x21xbf16>
    %c35_599 = arith.constant 35 : index
    %c0_600 = arith.constant 0 : index
    %c0_601 = arith.constant 0 : index
    %1046 = vector.load %arg5[%c35_599, %c0_600, %c0_601] : memref<48x16x128xbf16, #tpu.memory_space<vmem>>, vector<1x16x21xbf16>
    %1047 = vector.shape_cast %1046 : vector<1x16x21xbf16> to vector<16x21xbf16>
    %1048 = vector.shape_cast %1045 : vector<16x21xbf16> to vector<1x16x21xbf16>
    tpu.vector_store %arg5[%c35_599, %c0_600, %c0_601], %1048 {strides = array<i32>} : memref<48x16x128xbf16, #tpu.memory_space<vmem>>, vector<1x16x21xbf16>,
    %1049 = vector.extract_strided_slice %1043 {offsets = [1, 0], sizes = [16, 21], strides = [1, 1]} : vector<19x21xf32> to vector<16x21xf32>
    %1050 = arith.truncf %1049 : vector<16x21xf32> to vector<16x21xbf16>
    %c39_602 = arith.constant 39 : index
    %c0_603 = arith.constant 0 : index
    %c0_604 = arith.constant 0 : index
    %1051 = vector.load %arg5[%c39_602, %c0_603, %c0_604] : memref<48x16x128xbf16, #tpu.memory_space<vmem>>, vector<1x16x21xbf16>
    %1052 = vector.shape_cast %1051 : vector<1x16x21xbf16> to vector<16x21xbf16>
    %1053 = vector.shape_cast %1050 : vector<16x21xbf16> to vector<1x16x21xbf16>
    tpu.vector_store %arg5[%c39_602, %c0_603, %c0_604], %1053 {strides = array<i32>} : memref<48x16x128xbf16, #tpu.memory_space<vmem>>, vector<1x16x21xbf16>,
    %1054 = vector.extract_strided_slice %1043 {offsets = [2, 0], sizes = [16, 21], strides = [1, 1]} : vector<19x21xf32> to vector<16x21xf32>
    %1055 = arith.truncf %1054 : vector<16x21xf32> to vector<16x21xbf16>
    %c43_605 = arith.constant 43 : index
    %c0_606 = arith.constant 0 : index
    %c0_607 = arith.constant 0 : index
    %1056 = vector.load %arg5[%c43_605, %c0_606, %c0_607] : memref<48x16x128xbf16, #tpu.memory_space<vmem>>, vector<1x16x21xbf16>
    %1057 = vector.shape_cast %1056 : vector<1x16x21xbf16> to vector<16x21xbf16>
    %1058 = vector.shape_cast %1055 : vector<16x21xbf16> to vector<1x16x21xbf16>
    tpu.vector_store %arg5[%c43_605, %c0_606, %c0_607], %1058 {strides = array<i32>} : memref<48x16x128xbf16, #tpu.memory_space<vmem>>, vector<1x16x21xbf16>,
    %1059 = vector.extract_strided_slice %1043 {offsets = [3, 0], sizes = [16, 21], strides = [1, 1]} : vector<19x21xf32> to vector<16x21xf32>
    %1060 = arith.truncf %1059 : vector<16x21xf32> to vector<16x21xbf16>
    %c47_608 = arith.constant 47 : index
    %c0_609 = arith.constant 0 : index
    %c0_610 = arith.constant 0 : index
    %1061 = vector.load %arg5[%c47_608, %c0_609, %c0_610] : memref<48x16x128xbf16, #tpu.memory_space<vmem>>, vector<1x16x21xbf16>
    %1062 = vector.shape_cast %1061 : vector<1x16x21xbf16> to vector<16x21xbf16>
    %1063 = vector.shape_cast %1060 : vector<16x21xbf16> to vector<1x16x21xbf16>
    tpu.vector_store %arg5[%c47_608, %c0_609, %c0_610], %1063 {strides = array<i32>} : memref<48x16x128xbf16, #tpu.memory_space<vmem>>, vector<1x16x21xbf16>,
    %c0_611 = arith.constant 0 : index
    %c0_612 = arith.constant 0 : index
    %c0_613 = arith.constant 0 : index
    %1064 = vector.load %arg5[%c0_611, %c0_612, %c0_613] : memref<48x16x128xbf16, #tpu.memory_space<vmem>>, vector<48x16x128xbf16>
    %1065 = vector.shape_cast %1064 : vector<48x16x128xbf16> to vector<48x2048xbf16>
    %c0_614 = arith.constant 0 : index
    %c0_615 = arith.constant 0 : index
    %1066 = vector.load %arg2[%c0_614, %c0_615] : memref<8x48xbf16, #tpu.memory_space<vmem>>, vector<8x48xbf16>
    %cst_616 = arith.constant dense<0.000000e+00> : vector<8x2048xf32>
    %1067 = tpu.matmul %1066, %1065, %cst_616 {dimension_numbers = #tpu.dot_dimension_numbers<[1], [0], [0], [1], [0, 0, 1, 1], [], []>} : vector<8x48xbf16>, vector<48x2048xbf16>, vector<8x2048xf32> -> vector<8x2048xf32>
    %c0_617 = arith.constant 0 : index
    %c0_618 = arith.constant 0 : index
    %1068 = vector.load %arg3[%c0_617, %c0_618] : memref<8x1xf32, #tpu.memory_space<vmem>>, vector<8x1xf32>
    %1069 = vector.broadcast %1068 : vector<8x1xf32> to vector<8x2048xf32>
    %1070 = arith.addf %1067, %1069 : vector<8x2048xf32>
    %c1_619 = arith.constant 1 : index
    %c0_620 = arith.constant 0 : index
    %c2048_621 = arith.constant 2048 : index
    %1071 = vector.load %arg4[%c1_619, %c0_620, %c2048_621] : memref<2x8x4096xf32, #tpu.memory_space<vmem>>, vector<1x8x2048xf32>
    %1072 = vector.shape_cast %1071 : vector<1x8x2048xf32> to vector<8x2048xf32>
    %1073 = vector.shape_cast %1070 : vector<8x2048xf32> to vector<1x8x2048xf32>
    tpu.vector_store %arg4[%c1_619, %c0_620, %c2048_621], %1073 {strides = array<i32>} : memref<2x8x4096xf32, #tpu.memory_space<vmem>>, vector<1x8x2048xf32>,
    return
  }
  func.func @transform_0(%arg0: i32) -> (i32, i32, i32, i32) {
    %c0_i32 = arith.constant 0 : i32
    %c0_i32_0 = arith.constant 0 : i32
    %c0_i32_1 = arith.constant 0 : i32
    %c0_i32_2 = arith.constant 0 : i32
    return %arg0, %c0_i32, %c0_i32_0, %c0_i32_1 : i32, i32, i32, i32
  }
  func.func @transform_1(%arg0: i32) -> (i32, i32) {
    %c0_i32 = arith.constant 0 : i32
    %c0_i32_0 = arith.constant 0 : i32
    %c0_i32_1 = arith.constant 0 : i32
    return %c0_i32, %c0_i32_0 : i32, i32
  }
  func.func @transform_2(%arg0: i32) -> (i32, i32) {
    %c0_i32 = arith.constant 0 : i32
    %c0_i32_0 = arith.constant 0 : i32
    %c0_i32_1 = arith.constant 0 : i32
    return %c0_i32, %c0_i32_0 : i32, i32
  }
  func.func @transform_3(%arg0: i32) -> (i32, i32, i32) {
    %c0_i32 = arith.constant 0 : i32
    %c0_i32_0 = arith.constant 0 : i32
    %c0_i32_1 = arith.constant 0 : i32
    return %arg0, %c0_i32, %c0_i32_0 : i32, i32, i32
  }
}

</mosaic_0001>

<llo_original>
// kernel: tpu_custom_call.1
$region0: #{tpu_custom_call.1}
  #allocation0 [shape = 'u32[]', space=smem, size = 0x4, offset = 0x4, fixed_abs, tag = 'smem constant byte address 0x4 - core index']
  #allocation1 [shape = 'u32[144,128]{1,0:T(1,128)}', space=vmem, size = 0x12000, scoped, tag = 'internal scratch']
  #allocation2 [shape = 'bf16[48,16,128]{2,1,0:T(16,128)(2,1)}', space=vmem, size = 0x30000, scoped, tag = 'scratch operand']
  %s0 = inlined_call_operand.vmem [shape: f32[2,3,35,24], index: 0, kind: input, shape index: {}]
  %s1 = inlined_call_operand.vmem [shape: bf16[8,48], index: 1, kind: input, shape index: {}]
  %s2 = inlined_call_operand.vmem [shape: f32[8,1], index: 2, kind: input, shape index: {}]
  %s3 = inlined_call_operand.hbm [shape: f32[2,8,4096], index: 3, kind: output, shape index: {}]
  %s4 = sld [smem:[#allocation0]]
  $region22: #{tpu_custom_call.1} parent=0
    _
  %s6 = ssub.s32 1, %s4
  %s7 = scalar_select 0, %s6, %s4
  $region1: #{tpu_custom_call.1} parent=0
    #allocation3 [shape = 'u8[262144]{0}', space=vmem, size = 0x40000, scoped, tag = 'output window, operand 0, single buffered']
    #allocation4 [shape = 's32[1]{0}', space=sflag, size = 0x4, scoped, tag = 'scoped memory for tpu_custom_call.1']
    %8 = vsyncpa [#allocation4], 0
    // Predicated region
    $region2: #{tpu_custom_call.1} parent=1 // pred_check
      _
    $region3: #{tpu_custom_call.1} parent=1 // pred_check_branch
      %10 = sbr.rel (0) target = $region5
    $region4: #{tpu_custom_call.1} parent=1 // pred_region
      _
    $region5: #{tpu_custom_call.1} parent=1 // pred_fallthru
      _
    // Predicated region
    $region6: #{tpu_custom_call.1} parent=1 // pred_check
      _
    $region7: #{tpu_custom_call.1} parent=1 // pred_check_branch
      %12 = sbr.rel (0) target = $region9
    $region8: #{tpu_custom_call.1} parent=1 // pred_region
      _
    $region9: #{tpu_custom_call.1} parent=1 // pred_fallthru
      _
    // Predicated region
    $region10: #{tpu_custom_call.1} parent=1 // pred_check
      _
    $region11: #{tpu_custom_call.1} parent=1 // pred_check_branch
      %14 = sbr.rel (0) target = $region13
    $region12: #{tpu_custom_call.1} parent=1 // pred_region
      _
    $region13: #{tpu_custom_call.1} parent=1 // pred_fallthru
      _
    %16 = vst [vmem:[#allocation2] sm:$0xff] 0
    %17 = vst [vmem:[#allocation2 + $0x8] sm:$0xff] 0
    %18 = vst [vmem:[#allocation2 + $0x10] sm:$0xff] 0
    %19 = vst [vmem:[#allocation2 + $0x18] sm:$0xff] 0
    %20 = vst [vmem:[#allocation2 + $0x20] sm:$0xff] 0
    %21 = vst [vmem:[#allocation2 + $0x28] sm:$0xff] 0
    %22 = vst [vmem:[#allocation2 + $0x30] sm:$0xff] 0
    %23 = vst [vmem:[#allocation2 + $0x38] sm:$0xff] 0
    %24 = vst [vmem:[#allocation2 + $0x40] sm:$0xff] 0
    %25 = vst [vmem:[#allocation2 + $0x48] sm:$0xff] 0
    %26 = vst [vmem:[#allocation2 + $0x50] sm:$0xff] 0
    %27 = vst [vmem:[#allocation2 + $0x58] sm:$0xff] 0
    %28 = vst [vmem:[#allocation2 + $0x60] sm:$0xff] 0
    %29 = vst [vmem:[#allocation2 + $0x68] sm:$0xff] 0
    %30 = vst [vmem:[#allocation2 + $0x70] sm:$0xff] 0
    %31 = vst [vmem:[#allocation2 + $0x78] sm:$0xff] 0
    %32 = vst [vmem:[#allocation2 + $0x80] sm:$0xff] 0
    %33 = vst [vmem:[#allocation2 + $0x88] sm:$0xff] 0
    %34 = vst [vmem:[#allocation2 + $0x90] sm:$0xff] 0
    %35 = vst [vmem:[#allocation2 + $0x98] sm:$0xff] 0
    %36 = vst [vmem:[#allocation2 + $0xa0] sm:$0xff] 0
    %37 = vst [vmem:[#allocation2 + $0xa8] sm:$0xff] 0
    %38 = vst [vmem:[#allocation2 + $0xb0] sm:$0xff] 0
    %39 = vst [vmem:[#allocation2 + $0xb8] sm:$0xff] 0
    %40 = vst [vmem:[#allocation2 + $0xc0] sm:$0xff] 0
    %41 = vst [vmem:[#allocation2 + $0xc8] sm:$0xff] 0
    %42 = vst [vmem:[#allocation2 + $0xd0] sm:$0xff] 0
    %43 = vst [vmem:[#allocation2 + $0xd8] sm:$0xff] 0
    %44 = vst [vmem:[#allocation2 + $0xe0] sm:$0xff] 0
    %45 = vst [vmem:[#allocation2 + $0xe8] sm:$0xff] 0
    %46 = vst [vmem:[#allocation2 + $0xf0] sm:$0xff] 0
    %47 = vst [vmem:[#allocation2 + $0xf8] sm:$0xff] 0
    %48 = vst [vmem:[#allocation2 + $0x100] sm:$0xff] 0
    %49 = vst [vmem:[#allocation2 + $0x108] sm:$0xff] 0
    %50 = vst [vmem:[#allocation2 + $0x110] sm:$0xff] 0
    %51 = vst [vmem:[#allocation2 + $0x118] sm:$0xff] 0
    %52 = vst [vmem:[#allocation2 + $0x120] sm:$0xff] 0
    %53 = vst [vmem:[#allocation2 + $0x128] sm:$0xff] 0
    %54 = vst [vmem:[#allocation2 + $0x130] sm:$0xff] 0
    %55 = vst [vmem:[#allocation2 + $0x138] sm:$0xff] 0
    %56 = vst [vmem:[#allocation2 + $0x140] sm:$0xff] 0
    %57 = vst [vmem:[#allocation2 + $0x148] sm:$0xff] 0
    %58 = vst [vmem:[#allocation2 + $0x150] sm:$0xff] 0
    %59 = vst [vmem:[#allocation2 + $0x158] sm:$0xff] 0
    %60 = vst [vmem:[#allocation2 + $0x160] sm:$0xff] 0
    %61 = vst [vmem:[#allocation2 + $0x168] sm:$0xff] 0
    %62 = vst [vmem:[#allocation2 + $0x170] sm:$0xff] 0
    %63 = vst [vmem:[#allocation2 + $0x178] sm:$0xff] 0
    %v64 = vld [vmem:[%s0] sm:$0xff]
    %v65 = vld [vmem:[%s0 + $0x8] sm:$0xff]
    %v66 = vld [vmem:[%s0 + $0x10] sm:$0x7]
    %v67 = vpack.c.bf16 %v65, %v64
    %vm68 = vcmask 171008
    %69 = vst.msk [vmem:[#allocation2] sm:$0xff] %vm68, %v67
    %v70 = vpack.c.bf16 %v66, %v66
    %vm71 = vsmask.f32 7424
    %v73 = vshrl.u32 %v67, 16
    %v75 = vshll.u32 %v67, 16
    %v77 = vrot.slane %v75, 1
    %v78 = vor.u32 %v73, %v77
    %v80 = vshll.u32 %v70, 16
    %v82 = vrot.slane %v80, 1
    %v83 = vsel %vm71, %v78, %v82
    %s85 = scalar_lea.vmem [#allocation2], 32
    %86 = vst.msk [vmem:[%s85] sm:$0xff] %vm68, %v83
    %vm89 = vcmask 1046528
    %v90 = vrot.slane %v67, 1
    %v91 = vrot.slane %v70, 1
    %v92 = vsel %vm89, %v90, %v91
    %s94 = scalar_lea.vmem [#allocation2], 64
    %95 = vst.msk [vmem:[%s94] sm:$0xff] %vm68, %v92
    %vm96 = vsmask.f32 6400
    %v97 = vrot.slane %v73, 1
    %v98 = vrot.slane %v75, 2
    %v99 = vor.u32 %v97, %v98
    %v100 = vshrl.u32 %v70, 16
    %v102 = vrot.slane %v100, 1
    %v103 = vrot.slane %v80, 2
    %v104 = vor.u32 %v102, %v103
    %v105 = vsel %vm96, %v99, %v104
    %s107 = scalar_lea.vmem [#allocation2], 96
    %108 = vst.msk [vmem:[%s107] sm:$0xff] %vm68, %v105
    %109 = vrot.lane.b32.xlu0 %v67, 127
    %v110 = vpop.permute.xlu0 %109
    %s112 = scalar_lea.vmem [#allocation2], 8
    %113 = vst.msk [vmem:[%s112] sm:$0xff] %vm68, %v110
    %114 = vrot.lane.b32.xlu0 %v83, 127
    %v115 = vpop.permute.xlu0 %114
    %s117 = scalar_lea.vmem [#allocation2], 40
    %118 = vst.msk [vmem:[%s117] sm:$0xff] %vm68, %v115
    %119 = vrot.lane.b32.xlu0 %v92, 127
    %v120 = vpop.permute.xlu0 %119
    %s122 = scalar_lea.vmem [#allocation2], 72
    %123 = vst.msk [vmem:[%s122] sm:$0xff] %vm68, %v120
    %124 = vrot.lane.b32.xlu0 %v105, 127
    %v125 = vpop.permute.xlu0 %124
    %s127 = scalar_lea.vmem [#allocation2], 104
    %128 = vst.msk [vmem:[%s127] sm:$0xff] %vm68, %v125
    %129 = vrot.lane.b32.xlu0 %v67, 126
    %v130 = vpop.permute.xlu0 %129
    %s132 = scalar_lea.vmem [#allocation2], 16
    %133 = vst.msk [vmem:[%s132] sm:$0xff] %vm68, %v130
    %134 = vrot.lane.b32.xlu0 %v83, 126
    %v135 = vpop.permute.xlu0 %134
    %s137 = scalar_lea.vmem [#allocation2], 48
    %138 = vst.msk [vmem:[%s137] sm:$0xff] %vm68, %v135
    %139 = vrot.lane.b32.xlu0 %v92, 126
    %v140 = vpop.permute.xlu0 %139
    %s142 = scalar_lea.vmem [#allocation2], 80
    %143 = vst.msk [vmem:[%s142] sm:$0xff] %vm68, %v140
    %144 = vrot.lane.b32.xlu0 %v105, 126
    %v145 = vpop.permute.xlu0 %144
    %s147 = scalar_lea.vmem [#allocation2], 112
    %148 = vst.msk [vmem:[%s147] sm:$0xff] %vm68, %v145
    %149 = vrot.lane.b32.xlu0 %v67, 125
    %v150 = vpop.permute.xlu0 %149
    %s152 = scalar_lea.vmem [#allocation2], 24
    %153 = vst.msk [vmem:[%s152] sm:$0xff] %vm68, %v150
    %154 = vrot.lane.b32.xlu0 %v83, 125
    %v155 = vpop.permute.xlu0 %154
    %s157 = scalar_lea.vmem [#allocation2], 56
    %158 = vst.msk [vmem:[%s157] sm:$0xff] %vm68, %v155
    %159 = vrot.lane.b32.xlu0 %v92, 125
    %v160 = vpop.permute.xlu0 %159
    %s162 = scalar_lea.vmem [#allocation2], 88
    %163 = vst.msk [vmem:[%s162] sm:$0xff] %vm68, %v160
    %164 = vrot.lane.b32.xlu0 %v105, 125
    %v165 = vpop.permute.xlu0 %164
    %s167 = scalar_lea.vmem [#allocation2], 120
    %168 = vst.msk [vmem:[%s167] sm:$0xff] %vm68, %v165
    %s169 = scalar_lea.vmem %s0, 40
    %v170 = vld [vmem:[%s169] sm:$0xff]
    %v171 = vld [vmem:[%s169 + $0x8] sm:$0xff]
    %v172 = vld [vmem:[%s169 + $0x10] sm:$0x7]
    %v173 = vpack.c.bf16 %v171, %v170
    %s174 = scalar_lea.vmem [#allocation2], 128
    %175 = vst.msk [vmem:[%s174] sm:$0xff] %vm68, %v173
    %v176 = vpack.c.bf16 %v172, %v172
    %v178 = vshrl.u32 %v173, 16
    %v180 = vshll.u32 %v173, 16
    %v182 = vrot.slane %v180, 1
    %v183 = vor.u32 %v178, %v182
    %v185 = vshll.u32 %v176, 16
    %v187 = vrot.slane %v185, 1
    %v188 = vsel %vm71, %v183, %v187
    %s190 = scalar_lea.vmem [#allocation2], 160
    %191 = vst.msk [vmem:[%s190] sm:$0xff] %vm68, %v188
    %v194 = vrot.slane %v173, 1
    %v195 = vrot.slane %v176, 1
    %v196 = vsel %vm89, %v194, %v195
    %s198 = scalar_lea.vmem [#allocation2], 192
    %199 = vst.msk [vmem:[%s198] sm:$0xff] %vm68, %v196
    %v200 = vrot.slane %v178, 1
    %v201 = vrot.slane %v180, 2
    %v202 = vor.u32 %v200, %v201
    %v203 = vshrl.u32 %v176, 16
    %v205 = vrot.slane %v203, 1
    %v206 = vrot.slane %v185, 2
    %v207 = vor.u32 %v205, %v206
    %v208 = vsel %vm96, %v202, %v207
    %s210 = scalar_lea.vmem [#allocation2], 224
    %211 = vst.msk [vmem:[%s210] sm:$0xff] %vm68, %v208
    %212 = vrot.lane.b32.xlu0 %v173, 127
    %v213 = vpop.permute.xlu0 %212
    %s215 = scalar_lea.vmem [#allocation2], 136
    %216 = vst.msk [vmem:[%s215] sm:$0xff] %vm68, %v213
    %217 = vrot.lane.b32.xlu0 %v188, 127
    %v218 = vpop.permute.xlu0 %217
    %s220 = scalar_lea.vmem [#allocation2], 168
    %221 = vst.msk [vmem:[%s220] sm:$0xff] %vm68, %v218
    %222 = vrot.lane.b32.xlu0 %v196, 127
    %v223 = vpop.permute.xlu0 %222
    %s225 = scalar_lea.vmem [#allocation2], 200
    %226 = vst.msk [vmem:[%s225] sm:$0xff] %vm68, %v223
    %227 = vrot.lane.b32.xlu0 %v208, 127
    %v228 = vpop.permute.xlu0 %227
    %s230 = scalar_lea.vmem [#allocation2], 232
    %231 = vst.msk [vmem:[%s230] sm:$0xff] %vm68, %v228
    %232 = vrot.lane.b32.xlu0 %v173, 126
    %v233 = vpop.permute.xlu0 %232
    %s235 = scalar_lea.vmem [#allocation2], 144
    %236 = vst.msk [vmem:[%s235] sm:$0xff] %vm68, %v233
    %237 = vrot.lane.b32.xlu0 %v188, 126
    %v238 = vpop.permute.xlu0 %237
    %s240 = scalar_lea.vmem [#allocation2], 176
    %241 = vst.msk [vmem:[%s240] sm:$0xff] %vm68, %v238
    %242 = vrot.lane.b32.xlu0 %v196, 126
    %v243 = vpop.permute.xlu0 %242
    %s245 = scalar_lea.vmem [#allocation2], 208
    %246 = vst.msk [vmem:[%s245] sm:$0xff] %vm68, %v243
    %247 = vrot.lane.b32.xlu0 %v208, 126
    %v248 = vpop.permute.xlu0 %247
    %s250 = scalar_lea.vmem [#allocation2], 240
    %251 = vst.msk [vmem:[%s250] sm:$0xff] %vm68, %v248
    %252 = vrot.lane.b32.xlu0 %v173, 125
    %v253 = vpop.permute.xlu0 %252
    %s255 = scalar_lea.vmem [#allocation2], 152
    %256 = vst.msk [vmem:[%s255] sm:$0xff] %vm68, %v253
    %257 = vrot.lane.b32.xlu0 %v188, 125
    %v258 = vpop.permute.xlu0 %257
    %s260 = scalar_lea.vmem [#allocation2], 184
    %261 = vst.msk [vmem:[%s260] sm:$0xff] %vm68, %v258
    %262 = vrot.lane.b32.xlu0 %v196, 125
    %v263 = vpop.permute.xlu0 %262
    %s265 = scalar_lea.vmem [#allocation2], 216
    %266 = vst.msk [vmem:[%s265] sm:$0xff] %vm68, %v263
    %267 = vrot.lane.b32.xlu0 %v208, 125
    %v268 = vpop.permute.xlu0 %267
    %s270 = scalar_lea.vmem [#allocation2], 248
    %271 = vst.msk [vmem:[%s270] sm:$0xff] %vm68, %v268
    %s272 = scalar_lea.vmem %s0, 80
    %v273 = vld [vmem:[%s272] sm:$0xff]
    %v274 = vld [vmem:[%s272 + $0x8] sm:$0xff]
    %v275 = vld [vmem:[%s272 + $0x10] sm:$0x7]
    %v276 = vpack.c.bf16 %v274, %v273
    %s277 = scalar_lea.vmem [#allocation2], 256
    %278 = vst.msk [vmem:[%s277] sm:$0xff] %vm68, %v276
    %v279 = vpack.c.bf16 %v275, %v275
    %v281 = vshrl.u32 %v276, 16
    %v283 = vshll.u32 %v276, 16
    %v285 = vrot.slane %v283, 1
    %v286 = vor.u32 %v281, %v285
    %v288 = vshll.u32 %v279, 16
    %v290 = vrot.slane %v288, 1
    %v291 = vsel %vm71, %v286, %v290
    %s293 = scalar_lea.vmem [#allocation2], 288
    %294 = vst.msk [vmem:[%s293] sm:$0xff] %vm68, %v291
    %v297 = vrot.slane %v276, 1
    %v298 = vrot.slane %v279, 1
    %v299 = vsel %vm89, %v297, %v298
    %s301 = scalar_lea.vmem [#allocation2], 320
    %302 = vst.msk [vmem:[%s301] sm:$0xff] %vm68, %v299
    %v303 = vrot.slane %v281, 1
    %v304 = vrot.slane %v283, 2
    %v305 = vor.u32 %v303, %v304
    %v306 = vshrl.u32 %v279, 16
    %v308 = vrot.slane %v306, 1
    %v309 = vrot.slane %v288, 2
    %v310 = vor.u32 %v308, %v309
    %v311 = vsel %vm96, %v305, %v310
    %s313 = scalar_lea.vmem [#allocation2], 352
    %314 = vst.msk [vmem:[%s313] sm:$0xff] %vm68, %v311
    %315 = vrot.lane.b32.xlu0 %v276, 127
    %v316 = vpop.permute.xlu0 %315
    %s318 = scalar_lea.vmem [#allocation2], 264
    %319 = vst.msk [vmem:[%s318] sm:$0xff] %vm68, %v316
    %320 = vrot.lane.b32.xlu0 %v291, 127
    %v321 = vpop.permute.xlu0 %320
    %s323 = scalar_lea.vmem [#allocation2], 296
    %324 = vst.msk [vmem:[%s323] sm:$0xff] %vm68, %v321
    %325 = vrot.lane.b32.xlu0 %v299, 127
    %v326 = vpop.permute.xlu0 %325
    %s328 = scalar_lea.vmem [#allocation2], 328
    %329 = vst.msk [vmem:[%s328] sm:$0xff] %vm68, %v326
    %330 = vrot.lane.b32.xlu0 %v311, 127
    %v331 = vpop.permute.xlu0 %330
    %s333 = scalar_lea.vmem [#allocation2], 360
    %334 = vst.msk [vmem:[%s333] sm:$0xff] %vm68, %v331
    %335 = vrot.lane.b32.xlu0 %v276, 126
    %v336 = vpop.permute.xlu0 %335
    %s338 = scalar_lea.vmem [#allocation2], 272
    %339 = vst.msk [vmem:[%s338] sm:$0xff] %vm68, %v336
    %340 = vrot.lane.b32.xlu0 %v291, 126
    %v341 = vpop.permute.xlu0 %340
    %s343 = scalar_lea.vmem [#allocation2], 304
    %344 = vst.msk [vmem:[%s343] sm:$0xff] %vm68, %v341
    %345 = vrot.lane.b32.xlu0 %v299, 126
    %v346 = vpop.permute.xlu0 %345
    %s348 = scalar_lea.vmem [#allocation2], 336
    %349 = vst.msk [vmem:[%s348] sm:$0xff] %vm68, %v346
    %350 = vrot.lane.b32.xlu0 %v311, 126
    %v351 = vpop.permute.xlu0 %350
    %s353 = scalar_lea.vmem [#allocation2], 368
    %354 = vst.msk [vmem:[%s353] sm:$0xff] %vm68, %v351
    %355 = vrot.lane.b32.xlu0 %v276, 125
    %v356 = vpop.permute.xlu0 %355
    %s358 = scalar_lea.vmem [#allocation2], 280
    %359 = vst.msk [vmem:[%s358] sm:$0xff] %vm68, %v356
    %360 = vrot.lane.b32.xlu0 %v291, 125
    %v361 = vpop.permute.xlu0 %360
    %s363 = scalar_lea.vmem [#allocation2], 312
    %364 = vst.msk [vmem:[%s363] sm:$0xff] %vm68, %v361
    %365 = vrot.lane.b32.xlu0 %v299, 125
    %v366 = vpop.permute.xlu0 %365
    %s368 = scalar_lea.vmem [#allocation2], 344
    %369 = vst.msk [vmem:[%s368] sm:$0xff] %vm68, %v366
    %370 = vrot.lane.b32.xlu0 %v311, 125
    %v371 = vpop.permute.xlu0 %370
    %s373 = scalar_lea.vmem [#allocation2], 376
    %374 = vst.msk [vmem:[%s373] sm:$0xff] %vm68, %v371
    %v375 = vld [vmem:[#allocation2] sm:$0xff]
    %v376 = vld [vmem:[#allocation2 + $0x8] sm:$0xff]
    %v377 = vld [vmem:[#allocation2 + $0x10] sm:$0xff]
    %v378 = vld [vmem:[#allocation2 + $0x18] sm:$0xff]
    %v379 = vld [vmem:[#allocation2 + $0x20] sm:$0xff]
    %v380 = vld [vmem:[#allocation2 + $0x28] sm:$0xff]
    %v381 = vld [vmem:[#allocation2 + $0x30] sm:$0xff]
    %v382 = vld [vmem:[#allocation2 + $0x38] sm:$0xff]
    %v383 = vld [vmem:[#allocation2 + $0x40] sm:$0xff]
    %v384 = vld [vmem:[#allocation2 + $0x48] sm:$0xff]
    %v385 = vld [vmem:[#allocation2 + $0x50] sm:$0xff]
    %v386 = vld [vmem:[#allocation2 + $0x58] sm:$0xff]
    %v387 = vld [vmem:[#allocation2 + $0x60] sm:$0xff]
    %v388 = vld [vmem:[#allocation2 + $0x68] sm:$0xff]
    %v389 = vld [vmem:[#allocation2 + $0x70] sm:$0xff]
    %v390 = vld [vmem:[#allocation2 + $0x78] sm:$0xff]
    %v391 = vld [vmem:[#allocation2 + $0x80] sm:$0xff]
    %v392 = vld [vmem:[#allocation2 + $0x88] sm:$0xff]
    %v393 = vld [vmem:[#allocation2 + $0x90] sm:$0xff]
    %v394 = vld [vmem:[#allocation2 + $0x98] sm:$0xff]
    %v395 = vld [vmem:[#allocation2 + $0xa0] sm:$0xff]
    %v396 = vld [vmem:[#allocation2 + $0xa8] sm:$0xff]
    %v397 = vld [vmem:[#allocation2 + $0xb0] sm:$0xff]
    %v398 = vld [vmem:[#allocation2 + $0xb8] sm:$0xff]
    %v399 = vld [vmem:[#allocation2 + $0xc0] sm:$0xff]
    %v400 = vld [vmem:[#allocation2 + $0xc8] sm:$0xff]
    %v401 = vld [vmem:[#allocation2 + $0xd0] sm:$0xff]
    %v402 = vld [vmem:[#allocation2 + $0xd8] sm:$0xff]
    %v403 = vld [vmem:[#allocation2 + $0xe0] sm:$0xff]
    %v404 = vld [vmem:[#allocation2 + $0xe8] sm:$0xff]
    %v405 = vld [vmem:[#allocation2 + $0xf0] sm:$0xff]
    %v406 = vld [vmem:[#allocation2 + $0xf8] sm:$0xff]
    %v407 = vld [vmem:[#allocation2 + $0x100] sm:$0xff]
    %v408 = vld [vmem:[#allocation2 + $0x108] sm:$0xff]
    %v409 = vld [vmem:[#allocation2 + $0x110] sm:$0xff]
    %v410 = vld [vmem:[#allocation2 + $0x118] sm:$0xff]
    %v411 = vld [vmem:[#allocation2 + $0x120] sm:$0xff]
    %v412 = vld [vmem:[#allocation2 + $0x128] sm:$0xff]
    %v413 = vld [vmem:[#allocation2 + $0x130] sm:$0xff]
    %v414 = vld [vmem:[#allocation2 + $0x138] sm:$0xff]
    %v415 = vld [vmem:[#allocation2 + $0x140] sm:$0xff]
    %v416 = vld [vmem:[#allocation2 + $0x148] sm:$0xff]
    %v417 = vld [vmem:[#allocation2 + $0x150] sm:$0xff]
    %v418 = vld [vmem:[#allocation2 + $0x158] sm:$0xff]
    %v419 = vld [vmem:[#allocation2 + $0x160] sm:$0xff]
    %v420 = vld [vmem:[#allocation2 + $0x168] sm:$0xff]
    %v421 = vld [vmem:[#allocation2 + $0x170] sm:$0xff]
    %v422 = vld [vmem:[#allocation2 + $0x178] sm:$0xff]
    %v423 = vcombine.low %v375, %v379
    %v424 = vcombine.high %v375, %v379
    %v426 = vunpack.c.l.s4 1983009808
    %v427 = vunpack.c.0.s8 %v426
    %v428 = vlaneseq
    %v429 = vshrl.u32 %v428, 7
    %v430 = vsub.s32 %v427, %v429
    %v431 = vrot.slane %v423, %v430
    %v433 = vunpack.c.l.s4 1983009808
    %v434 = vunpack.c.0.s8 %v433
    %v435 = vlaneseq
    %v436 = vshrl.u32 %v435, 7
    %v437 = vsub.s32 %v434, %v436
    %v438 = vrot.slane %v424, %v437
    %v439 = vcombine.low %v377, %v381
    %v440 = vcombine.high %v377, %v381
    %v442 = vunpack.c.l.s4 1983009808
    %v443 = vunpack.c.0.s8 %v442
    %v444 = vlaneseq
    %v445 = vshrl.u32 %v444, 7
    %v446 = vsub.s32 %v443, %v445
    %v447 = vrot.slane %v439, %v446
    %v449 = vunpack.c.l.s4 1983009808
    %v450 = vunpack.c.0.s8 %v449
    %v451 = vlaneseq
    %v452 = vshrl.u32 %v451, 7
    %v453 = vsub.s32 %v450, %v452
    %v454 = vrot.slane %v440, %v453
    %v455 = vcombine.low %v383, %v387
    %v456 = vcombine.high %v383, %v387
    %v458 = vunpack.c.l.s4 1983009808
    %v459 = vunpack.c.0.s8 %v458
    %v460 = vlaneseq
    %v461 = vshrl.u32 %v460, 7
    %v462 = vsub.s32 %v459, %v461
    %v463 = vrot.slane %v455, %v462
    %v465 = vunpack.c.l.s4 1983009808
    %v466 = vunpack.c.0.s8 %v465
    %v467 = vlaneseq
    %v468 = vshrl.u32 %v467, 7
    %v469 = vsub.s32 %v466, %v468
    %v470 = vrot.slane %v456, %v469
    %v471 = vcombine.low %v385, %v389
    %v472 = vcombine.high %v385, %v389
    %v474 = vunpack.c.l.s4 1983009808
    %v475 = vunpack.c.0.s8 %v474
    %v476 = vlaneseq
    %v477 = vshrl.u32 %v476, 7
    %v478 = vsub.s32 %v475, %v477
    %v479 = vrot.slane %v471, %v478
    %v481 = vunpack.c.l.s4 1983009808
    %v482 = vunpack.c.0.s8 %v481
    %v483 = vlaneseq
    %v484 = vshrl.u32 %v483, 7
    %v485 = vsub.s32 %v482, %v484
    %v486 = vrot.slane %v472, %v485
    %v487 = vcombine.low %v431, %v447
    %v488 = vcombine.high %v431, %v447
    %v490 = vunpack.c.l.s4 1934713408
    %v491 = vunpack.c.0.s8 %v490
    %v492 = vlaneseq
    %v493 = vshrl.u32 %v492, 7
    %v494 = vsub.s32 %v491, %v493
    %v495 = vrot.slane %v487, %v494
    %v497 = vunpack.c.l.s4 1934713408
    %v498 = vunpack.c.0.s8 %v497
    %v499 = vlaneseq
    %v500 = vshrl.u32 %v499, 7
    %v501 = vsub.s32 %v498, %v500
    %v502 = vrot.slane %v488, %v501
    %v503 = vcombine.low %v438, %v454
    %v504 = vcombine.high %v438, %v454
    %v506 = vunpack.c.l.s4 1934713408
    %v507 = vunpack.c.0.s8 %v506
    %v508 = vlaneseq
    %v509 = vshrl.u32 %v508, 7
    %v510 = vsub.s32 %v507, %v509
    %v511 = vrot.slane %v503, %v510
    %v513 = vunpack.c.l.s4 1934713408
    %v514 = vunpack.c.0.s8 %v513
    %v515 = vlaneseq
    %v516 = vshrl.u32 %v515, 7
    %v517 = vsub.s32 %v514, %v516
    %v518 = vrot.slane %v504, %v517
    %v519 = vcombine.low %v463, %v479
    %v520 = vcombine.high %v463, %v479
    %v522 = vunpack.c.l.s4 1934713408
    %v523 = vunpack.c.0.s8 %v522
    %v524 = vlaneseq
    %v525 = vshrl.u32 %v524, 7
    %v526 = vsub.s32 %v523, %v525
    %v527 = vrot.slane %v519, %v526
    %v529 = vunpack.c.l.s4 1934713408
    %v530 = vunpack.c.0.s8 %v529
    %v531 = vlaneseq
    %v532 = vshrl.u32 %v531, 7
    %v533 = vsub.s32 %v530, %v532
    %v534 = vrot.slane %v520, %v533
    %v535 = vcombine.low %v470, %v486
    %v536 = vcombine.high %v470, %v486
    %v538 = vunpack.c.l.s4 1934713408
    %v539 = vunpack.c.0.s8 %v538
    %v540 = vlaneseq
    %v541 = vshrl.u32 %v540, 7
    %v542 = vsub.s32 %v539, %v541
    %v543 = vrot.slane %v535, %v542
    %v545 = vunpack.c.l.s4 1934713408
    %v546 = vunpack.c.0.s8 %v545
    %v547 = vlaneseq
    %v548 = vshrl.u32 %v547, 7
    %v549 = vsub.s32 %v546, %v548
    %v550 = vrot.slane %v536, %v549
    %v551 = vcombine.low %v495, %v527
    %v552 = vcombine.high %v495, %v527
    %v553 = vcombine.low %v502, %v534
    %v554 = vcombine.high %v502, %v534
    %v555 = vcombine.low %v511, %v543
    %v556 = vcombine.high %v511, %v543
    %v557 = vcombine.low %v518, %v550
    %v558 = vcombine.high %v518, %v550
    %v559 = vcombine.low %v376, %v380
    %v560 = vcombine.high %v376, %v380
    %v562 = vunpack.c.l.s4 1983009808
    %v563 = vunpack.c.0.s8 %v562
    %v564 = vlaneseq
    %v565 = vshrl.u32 %v564, 7
    %v566 = vsub.s32 %v563, %v565
    %v567 = vrot.slane %v559, %v566
    %v569 = vunpack.c.l.s4 1983009808
    %v570 = vunpack.c.0.s8 %v569
    %v571 = vlaneseq
    %v572 = vshrl.u32 %v571, 7
    %v573 = vsub.s32 %v570, %v572
    %v574 = vrot.slane %v560, %v573
    %v575 = vcombine.low %v378, %v382
    %v576 = vcombine.high %v378, %v382
    %v578 = vunpack.c.l.s4 1983009808
    %v579 = vunpack.c.0.s8 %v578
    %v580 = vlaneseq
    %v581 = vshrl.u32 %v580, 7
    %v582 = vsub.s32 %v579, %v581
    %v583 = vrot.slane %v575, %v582
    %v585 = vunpack.c.l.s4 1983009808
    %v586 = vunpack.c.0.s8 %v585
    %v587 = vlaneseq
    %v588 = vshrl.u32 %v587, 7
    %v589 = vsub.s32 %v586, %v588
    %v590 = vrot.slane %v576, %v589
    %v591 = vcombine.low %v384, %v388
    %v592 = vcombine.high %v384, %v388
    %v594 = vunpack.c.l.s4 1983009808
    %v595 = vunpack.c.0.s8 %v594
    %v596 = vlaneseq
    %v597 = vshrl.u32 %v596, 7
    %v598 = vsub.s32 %v595, %v597
    %v599 = vrot.slane %v591, %v598
    %v601 = vunpack.c.l.s4 1983009808
    %v602 = vunpack.c.0.s8 %v601
    %v603 = vlaneseq
    %v604 = vshrl.u32 %v603, 7
    %v605 = vsub.s32 %v602, %v604
    %v606 = vrot.slane %v592, %v605
    %v607 = vcombine.low %v386, %v390
    %v608 = vcombine.high %v386, %v390
    %v610 = vunpack.c.l.s4 1983009808
    %v611 = vunpack.c.0.s8 %v610
    %v612 = vlaneseq
    %v613 = vshrl.u32 %v612, 7
    %v614 = vsub.s32 %v611, %v613
    %v615 = vrot.slane %v607, %v614
    %v617 = vunpack.c.l.s4 1983009808
    %v618 = vunpack.c.0.s8 %v617
    %v619 = vlaneseq
    %v620 = vshrl.u32 %v619, 7
    %v621 = vsub.s32 %v618, %v620
    %v622 = vrot.slane %v608, %v621
    %v623 = vcombine.low %v567, %v583
    %v624 = vcombine.high %v567, %v583
    %v626 = vunpack.c.l.s4 1934713408
    %v627 = vunpack.c.0.s8 %v626
    %v628 = vlaneseq
    %v629 = vshrl.u32 %v628, 7
    %v630 = vsub.s32 %v627, %v629
    %v631 = vrot.slane %v623, %v630
    %v633 = vunpack.c.l.s4 1934713408
    %v634 = vunpack.c.0.s8 %v633
    %v635 = vlaneseq
    %v636 = vshrl.u32 %v635, 7
    %v637 = vsub.s32 %v634, %v636
    %v638 = vrot.slane %v624, %v637
    %v639 = vcombine.low %v574, %v590
    %v640 = vcombine.high %v574, %v590
    %v642 = vunpack.c.l.s4 1934713408
    %v643 = vunpack.c.0.s8 %v642
    %v644 = vlaneseq
    %v645 = vshrl.u32 %v644, 7
    %v646 = vsub.s32 %v643, %v645
    %v647 = vrot.slane %v639, %v646
    %v649 = vunpack.c.l.s4 1934713408
    %v650 = vunpack.c.0.s8 %v649
    %v651 = vlaneseq
    %v652 = vshrl.u32 %v651, 7
    %v653 = vsub.s32 %v650, %v652
    %v654 = vrot.slane %v640, %v653
    %v655 = vcombine.low %v599, %v615
    %v656 = vcombine.high %v599, %v615
    %v658 = vunpack.c.l.s4 1934713408
    %v659 = vunpack.c.0.s8 %v658
    %v660 = vlaneseq
    %v661 = vshrl.u32 %v660, 7
    %v662 = vsub.s32 %v659, %v661
    %v663 = vrot.slane %v655, %v662
    %v665 = vunpack.c.l.s4 1934713408
    %v666 = vunpack.c.0.s8 %v665
    %v667 = vlaneseq
    %v668 = vshrl.u32 %v667, 7
    %v669 = vsub.s32 %v666, %v668
    %v670 = vrot.slane %v656, %v669
    %v671 = vcombine.low %v606, %v622
    %v672 = vcombine.high %v606, %v622
    %v674 = vunpack.c.l.s4 1934713408
    %v675 = vunpack.c.0.s8 %v674
    %v676 = vlaneseq
    %v677 = vshrl.u32 %v676, 7
    %v678 = vsub.s32 %v675, %v677
    %v679 = vrot.slane %v671, %v678
    %v681 = vunpack.c.l.s4 1934713408
    %v682 = vunpack.c.0.s8 %v681
    %v683 = vlaneseq
    %v684 = vshrl.u32 %v683, 7
    %v685 = vsub.s32 %v682, %v684
    %v686 = vrot.slane %v672, %v685
    %v687 = vcombine.low %v631, %v663
    %v688 = vcombine.high %v631, %v663
    %v689 = vcombine.low %v638, %v670
    %v690 = vcombine.high %v638, %v670
    %v691 = vcombine.low %v647, %v679
    %v692 = vcombine.high %v647, %v679
    %v693 = vcombine.low %v654, %v686
    %v694 = vcombine.high %v654, %v686
    %v695 = vcombine.low %v391, %v395
    %v696 = vcombine.high %v391, %v395
    %v698 = vunpack.c.l.s4 1983009808
    %v699 = vunpack.c.0.s8 %v698
    %v700 = vlaneseq
    %v701 = vshrl.u32 %v700, 7
    %v702 = vsub.s32 %v699, %v701
    %v703 = vrot.slane %v695, %v702
    %v705 = vunpack.c.l.s4 1983009808
    %v706 = vunpack.c.0.s8 %v705
    %v707 = vlaneseq
    %v708 = vshrl.u32 %v707, 7
    %v709 = vsub.s32 %v706, %v708
    %v710 = vrot.slane %v696, %v709
    %v711 = vcombine.low %v393, %v397
    %v712 = vcombine.high %v393, %v397
    %v714 = vunpack.c.l.s4 1983009808
    %v715 = vunpack.c.0.s8 %v714
    %v716 = vlaneseq
    %v717 = vshrl.u32 %v716, 7
    %v718 = vsub.s32 %v715, %v717
    %v719 = vrot.slane %v711, %v718
    %v721 = vunpack.c.l.s4 1983009808
    %v722 = vunpack.c.0.s8 %v721
    %v723 = vlaneseq
    %v724 = vshrl.u32 %v723, 7
    %v725 = vsub.s32 %v722, %v724
    %v726 = vrot.slane %v712, %v725
    %v727 = vcombine.low %v399, %v403
    %v728 = vcombine.high %v399, %v403
    %v730 = vunpack.c.l.s4 1983009808
    %v731 = vunpack.c.0.s8 %v730
    %v732 = vlaneseq
    %v733 = vshrl.u32 %v732, 7
    %v734 = vsub.s32 %v731, %v733
    %v735 = vrot.slane %v727, %v734
    %v737 = vunpack.c.l.s4 1983009808
    %v738 = vunpack.c.0.s8 %v737
    %v739 = vlaneseq
    %v740 = vshrl.u32 %v739, 7
    %v741 = vsub.s32 %v738, %v740
    %v742 = vrot.slane %v728, %v741
    %v743 = vcombine.low %v401, %v405
    %v744 = vcombine.high %v401, %v405
    %v746 = vunpack.c.l.s4 1983009808
    %v747 = vunpack.c.0.s8 %v746
    %v748 = vlaneseq
    %v749 = vshrl.u32 %v748, 7
    %v750 = vsub.s32 %v747, %v749
    %v751 = vrot.slane %v743, %v750
    %v753 = vunpack.c.l.s4 1983009808
    %v754 = vunpack.c.0.s8 %v753
    %v755 = vlaneseq
    %v756 = vshrl.u32 %v755, 7
    %v757 = vsub.s32 %v754, %v756
    %v758 = vrot.slane %v744, %v757
    %v759 = vcombine.low %v703, %v719
    %v760 = vcombine.high %v703, %v719
    %v762 = vunpack.c.l.s4 1934713408
    %v763 = vunpack.c.0.s8 %v762
    %v764 = vlaneseq
    %v765 = vshrl.u32 %v764, 7
    %v766 = vsub.s32 %v763, %v765
    %v767 = vrot.slane %v759, %v766
    %v769 = vunpack.c.l.s4 1934713408
    %v770 = vunpack.c.0.s8 %v769
    %v771 = vlaneseq
    %v772 = vshrl.u32 %v771, 7
    %v773 = vsub.s32 %v770, %v772
    %v774 = vrot.slane %v760, %v773
    %v775 = vcombine.low %v710, %v726
    %v776 = vcombine.high %v710, %v726
    %v778 = vunpack.c.l.s4 1934713408
    %v779 = vunpack.c.0.s8 %v778
    %v780 = vlaneseq
    %v781 = vshrl.u32 %v780, 7
    %v782 = vsub.s32 %v779, %v781
    %v783 = vrot.slane %v775, %v782
    %v785 = vunpack.c.l.s4 1934713408
    %v786 = vunpack.c.0.s8 %v785
    %v787 = vlaneseq
    %v788 = vshrl.u32 %v787, 7
    %v789 = vsub.s32 %v786, %v788
    %v790 = vrot.slane %v776, %v789
    %v791 = vcombine.low %v735, %v751
    %v792 = vcombine.high %v735, %v751
    %v794 = vunpack.c.l.s4 1934713408
    %v795 = vunpack.c.0.s8 %v794
    %v796 = vlaneseq
    %v797 = vshrl.u32 %v796, 7
    %v798 = vsub.s32 %v795, %v797
    %v799 = vrot.slane %v791, %v798
    %v801 = vunpack.c.l.s4 1934713408
    %v802 = vunpack.c.0.s8 %v801
    %v803 = vlaneseq
    %v804 = vshrl.u32 %v803, 7
    %v805 = vsub.s32 %v802, %v804
    %v806 = vrot.slane %v792, %v805
    %v807 = vcombine.low %v742, %v758
    %v808 = vcombine.high %v742, %v758
    %v810 = vunpack.c.l.s4 1934713408
    %v811 = vunpack.c.0.s8 %v810
    %v812 = vlaneseq
    %v813 = vshrl.u32 %v812, 7
    %v814 = vsub.s32 %v811, %v813
    %v815 = vrot.slane %v807, %v814
    %v817 = vunpack.c.l.s4 1934713408
    %v818 = vunpack.c.0.s8 %v817
    %v819 = vlaneseq
    %v820 = vshrl.u32 %v819, 7
    %v821 = vsub.s32 %v818, %v820
    %v822 = vrot.slane %v808, %v821
    %v823 = vcombine.low %v767, %v799
    %v824 = vcombine.high %v767, %v799
    %v825 = vcombine.low %v774, %v806
    %v826 = vcombine.high %v774, %v806
    %v827 = vcombine.low %v783, %v815
    %v828 = vcombine.high %v783, %v815
    %v829 = vcombine.low %v790, %v822
    %v830 = vcombine.high %v790, %v822
    %v831 = vcombine.low %v392, %v396
    %v832 = vcombine.high %v392, %v396
    %v834 = vunpack.c.l.s4 1983009808
    %v835 = vunpack.c.0.s8 %v834
    %v836 = vlaneseq
    %v837 = vshrl.u32 %v836, 7
    %v838 = vsub.s32 %v835, %v837
    %v839 = vrot.slane %v831, %v838
    %v841 = vunpack.c.l.s4 1983009808
    %v842 = vunpack.c.0.s8 %v841
    %v843 = vlaneseq
    %v844 = vshrl.u32 %v843, 7
    %v845 = vsub.s32 %v842, %v844
    %v846 = vrot.slane %v832, %v845
    %v847 = vcombine.low %v394, %v398
    %v848 = vcombine.high %v394, %v398
    %v850 = vunpack.c.l.s4 1983009808
    %v851 = vunpack.c.0.s8 %v850
    %v852 = vlaneseq
    %v853 = vshrl.u32 %v852, 7
    %v854 = vsub.s32 %v851, %v853
    %v855 = vrot.slane %v847, %v854
    %v857 = vunpack.c.l.s4 1983009808
    %v858 = vunpack.c.0.s8 %v857
    %v859 = vlaneseq
    %v860 = vshrl.u32 %v859, 7
    %v861 = vsub.s32 %v858, %v860
    %v862 = vrot.slane %v848, %v861
    %v863 = vcombine.low %v400, %v404
    %v864 = vcombine.high %v400, %v404
    %v866 = vunpack.c.l.s4 1983009808
    %v867 = vunpack.c.0.s8 %v866
    %v868 = vlaneseq
    %v869 = vshrl.u32 %v868, 7
    %v870 = vsub.s32 %v867, %v869
    %v871 = vrot.slane %v863, %v870
    %v873 = vunpack.c.l.s4 1983009808
    %v874 = vunpack.c.0.s8 %v873
    %v875 = vlaneseq
    %v876 = vshrl.u32 %v875, 7
    %v877 = vsub.s32 %v874, %v876
    %v878 = vrot.slane %v864, %v877
    %v879 = vcombine.low %v402, %v406
    %v880 = vcombine.high %v402, %v406
    %v882 = vunpack.c.l.s4 1983009808
    %v883 = vunpack.c.0.s8 %v882
    %v884 = vlaneseq
    %v885 = vshrl.u32 %v884, 7
    %v886 = vsub.s32 %v883, %v885
    %v887 = vrot.slane %v879, %v886
    %v889 = vunpack.c.l.s4 1983009808
    %v890 = vunpack.c.0.s8 %v889
    %v891 = vlaneseq
    %v892 = vshrl.u32 %v891, 7
    %v893 = vsub.s32 %v890, %v892
    %v894 = vrot.slane %v880, %v893
    %v895 = vcombine.low %v839, %v855
    %v896 = vcombine.high %v839, %v855
    %v898 = vunpack.c.l.s4 1934713408
    %v899 = vunpack.c.0.s8 %v898
    %v900 = vlaneseq
    %v901 = vshrl.u32 %v900, 7
    %v902 = vsub.s32 %v899, %v901
    %v903 = vrot.slane %v895, %v902
    %v905 = vunpack.c.l.s4 1934713408
    %v906 = vunpack.c.0.s8 %v905
    %v907 = vlaneseq
    %v908 = vshrl.u32 %v907, 7
    %v909 = vsub.s32 %v906, %v908
    %v910 = vrot.slane %v896, %v909
    %v911 = vcombine.low %v846, %v862
    %v912 = vcombine.high %v846, %v862
    %v914 = vunpack.c.l.s4 1934713408
    %v915 = vunpack.c.0.s8 %v914
    %v916 = vlaneseq
    %v917 = vshrl.u32 %v916, 7
    %v918 = vsub.s32 %v915, %v917
    %v919 = vrot.slane %v911, %v918
    %v921 = vunpack.c.l.s4 1934713408
    %v922 = vunpack.c.0.s8 %v921
    %v923 = vlaneseq
    %v924 = vshrl.u32 %v923, 7
    %v925 = vsub.s32 %v922, %v924
    %v926 = vrot.slane %v912, %v925
    %v927 = vcombine.low %v871, %v887
    %v928 = vcombine.high %v871, %v887
    %v930 = vunpack.c.l.s4 1934713408
    %v931 = vunpack.c.0.s8 %v930
    %v932 = vlaneseq
    %v933 = vshrl.u32 %v932, 7
    %v934 = vsub.s32 %v931, %v933
    %v935 = vrot.slane %v927, %v934
    %v937 = vunpack.c.l.s4 1934713408
    %v938 = vunpack.c.0.s8 %v937
    %v939 = vlaneseq
    %v940 = vshrl.u32 %v939, 7
    %v941 = vsub.s32 %v938, %v940
    %v942 = vrot.slane %v928, %v941
    %v943 = vcombine.low %v878, %v894
    %v944 = vcombine.high %v878, %v894
    %v946 = vunpack.c.l.s4 1934713408
    %v947 = vunpack.c.0.s8 %v946
    %v948 = vlaneseq
    %v949 = vshrl.u32 %v948, 7
    %v950 = vsub.s32 %v947, %v949
    %v951 = vrot.slane %v943, %v950
    %v953 = vunpack.c.l.s4 1934713408
    %v954 = vunpack.c.0.s8 %v953
    %v955 = vlaneseq
    %v956 = vshrl.u32 %v955, 7
    %v957 = vsub.s32 %v954, %v956
    %v958 = vrot.slane %v944, %v957
    %v959 = vcombine.low %v903, %v935
    %v960 = vcombine.high %v903, %v935
    %v961 = vcombine.low %v910, %v942
    %v962 = vcombine.high %v910, %v942
    %v963 = vcombine.low %v919, %v951
    %v964 = vcombine.high %v919, %v951
    %v965 = vcombine.low %v926, %v958
    %v966 = vcombine.high %v926, %v958
    %v967 = vcombine.low %v407, %v411
    %v968 = vcombine.high %v407, %v411
    %v970 = vunpack.c.l.s4 1983009808
    %v971 = vunpack.c.0.s8 %v970
    %v972 = vlaneseq
    %v973 = vshrl.u32 %v972, 7
    %v974 = vsub.s32 %v971, %v973
    %v975 = vrot.slane %v967, %v974
    %v977 = vunpack.c.l.s4 1983009808
    %v978 = vunpack.c.0.s8 %v977
    %v979 = vlaneseq
    %v980 = vshrl.u32 %v979, 7
    %v981 = vsub.s32 %v978, %v980
    %v982 = vrot.slane %v968, %v981
    %v983 = vcombine.low %v409, %v413
    %v984 = vcombine.high %v409, %v413
    %v986 = vunpack.c.l.s4 1983009808
    %v987 = vunpack.c.0.s8 %v986
    %v988 = vlaneseq
    %v989 = vshrl.u32 %v988, 7
    %v990 = vsub.s32 %v987, %v989
    %v991 = vrot.slane %v983, %v990
    %v993 = vunpack.c.l.s4 1983009808
    %v994 = vunpack.c.0.s8 %v993
    %v995 = vlaneseq
    %v996 = vshrl.u32 %v995, 7
    %v997 = vsub.s32 %v994, %v996
    %v998 = vrot.slane %v984, %v997
    %v999 = vcombine.low %v415, %v419
    %v1000 = vcombine.high %v415, %v419
    %v1002 = vunpack.c.l.s4 1983009808
    %v1003 = vunpack.c.0.s8 %v1002
    %v1004 = vlaneseq
    %v1005 = vshrl.u32 %v1004, 7
    %v1006 = vsub.s32 %v1003, %v1005
    %v1007 = vrot.slane %v999, %v1006
    %v1009 = vunpack.c.l.s4 1983009808
    %v1010 = vunpack.c.0.s8 %v1009
    %v1011 = vlaneseq
    %v1012 = vshrl.u32 %v1011, 7
    %v1013 = vsub.s32 %v1010, %v1012
    %v1014 = vrot.slane %v1000, %v1013
    %v1015 = vcombine.low %v417, %v421
    %v1016 = vcombine.high %v417, %v421
    %v1018 = vunpack.c.l.s4 1983009808
    %v1019 = vunpack.c.0.s8 %v1018
    %v1020 = vlaneseq
    %v1021 = vshrl.u32 %v1020, 7
    %v1022 = vsub.s32 %v1019, %v1021
    %v1023 = vrot.slane %v1015, %v1022
    %v1025 = vunpack.c.l.s4 1983009808
    %v1026 = vunpack.c.0.s8 %v1025
    %v1027 = vlaneseq
    %v1028 = vshrl.u32 %v1027, 7
    %v1029 = vsub.s32 %v1026, %v1028
    %v1030 = vrot.slane %v1016, %v1029
    %v1031 = vcombine.low %v975, %v991
    %v1032 = vcombine.high %v975, %v991
    %v1034 = vunpack.c.l.s4 1934713408
    %v1035 = vunpack.c.0.s8 %v1034
    %v1036 = vlaneseq
    %v1037 = vshrl.u32 %v1036, 7
    %v1038 = vsub.s32 %v1035, %v1037
    %v1039 = vrot.slane %v1031, %v1038
    %v1041 = vunpack.c.l.s4 1934713408
    %v1042 = vunpack.c.0.s8 %v1041
    %v1043 = vlaneseq
    %v1044 = vshrl.u32 %v1043, 7
    %v1045 = vsub.s32 %v1042, %v1044
    %v1046 = vrot.slane %v1032, %v1045
    %v1047 = vcombine.low %v982, %v998
    %v1048 = vcombine.high %v982, %v998
    %v1050 = vunpack.c.l.s4 1934713408
    %v1051 = vunpack.c.0.s8 %v1050
    %v1052 = vlaneseq
    %v1053 = vshrl.u32 %v1052, 7
    %v1054 = vsub.s32 %v1051, %v1053
    %v1055 = vrot.slane %v1047, %v1054
    %v1057 = vunpack.c.l.s4 1934713408
    %v1058 = vunpack.c.0.s8 %v1057
    %v1059 = vlaneseq
    %v1060 = vshrl.u32 %v1059, 7
    %v1061 = vsub.s32 %v1058, %v1060
    %v1062 = vrot.slane %v1048, %v1061
    %v1063 = vcombine.low %v1007, %v1023
    %v1064 = vcombine.high %v1007, %v1023
    %v1066 = vunpack.c.l.s4 1934713408
    %v1067 = vunpack.c.0.s8 %v1066
    %v1068 = vlaneseq
    %v1069 = vshrl.u32 %v1068, 7
    %v1070 = vsub.s32 %v1067, %v1069
    %v1071 = vrot.slane %v1063, %v1070
    %v1073 = vunpack.c.l.s4 1934713408
    %v1074 = vunpack.c.0.s8 %v1073
    %v1075 = vlaneseq
    %v1076 = vshrl.u32 %v1075, 7
    %v1077 = vsub.s32 %v1074, %v1076
    %v1078 = vrot.slane %v1064, %v1077
    %v1079 = vcombine.low %v1014, %v1030
    %v1080 = vcombine.high %v1014, %v1030
    %v1082 = vunpack.c.l.s4 1934713408
    %v1083 = vunpack.c.0.s8 %v1082
    %v1084 = vlaneseq
    %v1085 = vshrl.u32 %v1084, 7
    %v1086 = vsub.s32 %v1083, %v1085
    %v1087 = vrot.slane %v1079, %v1086
    %v1089 = vunpack.c.l.s4 1934713408
    %v1090 = vunpack.c.0.s8 %v1089
    %v1091 = vlaneseq
    %v1092 = vshrl.u32 %v1091, 7
    %v1093 = vsub.s32 %v1090, %v1092
    %v1094 = vrot.slane %v1080, %v1093
    %v1095 = vcombine.low %v1039, %v1071
    %v1096 = vcombine.high %v1039, %v1071
    %v1097 = vcombine.low %v1046, %v1078
    %v1098 = vcombine.high %v1046, %v1078
    %v1099 = vcombine.low %v1055, %v1087
    %v1100 = vcombine.high %v1055, %v1087
    %v1101 = vcombine.low %v1062, %v1094
    %v1102 = vcombine.high %v1062, %v1094
    %v1103 = vcombine.low %v408, %v412
    %v1104 = vcombine.high %v408, %v412
    %v1106 = vunpack.c.l.s4 1983009808
    %v1107 = vunpack.c.0.s8 %v1106
    %v1108 = vlaneseq
    %v1109 = vshrl.u32 %v1108, 7
    %v1110 = vsub.s32 %v1107, %v1109
    %v1111 = vrot.slane %v1103, %v1110
    %v1113 = vunpack.c.l.s4 1983009808
    %v1114 = vunpack.c.0.s8 %v1113
    %v1115 = vlaneseq
    %v1116 = vshrl.u32 %v1115, 7
    %v1117 = vsub.s32 %v1114, %v1116
    %v1118 = vrot.slane %v1104, %v1117
    %v1119 = vcombine.low %v410, %v414
    %v1120 = vcombine.high %v410, %v414
    %v1122 = vunpack.c.l.s4 1983009808
    %v1123 = vunpack.c.0.s8 %v1122
    %v1124 = vlaneseq
    %v1125 = vshrl.u32 %v1124, 7
    %v1126 = vsub.s32 %v1123, %v1125
    %v1127 = vrot.slane %v1119, %v1126
    %v1129 = vunpack.c.l.s4 1983009808
    %v1130 = vunpack.c.0.s8 %v1129
    %v1131 = vlaneseq
    %v1132 = vshrl.u32 %v1131, 7
    %v1133 = vsub.s32 %v1130, %v1132
    %v1134 = vrot.slane %v1120, %v1133
    %v1135 = vcombine.low %v416, %v420
    %v1136 = vcombine.high %v416, %v420
    %v1138 = vunpack.c.l.s4 1983009808
    %v1139 = vunpack.c.0.s8 %v1138
    %v1140 = vlaneseq
    %v1141 = vshrl.u32 %v1140, 7
    %v1142 = vsub.s32 %v1139, %v1141
    %v1143 = vrot.slane %v1135, %v1142
    %v1145 = vunpack.c.l.s4 1983009808
    %v1146 = vunpack.c.0.s8 %v1145
    %v1147 = vlaneseq
    %v1148 = vshrl.u32 %v1147, 7
    %v1149 = vsub.s32 %v1146, %v1148
    %v1150 = vrot.slane %v1136, %v1149
    %v1151 = vcombine.low %v418, %v422
    %v1152 = vcombine.high %v418, %v422
    %v1154 = vunpack.c.l.s4 1983009808
    %v1155 = vunpack.c.0.s8 %v1154
    %v1156 = vlaneseq
    %v1157 = vshrl.u32 %v1156, 7
    %v1158 = vsub.s32 %v1155, %v1157
    %v1159 = vrot.slane %v1151, %v1158
    %v1161 = vunpack.c.l.s4 1983009808
    %v1162 = vunpack.c.0.s8 %v1161
    %v1163 = vlaneseq
    %v1164 = vshrl.u32 %v1163, 7
    %v1165 = vsub.s32 %v1162, %v1164
    %v1166 = vrot.slane %v1152, %v1165
    %v1167 = vcombine.low %v1111, %v1127
    %v1168 = vcombine.high %v1111, %v1127
    %v1170 = vunpack.c.l.s4 1934713408
    %v1171 = vunpack.c.0.s8 %v1170
    %v1172 = vlaneseq
    %v1173 = vshrl.u32 %v1172, 7
    %v1174 = vsub.s32 %v1171, %v1173
    %v1175 = vrot.slane %v1167, %v1174
    %v1177 = vunpack.c.l.s4 1934713408
    %v1178 = vunpack.c.0.s8 %v1177
    %v1179 = vlaneseq
    %v1180 = vshrl.u32 %v1179, 7
    %v1181 = vsub.s32 %v1178, %v1180
    %v1182 = vrot.slane %v1168, %v1181
    %v1183 = vcombine.low %v1118, %v1134
    %v1184 = vcombine.high %v1118, %v1134
    %v1186 = vunpack.c.l.s4 1934713408
    %v1187 = vunpack.c.0.s8 %v1186
    %v1188 = vlaneseq
    %v1189 = vshrl.u32 %v1188, 7
    %v1190 = vsub.s32 %v1187, %v1189
    %v1191 = vrot.slane %v1183, %v1190
    %v1193 = vunpack.c.l.s4 1934713408
    %v1194 = vunpack.c.0.s8 %v1193
    %v1195 = vlaneseq
    %v1196 = vshrl.u32 %v1195, 7
    %v1197 = vsub.s32 %v1194, %v1196
    %v1198 = vrot.slane %v1184, %v1197
    %v1199 = vcombine.low %v1143, %v1159
    %v1200 = vcombine.high %v1143, %v1159
    %v1202 = vunpack.c.l.s4 1934713408
    %v1203 = vunpack.c.0.s8 %v1202
    %v1204 = vlaneseq
    %v1205 = vshrl.u32 %v1204, 7
    %v1206 = vsub.s32 %v1203, %v1205
    %v1207 = vrot.slane %v1199, %v1206
    %v1209 = vunpack.c.l.s4 1934713408
    %v1210 = vunpack.c.0.s8 %v1209
    %v1211 = vlaneseq
    %v1212 = vshrl.u32 %v1211, 7
    %v1213 = vsub.s32 %v1210, %v1212
    %v1214 = vrot.slane %v1200, %v1213
    %v1215 = vcombine.low %v1150, %v1166
    %v1216 = vcombine.high %v1150, %v1166
    %v1218 = vunpack.c.l.s4 1934713408
    %v1219 = vunpack.c.0.s8 %v1218
    %v1220 = vlaneseq
    %v1221 = vshrl.u32 %v1220, 7
    %v1222 = vsub.s32 %v1219, %v1221
    %v1223 = vrot.slane %v1215, %v1222
    %v1225 = vunpack.c.l.s4 1934713408
    %v1226 = vunpack.c.0.s8 %v1225
    %v1227 = vlaneseq
    %v1228 = vshrl.u32 %v1227, 7
    %v1229 = vsub.s32 %v1226, %v1228
    %v1230 = vrot.slane %v1216, %v1229
    %v1231 = vcombine.low %v1175, %v1207
    %v1232 = vcombine.high %v1175, %v1207
    %v1233 = vcombine.low %v1182, %v1214
    %v1234 = vcombine.high %v1182, %v1214
    %v1235 = vcombine.low %v1191, %v1223
    %v1236 = vcombine.high %v1191, %v1223
    %v1237 = vcombine.low %v1198, %v1230
    %v1238 = vcombine.high %v1198, %v1230
    %v1241 = vpack.i.b16 %v687, %v551
    %v1243 = vshrl.u32 %v551, 16
    %v1244 = vshrl.u32 %v687, 16
    %v1245 = vpack.i.b16 %v1244, %v1243
    %v1249 = vpack.i.b16 %v688, %v552
    %v1251 = vshrl.u32 %v552, 16
    %v1252 = vshrl.u32 %v688, 16
    %v1253 = vpack.i.b16 %v1252, %v1251
    %v1257 = vpack.i.b16 %v689, %v553
    %v1259 = vshrl.u32 %v553, 16
    %v1260 = vshrl.u32 %v689, 16
    %v1261 = vpack.i.b16 %v1260, %v1259
    %v1265 = vpack.i.b16 %v690, %v554
    %v1267 = vshrl.u32 %v554, 16
    %v1268 = vshrl.u32 %v690, 16
    %v1269 = vpack.i.b16 %v1268, %v1267
    %v1273 = vpack.i.b16 %v691, %v555
    %v1275 = vshrl.u32 %v555, 16
    %v1276 = vshrl.u32 %v691, 16
    %v1277 = vpack.i.b16 %v1276, %v1275
    %v1281 = vpack.i.b16 %v692, %v556
    %v1283 = vshrl.u32 %v556, 16
    %v1284 = vshrl.u32 %v692, 16
    %v1285 = vpack.i.b16 %v1284, %v1283
    %v1289 = vpack.i.b16 %v693, %v557
    %v1291 = vshrl.u32 %v557, 16
    %v1292 = vshrl.u32 %v693, 16
    %v1293 = vpack.i.b16 %v1292, %v1291
    %v1297 = vpack.i.b16 %v694, %v558
    %v1299 = vshrl.u32 %v558, 16
    %v1300 = vshrl.u32 %v694, 16
    %v1301 = vpack.i.b16 %v1300, %v1299
    %v1305 = vpack.i.b16 %v959, %v823
    %v1307 = vshrl.u32 %v823, 16
    %v1308 = vshrl.u32 %v959, 16
    %v1309 = vpack.i.b16 %v1308, %v1307
    %v1313 = vpack.i.b16 %v960, %v824
    %v1315 = vshrl.u32 %v824, 16
    %v1316 = vshrl.u32 %v960, 16
    %v1317 = vpack.i.b16 %v1316, %v1315
    %v1321 = vpack.i.b16 %v961, %v825
    %v1323 = vshrl.u32 %v825, 16
    %v1324 = vshrl.u32 %v961, 16
    %v1325 = vpack.i.b16 %v1324, %v1323
    %v1329 = vpack.i.b16 %v962, %v826
    %v1331 = vshrl.u32 %v826, 16
    %v1332 = vshrl.u32 %v962, 16
    %v1333 = vpack.i.b16 %v1332, %v1331
    %v1337 = vpack.i.b16 %v963, %v827
    %v1339 = vshrl.u32 %v827, 16
    %v1340 = vshrl.u32 %v963, 16
    %v1341 = vpack.i.b16 %v1340, %v1339
    %v1345 = vpack.i.b16 %v964, %v828
    %v1347 = vshrl.u32 %v828, 16
    %v1348 = vshrl.u32 %v964, 16
    %v1349 = vpack.i.b16 %v1348, %v1347
    %v1353 = vpack.i.b16 %v965, %v829
    %v1355 = vshrl.u32 %v829, 16
    %v1356 = vshrl.u32 %v965, 16
    %v1357 = vpack.i.b16 %v1356, %v1355
    %v1361 = vpack.i.b16 %v966, %v830
    %v1363 = vshrl.u32 %v830, 16
    %v1364 = vshrl.u32 %v966, 16
    %v1365 = vpack.i.b16 %v1364, %v1363
    %v1369 = vpack.i.b16 %v1231, %v1095
    %v1371 = vshrl.u32 %v1095, 16
    %v1372 = vshrl.u32 %v1231, 16
    %v1373 = vpack.i.b16 %v1372, %v1371
    %v1377 = vpack.i.b16 %v1232, %v1096
    %v1379 = vshrl.u32 %v1096, 16
    %v1380 = vshrl.u32 %v1232, 16
    %v1381 = vpack.i.b16 %v1380, %v1379
    %v1385 = vpack.i.b16 %v1233, %v1097
    %v1387 = vshrl.u32 %v1097, 16
    %v1388 = vshrl.u32 %v1233, 16
    %v1389 = vpack.i.b16 %v1388, %v1387
    %v1393 = vpack.i.b16 %v1234, %v1098
    %v1395 = vshrl.u32 %v1098, 16
    %v1396 = vshrl.u32 %v1234, 16
    %v1397 = vpack.i.b16 %v1396, %v1395
    %v1401 = vpack.i.b16 %v1235, %v1099
    %v1403 = vshrl.u32 %v1099, 16
    %v1404 = vshrl.u32 %v1235, 16
    %v1405 = vpack.i.b16 %v1404, %v1403
    %v1409 = vpack.i.b16 %v1236, %v1100
    %v1411 = vshrl.u32 %v1100, 16
    %v1412 = vshrl.u32 %v1236, 16
    %v1413 = vpack.i.b16 %v1412, %v1411
    %v1417 = vpack.i.b16 %v1237, %v1101
    %v1419 = vshrl.u32 %v1101, 16
    %v1420 = vshrl.u32 %v1237, 16
    %v1421 = vpack.i.b16 %v1420, %v1419
    %v1425 = vpack.i.b16 %v1238, %v1102
    %v1427 = vshrl.u32 %v1102, 16
    %v1428 = vshrl.u32 %v1238, 16
    %v1429 = vpack.i.b16 %v1428, %v1427
    %v1431 = vld [vmem:[%s1] sm:$0xf]
    %v1432 = vld [vmem:[%s2] sm:$0xff]
    %1434 = vset.pattern.permute.xlu0 0
    %1435 = vperm.xlu0 %1434, %v1432
    %v1436 = vpop.permute.xlu0 %1435
    %vm1438 = vcmask 392192
    %v1440 = vsel %vm1438, %v1431, 0
    %1442 = vmatprep.subr.bf16.mxu0 %v1245
    %1443 = vmatpush1.bf16.msra.mxu0 %v1241
    %1444 = vmatprep.subr.bf16.mxu0 %v1309
    %1445 = vmatpush1.bf16.msra.mxu0 %v1305
    %1446 = vmatprep.subr.bf16.mxu0 %v1373
    %1447 = vmatpush1.bf16.msra.mxu0 %v1369
    %1448 = vmatprep.subr.bf16.mxu0 0
    %1449 = vmatpush1.bf16.msra.mxu0 0
    %1450 = vmatprep.subr.bf16.mxu0 0
    %1451 = vmatpush1.bf16.msra.mxu0 0
    %1452 = vmatprep.subr.bf16.mxu0 0
    %1453 = vmatpush1.bf16.msra.mxu0 0
    %1454 = vmatprep.subr.bf16.mxu0 0
    %1455 = vmatpush1.bf16.msra.mxu0 0
    %1456 = vmatprep.subr.bf16.mxu0 0
    %1457 = vmatpush1.bf16.msra.mxu0 0
    %1458 = vmatprep.subr.bf16.mxu0 0
    %1459 = vmatpush1.bf16.msra.mxu0 0
    %1460 = vmatprep.subr.bf16.mxu0 0
    %1461 = vmatpush1.bf16.msra.mxu0 0
    %1462 = vmatprep.subr.bf16.mxu0 0
    %1463 = vmatpush1.bf16.msra.mxu0 0
    %1464 = vmatprep.subr.bf16.mxu0 0
    %1465 = vmatpush1.bf16.msra.mxu0 0
    %1466 = vmatprep.subr.bf16.mxu0 0
    %1467 = vmatpush1.bf16.msra.mxu0 0
    %1468 = vmatprep.subr.bf16.mxu0 0
    %1469 = vmatpush1.bf16.msra.mxu0 0
    %1470 = vmatprep.subr.bf16.mxu0 0
    %1471 = vmatpush1.bf16.msra.mxu0 0
    %1472 = vmatprep.subr.bf16.mxu0 0
    %1473 = vmatpush1.bf16.msra.mxu0 0
    %1474 = vmatprep.mubr.bf16.mxu0 0
    %1475 = vmatmul.mubr.bf16.gmra.mrb[0].mxu0 %v1440
    %v1476 = vpop.f32.mrb[0].mxu0
    %v1477 = vadd.f32 %v1436, %v1476
    %v1478 = vpop.f32.mrb[0].mxu0
    %v1479 = vadd.f32 %v1436, %v1478
    %v1480 = vpop.f32.mrb[0].mxu0
    %v1481 = vpop.f32.mrb[0].mxu0
    %1482 = vdwg.mxu0
    %1483 = vmatprep.subr.bf16.mxu0 %v1253
    %1484 = vmatpush1.bf16.msra.mxu0 %v1249
    %1485 = vmatprep.subr.bf16.mxu0 %v1317
    %1486 = vmatpush1.bf16.msra.mxu0 %v1313
    %1487 = vmatprep.subr.bf16.mxu0 %v1381
    %1488 = vmatpush1.bf16.msra.mxu0 %v1377
    %1489 = vmatprep.subr.bf16.mxu0 0
    %1490 = vmatpush1.bf16.msra.mxu0 0
    %1491 = vmatprep.subr.bf16.mxu0 0
    %1492 = vmatpush1.bf16.msra.mxu0 0
    %1493 = vmatprep.subr.bf16.mxu0 0
    %1494 = vmatpush1.bf16.msra.mxu0 0
    %1495 = vmatprep.subr.bf16.mxu0 0
    %1496 = vmatpush1.bf16.msra.mxu0 0
    %1497 = vmatprep.subr.bf16.mxu0 0
    %1498 = vmatpush1.bf16.msra.mxu0 0
    %1499 = vmatprep.subr.bf16.mxu0 0
    %1500 = vmatpush1.bf16.msra.mxu0 0
    %1501 = vmatprep.subr.bf16.mxu0 0
    %1502 = vmatpush1.bf16.msra.mxu0 0
    %1503 = vmatprep.subr.bf16.mxu0 0
    %1504 = vmatpush1.bf16.msra.mxu0 0
    %1505 = vmatprep.subr.bf16.mxu0 0
    %1506 = vmatpush1.bf16.msra.mxu0 0
    %1507 = vmatprep.subr.bf16.mxu0 0
    %1508 = vmatpush1.bf16.msra.mxu0 0
    %1509 = vmatprep.subr.bf16.mxu0 0
    %1510 = vmatpush1.bf16.msra.mxu0 0
    %1511 = vmatprep.subr.bf16.mxu0 0
    %1512 = vmatpush1.bf16.msra.mxu0 0
    %1513 = vmatprep.subr.bf16.mxu0 0
    %1514 = vmatpush1.bf16.msra.mxu0 0
    %1515 = vmatprep.mubr.bf16.mxu0 0
    %1516 = vmatmul.mubr.bf16.gmra.mrb[0].mxu0 %v1440
    %v1517 = vpop.f32.mrb[0].mxu0
    %v1518 = vadd.f32 %v1436, %v1517
    %v1519 = vpop.f32.mrb[0].mxu0
    %v1520 = vadd.f32 %v1436, %v1519
    %v1521 = vpop.f32.mrb[0].mxu0
    %v1522 = vpop.f32.mrb[0].mxu0
    %1523 = vdwg.mxu0
    %1524 = vmatprep.subr.bf16.mxu0 %v1261
    %1525 = vmatpush1.bf16.msra.mxu0 %v1257
    %1526 = vmatprep.subr.bf16.mxu0 %v1325
    %1527 = vmatpush1.bf16.msra.mxu0 %v1321
    %1528 = vmatprep.subr.bf16.mxu0 %v1389
    %1529 = vmatpush1.bf16.msra.mxu0 %v1385
    %1530 = vmatprep.subr.bf16.mxu0 0
    %1531 = vmatpush1.bf16.msra.mxu0 0
    %1532 = vmatprep.subr.bf16.mxu0 0
    %1533 = vmatpush1.bf16.msra.mxu0 0
    %1534 = vmatprep.subr.bf16.mxu0 0
    %1535 = vmatpush1.bf16.msra.mxu0 0
    %1536 = vmatprep.subr.bf16.mxu0 0
    %1537 = vmatpush1.bf16.msra.mxu0 0
    %1538 = vmatprep.subr.bf16.mxu0 0
    %1539 = vmatpush1.bf16.msra.mxu0 0
    %1540 = vmatprep.subr.bf16.mxu0 0
    %1541 = vmatpush1.bf16.msra.mxu0 0
    %1542 = vmatprep.subr.bf16.mxu0 0
    %1543 = vmatpush1.bf16.msra.mxu0 0
    %1544 = vmatprep.subr.bf16.mxu0 0
    %1545 = vmatpush1.bf16.msra.mxu0 0
    %1546 = vmatprep.subr.bf16.mxu0 0
    %1547 = vmatpush1.bf16.msra.mxu0 0
    %1548 = vmatprep.subr.bf16.mxu0 0
    %1549 = vmatpush1.bf16.msra.mxu0 0
    %1550 = vmatprep.subr.bf16.mxu0 0
    %1551 = vmatpush1.bf16.msra.mxu0 0
    %1552 = vmatprep.subr.bf16.mxu0 0
    %1553 = vmatpush1.bf16.msra.mxu0 0
    %1554 = vmatprep.subr.bf16.mxu0 0
    %1555 = vmatpush1.bf16.msra.mxu0 0
    %1556 = vmatprep.mubr.bf16.mxu0 0
    %1557 = vmatmul.mubr.bf16.gmra.mrb[0].mxu0 %v1440
    %v1558 = vpop.f32.mrb[0].mxu0
    %v1559 = vadd.f32 %v1436, %v1558
    %v1560 = vpop.f32.mrb[0].mxu0
    %v1561 = vadd.f32 %v1436, %v1560
    %v1562 = vpop.f32.mrb[0].mxu0
    %v1563 = vpop.f32.mrb[0].mxu0
    %1564 = vdwg.mxu0
    %1565 = vmatprep.subr.bf16.mxu0 %v1269
    %1566 = vmatpush1.bf16.msra.mxu0 %v1265
    %1567 = vmatprep.subr.bf16.mxu0 %v1333
    %1568 = vmatpush1.bf16.msra.mxu0 %v1329
    %1569 = vmatprep.subr.bf16.mxu0 %v1397
    %1570 = vmatpush1.bf16.msra.mxu0 %v1393
    %1571 = vmatprep.subr.bf16.mxu0 0
    %1572 = vmatpush1.bf16.msra.mxu0 0
    %1573 = vmatprep.subr.bf16.mxu0 0
    %1574 = vmatpush1.bf16.msra.mxu0 0
    %1575 = vmatprep.subr.bf16.mxu0 0
    %1576 = vmatpush1.bf16.msra.mxu0 0
    %1577 = vmatprep.subr.bf16.mxu0 0
    %1578 = vmatpush1.bf16.msra.mxu0 0
    %1579 = vmatprep.subr.bf16.mxu0 0
    %1580 = vmatpush1.bf16.msra.mxu0 0
    %1581 = vmatprep.subr.bf16.mxu0 0
    %1582 = vmatpush1.bf16.msra.mxu0 0
    %1583 = vmatprep.subr.bf16.mxu0 0
    %1584 = vmatpush1.bf16.msra.mxu0 0
    %1585 = vmatprep.subr.bf16.mxu0 0
    %1586 = vmatpush1.bf16.msra.mxu0 0
    %1587 = vmatprep.subr.bf16.mxu0 0
    %1588 = vmatpush1.bf16.msra.mxu0 0
    %1589 = vmatprep.subr.bf16.mxu0 0
    %1590 = vmatpush1.bf16.msra.mxu0 0
    %1591 = vmatprep.subr.bf16.mxu0 0
    %1592 = vmatpush1.bf16.msra.mxu0 0
    %1593 = vmatprep.subr.bf16.mxu0 0
    %1594 = vmatpush1.bf16.msra.mxu0 0
    %1595 = vmatprep.subr.bf16.mxu0 0
    %1596 = vmatpush1.bf16.msra.mxu0 0
    %1597 = vmatprep.mubr.bf16.mxu0 0
    %1598 = vmatmul.mubr.bf16.gmra.mrb[0].mxu0 %v1440
    %v1599 = vpop.f32.mrb[0].mxu0
    %v1600 = vadd.f32 %v1436, %v1599
    %v1601 = vpop.f32.mrb[0].mxu0
    %v1602 = vadd.f32 %v1436, %v1601
    %v1603 = vpop.f32.mrb[0].mxu0
    %v1604 = vpop.f32.mrb[0].mxu0
    %1605 = vdwg.mxu0
    %1606 = vmatprep.subr.bf16.mxu0 %v1277
    %1607 = vmatpush1.bf16.msra.mxu0 %v1273
    %1608 = vmatprep.subr.bf16.mxu0 %v1341
    %1609 = vmatpush1.bf16.msra.mxu0 %v1337
    %1610 = vmatprep.subr.bf16.mxu0 %v1405
    %1611 = vmatpush1.bf16.msra.mxu0 %v1401
    %1612 = vmatprep.subr.bf16.mxu0 0
    %1613 = vmatpush1.bf16.msra.mxu0 0
    %1614 = vmatprep.subr.bf16.mxu0 0
    %1615 = vmatpush1.bf16.msra.mxu0 0
    %1616 = vmatprep.subr.bf16.mxu0 0
    %1617 = vmatpush1.bf16.msra.mxu0 0
    %1618 = vmatprep.subr.bf16.mxu0 0
    %1619 = vmatpush1.bf16.msra.mxu0 0
    %1620 = vmatprep.subr.bf16.mxu0 0
    %1621 = vmatpush1.bf16.msra.mxu0 0
    %1622 = vmatprep.subr.bf16.mxu0 0
    %1623 = vmatpush1.bf16.msra.mxu0 0
    %1624 = vmatprep.subr.bf16.mxu0 0
    %1625 = vmatpush1.bf16.msra.mxu0 0
    %1626 = vmatprep.subr.bf16.mxu0 0
    %1627 = vmatpush1.bf16.msra.mxu0 0
    %1628 = vmatprep.subr.bf16.mxu0 0
    %1629 = vmatpush1.bf16.msra.mxu0 0
    %1630 = vmatprep.subr.bf16.mxu0 0
    %1631 = vmatpush1.bf16.msra.mxu0 0
    %1632 = vmatprep.subr.bf16.mxu0 0
    %1633 = vmatpush1.bf16.msra.mxu0 0
    %1634 = vmatprep.subr.bf16.mxu0 0
    %1635 = vmatpush1.bf16.msra.mxu0 0
    %1636 = vmatprep.subr.bf16.mxu0 0
    %1637 = vmatpush1.bf16.msra.mxu0 0
    %1638 = vmatprep.mubr.bf16.mxu0 0
    %1639 = vmatmul.mubr.bf16.gmra.mrb[0].mxu0 %v1440
    %v1640 = vpop.f32.mrb[0].mxu0
    %v1641 = vadd.f32 %v1436, %v1640
    %v1642 = vpop.f32.mrb[0].mxu0
    %v1643 = vadd.f32 %v1436, %v1642
    %v1644 = vpop.f32.mrb[0].mxu0
    %v1645 = vpop.f32.mrb[0].mxu0
    %1646 = vdwg.mxu0
    %1647 = vmatprep.subr.bf16.mxu0 %v1285
    %1648 = vmatpush1.bf16.msra.mxu0 %v1281
    %1649 = vmatprep.subr.bf16.mxu0 %v1349
    %1650 = vmatpush1.bf16.msra.mxu0 %v1345
    %1651 = vmatprep.subr.bf16.mxu0 %v1413
    %1652 = vmatpush1.bf16.msra.mxu0 %v1409
    %1653 = vmatprep.subr.bf16.mxu0 0
    %1654 = vmatpush1.bf16.msra.mxu0 0
    %1655 = vmatprep.subr.bf16.mxu0 0
    %1656 = vmatpush1.bf16.msra.mxu0 0
    %1657 = vmatprep.subr.bf16.mxu0 0
    %1658 = vmatpush1.bf16.msra.mxu0 0
    %1659 = vmatprep.subr.bf16.mxu0 0
    %1660 = vmatpush1.bf16.msra.mxu0 0
    %1661 = vmatprep.subr.bf16.mxu0 0
    %1662 = vmatpush1.bf16.msra.mxu0 0
    %1663 = vmatprep.subr.bf16.mxu0 0
    %1664 = vmatpush1.bf16.msra.mxu0 0
    %1665 = vmatprep.subr.bf16.mxu0 0
    %1666 = vmatpush1.bf16.msra.mxu0 0
    %1667 = vmatprep.subr.bf16.mxu0 0
    %1668 = vmatpush1.bf16.msra.mxu0 0
    %1669 = vmatprep.subr.bf16.mxu0 0
    %1670 = vmatpush1.bf16.msra.mxu0 0
    %1671 = vmatprep.subr.bf16.mxu0 0
    %1672 = vmatpush1.bf16.msra.mxu0 0
    %1673 = vmatprep.subr.bf16.mxu0 0
    %1674 = vmatpush1.bf16.msra.mxu0 0
    %1675 = vmatprep.subr.bf16.mxu0 0
    %1676 = vmatpush1.bf16.msra.mxu0 0
    %1677 = vmatprep.subr.bf16.mxu0 0
    %1678 = vmatpush1.bf16.msra.mxu0 0
    %1679 = vmatprep.mubr.bf16.mxu0 0
    %1680 = vmatmul.mubr.bf16.gmra.mrb[0].mxu0 %v1440
    %v1681 = vpop.f32.mrb[0].mxu0
    %v1682 = vadd.f32 %v1436, %v1681
    %v1683 = vpop.f32.mrb[0].mxu0
    %v1684 = vadd.f32 %v1436, %v1683
    %v1685 = vpop.f32.mrb[0].mxu0
    %v1686 = vpop.f32.mrb[0].mxu0
    %1687 = vdwg.mxu0
    %1688 = vmatprep.subr.bf16.mxu0 %v1293
    %1689 = vmatpush1.bf16.msra.mxu0 %v1289
    %1690 = vmatprep.subr.bf16.mxu0 %v1357
    %1691 = vmatpush1.bf16.msra.mxu0 %v1353
    %1692 = vmatprep.subr.bf16.mxu0 %v1421
    %1693 = vmatpush1.bf16.msra.mxu0 %v1417
    %1694 = vmatprep.subr.bf16.mxu0 0
    %1695 = vmatpush1.bf16.msra.mxu0 0
    %1696 = vmatprep.subr.bf16.mxu0 0
    %1697 = vmatpush1.bf16.msra.mxu0 0
    %1698 = vmatprep.subr.bf16.mxu0 0
    %1699 = vmatpush1.bf16.msra.mxu0 0
    %1700 = vmatprep.subr.bf16.mxu0 0
    %1701 = vmatpush1.bf16.msra.mxu0 0
    %1702 = vmatprep.subr.bf16.mxu0 0
    %1703 = vmatpush1.bf16.msra.mxu0 0
    %1704 = vmatprep.subr.bf16.mxu0 0
    %1705 = vmatpush1.bf16.msra.mxu0 0
    %1706 = vmatprep.subr.bf16.mxu0 0
    %1707 = vmatpush1.bf16.msra.mxu0 0
    %1708 = vmatprep.subr.bf16.mxu0 0
    %1709 = vmatpush1.bf16.msra.mxu0 0
    %1710 = vmatprep.subr.bf16.mxu0 0
    %1711 = vmatpush1.bf16.msra.mxu0 0
    %1712 = vmatprep.subr.bf16.mxu0 0
    %1713 = vmatpush1.bf16.msra.mxu0 0
    %1714 = vmatprep.subr.bf16.mxu0 0
    %1715 = vmatpush1.bf16.msra.mxu0 0
    %1716 = vmatprep.subr.bf16.mxu0 0
    %1717 = vmatpush1.bf16.msra.mxu0 0
    %1718 = vmatprep.subr.bf16.mxu0 0
    %1719 = vmatpush1.bf16.msra.mxu0 0
    %1720 = vmatprep.mubr.bf16.mxu0 0
    %1721 = vmatmul.mubr.bf16.gmra.mrb[0].mxu0 %v1440
    %v1722 = vpop.f32.mrb[0].mxu0
    %v1723 = vadd.f32 %v1436, %v1722
    %v1724 = vpop.f32.mrb[0].mxu0
    %v1725 = vadd.f32 %v1436, %v1724
    %v1726 = vpop.f32.mrb[0].mxu0
    %v1727 = vpop.f32.mrb[0].mxu0
    %1728 = vdwg.mxu0
    %1729 = vmatprep.subr.bf16.mxu0 %v1301
    %1730 = vmatpush1.bf16.msra.mxu0 %v1297
    %1731 = vmatprep.subr.bf16.mxu0 %v1365
    %1732 = vmatpush1.bf16.msra.mxu0 %v1361
    %1733 = vmatprep.subr.bf16.mxu0 %v1429
    %1734 = vmatpush1.bf16.msra.mxu0 %v1425
    %1735 = vmatprep.subr.bf16.mxu0 0
    %1736 = vmatpush1.bf16.msra.mxu0 0
    %1737 = vmatprep.subr.bf16.mxu0 0
    %1738 = vmatpush1.bf16.msra.mxu0 0
    %1739 = vmatprep.subr.bf16.mxu0 0
    %1740 = vmatpush1.bf16.msra.mxu0 0
    %1741 = vmatprep.subr.bf16.mxu0 0
    %1742 = vmatpush1.bf16.msra.mxu0 0
    %1743 = vmatprep.subr.bf16.mxu0 0
    %1744 = vmatpush1.bf16.msra.mxu0 0
    %1745 = vmatprep.subr.bf16.mxu0 0
    %1746 = vmatpush1.bf16.msra.mxu0 0
    %1747 = vmatprep.subr.bf16.mxu0 0
    %1748 = vmatpush1.bf16.msra.mxu0 0
    %1749 = vmatprep.subr.bf16.mxu0 0
    %1750 = vmatpush1.bf16.msra.mxu0 0
    %1751 = vmatprep.subr.bf16.mxu0 0
    %1752 = vmatpush1.bf16.msra.mxu0 0
    %1753 = vmatprep.subr.bf16.mxu0 0
    %1754 = vmatpush1.bf16.msra.mxu0 0
    %1755 = vmatprep.subr.bf16.mxu0 0
    %1756 = vmatpush1.bf16.msra.mxu0 0
    %1757 = vmatprep.subr.bf16.mxu0 0
    %1758 = vmatpush1.bf16.msra.mxu0 0
    %1759 = vmatprep.subr.bf16.mxu0 0
    %1760 = vmatpush1.bf16.msra.mxu0 0
    %1761 = vmatprep.mubr.bf16.mxu0 0
    %1762 = vmatmul.mubr.bf16.gmra.mrb[0].mxu0 %v1440
    %v1763 = vpop.f32.mrb[0].mxu0
    %v1764 = vadd.f32 %v1436, %v1763
    %v1765 = vpop.f32.mrb[0].mxu0
    %v1766 = vadd.f32 %v1436, %v1765
    %v1767 = vpop.f32.mrb[0].mxu0
    %v1768 = vpop.f32.mrb[0].mxu0
    %1769 = vdwg.mxu0
    %1770 = vst [vmem:[#allocation3] sm:$0xff] %v1477
    %1771 = vst [vmem:[#allocation3 + $0x8] sm:$0xff] %v1479
    %1772 = vst [vmem:[#allocation3 + $0x10] sm:$0xff] %v1518
    %1773 = vst [vmem:[#allocation3 + $0x18] sm:$0xff] %v1520
    %1774 = vst [vmem:[#allocation3 + $0x20] sm:$0xff] %v1559
    %1775 = vst [vmem:[#allocation3 + $0x28] sm:$0xff] %v1561
    %1776 = vst [vmem:[#allocation3 + $0x30] sm:$0xff] %v1600
    %1777 = vst [vmem:[#allocation3 + $0x38] sm:$0xff] %v1602
    %1778 = vst [vmem:[#allocation3 + $0x40] sm:$0xff] %v1641
    %1779 = vst [vmem:[#allocation3 + $0x48] sm:$0xff] %v1643
    %1780 = vst [vmem:[#allocation3 + $0x50] sm:$0xff] %v1682
    %1781 = vst [vmem:[#allocation3 + $0x58] sm:$0xff] %v1684
    %1782 = vst [vmem:[#allocation3 + $0x60] sm:$0xff] %v1723
    %1783 = vst [vmem:[#allocation3 + $0x68] sm:$0xff] %v1725
    %1784 = vst [vmem:[#allocation3 + $0x70] sm:$0xff] %v1764
    %1785 = vst [vmem:[#allocation3 + $0x78] sm:$0xff] %v1766
    %v1786 = vld [vmem:[%s0 + $0x10] sm:$0xff]
    %v1787 = vld [vmem:[%s0 + $0x18] sm:$0xff]
    %v1788 = vld [vmem:[%s0 + $0x20] sm:$0x7]
    %v1789 = vpack.c.bf16 %v1787, %v1786
    %1790 = vst.msk [vmem:[#allocation2] sm:$0xff] %vm68, %v1789
    %v1791 = vpack.c.bf16 %v1788, %v1788
    %v1793 = vshrl.u32 %v1789, 16
    %v1795 = vshll.u32 %v1789, 16
    %v1797 = vrot.slane %v1795, 1
    %v1798 = vor.u32 %v1793, %v1797
    %v1800 = vshll.u32 %v1791, 16
    %v1802 = vrot.slane %v1800, 1
    %v1803 = vsel %vm71, %v1798, %v1802
    %1805 = vst.msk [vmem:[%s85] sm:$0xff] %vm68, %v1803
    %v1808 = vrot.slane %v1789, 1
    %v1809 = vrot.slane %v1791, 1
    %v1810 = vsel %vm89, %v1808, %v1809
    %1812 = vst.msk [vmem:[%s94] sm:$0xff] %vm68, %v1810
    %v1813 = vrot.slane %v1793, 1
    %v1814 = vrot.slane %v1795, 2
    %v1815 = vor.u32 %v1813, %v1814
    %v1816 = vshrl.u32 %v1791, 16
    %v1818 = vrot.slane %v1816, 1
    %v1819 = vrot.slane %v1800, 2
    %v1820 = vor.u32 %v1818, %v1819
    %v1821 = vsel %vm96, %v1815, %v1820
    %1823 = vst.msk [vmem:[%s107] sm:$0xff] %vm68, %v1821
    %1824 = vrot.lane.b32.xlu0 %v1789, 127
    %v1825 = vpop.permute.xlu0 %1824
    %1827 = vst.msk [vmem:[%s112] sm:$0xff] %vm68, %v1825
    %1828 = vrot.lane.b32.xlu0 %v1803, 127
    %v1829 = vpop.permute.xlu0 %1828
    %1831 = vst.msk [vmem:[%s117] sm:$0xff] %vm68, %v1829
    %1832 = vrot.lane.b32.xlu0 %v1810, 127
    %v1833 = vpop.permute.xlu0 %1832
    %1835 = vst.msk [vmem:[%s122] sm:$0xff] %vm68, %v1833
    %1836 = vrot.lane.b32.xlu0 %v1821, 127
    %v1837 = vpop.permute.xlu0 %1836
    %1839 = vst.msk [vmem:[%s127] sm:$0xff] %vm68, %v1837
    %1840 = vrot.lane.b32.xlu0 %v1789, 126
    %v1841 = vpop.permute.xlu0 %1840
    %1843 = vst.msk [vmem:[%s132] sm:$0xff] %vm68, %v1841
    %1844 = vrot.lane.b32.xlu0 %v1803, 126
    %v1845 = vpop.permute.xlu0 %1844
    %1847 = vst.msk [vmem:[%s137] sm:$0xff] %vm68, %v1845
    %1848 = vrot.lane.b32.xlu0 %v1810, 126
    %v1849 = vpop.permute.xlu0 %1848
    %1851 = vst.msk [vmem:[%s142] sm:$0xff] %vm68, %v1849
    %1852 = vrot.lane.b32.xlu0 %v1821, 126
    %v1853 = vpop.permute.xlu0 %1852
    %1855 = vst.msk [vmem:[%s147] sm:$0xff] %vm68, %v1853
    %1856 = vrot.lane.b32.xlu0 %v1789, 125
    %v1857 = vpop.permute.xlu0 %1856
    %1859 = vst.msk [vmem:[%s152] sm:$0xff] %vm68, %v1857
    %1860 = vrot.lane.b32.xlu0 %v1803, 125
    %v1861 = vpop.permute.xlu0 %1860
    %1863 = vst.msk [vmem:[%s157] sm:$0xff] %vm68, %v1861
    %1864 = vrot.lane.b32.xlu0 %v1810, 125
    %v1865 = vpop.permute.xlu0 %1864
    %1867 = vst.msk [vmem:[%s162] sm:$0xff] %vm68, %v1865
    %1868 = vrot.lane.b32.xlu0 %v1821, 125
    %v1869 = vpop.permute.xlu0 %1868
    %1871 = vst.msk [vmem:[%s167] sm:$0xff] %vm68, %v1869
    %v1872 = vld [vmem:[%s169 + $0x10] sm:$0xff]
    %v1873 = vld [vmem:[%s169 + $0x18] sm:$0xff]
    %v1874 = vld [vmem:[%s169 + $0x20] sm:$0x7]
    %v1875 = vpack.c.bf16 %v1873, %v1872
    %1876 = vst.msk [vmem:[%s174] sm:$0xff] %vm68, %v1875
    %v1877 = vpack.c.bf16 %v1874, %v1874
    %v1879 = vshrl.u32 %v1875, 16
    %v1881 = vshll.u32 %v1875, 16
    %v1883 = vrot.slane %v1881, 1
    %v1884 = vor.u32 %v1879, %v1883
    %v1886 = vshll.u32 %v1877, 16
    %v1888 = vrot.slane %v1886, 1
    %v1889 = vsel %vm71, %v1884, %v1888
    %1891 = vst.msk [vmem:[%s190] sm:$0xff] %vm68, %v1889
    %v1894 = vrot.slane %v1875, 1
    %v1895 = vrot.slane %v1877, 1
    %v1896 = vsel %vm89, %v1894, %v1895
    %1898 = vst.msk [vmem:[%s198] sm:$0xff] %vm68, %v1896
    %v1899 = vrot.slane %v1879, 1
    %v1900 = vrot.slane %v1881, 2
    %v1901 = vor.u32 %v1899, %v1900
    %v1902 = vshrl.u32 %v1877, 16
    %v1904 = vrot.slane %v1902, 1
    %v1905 = vrot.slane %v1886, 2
    %v1906 = vor.u32 %v1904, %v1905
    %v1907 = vsel %vm96, %v1901, %v1906
    %1909 = vst.msk [vmem:[%s210] sm:$0xff] %vm68, %v1907
    %1910 = vrot.lane.b32.xlu0 %v1875, 127
    %v1911 = vpop.permute.xlu0 %1910
    %1913 = vst.msk [vmem:[%s215] sm:$0xff] %vm68, %v1911
    %1914 = vrot.lane.b32.xlu0 %v1889, 127
    %v1915 = vpop.permute.xlu0 %1914
    %1917 = vst.msk [vmem:[%s220] sm:$0xff] %vm68, %v1915
    %1918 = vrot.lane.b32.xlu0 %v1896, 127
    %v1919 = vpop.permute.xlu0 %1918
    %1921 = vst.msk [vmem:[%s225] sm:$0xff] %vm68, %v1919
    %1922 = vrot.lane.b32.xlu0 %v1907, 127
    %v1923 = vpop.permute.xlu0 %1922
    %1925 = vst.msk [vmem:[%s230] sm:$0xff] %vm68, %v1923
    %1926 = vrot.lane.b32.xlu0 %v1875, 126
    %v1927 = vpop.permute.xlu0 %1926
    %1929 = vst.msk [vmem:[%s235] sm:$0xff] %vm68, %v1927
    %1930 = vrot.lane.b32.xlu0 %v1889, 126
    %v1931 = vpop.permute.xlu0 %1930
    %1933 = vst.msk [vmem:[%s240] sm:$0xff] %vm68, %v1931
    %1934 = vrot.lane.b32.xlu0 %v1896, 126
    %v1935 = vpop.permute.xlu0 %1934
    %1937 = vst.msk [vmem:[%s245] sm:$0xff] %vm68, %v1935
    %1938 = vrot.lane.b32.xlu0 %v1907, 126
    %v1939 = vpop.permute.xlu0 %1938
    %1941 = vst.msk [vmem:[%s250] sm:$0xff] %vm68, %v1939
    %1942 = vrot.lane.b32.xlu0 %v1875, 125
    %v1943 = vpop.permute.xlu0 %1942
    %1945 = vst.msk [vmem:[%s255] sm:$0xff] %vm68, %v1943
    %1946 = vrot.lane.b32.xlu0 %v1889, 125
    %v1947 = vpop.permute.xlu0 %1946
    %1949 = vst.msk [vmem:[%s260] sm:$0xff] %vm68, %v1947
    %1950 = vrot.lane.b32.xlu0 %v1896, 125
    %v1951 = vpop.permute.xlu0 %1950
    %1953 = vst.msk [vmem:[%s265] sm:$0xff] %vm68, %v1951
    %1954 = vrot.lane.b32.xlu0 %v1907, 125
    %v1955 = vpop.permute.xlu0 %1954
    %1957 = vst.msk [vmem:[%s270] sm:$0xff] %vm68, %v1955
    %v1958 = vld [vmem:[%s272 + $0x10] sm:$0xff]
    %v1959 = vld [vmem:[%s272 + $0x18] sm:$0xff]
    %v1960 = vld [vmem:[%s272 + $0x20] sm:$0x7]
    %v1961 = vpack.c.bf16 %v1959, %v1958
    %1962 = vst.msk [vmem:[%s277] sm:$0xff] %vm68, %v1961
    %v1963 = vpack.c.bf16 %v1960, %v1960
    %v1965 = vshrl.u32 %v1961, 16
    %v1967 = vshll.u32 %v1961, 16
    %v1969 = vrot.slane %v1967, 1
    %v1970 = vor.u32 %v1965, %v1969
    %v1972 = vshll.u32 %v1963, 16
    %v1974 = vrot.slane %v1972, 1
    %v1975 = vsel %vm71, %v1970, %v1974
    %1977 = vst.msk [vmem:[%s293] sm:$0xff] %vm68, %v1975
    %v1980 = vrot.slane %v1961, 1
    %v1981 = vrot.slane %v1963, 1
    %v1982 = vsel %vm89, %v1980, %v1981
    %1984 = vst.msk [vmem:[%s301] sm:$0xff] %vm68, %v1982
    %v1985 = vrot.slane %v1965, 1
    %v1986 = vrot.slane %v1967, 2
    %v1987 = vor.u32 %v1985, %v1986
    %v1988 = vshrl.u32 %v1963, 16
    %v1990 = vrot.slane %v1988, 1
    %v1991 = vrot.slane %v1972, 2
    %v1992 = vor.u32 %v1990, %v1991
    %v1993 = vsel %vm96, %v1987, %v1992
    %1995 = vst.msk [vmem:[%s313] sm:$0xff] %vm68, %v1993
    %1996 = vrot.lane.b32.xlu0 %v1961, 127
    %v1997 = vpop.permute.xlu0 %1996
    %1999 = vst.msk [vmem:[%s318] sm:$0xff] %vm68, %v1997
    %2000 = vrot.lane.b32.xlu0 %v1975, 127
    %v2001 = vpop.permute.xlu0 %2000
    %2003 = vst.msk [vmem:[%s323] sm:$0xff] %vm68, %v2001
    %2004 = vrot.lane.b32.xlu0 %v1982, 127
    %v2005 = vpop.permute.xlu0 %2004
    %2007 = vst.msk [vmem:[%s328] sm:$0xff] %vm68, %v2005
    %2008 = vrot.lane.b32.xlu0 %v1993, 127
    %v2009 = vpop.permute.xlu0 %2008
    %2011 = vst.msk [vmem:[%s333] sm:$0xff] %vm68, %v2009
    %2012 = vrot.lane.b32.xlu0 %v1961, 126
    %v2013 = vpop.permute.xlu0 %2012
    %2015 = vst.msk [vmem:[%s338] sm:$0xff] %vm68, %v2013
    %2016 = vrot.lane.b32.xlu0 %v1975, 126
    %v2017 = vpop.permute.xlu0 %2016
    %2019 = vst.msk [vmem:[%s343] sm:$0xff] %vm68, %v2017
    %2020 = vrot.lane.b32.xlu0 %v1982, 126
    %v2021 = vpop.permute.xlu0 %2020
    %2023 = vst.msk [vmem:[%s348] sm:$0xff] %vm68, %v2021
    %2024 = vrot.lane.b32.xlu0 %v1993, 126
    %v2025 = vpop.permute.xlu0 %2024
    %2027 = vst.msk [vmem:[%s353] sm:$0xff] %vm68, %v2025
    %2028 = vrot.lane.b32.xlu0 %v1961, 125
    %v2029 = vpop.permute.xlu0 %2028
    %2031 = vst.msk [vmem:[%s358] sm:$0xff] %vm68, %v2029
    %2032 = vrot.lane.b32.xlu0 %v1975, 125
    %v2033 = vpop.permute.xlu0 %2032
    %2035 = vst.msk [vmem:[%s363] sm:$0xff] %vm68, %v2033
    %2036 = vrot.lane.b32.xlu0 %v1982, 125
    %v2037 = vpop.permute.xlu0 %2036
    %2039 = vst.msk [vmem:[%s368] sm:$0xff] %vm68, %v2037
    %2040 = vrot.lane.b32.xlu0 %v1993, 125
    %v2041 = vpop.permute.xlu0 %2040
    %2043 = vst.msk [vmem:[%s373] sm:$0xff] %vm68, %v2041
    %v2044 = vld [vmem:[#allocation2] sm:$0xff]
    %v2045 = vld [vmem:[#allocation2 + $0x8] sm:$0xff]
    %v2046 = vld [vmem:[#allocation2 + $0x10] sm:$0xff]
    %v2047 = vld [vmem:[#allocation2 + $0x18] sm:$0xff]
    %v2048 = vld [vmem:[#allocation2 + $0x20] sm:$0xff]
    %v2049 = vld [vmem:[#allocation2 + $0x28] sm:$0xff]
    %v2050 = vld [vmem:[#allocation2 + $0x30] sm:$0xff]
    %v2051 = vld [vmem:[#allocation2 + $0x38] sm:$0xff]
    %v2052 = vld [vmem:[#allocation2 + $0x40] sm:$0xff]
    %v2053 = vld [vmem:[#allocation2 + $0x48] sm:$0xff]
    %v2054 = vld [vmem:[#allocation2 + $0x50] sm:$0xff]
    %v2055 = vld [vmem:[#allocation2 + $0x58] sm:$0xff]
    %v2056 = vld [vmem:[#allocation2 + $0x60] sm:$0xff]
    %v2057 = vld [vmem:[#allocation2 + $0x68] sm:$0xff]
    %v2058 = vld [vmem:[#allocation2 + $0x70] sm:$0xff]
    %v2059 = vld [vmem:[#allocation2 + $0x78] sm:$0xff]
    %v2060 = vld [vmem:[#allocation2 + $0x80] sm:$0xff]
    %v2061 = vld [vmem:[#allocation2 + $0x88] sm:$0xff]
    %v2062 = vld [vmem:[#allocation2 + $0x90] sm:$0xff]
    %v2063 = vld [vmem:[#allocation2 + $0x98] sm:$0xff]
    %v2064 = vld [vmem:[#allocation2 + $0xa0] sm:$0xff]
    %v2065 = vld [vmem:[#allocation2 + $0xa8] sm:$0xff]
    %v2066 = vld [vmem:[#allocation2 + $0xb0] sm:$0xff]
    %v2067 = vld [vmem:[#allocation2 + $0xb8] sm:$0xff]
    %v2068 = vld [vmem:[#allocation2 + $0xc0] sm:$0xff]
    %v2069 = vld [vmem:[#allocation2 + $0xc8] sm:$0xff]
    %v2070 = vld [vmem:[#allocation2 + $0xd0] sm:$0xff]
    %v2071 = vld [vmem:[#allocation2 + $0xd8] sm:$0xff]
    %v2072 = vld [vmem:[#allocation2 + $0xe0] sm:$0xff]
    %v2073 = vld [vmem:[#allocation2 + $0xe8] sm:$0xff]
    %v2074 = vld [vmem:[#allocation2 + $0xf0] sm:$0xff]
    %v2075 = vld [vmem:[#allocation2 + $0xf8] sm:$0xff]
    %v2076 = vld [vmem:[#allocation2 + $0x100] sm:$0xff]
    %v2077 = vld [vmem:[#allocation2 + $0x108] sm:$0xff]
    %v2078 = vld [vmem:[#allocation2 + $0x110] sm:$0xff]
    %v2079 = vld [vmem:[#allocation2 + $0x118] sm:$0xff]
    %v2080 = vld [vmem:[#allocation2 + $0x120] sm:$0xff]
    %v2081 = vld [vmem:[#allocation2 + $0x128] sm:$0xff]
    %v2082 = vld [vmem:[#allocation2 + $0x130] sm:$0xff]
    %v2083 = vld [vmem:[#allocation2 + $0x138] sm:$0xff]
    %v2084 = vld [vmem:[#allocation2 + $0x140] sm:$0xff]
    %v2085 = vld [vmem:[#allocation2 + $0x148] sm:$0xff]
    %v2086 = vld [vmem:[#allocation2 + $0x150] sm:$0xff]
    %v2087 = vld [vmem:[#allocation2 + $0x158] sm:$0xff]
    %v2088 = vld [vmem:[#allocation2 + $0x160] sm:$0xff]
    %v2089 = vld [vmem:[#allocation2 + $0x168] sm:$0xff]
    %v2090 = vld [vmem:[#allocation2 + $0x170] sm:$0xff]
    %v2091 = vld [vmem:[#allocation2 + $0x178] sm:$0xff]
    %v2092 = vcombine.low %v2044, %v2048
    %v2093 = vcombine.high %v2044, %v2048
    %v2095 = vunpack.c.l.s4 1983009808
    %v2096 = vunpack.c.0.s8 %v2095
    %v2097 = vlaneseq
    %v2098 = vshrl.u32 %v2097, 7
    %v2099 = vsub.s32 %v2096, %v2098
    %v2100 = vrot.slane %v2092, %v2099
    %v2102 = vunpack.c.l.s4 1983009808
    %v2103 = vunpack.c.0.s8 %v2102
    %v2104 = vlaneseq
    %v2105 = vshrl.u32 %v2104, 7
    %v2106 = vsub.s32 %v2103, %v2105
    %v2107 = vrot.slane %v2093, %v2106
    %v2108 = vcombine.low %v2046, %v2050
    %v2109 = vcombine.high %v2046, %v2050
    %v2111 = vunpack.c.l.s4 1983009808
    %v2112 = vunpack.c.0.s8 %v2111
    %v2113 = vlaneseq
    %v2114 = vshrl.u32 %v2113, 7
    %v2115 = vsub.s32 %v2112, %v2114
    %v2116 = vrot.slane %v2108, %v2115
    %v2118 = vunpack.c.l.s4 1983009808
    %v2119 = vunpack.c.0.s8 %v2118
    %v2120 = vlaneseq
    %v2121 = vshrl.u32 %v2120, 7
    %v2122 = vsub.s32 %v2119, %v2121
    %v2123 = vrot.slane %v2109, %v2122
    %v2124 = vcombine.low %v2052, %v2056
    %v2125 = vcombine.high %v2052, %v2056
    %v2127 = vunpack.c.l.s4 1983009808
    %v2128 = vunpack.c.0.s8 %v2127
    %v2129 = vlaneseq
    %v2130 = vshrl.u32 %v2129, 7
    %v2131 = vsub.s32 %v2128, %v2130
    %v2132 = vrot.slane %v2124, %v2131
    %v2134 = vunpack.c.l.s4 1983009808
    %v2135 = vunpack.c.0.s8 %v2134
    %v2136 = vlaneseq
    %v2137 = vshrl.u32 %v2136, 7
    %v2138 = vsub.s32 %v2135, %v2137
    %v2139 = vrot.slane %v2125, %v2138
    %v2140 = vcombine.low %v2054, %v2058
    %v2141 = vcombine.high %v2054, %v2058
    %v2143 = vunpack.c.l.s4 1983009808
    %v2144 = vunpack.c.0.s8 %v2143
    %v2145 = vlaneseq
    %v2146 = vshrl.u32 %v2145, 7
    %v2147 = vsub.s32 %v2144, %v2146
    %v2148 = vrot.slane %v2140, %v2147
    %v2150 = vunpack.c.l.s4 1983009808
    %v2151 = vunpack.c.0.s8 %v2150
    %v2152 = vlaneseq
    %v2153 = vshrl.u32 %v2152, 7
    %v2154 = vsub.s32 %v2151, %v2153
    %v2155 = vrot.slane %v2141, %v2154
    %v2156 = vcombine.low %v2100, %v2116
    %v2157 = vcombine.high %v2100, %v2116
    %v2159 = vunpack.c.l.s4 1934713408
    %v2160 = vunpack.c.0.s8 %v2159
    %v2161 = vlaneseq
    %v2162 = vshrl.u32 %v2161, 7
    %v2163 = vsub.s32 %v2160, %v2162
    %v2164 = vrot.slane %v2156, %v2163
    %v2166 = vunpack.c.l.s4 1934713408
    %v2167 = vunpack.c.0.s8 %v2166
    %v2168 = vlaneseq
    %v2169 = vshrl.u32 %v2168, 7
    %v2170 = vsub.s32 %v2167, %v2169
    %v2171 = vrot.slane %v2157, %v2170
    %v2172 = vcombine.low %v2107, %v2123
    %v2173 = vcombine.high %v2107, %v2123
    %v2175 = vunpack.c.l.s4 1934713408
    %v2176 = vunpack.c.0.s8 %v2175
    %v2177 = vlaneseq
    %v2178 = vshrl.u32 %v2177, 7
    %v2179 = vsub.s32 %v2176, %v2178
    %v2180 = vrot.slane %v2172, %v2179
    %v2182 = vunpack.c.l.s4 1934713408
    %v2183 = vunpack.c.0.s8 %v2182
    %v2184 = vlaneseq
    %v2185 = vshrl.u32 %v2184, 7
    %v2186 = vsub.s32 %v2183, %v2185
    %v2187 = vrot.slane %v2173, %v2186
    %v2188 = vcombine.low %v2132, %v2148
    %v2189 = vcombine.high %v2132, %v2148
    %v2191 = vunpack.c.l.s4 1934713408
    %v2192 = vunpack.c.0.s8 %v2191
    %v2193 = vlaneseq
    %v2194 = vshrl.u32 %v2193, 7
    %v2195 = vsub.s32 %v2192, %v2194
    %v2196 = vrot.slane %v2188, %v2195
    %v2198 = vunpack.c.l.s4 1934713408
    %v2199 = vunpack.c.0.s8 %v2198
    %v2200 = vlaneseq
    %v2201 = vshrl.u32 %v2200, 7
    %v2202 = vsub.s32 %v2199, %v2201
    %v2203 = vrot.slane %v2189, %v2202
    %v2204 = vcombine.low %v2139, %v2155
    %v2205 = vcombine.high %v2139, %v2155
    %v2207 = vunpack.c.l.s4 1934713408
    %v2208 = vunpack.c.0.s8 %v2207
    %v2209 = vlaneseq
    %v2210 = vshrl.u32 %v2209, 7
    %v2211 = vsub.s32 %v2208, %v2210
    %v2212 = vrot.slane %v2204, %v2211
    %v2214 = vunpack.c.l.s4 1934713408
    %v2215 = vunpack.c.0.s8 %v2214
    %v2216 = vlaneseq
    %v2217 = vshrl.u32 %v2216, 7
    %v2218 = vsub.s32 %v2215, %v2217
    %v2219 = vrot.slane %v2205, %v2218
    %v2220 = vcombine.low %v2164, %v2196
    %v2221 = vcombine.high %v2164, %v2196
    %v2222 = vcombine.low %v2171, %v2203
    %v2223 = vcombine.high %v2171, %v2203
    %v2224 = vcombine.low %v2180, %v2212
    %v2225 = vcombine.high %v2180, %v2212
    %v2226 = vcombine.low %v2187, %v2219
    %v2227 = vcombine.high %v2187, %v2219
    %v2228 = vcombine.low %v2045, %v2049
    %v2229 = vcombine.high %v2045, %v2049
    %v2231 = vunpack.c.l.s4 1983009808
    %v2232 = vunpack.c.0.s8 %v2231
    %v2233 = vlaneseq
    %v2234 = vshrl.u32 %v2233, 7
    %v2235 = vsub.s32 %v2232, %v2234
    %v2236 = vrot.slane %v2228, %v2235
    %v2238 = vunpack.c.l.s4 1983009808
    %v2239 = vunpack.c.0.s8 %v2238
    %v2240 = vlaneseq
    %v2241 = vshrl.u32 %v2240, 7
    %v2242 = vsub.s32 %v2239, %v2241
    %v2243 = vrot.slane %v2229, %v2242
    %v2244 = vcombine.low %v2047, %v2051
    %v2245 = vcombine.high %v2047, %v2051
    %v2247 = vunpack.c.l.s4 1983009808
    %v2248 = vunpack.c.0.s8 %v2247
    %v2249 = vlaneseq
    %v2250 = vshrl.u32 %v2249, 7
    %v2251 = vsub.s32 %v2248, %v2250
    %v2252 = vrot.slane %v2244, %v2251
    %v2254 = vunpack.c.l.s4 1983009808
    %v2255 = vunpack.c.0.s8 %v2254
    %v2256 = vlaneseq
    %v2257 = vshrl.u32 %v2256, 7
    %v2258 = vsub.s32 %v2255, %v2257
    %v2259 = vrot.slane %v2245, %v2258
    %v2260 = vcombine.low %v2053, %v2057
    %v2261 = vcombine.high %v2053, %v2057
    %v2263 = vunpack.c.l.s4 1983009808
    %v2264 = vunpack.c.0.s8 %v2263
    %v2265 = vlaneseq
    %v2266 = vshrl.u32 %v2265, 7
    %v2267 = vsub.s32 %v2264, %v2266
    %v2268 = vrot.slane %v2260, %v2267
    %v2270 = vunpack.c.l.s4 1983009808
    %v2271 = vunpack.c.0.s8 %v2270
    %v2272 = vlaneseq
    %v2273 = vshrl.u32 %v2272, 7
    %v2274 = vsub.s32 %v2271, %v2273
    %v2275 = vrot.slane %v2261, %v2274
    %v2276 = vcombine.low %v2055, %v2059
    %v2277 = vcombine.high %v2055, %v2059
    %v2279 = vunpack.c.l.s4 1983009808
    %v2280 = vunpack.c.0.s8 %v2279
    %v2281 = vlaneseq
    %v2282 = vshrl.u32 %v2281, 7
    %v2283 = vsub.s32 %v2280, %v2282
    %v2284 = vrot.slane %v2276, %v2283
    %v2286 = vunpack.c.l.s4 1983009808
    %v2287 = vunpack.c.0.s8 %v2286
    %v2288 = vlaneseq
    %v2289 = vshrl.u32 %v2288, 7
    %v2290 = vsub.s32 %v2287, %v2289
    %v2291 = vrot.slane %v2277, %v2290
    %v2292 = vcombine.low %v2236, %v2252
    %v2293 = vcombine.high %v2236, %v2252
    %v2295 = vunpack.c.l.s4 1934713408
    %v2296 = vunpack.c.0.s8 %v2295
    %v2297 = vlaneseq
    %v2298 = vshrl.u32 %v2297, 7
    %v2299 = vsub.s32 %v2296, %v2298
    %v2300 = vrot.slane %v2292, %v2299
    %v2302 = vunpack.c.l.s4 1934713408
    %v2303 = vunpack.c.0.s8 %v2302
    %v2304 = vlaneseq
    %v2305 = vshrl.u32 %v2304, 7
    %v2306 = vsub.s32 %v2303, %v2305
    %v2307 = vrot.slane %v2293, %v2306
    %v2308 = vcombine.low %v2243, %v2259
    %v2309 = vcombine.high %v2243, %v2259
    %v2311 = vunpack.c.l.s4 1934713408
    %v2312 = vunpack.c.0.s8 %v2311
    %v2313 = vlaneseq
    %v2314 = vshrl.u32 %v2313, 7
    %v2315 = vsub.s32 %v2312, %v2314
    %v2316 = vrot.slane %v2308, %v2315
    %v2318 = vunpack.c.l.s4 1934713408
    %v2319 = vunpack.c.0.s8 %v2318
    %v2320 = vlaneseq
    %v2321 = vshrl.u32 %v2320, 7
    %v2322 = vsub.s32 %v2319, %v2321
    %v2323 = vrot.slane %v2309, %v2322
    %v2324 = vcombine.low %v2268, %v2284
    %v2325 = vcombine.high %v2268, %v2284
    %v2327 = vunpack.c.l.s4 1934713408
    %v2328 = vunpack.c.0.s8 %v2327
    %v2329 = vlaneseq
    %v2330 = vshrl.u32 %v2329, 7
    %v2331 = vsub.s32 %v2328, %v2330
    %v2332 = vrot.slane %v2324, %v2331
    %v2334 = vunpack.c.l.s4 1934713408
    %v2335 = vunpack.c.0.s8 %v2334
    %v2336 = vlaneseq
    %v2337 = vshrl.u32 %v2336, 7
    %v2338 = vsub.s32 %v2335, %v2337
    %v2339 = vrot.slane %v2325, %v2338
    %v2340 = vcombine.low %v2275, %v2291
    %v2341 = vcombine.high %v2275, %v2291
    %v2343 = vunpack.c.l.s4 1934713408
    %v2344 = vunpack.c.0.s8 %v2343
    %v2345 = vlaneseq
    %v2346 = vshrl.u32 %v2345, 7
    %v2347 = vsub.s32 %v2344, %v2346
    %v2348 = vrot.slane %v2340, %v2347
    %v2350 = vunpack.c.l.s4 1934713408
    %v2351 = vunpack.c.0.s8 %v2350
    %v2352 = vlaneseq
    %v2353 = vshrl.u32 %v2352, 7
    %v2354 = vsub.s32 %v2351, %v2353
    %v2355 = vrot.slane %v2341, %v2354
    %v2356 = vcombine.low %v2300, %v2332
    %v2357 = vcombine.high %v2300, %v2332
    %v2358 = vcombine.low %v2307, %v2339
    %v2359 = vcombine.high %v2307, %v2339
    %v2360 = vcombine.low %v2316, %v2348
    %v2361 = vcombine.high %v2316, %v2348
    %v2362 = vcombine.low %v2323, %v2355
    %v2363 = vcombine.high %v2323, %v2355
    %v2364 = vcombine.low %v2060, %v2064
    %v2365 = vcombine.high %v2060, %v2064
    %v2367 = vunpack.c.l.s4 1983009808
    %v2368 = vunpack.c.0.s8 %v2367
    %v2369 = vlaneseq
    %v2370 = vshrl.u32 %v2369, 7
    %v2371 = vsub.s32 %v2368, %v2370
    %v2372 = vrot.slane %v2364, %v2371
    %v2374 = vunpack.c.l.s4 1983009808
    %v2375 = vunpack.c.0.s8 %v2374
    %v2376 = vlaneseq
    %v2377 = vshrl.u32 %v2376, 7
    %v2378 = vsub.s32 %v2375, %v2377
    %v2379 = vrot.slane %v2365, %v2378
    %v2380 = vcombine.low %v2062, %v2066
    %v2381 = vcombine.high %v2062, %v2066
    %v2383 = vunpack.c.l.s4 1983009808
    %v2384 = vunpack.c.0.s8 %v2383
    %v2385 = vlaneseq
    %v2386 = vshrl.u32 %v2385, 7
    %v2387 = vsub.s32 %v2384, %v2386
    %v2388 = vrot.slane %v2380, %v2387
    %v2390 = vunpack.c.l.s4 1983009808
    %v2391 = vunpack.c.0.s8 %v2390
    %v2392 = vlaneseq
    %v2393 = vshrl.u32 %v2392, 7
    %v2394 = vsub.s32 %v2391, %v2393
    %v2395 = vrot.slane %v2381, %v2394
    %v2396 = vcombine.low %v2068, %v2072
    %v2397 = vcombine.high %v2068, %v2072
    %v2399 = vunpack.c.l.s4 1983009808
    %v2400 = vunpack.c.0.s8 %v2399
    %v2401 = vlaneseq
    %v2402 = vshrl.u32 %v2401, 7
    %v2403 = vsub.s32 %v2400, %v2402
    %v2404 = vrot.slane %v2396, %v2403
    %v2406 = vunpack.c.l.s4 1983009808
    %v2407 = vunpack.c.0.s8 %v2406
    %v2408 = vlaneseq
    %v2409 = vshrl.u32 %v2408, 7
    %v2410 = vsub.s32 %v2407, %v2409
    %v2411 = vrot.slane %v2397, %v2410
    %v2412 = vcombine.low %v2070, %v2074
    %v2413 = vcombine.high %v2070, %v2074
    %v2415 = vunpack.c.l.s4 1983009808
    %v2416 = vunpack.c.0.s8 %v2415
    %v2417 = vlaneseq
    %v2418 = vshrl.u32 %v2417, 7
    %v2419 = vsub.s32 %v2416, %v2418
    %v2420 = vrot.slane %v2412, %v2419
    %v2422 = vunpack.c.l.s4 1983009808
    %v2423 = vunpack.c.0.s8 %v2422
    %v2424 = vlaneseq
    %v2425 = vshrl.u32 %v2424, 7
    %v2426 = vsub.s32 %v2423, %v2425
    %v2427 = vrot.slane %v2413, %v2426
    %v2428 = vcombine.low %v2372, %v2388
    %v2429 = vcombine.high %v2372, %v2388
    %v2431 = vunpack.c.l.s4 1934713408
    %v2432 = vunpack.c.0.s8 %v2431
    %v2433 = vlaneseq
    %v2434 = vshrl.u32 %v2433, 7
    %v2435 = vsub.s32 %v2432, %v2434
    %v2436 = vrot.slane %v2428, %v2435
    %v2438 = vunpack.c.l.s4 1934713408
    %v2439 = vunpack.c.0.s8 %v2438
    %v2440 = vlaneseq
    %v2441 = vshrl.u32 %v2440, 7
    %v2442 = vsub.s32 %v2439, %v2441
    %v2443 = vrot.slane %v2429, %v2442
    %v2444 = vcombine.low %v2379, %v2395
    %v2445 = vcombine.high %v2379, %v2395
    %v2447 = vunpack.c.l.s4 1934713408
    %v2448 = vunpack.c.0.s8 %v2447
    %v2449 = vlaneseq
    %v2450 = vshrl.u32 %v2449, 7
    %v2451 = vsub.s32 %v2448, %v2450
    %v2452 = vrot.slane %v2444, %v2451
    %v2454 = vunpack.c.l.s4 1934713408
    %v2455 = vunpack.c.0.s8 %v2454
    %v2456 = vlaneseq
    %v2457 = vshrl.u32 %v2456, 7
    %v2458 = vsub.s32 %v2455, %v2457
    %v2459 = vrot.slane %v2445, %v2458
    %v2460 = vcombine.low %v2404, %v2420
    %v2461 = vcombine.high %v2404, %v2420
    %v2463 = vunpack.c.l.s4 1934713408
    %v2464 = vunpack.c.0.s8 %v2463
    %v2465 = vlaneseq
    %v2466 = vshrl.u32 %v2465, 7
    %v2467 = vsub.s32 %v2464, %v2466
    %v2468 = vrot.slane %v2460, %v2467
    %v2470 = vunpack.c.l.s4 1934713408
    %v2471 = vunpack.c.0.s8 %v2470
    %v2472 = vlaneseq
    %v2473 = vshrl.u32 %v2472, 7
    %v2474 = vsub.s32 %v2471, %v2473
    %v2475 = vrot.slane %v2461, %v2474
    %v2476 = vcombine.low %v2411, %v2427
    %v2477 = vcombine.high %v2411, %v2427
    %v2479 = vunpack.c.l.s4 1934713408
    %v2480 = vunpack.c.0.s8 %v2479
    %v2481 = vlaneseq
    %v2482 = vshrl.u32 %v2481, 7
    %v2483 = vsub.s32 %v2480, %v2482
    %v2484 = vrot.slane %v2476, %v2483
    %v2486 = vunpack.c.l.s4 1934713408
    %v2487 = vunpack.c.0.s8 %v2486
    %v2488 = vlaneseq
    %v2489 = vshrl.u32 %v2488, 7
    %v2490 = vsub.s32 %v2487, %v2489
    %v2491 = vrot.slane %v2477, %v2490
    %v2492 = vcombine.low %v2436, %v2468
    %v2493 = vcombine.high %v2436, %v2468
    %v2494 = vcombine.low %v2443, %v2475
    %v2495 = vcombine.high %v2443, %v2475
    %v2496 = vcombine.low %v2452, %v2484
    %v2497 = vcombine.high %v2452, %v2484
    %v2498 = vcombine.low %v2459, %v2491
    %v2499 = vcombine.high %v2459, %v2491
    %v2500 = vcombine.low %v2061, %v2065
    %v2501 = vcombine.high %v2061, %v2065
    %v2503 = vunpack.c.l.s4 1983009808
    %v2504 = vunpack.c.0.s8 %v2503
    %v2505 = vlaneseq
    %v2506 = vshrl.u32 %v2505, 7
    %v2507 = vsub.s32 %v2504, %v2506
    %v2508 = vrot.slane %v2500, %v2507
    %v2510 = vunpack.c.l.s4 1983009808
    %v2511 = vunpack.c.0.s8 %v2510
    %v2512 = vlaneseq
    %v2513 = vshrl.u32 %v2512, 7
    %v2514 = vsub.s32 %v2511, %v2513
    %v2515 = vrot.slane %v2501, %v2514
    %v2516 = vcombine.low %v2063, %v2067
    %v2517 = vcombine.high %v2063, %v2067
    %v2519 = vunpack.c.l.s4 1983009808
    %v2520 = vunpack.c.0.s8 %v2519
    %v2521 = vlaneseq
    %v2522 = vshrl.u32 %v2521, 7
    %v2523 = vsub.s32 %v2520, %v2522
    %v2524 = vrot.slane %v2516, %v2523
    %v2526 = vunpack.c.l.s4 1983009808
    %v2527 = vunpack.c.0.s8 %v2526
    %v2528 = vlaneseq
    %v2529 = vshrl.u32 %v2528, 7
    %v2530 = vsub.s32 %v2527, %v2529
    %v2531 = vrot.slane %v2517, %v2530
    %v2532 = vcombine.low %v2069, %v2073
    %v2533 = vcombine.high %v2069, %v2073
    %v2535 = vunpack.c.l.s4 1983009808
    %v2536 = vunpack.c.0.s8 %v2535
    %v2537 = vlaneseq
    %v2538 = vshrl.u32 %v2537, 7
    %v2539 = vsub.s32 %v2536, %v2538
    %v2540 = vrot.slane %v2532, %v2539
    %v2542 = vunpack.c.l.s4 1983009808
    %v2543 = vunpack.c.0.s8 %v2542
    %v2544 = vlaneseq
    %v2545 = vshrl.u32 %v2544, 7
    %v2546 = vsub.s32 %v2543, %v2545
    %v2547 = vrot.slane %v2533, %v2546
    %v2548 = vcombine.low %v2071, %v2075
    %v2549 = vcombine.high %v2071, %v2075
    %v2551 = vunpack.c.l.s4 1983009808
    %v2552 = vunpack.c.0.s8 %v2551
    %v2553 = vlaneseq
    %v2554 = vshrl.u32 %v2553, 7
    %v2555 = vsub.s32 %v2552, %v2554
    %v2556 = vrot.slane %v2548, %v2555
    %v2558 = vunpack.c.l.s4 1983009808
    %v2559 = vunpack.c.0.s8 %v2558
    %v2560 = vlaneseq
    %v2561 = vshrl.u32 %v2560, 7
    %v2562 = vsub.s32 %v2559, %v2561
    %v2563 = vrot.slane %v2549, %v2562
    %v2564 = vcombine.low %v2508, %v2524
    %v2565 = vcombine.high %v2508, %v2524
    %v2567 = vunpack.c.l.s4 1934713408
    %v2568 = vunpack.c.0.s8 %v2567
    %v2569 = vlaneseq
    %v2570 = vshrl.u32 %v2569, 7
    %v2571 = vsub.s32 %v2568, %v2570
    %v2572 = vrot.slane %v2564, %v2571
    %v2574 = vunpack.c.l.s4 1934713408
    %v2575 = vunpack.c.0.s8 %v2574
    %v2576 = vlaneseq
    %v2577 = vshrl.u32 %v2576, 7
    %v2578 = vsub.s32 %v2575, %v2577
    %v2579 = vrot.slane %v2565, %v2578
    %v2580 = vcombine.low %v2515, %v2531
    %v2581 = vcombine.high %v2515, %v2531
    %v2583 = vunpack.c.l.s4 1934713408
    %v2584 = vunpack.c.0.s8 %v2583
    %v2585 = vlaneseq
    %v2586 = vshrl.u32 %v2585, 7
    %v2587 = vsub.s32 %v2584, %v2586
    %v2588 = vrot.slane %v2580, %v2587
    %v2590 = vunpack.c.l.s4 1934713408
    %v2591 = vunpack.c.0.s8 %v2590
    %v2592 = vlaneseq
    %v2593 = vshrl.u32 %v2592, 7
    %v2594 = vsub.s32 %v2591, %v2593
    %v2595 = vrot.slane %v2581, %v2594
    %v2596 = vcombine.low %v2540, %v2556
    %v2597 = vcombine.high %v2540, %v2556
    %v2599 = vunpack.c.l.s4 1934713408
    %v2600 = vunpack.c.0.s8 %v2599
    %v2601 = vlaneseq
    %v2602 = vshrl.u32 %v2601, 7
    %v2603 = vsub.s32 %v2600, %v2602
    %v2604 = vrot.slane %v2596, %v2603
    %v2606 = vunpack.c.l.s4 1934713408
    %v2607 = vunpack.c.0.s8 %v2606
    %v2608 = vlaneseq
    %v2609 = vshrl.u32 %v2608, 7
    %v2610 = vsub.s32 %v2607, %v2609
    %v2611 = vrot.slane %v2597, %v2610
    %v2612 = vcombine.low %v2547, %v2563
    %v2613 = vcombine.high %v2547, %v2563
    %v2615 = vunpack.c.l.s4 1934713408
    %v2616 = vunpack.c.0.s8 %v2615
    %v2617 = vlaneseq
    %v2618 = vshrl.u32 %v2617, 7
    %v2619 = vsub.s32 %v2616, %v2618
    %v2620 = vrot.slane %v2612, %v2619
    %v2622 = vunpack.c.l.s4 1934713408
    %v2623 = vunpack.c.0.s8 %v2622
    %v2624 = vlaneseq
    %v2625 = vshrl.u32 %v2624, 7
    %v2626 = vsub.s32 %v2623, %v2625
    %v2627 = vrot.slane %v2613, %v2626
    %v2628 = vcombine.low %v2572, %v2604
    %v2629 = vcombine.high %v2572, %v2604
    %v2630 = vcombine.low %v2579, %v2611
    %v2631 = vcombine.high %v2579, %v2611
    %v2632 = vcombine.low %v2588, %v2620
    %v2633 = vcombine.high %v2588, %v2620
    %v2634 = vcombine.low %v2595, %v2627
    %v2635 = vcombine.high %v2595, %v2627
    %v2636 = vcombine.low %v2076, %v2080
    %v2637 = vcombine.high %v2076, %v2080
    %v2639 = vunpack.c.l.s4 1983009808
    %v2640 = vunpack.c.0.s8 %v2639
    %v2641 = vlaneseq
    %v2642 = vshrl.u32 %v2641, 7
    %v2643 = vsub.s32 %v2640, %v2642
    %v2644 = vrot.slane %v2636, %v2643
    %v2646 = vunpack.c.l.s4 1983009808
    %v2647 = vunpack.c.0.s8 %v2646
    %v2648 = vlaneseq
    %v2649 = vshrl.u32 %v2648, 7
    %v2650 = vsub.s32 %v2647, %v2649
    %v2651 = vrot.slane %v2637, %v2650
    %v2652 = vcombine.low %v2078, %v2082
    %v2653 = vcombine.high %v2078, %v2082
    %v2655 = vunpack.c.l.s4 1983009808
    %v2656 = vunpack.c.0.s8 %v2655
    %v2657 = vlaneseq
    %v2658 = vshrl.u32 %v2657, 7
    %v2659 = vsub.s32 %v2656, %v2658
    %v2660 = vrot.slane %v2652, %v2659
    %v2662 = vunpack.c.l.s4 1983009808
    %v2663 = vunpack.c.0.s8 %v2662
    %v2664 = vlaneseq
    %v2665 = vshrl.u32 %v2664, 7
    %v2666 = vsub.s32 %v2663, %v2665
    %v2667 = vrot.slane %v2653, %v2666
    %v2668 = vcombine.low %v2084, %v2088
    %v2669 = vcombine.high %v2084, %v2088
    %v2671 = vunpack.c.l.s4 1983009808
    %v2672 = vunpack.c.0.s8 %v2671
    %v2673 = vlaneseq
    %v2674 = vshrl.u32 %v2673, 7
    %v2675 = vsub.s32 %v2672, %v2674
    %v2676 = vrot.slane %v2668, %v2675
    %v2678 = vunpack.c.l.s4 1983009808
    %v2679 = vunpack.c.0.s8 %v2678
    %v2680 = vlaneseq
    %v2681 = vshrl.u32 %v2680, 7
    %v2682 = vsub.s32 %v2679, %v2681
    %v2683 = vrot.slane %v2669, %v2682
    %v2684 = vcombine.low %v2086, %v2090
    %v2685 = vcombine.high %v2086, %v2090
    %v2687 = vunpack.c.l.s4 1983009808
    %v2688 = vunpack.c.0.s8 %v2687
    %v2689 = vlaneseq
    %v2690 = vshrl.u32 %v2689, 7
    %v2691 = vsub.s32 %v2688, %v2690
    %v2692 = vrot.slane %v2684, %v2691
    %v2694 = vunpack.c.l.s4 1983009808
    %v2695 = vunpack.c.0.s8 %v2694
    %v2696 = vlaneseq
    %v2697 = vshrl.u32 %v2696, 7
    %v2698 = vsub.s32 %v2695, %v2697
    %v2699 = vrot.slane %v2685, %v2698
    %v2700 = vcombine.low %v2644, %v2660
    %v2701 = vcombine.high %v2644, %v2660
    %v2703 = vunpack.c.l.s4 1934713408
    %v2704 = vunpack.c.0.s8 %v2703
    %v2705 = vlaneseq
    %v2706 = vshrl.u32 %v2705, 7
    %v2707 = vsub.s32 %v2704, %v2706
    %v2708 = vrot.slane %v2700, %v2707
    %v2710 = vunpack.c.l.s4 1934713408
    %v2711 = vunpack.c.0.s8 %v2710
    %v2712 = vlaneseq
    %v2713 = vshrl.u32 %v2712, 7
    %v2714 = vsub.s32 %v2711, %v2713
    %v2715 = vrot.slane %v2701, %v2714
    %v2716 = vcombine.low %v2651, %v2667
    %v2717 = vcombine.high %v2651, %v2667
    %v2719 = vunpack.c.l.s4 1934713408
    %v2720 = vunpack.c.0.s8 %v2719
    %v2721 = vlaneseq
    %v2722 = vshrl.u32 %v2721, 7
    %v2723 = vsub.s32 %v2720, %v2722
    %v2724 = vrot.slane %v2716, %v2723
    %v2726 = vunpack.c.l.s4 1934713408
    %v2727 = vunpack.c.0.s8 %v2726
    %v2728 = vlaneseq
    %v2729 = vshrl.u32 %v2728, 7
    %v2730 = vsub.s32 %v2727, %v2729
    %v2731 = vrot.slane %v2717, %v2730
    %v2732 = vcombine.low %v2676, %v2692
    %v2733 = vcombine.high %v2676, %v2692
    %v2735 = vunpack.c.l.s4 1934713408
    %v2736 = vunpack.c.0.s8 %v2735
    %v2737 = vlaneseq
    %v2738 = vshrl.u32 %v2737, 7
    %v2739 = vsub.s32 %v2736, %v2738
    %v2740 = vrot.slane %v2732, %v2739
    %v2742 = vunpack.c.l.s4 1934713408
    %v2743 = vunpack.c.0.s8 %v2742
    %v2744 = vlaneseq
    %v2745 = vshrl.u32 %v2744, 7
    %v2746 = vsub.s32 %v2743, %v2745
    %v2747 = vrot.slane %v2733, %v2746
    %v2748 = vcombine.low %v2683, %v2699
    %v2749 = vcombine.high %v2683, %v2699
    %v2751 = vunpack.c.l.s4 1934713408
    %v2752 = vunpack.c.0.s8 %v2751
    %v2753 = vlaneseq
    %v2754 = vshrl.u32 %v2753, 7
    %v2755 = vsub.s32 %v2752, %v2754
    %v2756 = vrot.slane %v2748, %v2755
    %v2758 = vunpack.c.l.s4 1934713408
    %v2759 = vunpack.c.0.s8 %v2758
    %v2760 = vlaneseq
    %v2761 = vshrl.u32 %v2760, 7
    %v2762 = vsub.s32 %v2759, %v2761
    %v2763 = vrot.slane %v2749, %v2762
    %v2764 = vcombine.low %v2708, %v2740
    %v2765 = vcombine.high %v2708, %v2740
    %v2766 = vcombine.low %v2715, %v2747
    %v2767 = vcombine.high %v2715, %v2747
    %v2768 = vcombine.low %v2724, %v2756
    %v2769 = vcombine.high %v2724, %v2756
    %v2770 = vcombine.low %v2731, %v2763
    %v2771 = vcombine.high %v2731, %v2763
    %v2772 = vcombine.low %v2077, %v2081
    %v2773 = vcombine.high %v2077, %v2081
    %v2775 = vunpack.c.l.s4 1983009808
    %v2776 = vunpack.c.0.s8 %v2775
    %v2777 = vlaneseq
    %v2778 = vshrl.u32 %v2777, 7
    %v2779 = vsub.s32 %v2776, %v2778
    %v2780 = vrot.slane %v2772, %v2779
    %v2782 = vunpack.c.l.s4 1983009808
    %v2783 = vunpack.c.0.s8 %v2782
    %v2784 = vlaneseq
    %v2785 = vshrl.u32 %v2784, 7
    %v2786 = vsub.s32 %v2783, %v2785
    %v2787 = vrot.slane %v2773, %v2786
    %v2788 = vcombine.low %v2079, %v2083
    %v2789 = vcombine.high %v2079, %v2083
    %v2791 = vunpack.c.l.s4 1983009808
    %v2792 = vunpack.c.0.s8 %v2791
    %v2793 = vlaneseq
    %v2794 = vshrl.u32 %v2793, 7
    %v2795 = vsub.s32 %v2792, %v2794
    %v2796 = vrot.slane %v2788, %v2795
    %v2798 = vunpack.c.l.s4 1983009808
    %v2799 = vunpack.c.0.s8 %v2798
    %v2800 = vlaneseq
    %v2801 = vshrl.u32 %v2800, 7
    %v2802 = vsub.s32 %v2799, %v2801
    %v2803 = vrot.slane %v2789, %v2802
    %v2804 = vcombine.low %v2085, %v2089
    %v2805 = vcombine.high %v2085, %v2089
    %v2807 = vunpack.c.l.s4 1983009808
    %v2808 = vunpack.c.0.s8 %v2807
    %v2809 = vlaneseq
    %v2810 = vshrl.u32 %v2809, 7
    %v2811 = vsub.s32 %v2808, %v2810
    %v2812 = vrot.slane %v2804, %v2811
    %v2814 = vunpack.c.l.s4 1983009808
    %v2815 = vunpack.c.0.s8 %v2814
    %v2816 = vlaneseq
    %v2817 = vshrl.u32 %v2816, 7
    %v2818 = vsub.s32 %v2815, %v2817
    %v2819 = vrot.slane %v2805, %v2818
    %v2820 = vcombine.low %v2087, %v2091
    %v2821 = vcombine.high %v2087, %v2091
    %v2823 = vunpack.c.l.s4 1983009808
    %v2824 = vunpack.c.0.s8 %v2823
    %v2825 = vlaneseq
    %v2826 = vshrl.u32 %v2825, 7
    %v2827 = vsub.s32 %v2824, %v2826
    %v2828 = vrot.slane %v2820, %v2827
    %v2830 = vunpack.c.l.s4 1983009808
    %v2831 = vunpack.c.0.s8 %v2830
    %v2832 = vlaneseq
    %v2833 = vshrl.u32 %v2832, 7
    %v2834 = vsub.s32 %v2831, %v2833
    %v2835 = vrot.slane %v2821, %v2834
    %v2836 = vcombine.low %v2780, %v2796
    %v2837 = vcombine.high %v2780, %v2796
    %v2839 = vunpack.c.l.s4 1934713408
    %v2840 = vunpack.c.0.s8 %v2839
    %v2841 = vlaneseq
    %v2842 = vshrl.u32 %v2841, 7
    %v2843 = vsub.s32 %v2840, %v2842
    %v2844 = vrot.slane %v2836, %v2843
    %v2846 = vunpack.c.l.s4 1934713408
    %v2847 = vunpack.c.0.s8 %v2846
    %v2848 = vlaneseq
    %v2849 = vshrl.u32 %v2848, 7
    %v2850 = vsub.s32 %v2847, %v2849
    %v2851 = vrot.slane %v2837, %v2850
    %v2852 = vcombine.low %v2787, %v2803
    %v2853 = vcombine.high %v2787, %v2803
    %v2855 = vunpack.c.l.s4 1934713408
    %v2856 = vunpack.c.0.s8 %v2855
    %v2857 = vlaneseq
    %v2858 = vshrl.u32 %v2857, 7
    %v2859 = vsub.s32 %v2856, %v2858
    %v2860 = vrot.slane %v2852, %v2859
    %v2862 = vunpack.c.l.s4 1934713408
    %v2863 = vunpack.c.0.s8 %v2862
    %v2864 = vlaneseq
    %v2865 = vshrl.u32 %v2864, 7
    %v2866 = vsub.s32 %v2863, %v2865
    %v2867 = vrot.slane %v2853, %v2866
    %v2868 = vcombine.low %v2812, %v2828
    %v2869 = vcombine.high %v2812, %v2828
    %v2871 = vunpack.c.l.s4 1934713408
    %v2872 = vunpack.c.0.s8 %v2871
    %v2873 = vlaneseq
    %v2874 = vshrl.u32 %v2873, 7
    %v2875 = vsub.s32 %v2872, %v2874
    %v2876 = vrot.slane %v2868, %v2875
    %v2878 = vunpack.c.l.s4 1934713408
    %v2879 = vunpack.c.0.s8 %v2878
    %v2880 = vlaneseq
    %v2881 = vshrl.u32 %v2880, 7
    %v2882 = vsub.s32 %v2879, %v2881
    %v2883 = vrot.slane %v2869, %v2882
    %v2884 = vcombine.low %v2819, %v2835
    %v2885 = vcombine.high %v2819, %v2835
    %v2887 = vunpack.c.l.s4 1934713408
    %v2888 = vunpack.c.0.s8 %v2887
    %v2889 = vlaneseq
    %v2890 = vshrl.u32 %v2889, 7
    %v2891 = vsub.s32 %v2888, %v2890
    %v2892 = vrot.slane %v2884, %v2891
    %v2894 = vunpack.c.l.s4 1934713408
    %v2895 = vunpack.c.0.s8 %v2894
    %v2896 = vlaneseq
    %v2897 = vshrl.u32 %v2896, 7
    %v2898 = vsub.s32 %v2895, %v2897
    %v2899 = vrot.slane %v2885, %v2898
    %v2900 = vcombine.low %v2844, %v2876
    %v2901 = vcombine.high %v2844, %v2876
    %v2902 = vcombine.low %v2851, %v2883
    %v2903 = vcombine.high %v2851, %v2883
    %v2904 = vcombine.low %v2860, %v2892
    %v2905 = vcombine.high %v2860, %v2892
    %v2906 = vcombine.low %v2867, %v2899
    %v2907 = vcombine.high %v2867, %v2899
    %v2910 = vpack.i.b16 %v2356, %v2220
    %v2912 = vshrl.u32 %v2220, 16
    %v2913 = vshrl.u32 %v2356, 16
    %v2914 = vpack.i.b16 %v2913, %v2912
    %v2918 = vpack.i.b16 %v2357, %v2221
    %v2920 = vshrl.u32 %v2221, 16
    %v2921 = vshrl.u32 %v2357, 16
    %v2922 = vpack.i.b16 %v2921, %v2920
    %v2926 = vpack.i.b16 %v2358, %v2222
    %v2928 = vshrl.u32 %v2222, 16
    %v2929 = vshrl.u32 %v2358, 16
    %v2930 = vpack.i.b16 %v2929, %v2928
    %v2934 = vpack.i.b16 %v2359, %v2223
    %v2936 = vshrl.u32 %v2223, 16
    %v2937 = vshrl.u32 %v2359, 16
    %v2938 = vpack.i.b16 %v2937, %v2936
    %v2942 = vpack.i.b16 %v2360, %v2224
    %v2944 = vshrl.u32 %v2224, 16
    %v2945 = vshrl.u32 %v2360, 16
    %v2946 = vpack.i.b16 %v2945, %v2944
    %v2950 = vpack.i.b16 %v2361, %v2225
    %v2952 = vshrl.u32 %v2225, 16
    %v2953 = vshrl.u32 %v2361, 16
    %v2954 = vpack.i.b16 %v2953, %v2952
    %v2958 = vpack.i.b16 %v2362, %v2226
    %v2960 = vshrl.u32 %v2226, 16
    %v2961 = vshrl.u32 %v2362, 16
    %v2962 = vpack.i.b16 %v2961, %v2960
    %v2966 = vpack.i.b16 %v2363, %v2227
    %v2968 = vshrl.u32 %v2227, 16
    %v2969 = vshrl.u32 %v2363, 16
    %v2970 = vpack.i.b16 %v2969, %v2968
    %v2974 = vpack.i.b16 %v2628, %v2492
    %v2976 = vshrl.u32 %v2492, 16
    %v2977 = vshrl.u32 %v2628, 16
    %v2978 = vpack.i.b16 %v2977, %v2976
    %v2982 = vpack.i.b16 %v2629, %v2493
    %v2984 = vshrl.u32 %v2493, 16
    %v2985 = vshrl.u32 %v2629, 16
    %v2986 = vpack.i.b16 %v2985, %v2984
    %v2990 = vpack.i.b16 %v2630, %v2494
    %v2992 = vshrl.u32 %v2494, 16
    %v2993 = vshrl.u32 %v2630, 16
    %v2994 = vpack.i.b16 %v2993, %v2992
    %v2998 = vpack.i.b16 %v2631, %v2495
    %v3000 = vshrl.u32 %v2495, 16
    %v3001 = vshrl.u32 %v2631, 16
    %v3002 = vpack.i.b16 %v3001, %v3000
    %v3006 = vpack.i.b16 %v2632, %v2496
    %v3008 = vshrl.u32 %v2496, 16
    %v3009 = vshrl.u32 %v2632, 16
    %v3010 = vpack.i.b16 %v3009, %v3008
    %v3014 = vpack.i.b16 %v2633, %v2497
    %v3016 = vshrl.u32 %v2497, 16
    %v3017 = vshrl.u32 %v2633, 16
    %v3018 = vpack.i.b16 %v3017, %v3016
    %v3022 = vpack.i.b16 %v2634, %v2498
    %v3024 = vshrl.u32 %v2498, 16
    %v3025 = vshrl.u32 %v2634, 16
    %v3026 = vpack.i.b16 %v3025, %v3024
    %v3030 = vpack.i.b16 %v2635, %v2499
    %v3032 = vshrl.u32 %v2499, 16
    %v3033 = vshrl.u32 %v2635, 16
    %v3034 = vpack.i.b16 %v3033, %v3032
    %v3038 = vpack.i.b16 %v2900, %v2764
    %v3040 = vshrl.u32 %v2764, 16
    %v3041 = vshrl.u32 %v2900, 16
    %v3042 = vpack.i.b16 %v3041, %v3040
    %v3046 = vpack.i.b16 %v2901, %v2765
    %v3048 = vshrl.u32 %v2765, 16
    %v3049 = vshrl.u32 %v2901, 16
    %v3050 = vpack.i.b16 %v3049, %v3048
    %v3054 = vpack.i.b16 %v2902, %v2766
    %v3056 = vshrl.u32 %v2766, 16
    %v3057 = vshrl.u32 %v2902, 16
    %v3058 = vpack.i.b16 %v3057, %v3056
    %v3062 = vpack.i.b16 %v2903, %v2767
    %v3064 = vshrl.u32 %v2767, 16
    %v3065 = vshrl.u32 %v2903, 16
    %v3066 = vpack.i.b16 %v3065, %v3064
    %v3070 = vpack.i.b16 %v2904, %v2768
    %v3072 = vshrl.u32 %v2768, 16
    %v3073 = vshrl.u32 %v2904, 16
    %v3074 = vpack.i.b16 %v3073, %v3072
    %v3078 = vpack.i.b16 %v2905, %v2769
    %v3080 = vshrl.u32 %v2769, 16
    %v3081 = vshrl.u32 %v2905, 16
    %v3082 = vpack.i.b16 %v3081, %v3080
    %v3086 = vpack.i.b16 %v2906, %v2770
    %v3088 = vshrl.u32 %v2770, 16
    %v3089 = vshrl.u32 %v2906, 16
    %v3090 = vpack.i.b16 %v3089, %v3088
    %v3094 = vpack.i.b16 %v2907, %v2771
    %v3096 = vshrl.u32 %v2771, 16
    %v3097 = vshrl.u32 %v2907, 16
    %v3098 = vpack.i.b16 %v3097, %v3096
    %v3100 = vld [vmem:[%s1] sm:$0xf]
    %v3101 = vld [vmem:[%s2] sm:$0xff]
    %3103 = vset.pattern.permute.xlu0 0
    %3104 = vperm.xlu0 %3103, %v3101
    %v3105 = vpop.permute.xlu0 %3104
    %v3108 = vsel %vm1438, %v3100, 0
    %3110 = vmatprep.subr.bf16.mxu0 %v2914
    %3111 = vmatpush1.bf16.msra.mxu0 %v2910
    %3112 = vmatprep.subr.bf16.mxu0 %v2978
    %3113 = vmatpush1.bf16.msra.mxu0 %v2974
    %3114 = vmatprep.subr.bf16.mxu0 %v3042
    %3115 = vmatpush1.bf16.msra.mxu0 %v3038
    %3116 = vmatprep.subr.bf16.mxu0 0
    %3117 = vmatpush1.bf16.msra.mxu0 0
    %3118 = vmatprep.subr.bf16.mxu0 0
    %3119 = vmatpush1.bf16.msra.mxu0 0
    %3120 = vmatprep.subr.bf16.mxu0 0
    %3121 = vmatpush1.bf16.msra.mxu0 0
    %3122 = vmatprep.subr.bf16.mxu0 0
    %3123 = vmatpush1.bf16.msra.mxu0 0
    %3124 = vmatprep.subr.bf16.mxu0 0
    %3125 = vmatpush1.bf16.msra.mxu0 0
    %3126 = vmatprep.subr.bf16.mxu0 0
    %3127 = vmatpush1.bf16.msra.mxu0 0
    %3128 = vmatprep.subr.bf16.mxu0 0
    %3129 = vmatpush1.bf16.msra.mxu0 0
    %3130 = vmatprep.subr.bf16.mxu0 0
    %3131 = vmatpush1.bf16.msra.mxu0 0
    %3132 = vmatprep.subr.bf16.mxu0 0
    %3133 = vmatpush1.bf16.msra.mxu0 0
    %3134 = vmatprep.subr.bf16.mxu0 0
    %3135 = vmatpush1.bf16.msra.mxu0 0
    %3136 = vmatprep.subr.bf16.mxu0 0
    %3137 = vmatpush1.bf16.msra.mxu0 0
    %3138 = vmatprep.subr.bf16.mxu0 0
    %3139 = vmatpush1.bf16.msra.mxu0 0
    %3140 = vmatprep.subr.bf16.mxu0 0
    %3141 = vmatpush1.bf16.msra.mxu0 0
    %3142 = vmatprep.mubr.bf16.mxu0 0
    %3143 = vmatmul.mubr.bf16.gmra.mrb[0].mxu0 %v3108
    %v3144 = vpop.f32.mrb[0].mxu0
    %v3145 = vadd.f32 %v3105, %v3144
    %v3146 = vpop.f32.mrb[0].mxu0
    %v3147 = vadd.f32 %v3105, %v3146
    %v3148 = vpop.f32.mrb[0].mxu0
    %v3149 = vpop.f32.mrb[0].mxu0
    %3150 = vdwg.mxu0
    %3151 = vmatprep.subr.bf16.mxu0 %v2922
    %3152 = vmatpush1.bf16.msra.mxu0 %v2918
    %3153 = vmatprep.subr.bf16.mxu0 %v2986
    %3154 = vmatpush1.bf16.msra.mxu0 %v2982
    %3155 = vmatprep.subr.bf16.mxu0 %v3050
    %3156 = vmatpush1.bf16.msra.mxu0 %v3046
    %3157 = vmatprep.subr.bf16.mxu0 0
    %3158 = vmatpush1.bf16.msra.mxu0 0
    %3159 = vmatprep.subr.bf16.mxu0 0
    %3160 = vmatpush1.bf16.msra.mxu0 0
    %3161 = vmatprep.subr.bf16.mxu0 0
    %3162 = vmatpush1.bf16.msra.mxu0 0
    %3163 = vmatprep.subr.bf16.mxu0 0
    %3164 = vmatpush1.bf16.msra.mxu0 0
    %3165 = vmatprep.subr.bf16.mxu0 0
    %3166 = vmatpush1.bf16.msra.mxu0 0
    %3167 = vmatprep.subr.bf16.mxu0 0
    %3168 = vmatpush1.bf16.msra.mxu0 0
    %3169 = vmatprep.subr.bf16.mxu0 0
    %3170 = vmatpush1.bf16.msra.mxu0 0
    %3171 = vmatprep.subr.bf16.mxu0 0
    %3172 = vmatpush1.bf16.msra.mxu0 0
    %3173 = vmatprep.subr.bf16.mxu0 0
    %3174 = vmatpush1.bf16.msra.mxu0 0
    %3175 = vmatprep.subr.bf16.mxu0 0
    %3176 = vmatpush1.bf16.msra.mxu0 0
    %3177 = vmatprep.subr.bf16.mxu0 0
    %3178 = vmatpush1.bf16.msra.mxu0 0
    %3179 = vmatprep.subr.bf16.mxu0 0
    %3180 = vmatpush1.bf16.msra.mxu0 0
    %3181 = vmatprep.subr.bf16.mxu0 0
    %3182 = vmatpush1.bf16.msra.mxu0 0
    %3183 = vmatprep.mubr.bf16.mxu0 0
    %3184 = vmatmul.mubr.bf16.gmra.mrb[0].mxu0 %v3108
    %v3185 = vpop.f32.mrb[0].mxu0
    %v3186 = vadd.f32 %v3105, %v3185
    %v3187 = vpop.f32.mrb[0].mxu0
    %v3188 = vadd.f32 %v3105, %v3187
    %v3189 = vpop.f32.mrb[0].mxu0
    %v3190 = vpop.f32.mrb[0].mxu0
    %3191 = vdwg.mxu0
    %3192 = vmatprep.subr.bf16.mxu0 %v2930
    %3193 = vmatpush1.bf16.msra.mxu0 %v2926
    %3194 = vmatprep.subr.bf16.mxu0 %v2994
    %3195 = vmatpush1.bf16.msra.mxu0 %v2990
    %3196 = vmatprep.subr.bf16.mxu0 %v3058
    %3197 = vmatpush1.bf16.msra.mxu0 %v3054
    %3198 = vmatprep.subr.bf16.mxu0 0
    %3199 = vmatpush1.bf16.msra.mxu0 0
    %3200 = vmatprep.subr.bf16.mxu0 0
    %3201 = vmatpush1.bf16.msra.mxu0 0
    %3202 = vmatprep.subr.bf16.mxu0 0
    %3203 = vmatpush1.bf16.msra.mxu0 0
    %3204 = vmatprep.subr.bf16.mxu0 0
    %3205 = vmatpush1.bf16.msra.mxu0 0
    %3206 = vmatprep.subr.bf16.mxu0 0
    %3207 = vmatpush1.bf16.msra.mxu0 0
    %3208 = vmatprep.subr.bf16.mxu0 0
    %3209 = vmatpush1.bf16.msra.mxu0 0
    %3210 = vmatprep.subr.bf16.mxu0 0
    %3211 = vmatpush1.bf16.msra.mxu0 0
    %3212 = vmatprep.subr.bf16.mxu0 0
    %3213 = vmatpush1.bf16.msra.mxu0 0
    %3214 = vmatprep.subr.bf16.mxu0 0
    %3215 = vmatpush1.bf16.msra.mxu0 0
    %3216 = vmatprep.subr.bf16.mxu0 0
    %3217 = vmatpush1.bf16.msra.mxu0 0
    %3218 = vmatprep.subr.bf16.mxu0 0
    %3219 = vmatpush1.bf16.msra.mxu0 0
    %3220 = vmatprep.subr.bf16.mxu0 0
    %3221 = vmatpush1.bf16.msra.mxu0 0
    %3222 = vmatprep.subr.bf16.mxu0 0
    %3223 = vmatpush1.bf16.msra.mxu0 0
    %3224 = vmatprep.mubr.bf16.mxu0 0
    %3225 = vmatmul.mubr.bf16.gmra.mrb[0].mxu0 %v3108
    %v3226 = vpop.f32.mrb[0].mxu0
    %v3227 = vadd.f32 %v3105, %v3226
    %v3228 = vpop.f32.mrb[0].mxu0
    %v3229 = vadd.f32 %v3105, %v3228
    %v3230 = vpop.f32.mrb[0].mxu0
    %v3231 = vpop.f32.mrb[0].mxu0
    %3232 = vdwg.mxu0
    %3233 = vmatprep.subr.bf16.mxu0 %v2938
    %3234 = vmatpush1.bf16.msra.mxu0 %v2934
    %3235 = vmatprep.subr.bf16.mxu0 %v3002
    %3236 = vmatpush1.bf16.msra.mxu0 %v2998
    %3237 = vmatprep.subr.bf16.mxu0 %v3066
    %3238 = vmatpush1.bf16.msra.mxu0 %v3062
    %3239 = vmatprep.subr.bf16.mxu0 0
    %3240 = vmatpush1.bf16.msra.mxu0 0
    %3241 = vmatprep.subr.bf16.mxu0 0
    %3242 = vmatpush1.bf16.msra.mxu0 0
    %3243 = vmatprep.subr.bf16.mxu0 0
    %3244 = vmatpush1.bf16.msra.mxu0 0
    %3245 = vmatprep.subr.bf16.mxu0 0
    %3246 = vmatpush1.bf16.msra.mxu0 0
    %3247 = vmatprep.subr.bf16.mxu0 0
    %3248 = vmatpush1.bf16.msra.mxu0 0
    %3249 = vmatprep.subr.bf16.mxu0 0
    %3250 = vmatpush1.bf16.msra.mxu0 0
    %3251 = vmatprep.subr.bf16.mxu0 0
    %3252 = vmatpush1.bf16.msra.mxu0 0
    %3253 = vmatprep.subr.bf16.mxu0 0
    %3254 = vmatpush1.bf16.msra.mxu0 0
    %3255 = vmatprep.subr.bf16.mxu0 0
    %3256 = vmatpush1.bf16.msra.mxu0 0
    %3257 = vmatprep.subr.bf16.mxu0 0
    %3258 = vmatpush1.bf16.msra.mxu0 0
    %3259 = vmatprep.subr.bf16.mxu0 0
    %3260 = vmatpush1.bf16.msra.mxu0 0
    %3261 = vmatprep.subr.bf16.mxu0 0
    %3262 = vmatpush1.bf16.msra.mxu0 0
    %3263 = vmatprep.subr.bf16.mxu0 0
    %3264 = vmatpush1.bf16.msra.mxu0 0
    %3265 = vmatprep.mubr.bf16.mxu0 0
    %3266 = vmatmul.mubr.bf16.gmra.mrb[0].mxu0 %v3108
    %v3267 = vpop.f32.mrb[0].mxu0
    %v3268 = vadd.f32 %v3105, %v3267
    %v3269 = vpop.f32.mrb[0].mxu0
    %v3270 = vadd.f32 %v3105, %v3269
    %v3271 = vpop.f32.mrb[0].mxu0
    %v3272 = vpop.f32.mrb[0].mxu0
    %3273 = vdwg.mxu0
    %3274 = vmatprep.subr.bf16.mxu0 %v2946
    %3275 = vmatpush1.bf16.msra.mxu0 %v2942
    %3276 = vmatprep.subr.bf16.mxu0 %v3010
    %3277 = vmatpush1.bf16.msra.mxu0 %v3006
    %3278 = vmatprep.subr.bf16.mxu0 %v3074
    %3279 = vmatpush1.bf16.msra.mxu0 %v3070
    %3280 = vmatprep.subr.bf16.mxu0 0
    %3281 = vmatpush1.bf16.msra.mxu0 0
    %3282 = vmatprep.subr.bf16.mxu0 0
    %3283 = vmatpush1.bf16.msra.mxu0 0
    %3284 = vmatprep.subr.bf16.mxu0 0
    %3285 = vmatpush1.bf16.msra.mxu0 0
    %3286 = vmatprep.subr.bf16.mxu0 0
    %3287 = vmatpush1.bf16.msra.mxu0 0
    %3288 = vmatprep.subr.bf16.mxu0 0
    %3289 = vmatpush1.bf16.msra.mxu0 0
    %3290 = vmatprep.subr.bf16.mxu0 0
    %3291 = vmatpush1.bf16.msra.mxu0 0
    %3292 = vmatprep.subr.bf16.mxu0 0
    %3293 = vmatpush1.bf16.msra.mxu0 0
    %3294 = vmatprep.subr.bf16.mxu0 0
    %3295 = vmatpush1.bf16.msra.mxu0 0
    %3296 = vmatprep.subr.bf16.mxu0 0
    %3297 = vmatpush1.bf16.msra.mxu0 0
    %3298 = vmatprep.subr.bf16.mxu0 0
    %3299 = vmatpush1.bf16.msra.mxu0 0
    %3300 = vmatprep.subr.bf16.mxu0 0
    %3301 = vmatpush1.bf16.msra.mxu0 0
    %3302 = vmatprep.subr.bf16.mxu0 0
    %3303 = vmatpush1.bf16.msra.mxu0 0
    %3304 = vmatprep.subr.bf16.mxu0 0
    %3305 = vmatpush1.bf16.msra.mxu0 0
    %3306 = vmatprep.mubr.bf16.mxu0 0
    %3307 = vmatmul.mubr.bf16.gmra.mrb[0].mxu0 %v3108
    %v3308 = vpop.f32.mrb[0].mxu0
    %v3309 = vadd.f32 %v3105, %v3308
    %v3310 = vpop.f32.mrb[0].mxu0
    %v3311 = vadd.f32 %v3105, %v3310
    %v3312 = vpop.f32.mrb[0].mxu0
    %v3313 = vpop.f32.mrb[0].mxu0
    %3314 = vdwg.mxu0
    %3315 = vmatprep.subr.bf16.mxu0 %v2954
    %3316 = vmatpush1.bf16.msra.mxu0 %v2950
    %3317 = vmatprep.subr.bf16.mxu0 %v3018
    %3318 = vmatpush1.bf16.msra.mxu0 %v3014
    %3319 = vmatprep.subr.bf16.mxu0 %v3082
    %3320 = vmatpush1.bf16.msra.mxu0 %v3078
    %3321 = vmatprep.subr.bf16.mxu0 0
    %3322 = vmatpush1.bf16.msra.mxu0 0
    %3323 = vmatprep.subr.bf16.mxu0 0
    %3324 = vmatpush1.bf16.msra.mxu0 0
    %3325 = vmatprep.subr.bf16.mxu0 0
    %3326 = vmatpush1.bf16.msra.mxu0 0
    %3327 = vmatprep.subr.bf16.mxu0 0
    %3328 = vmatpush1.bf16.msra.mxu0 0
    %3329 = vmatprep.subr.bf16.mxu0 0
    %3330 = vmatpush1.bf16.msra.mxu0 0
    %3331 = vmatprep.subr.bf16.mxu0 0
    %3332 = vmatpush1.bf16.msra.mxu0 0
    %3333 = vmatprep.subr.bf16.mxu0 0
    %3334 = vmatpush1.bf16.msra.mxu0 0
    %3335 = vmatprep.subr.bf16.mxu0 0
    %3336 = vmatpush1.bf16.msra.mxu0 0
    %3337 = vmatprep.subr.bf16.mxu0 0
    %3338 = vmatpush1.bf16.msra.mxu0 0
    %3339 = vmatprep.subr.bf16.mxu0 0
    %3340 = vmatpush1.bf16.msra.mxu0 0
    %3341 = vmatprep.subr.bf16.mxu0 0
    %3342 = vmatpush1.bf16.msra.mxu0 0
    %3343 = vmatprep.subr.bf16.mxu0 0
    %3344 = vmatpush1.bf16.msra.mxu0 0
    %3345 = vmatprep.subr.bf16.mxu0 0
    %3346 = vmatpush1.bf16.msra.mxu0 0
    %3347 = vmatprep.mubr.bf16.mxu0 0
    %3348 = vmatmul.mubr.bf16.gmra.mrb[0].mxu0 %v3108
    %v3349 = vpop.f32.mrb[0].mxu0
    %v3350 = vadd.f32 %v3105, %v3349
    %v3351 = vpop.f32.mrb[0].mxu0
    %v3352 = vadd.f32 %v3105, %v3351
    %v3353 = vpop.f32.mrb[0].mxu0
    %v3354 = vpop.f32.mrb[0].mxu0
    %3355 = vdwg.mxu0
    %3356 = vmatprep.subr.bf16.mxu0 %v2962
    %3357 = vmatpush1.bf16.msra.mxu0 %v2958
    %3358 = vmatprep.subr.bf16.mxu0 %v3026
    %3359 = vmatpush1.bf16.msra.mxu0 %v3022
    %3360 = vmatprep.subr.bf16.mxu0 %v3090
    %3361 = vmatpush1.bf16.msra.mxu0 %v3086
    %3362 = vmatprep.subr.bf16.mxu0 0
    %3363 = vmatpush1.bf16.msra.mxu0 0
    %3364 = vmatprep.subr.bf16.mxu0 0
    %3365 = vmatpush1.bf16.msra.mxu0 0
    %3366 = vmatprep.subr.bf16.mxu0 0
    %3367 = vmatpush1.bf16.msra.mxu0 0
    %3368 = vmatprep.subr.bf16.mxu0 0
    %3369 = vmatpush1.bf16.msra.mxu0 0
    %3370 = vmatprep.subr.bf16.mxu0 0
    %3371 = vmatpush1.bf16.msra.mxu0 0
    %3372 = vmatprep.subr.bf16.mxu0 0
    %3373 = vmatpush1.bf16.msra.mxu0 0
    %3374 = vmatprep.subr.bf16.mxu0 0
    %3375 = vmatpush1.bf16.msra.mxu0 0
    %3376 = vmatprep.subr.bf16.mxu0 0
    %3377 = vmatpush1.bf16.msra.mxu0 0
    %3378 = vmatprep.subr.bf16.mxu0 0
    %3379 = vmatpush1.bf16.msra.mxu0 0
    %3380 = vmatprep.subr.bf16.mxu0 0
    %3381 = vmatpush1.bf16.msra.mxu0 0
    %3382 = vmatprep.subr.bf16.mxu0 0
    %3383 = vmatpush1.bf16.msra.mxu0 0
    %3384 = vmatprep.subr.bf16.mxu0 0
    %3385 = vmatpush1.bf16.msra.mxu0 0
    %3386 = vmatprep.subr.bf16.mxu0 0
    %3387 = vmatpush1.bf16.msra.mxu0 0
    %3388 = vmatprep.mubr.bf16.mxu0 0
    %3389 = vmatmul.mubr.bf16.gmra.mrb[0].mxu0 %v3108
    %v3390 = vpop.f32.mrb[0].mxu0
    %v3391 = vadd.f32 %v3105, %v3390
    %v3392 = vpop.f32.mrb[0].mxu0
    %v3393 = vadd.f32 %v3105, %v3392
    %v3394 = vpop.f32.mrb[0].mxu0
    %v3395 = vpop.f32.mrb[0].mxu0
    %3396 = vdwg.mxu0
    %3397 = vmatprep.subr.bf16.mxu0 %v2970
    %3398 = vmatpush1.bf16.msra.mxu0 %v2966
    %3399 = vmatprep.subr.bf16.mxu0 %v3034
    %3400 = vmatpush1.bf16.msra.mxu0 %v3030
    %3401 = vmatprep.subr.bf16.mxu0 %v3098
    %3402 = vmatpush1.bf16.msra.mxu0 %v3094
    %3403 = vmatprep.subr.bf16.mxu0 0
    %3404 = vmatpush1.bf16.msra.mxu0 0
    %3405 = vmatprep.subr.bf16.mxu0 0
    %3406 = vmatpush1.bf16.msra.mxu0 0
    %3407 = vmatprep.subr.bf16.mxu0 0
    %3408 = vmatpush1.bf16.msra.mxu0 0
    %3409 = vmatprep.subr.bf16.mxu0 0
    %3410 = vmatpush1.bf16.msra.mxu0 0
    %3411 = vmatprep.subr.bf16.mxu0 0
    %3412 = vmatpush1.bf16.msra.mxu0 0
    %3413 = vmatprep.subr.bf16.mxu0 0
    %3414 = vmatpush1.bf16.msra.mxu0 0
    %3415 = vmatprep.subr.bf16.mxu0 0
    %3416 = vmatpush1.bf16.msra.mxu0 0
    %3417 = vmatprep.subr.bf16.mxu0 0
    %3418 = vmatpush1.bf16.msra.mxu0 0
    %3419 = vmatprep.subr.bf16.mxu0 0
    %3420 = vmatpush1.bf16.msra.mxu0 0
    %3421 = vmatprep.subr.bf16.mxu0 0
    %3422 = vmatpush1.bf16.msra.mxu0 0
    %3423 = vmatprep.subr.bf16.mxu0 0
    %3424 = vmatpush1.bf16.msra.mxu0 0
    %3425 = vmatprep.subr.bf16.mxu0 0
    %3426 = vmatpush1.bf16.msra.mxu0 0
    %3427 = vmatprep.subr.bf16.mxu0 0
    %3428 = vmatpush1.bf16.msra.mxu0 0
    %3429 = vmatprep.mubr.bf16.mxu0 0
    %3430 = vmatmul.mubr.bf16.gmra.mrb[0].mxu0 %v3108
    %v3431 = vpop.f32.mrb[0].mxu0
    %v3432 = vadd.f32 %v3105, %v3431
    %v3433 = vpop.f32.mrb[0].mxu0
    %v3434 = vadd.f32 %v3105, %v3433
    %v3435 = vpop.f32.mrb[0].mxu0
    %v3436 = vpop.f32.mrb[0].mxu0
    %3437 = vdwg.mxu0
    %3438 = vst [vmem:[#allocation3 + $0x80] sm:$0xff] %v3145
    %3439 = vst [vmem:[#allocation3 + $0x88] sm:$0xff] %v3147
    %3440 = vst [vmem:[#allocation3 + $0x90] sm:$0xff] %v3186
    %3441 = vst [vmem:[#allocation3 + $0x98] sm:$0xff] %v3188
    %3442 = vst [vmem:[#allocation3 + $0xa0] sm:$0xff] %v3227
    %3443 = vst [vmem:[#allocation3 + $0xa8] sm:$0xff] %v3229
    %3444 = vst [vmem:[#allocation3 + $0xb0] sm:$0xff] %v3268
    %3445 = vst [vmem:[#allocation3 + $0xb8] sm:$0xff] %v3270
    %3446 = vst [vmem:[#allocation3 + $0xc0] sm:$0xff] %v3309
    %3447 = vst [vmem:[#allocation3 + $0xc8] sm:$0xff] %v3311
    %3448 = vst [vmem:[#allocation3 + $0xd0] sm:$0xff] %v3350
    %3449 = vst [vmem:[#allocation3 + $0xd8] sm:$0xff] %v3352
    %3450 = vst [vmem:[#allocation3 + $0xe0] sm:$0xff] %v3391
    %3451 = vst [vmem:[#allocation3 + $0xe8] sm:$0xff] %v3393
    %3452 = vst [vmem:[#allocation3 + $0xf0] sm:$0xff] %v3432
    %3453 = vst [vmem:[#allocation3 + $0xf8] sm:$0xff] %v3434
    %s3454 = scalar_lea.vmem %s0, 120
    %v3455 = vld [vmem:[%s3454] sm:$0xff]
    %v3456 = vld [vmem:[%s3454 + $0x8] sm:$0xff]
    %v3457 = vld [vmem:[%s3454 + $0x10] sm:$0x7]
    %v3458 = vpack.c.bf16 %v3456, %v3455
    %3459 = vst.msk [vmem:[#allocation2] sm:$0xff] %vm68, %v3458
    %v3460 = vpack.c.bf16 %v3457, %v3457
    %v3462 = vshrl.u32 %v3458, 16
    %v3464 = vshll.u32 %v3458, 16
    %v3466 = vrot.slane %v3464, 1
    %v3467 = vor.u32 %v3462, %v3466
    %v3469 = vshll.u32 %v3460, 16
    %v3471 = vrot.slane %v3469, 1
    %v3472 = vsel %vm71, %v3467, %v3471
    %3474 = vst.msk [vmem:[%s85] sm:$0xff] %vm68, %v3472
    %v3477 = vrot.slane %v3458, 1
    %v3478 = vrot.slane %v3460, 1
    %v3479 = vsel %vm89, %v3477, %v3478
    %3481 = vst.msk [vmem:[%s94] sm:$0xff] %vm68, %v3479
    %v3482 = vrot.slane %v3462, 1
    %v3483 = vrot.slane %v3464, 2
    %v3484 = vor.u32 %v3482, %v3483
    %v3485 = vshrl.u32 %v3460, 16
    %v3487 = vrot.slane %v3485, 1
    %v3488 = vrot.slane %v3469, 2
    %v3489 = vor.u32 %v3487, %v3488
    %v3490 = vsel %vm96, %v3484, %v3489
    %3492 = vst.msk [vmem:[%s107] sm:$0xff] %vm68, %v3490
    %3493 = vrot.lane.b32.xlu0 %v3458, 127
    %v3494 = vpop.permute.xlu0 %3493
    %3496 = vst.msk [vmem:[%s112] sm:$0xff] %vm68, %v3494
    %3497 = vrot.lane.b32.xlu0 %v3472, 127
    %v3498 = vpop.permute.xlu0 %3497
    %3500 = vst.msk [vmem:[%s117] sm:$0xff] %vm68, %v3498
    %3501 = vrot.lane.b32.xlu0 %v3479, 127
    %v3502 = vpop.permute.xlu0 %3501
    %3504 = vst.msk [vmem:[%s122] sm:$0xff] %vm68, %v3502
    %3505 = vrot.lane.b32.xlu0 %v3490, 127
    %v3506 = vpop.permute.xlu0 %3505
    %3508 = vst.msk [vmem:[%s127] sm:$0xff] %vm68, %v3506
    %3509 = vrot.lane.b32.xlu0 %v3458, 126
    %v3510 = vpop.permute.xlu0 %3509
    %3512 = vst.msk [vmem:[%s132] sm:$0xff] %vm68, %v3510
    %3513 = vrot.lane.b32.xlu0 %v3472, 126
    %v3514 = vpop.permute.xlu0 %3513
    %3516 = vst.msk [vmem:[%s137] sm:$0xff] %vm68, %v3514
    %3517 = vrot.lane.b32.xlu0 %v3479, 126
    %v3518 = vpop.permute.xlu0 %3517
    %3520 = vst.msk [vmem:[%s142] sm:$0xff] %vm68, %v3518
    %3521 = vrot.lane.b32.xlu0 %v3490, 126
    %v3522 = vpop.permute.xlu0 %3521
    %3524 = vst.msk [vmem:[%s147] sm:$0xff] %vm68, %v3522
    %3525 = vrot.lane.b32.xlu0 %v3458, 125
    %v3526 = vpop.permute.xlu0 %3525
    %3528 = vst.msk [vmem:[%s152] sm:$0xff] %vm68, %v3526
    %3529 = vrot.lane.b32.xlu0 %v3472, 125
    %v3530 = vpop.permute.xlu0 %3529
    %3532 = vst.msk [vmem:[%s157] sm:$0xff] %vm68, %v3530
    %3533 = vrot.lane.b32.xlu0 %v3479, 125
    %v3534 = vpop.permute.xlu0 %3533
    %3536 = vst.msk [vmem:[%s162] sm:$0xff] %vm68, %v3534
    %3537 = vrot.lane.b32.xlu0 %v3490, 125
    %v3538 = vpop.permute.xlu0 %3537
    %3540 = vst.msk [vmem:[%s167] sm:$0xff] %vm68, %v3538
    %s3541 = scalar_lea.vmem %s0, 160
    %v3542 = vld [vmem:[%s3541] sm:$0xff]
    %v3543 = vld [vmem:[%s3541 + $0x8] sm:$0xff]
    %v3544 = vld [vmem:[%s3541 + $0x10] sm:$0x7]
    %v3545 = vpack.c.bf16 %v3543, %v3542
    %3546 = vst.msk [vmem:[%s174] sm:$0xff] %vm68, %v3545
    %v3547 = vpack.c.bf16 %v3544, %v3544
    %v3549 = vshrl.u32 %v3545, 16
    %v3551 = vshll.u32 %v3545, 16
    %v3553 = vrot.slane %v3551, 1
    %v3554 = vor.u32 %v3549, %v3553
    %v3556 = vshll.u32 %v3547, 16
    %v3558 = vrot.slane %v3556, 1
    %v3559 = vsel %vm71, %v3554, %v3558
    %3561 = vst.msk [vmem:[%s190] sm:$0xff] %vm68, %v3559
    %v3564 = vrot.slane %v3545, 1
    %v3565 = vrot.slane %v3547, 1
    %v3566 = vsel %vm89, %v3564, %v3565
    %3568 = vst.msk [vmem:[%s198] sm:$0xff] %vm68, %v3566
    %v3569 = vrot.slane %v3549, 1
    %v3570 = vrot.slane %v3551, 2
    %v3571 = vor.u32 %v3569, %v3570
    %v3572 = vshrl.u32 %v3547, 16
    %v3574 = vrot.slane %v3572, 1
    %v3575 = vrot.slane %v3556, 2
    %v3576 = vor.u32 %v3574, %v3575
    %v3577 = vsel %vm96, %v3571, %v3576
    %3579 = vst.msk [vmem:[%s210] sm:$0xff] %vm68, %v3577
    %3580 = vrot.lane.b32.xlu0 %v3545, 127
    %v3581 = vpop.permute.xlu0 %3580
    %3583 = vst.msk [vmem:[%s215] sm:$0xff] %vm68, %v3581
    %3584 = vrot.lane.b32.xlu0 %v3559, 127
    %v3585 = vpop.permute.xlu0 %3584
    %3587 = vst.msk [vmem:[%s220] sm:$0xff] %vm68, %v3585
    %3588 = vrot.lane.b32.xlu0 %v3566, 127
    %v3589 = vpop.permute.xlu0 %3588
    %3591 = vst.msk [vmem:[%s225] sm:$0xff] %vm68, %v3589
    %3592 = vrot.lane.b32.xlu0 %v3577, 127
    %v3593 = vpop.permute.xlu0 %3592
    %3595 = vst.msk [vmem:[%s230] sm:$0xff] %vm68, %v3593
    %3596 = vrot.lane.b32.xlu0 %v3545, 126
    %v3597 = vpop.permute.xlu0 %3596
    %3599 = vst.msk [vmem:[%s235] sm:$0xff] %vm68, %v3597
    %3600 = vrot.lane.b32.xlu0 %v3559, 126
    %v3601 = vpop.permute.xlu0 %3600
    %3603 = vst.msk [vmem:[%s240] sm:$0xff] %vm68, %v3601
    %3604 = vrot.lane.b32.xlu0 %v3566, 126
    %v3605 = vpop.permute.xlu0 %3604
    %3607 = vst.msk [vmem:[%s245] sm:$0xff] %vm68, %v3605
    %3608 = vrot.lane.b32.xlu0 %v3577, 126
    %v3609 = vpop.permute.xlu0 %3608
    %3611 = vst.msk [vmem:[%s250] sm:$0xff] %vm68, %v3609
    %3612 = vrot.lane.b32.xlu0 %v3545, 125
    %v3613 = vpop.permute.xlu0 %3612
    %3615 = vst.msk [vmem:[%s255] sm:$0xff] %vm68, %v3613
    %3616 = vrot.lane.b32.xlu0 %v3559, 125
    %v3617 = vpop.permute.xlu0 %3616
    %3619 = vst.msk [vmem:[%s260] sm:$0xff] %vm68, %v3617
    %3620 = vrot.lane.b32.xlu0 %v3566, 125
    %v3621 = vpop.permute.xlu0 %3620
    %3623 = vst.msk [vmem:[%s265] sm:$0xff] %vm68, %v3621
    %3624 = vrot.lane.b32.xlu0 %v3577, 125
    %v3625 = vpop.permute.xlu0 %3624
    %3627 = vst.msk [vmem:[%s270] sm:$0xff] %vm68, %v3625
    %s3628 = scalar_lea.vmem %s0, 200
    %v3629 = vld [vmem:[%s3628] sm:$0xff]
    %v3630 = vld [vmem:[%s3628 + $0x8] sm:$0xff]
    %v3631 = vld [vmem:[%s3628 + $0x10] sm:$0x7]
    %v3632 = vpack.c.bf16 %v3630, %v3629
    %3633 = vst.msk [vmem:[%s277] sm:$0xff] %vm68, %v3632
    %v3634 = vpack.c.bf16 %v3631, %v3631
    %v3636 = vshrl.u32 %v3632, 16
    %v3638 = vshll.u32 %v3632, 16
    %v3640 = vrot.slane %v3638, 1
    %v3641 = vor.u32 %v3636, %v3640
    %v3643 = vshll.u32 %v3634, 16
    %v3645 = vrot.slane %v3643, 1
    %v3646 = vsel %vm71, %v3641, %v3645
    %3648 = vst.msk [vmem:[%s293] sm:$0xff] %vm68, %v3646
    %v3651 = vrot.slane %v3632, 1
    %v3652 = vrot.slane %v3634, 1
    %v3653 = vsel %vm89, %v3651, %v3652
    %3655 = vst.msk [vmem:[%s301] sm:$0xff] %vm68, %v3653
    %v3656 = vrot.slane %v3636, 1
    %v3657 = vrot.slane %v3638, 2
    %v3658 = vor.u32 %v3656, %v3657
    %v3659 = vshrl.u32 %v3634, 16
    %v3661 = vrot.slane %v3659, 1
    %v3662 = vrot.slane %v3643, 2
    %v3663 = vor.u32 %v3661, %v3662
    %v3664 = vsel %vm96, %v3658, %v3663
    %3666 = vst.msk [vmem:[%s313] sm:$0xff] %vm68, %v3664
    %3667 = vrot.lane.b32.xlu0 %v3632, 127
    %v3668 = vpop.permute.xlu0 %3667
    %3670 = vst.msk [vmem:[%s318] sm:$0xff] %vm68, %v3668
    %3671 = vrot.lane.b32.xlu0 %v3646, 127
    %v3672 = vpop.permute.xlu0 %3671
    %3674 = vst.msk [vmem:[%s323] sm:$0xff] %vm68, %v3672
    %3675 = vrot.lane.b32.xlu0 %v3653, 127
    %v3676 = vpop.permute.xlu0 %3675
    %3678 = vst.msk [vmem:[%s328] sm:$0xff] %vm68, %v3676
    %3679 = vrot.lane.b32.xlu0 %v3664, 127
    %v3680 = vpop.permute.xlu0 %3679
    %3682 = vst.msk [vmem:[%s333] sm:$0xff] %vm68, %v3680
    %3683 = vrot.lane.b32.xlu0 %v3632, 126
    %v3684 = vpop.permute.xlu0 %3683
    %3686 = vst.msk [vmem:[%s338] sm:$0xff] %vm68, %v3684
    %3687 = vrot.lane.b32.xlu0 %v3646, 126
    %v3688 = vpop.permute.xlu0 %3687
    %3690 = vst.msk [vmem:[%s343] sm:$0xff] %vm68, %v3688
    %3691 = vrot.lane.b32.xlu0 %v3653, 126
    %v3692 = vpop.permute.xlu0 %3691
    %3694 = vst.msk [vmem:[%s348] sm:$0xff] %vm68, %v3692
    %3695 = vrot.lane.b32.xlu0 %v3664, 126
    %v3696 = vpop.permute.xlu0 %3695
    %3698 = vst.msk [vmem:[%s353] sm:$0xff] %vm68, %v3696
    %3699 = vrot.lane.b32.xlu0 %v3632, 125
    %v3700 = vpop.permute.xlu0 %3699
    %3702 = vst.msk [vmem:[%s358] sm:$0xff] %vm68, %v3700
    %3703 = vrot.lane.b32.xlu0 %v3646, 125
    %v3704 = vpop.permute.xlu0 %3703
    %3706 = vst.msk [vmem:[%s363] sm:$0xff] %vm68, %v3704
    %3707 = vrot.lane.b32.xlu0 %v3653, 125
    %v3708 = vpop.permute.xlu0 %3707
    %3710 = vst.msk [vmem:[%s368] sm:$0xff] %vm68, %v3708
    %3711 = vrot.lane.b32.xlu0 %v3664, 125
    %v3712 = vpop.permute.xlu0 %3711
    %3714 = vst.msk [vmem:[%s373] sm:$0xff] %vm68, %v3712
    %v3715 = vld [vmem:[#allocation2] sm:$0xff]
    %v3716 = vld [vmem:[#allocation2 + $0x8] sm:$0xff]
    %v3717 = vld [vmem:[#allocation2 + $0x10] sm:$0xff]
    %v3718 = vld [vmem:[#allocation2 + $0x18] sm:$0xff]
    %v3719 = vld [vmem:[#allocation2 + $0x20] sm:$0xff]
    %v3720 = vld [vmem:[#allocation2 + $0x28] sm:$0xff]
    %v3721 = vld [vmem:[#allocation2 + $0x30] sm:$0xff]
    %v3722 = vld [vmem:[#allocation2 + $0x38] sm:$0xff]
    %v3723 = vld [vmem:[#allocation2 + $0x40] sm:$0xff]
    %v3724 = vld [vmem:[#allocation2 + $0x48] sm:$0xff]
    %v3725 = vld [vmem:[#allocation2 + $0x50] sm:$0xff]
    %v3726 = vld [vmem:[#allocation2 + $0x58] sm:$0xff]
    %v3727 = vld [vmem:[#allocation2 + $0x60] sm:$0xff]
    %v3728 = vld [vmem:[#allocation2 + $0x68] sm:$0xff]
    %v3729 = vld [vmem:[#allocation2 + $0x70] sm:$0xff]
    %v3730 = vld [vmem:[#allocation2 + $0x78] sm:$0xff]
    %v3731 = vld [vmem:[#allocation2 + $0x80] sm:$0xff]
    %v3732 = vld [vmem:[#allocation2 + $0x88] sm:$0xff]
    %v3733 = vld [vmem:[#allocation2 + $0x90] sm:$0xff]
    %v3734 = vld [vmem:[#allocation2 + $0x98] sm:$0xff]
    %v3735 = vld [vmem:[#allocation2 + $0xa0] sm:$0xff]
    %v3736 = vld [vmem:[#allocation2 + $0xa8] sm:$0xff]
    %v3737 = vld [vmem:[#allocation2 + $0xb0] sm:$0xff]
    %v3738 = vld [vmem:[#allocation2 + $0xb8] sm:$0xff]
    %v3739 = vld [vmem:[#allocation2 + $0xc0] sm:$0xff]
    %v3740 = vld [vmem:[#allocation2 + $0xc8] sm:$0xff]
    %v3741 = vld [vmem:[#allocation2 + $0xd0] sm:$0xff]
    %v3742 = vld [vmem:[#allocation2 + $0xd8] sm:$0xff]
    %v3743 = vld [vmem:[#allocation2 + $0xe0] sm:$0xff]
    %v3744 = vld [vmem:[#allocation2 + $0xe8] sm:$0xff]
    %v3745 = vld [vmem:[#allocation2 + $0xf0] sm:$0xff]
    %v3746 = vld [vmem:[#allocation2 + $0xf8] sm:$0xff]
    %v3747 = vld [vmem:[#allocation2 + $0x100] sm:$0xff]
    %v3748 = vld [vmem:[#allocation2 + $0x108] sm:$0xff]
    %v3749 = vld [vmem:[#allocation2 + $0x110] sm:$0xff]
    %v3750 = vld [vmem:[#allocation2 + $0x118] sm:$0xff]
    %v3751 = vld [vmem:[#allocation2 + $0x120] sm:$0xff]
    %v3752 = vld [vmem:[#allocation2 + $0x128] sm:$0xff]
    %v3753 = vld [vmem:[#allocation2 + $0x130] sm:$0xff]
    %v3754 = vld [vmem:[#allocation2 + $0x138] sm:$0xff]
    %v3755 = vld [vmem:[#allocation2 + $0x140] sm:$0xff]
    %v3756 = vld [vmem:[#allocation2 + $0x148] sm:$0xff]
    %v3757 = vld [vmem:[#allocation2 + $0x150] sm:$0xff]
    %v3758 = vld [vmem:[#allocation2 + $0x158] sm:$0xff]
    %v3759 = vld [vmem:[#allocation2 + $0x160] sm:$0xff]
    %v3760 = vld [vmem:[#allocation2 + $0x168] sm:$0xff]
    %v3761 = vld [vmem:[#allocation2 + $0x170] sm:$0xff]
    %v3762 = vld [vmem:[#allocation2 + $0x178] sm:$0xff]
    %v3763 = vcombine.low %v3715, %v3719
    %v3764 = vcombine.high %v3715, %v3719
    %v3766 = vunpack.c.l.s4 1983009808
    %v3767 = vunpack.c.0.s8 %v3766
    %v3768 = vlaneseq
    %v3769 = vshrl.u32 %v3768, 7
    %v3770 = vsub.s32 %v3767, %v3769
    %v3771 = vrot.slane %v3763, %v3770
    %v3773 = vunpack.c.l.s4 1983009808
    %v3774 = vunpack.c.0.s8 %v3773
    %v3775 = vlaneseq
    %v3776 = vshrl.u32 %v3775, 7
    %v3777 = vsub.s32 %v3774, %v3776
    %v3778 = vrot.slane %v3764, %v3777
    %v3779 = vcombine.low %v3717, %v3721
    %v3780 = vcombine.high %v3717, %v3721
    %v3782 = vunpack.c.l.s4 1983009808
    %v3783 = vunpack.c.0.s8 %v3782
    %v3784 = vlaneseq
    %v3785 = vshrl.u32 %v3784, 7
    %v3786 = vsub.s32 %v3783, %v3785
    %v3787 = vrot.slane %v3779, %v3786
    %v3789 = vunpack.c.l.s4 1983009808
    %v3790 = vunpack.c.0.s8 %v3789
    %v3791 = vlaneseq
    %v3792 = vshrl.u32 %v3791, 7
    %v3793 = vsub.s32 %v3790, %v3792
    %v3794 = vrot.slane %v3780, %v3793
    %v3795 = vcombine.low %v3723, %v3727
    %v3796 = vcombine.high %v3723, %v3727
    %v3798 = vunpack.c.l.s4 1983009808
    %v3799 = vunpack.c.0.s8 %v3798
    %v3800 = vlaneseq
    %v3801 = vshrl.u32 %v3800, 7
    %v3802 = vsub.s32 %v3799, %v3801
    %v3803 = vrot.slane %v3795, %v3802
    %v3805 = vunpack.c.l.s4 1983009808
    %v3806 = vunpack.c.0.s8 %v3805
    %v3807 = vlaneseq
    %v3808 = vshrl.u32 %v3807, 7
    %v3809 = vsub.s32 %v3806, %v3808
    %v3810 = vrot.slane %v3796, %v3809
    %v3811 = vcombine.low %v3725, %v3729
    %v3812 = vcombine.high %v3725, %v3729
    %v3814 = vunpack.c.l.s4 1983009808
    %v3815 = vunpack.c.0.s8 %v3814
    %v3816 = vlaneseq
    %v3817 = vshrl.u32 %v3816, 7
    %v3818 = vsub.s32 %v3815, %v3817
    %v3819 = vrot.slane %v3811, %v3818
    %v3821 = vunpack.c.l.s4 1983009808
    %v3822 = vunpack.c.0.s8 %v3821
    %v3823 = vlaneseq
    %v3824 = vshrl.u32 %v3823, 7
    %v3825 = vsub.s32 %v3822, %v3824
    %v3826 = vrot.slane %v3812, %v3825
    %v3827 = vcombine.low %v3771, %v3787
    %v3828 = vcombine.high %v3771, %v3787
    %v3830 = vunpack.c.l.s4 1934713408
    %v3831 = vunpack.c.0.s8 %v3830
    %v3832 = vlaneseq
    %v3833 = vshrl.u32 %v3832, 7
    %v3834 = vsub.s32 %v3831, %v3833
    %v3835 = vrot.slane %v3827, %v3834
    %v3837 = vunpack.c.l.s4 1934713408
    %v3838 = vunpack.c.0.s8 %v3837
    %v3839 = vlaneseq
    %v3840 = vshrl.u32 %v3839, 7
    %v3841 = vsub.s32 %v3838, %v3840
    %v3842 = vrot.slane %v3828, %v3841
    %v3843 = vcombine.low %v3778, %v3794
    %v3844 = vcombine.high %v3778, %v3794
    %v3846 = vunpack.c.l.s4 1934713408
    %v3847 = vunpack.c.0.s8 %v3846
    %v3848 = vlaneseq
    %v3849 = vshrl.u32 %v3848, 7
    %v3850 = vsub.s32 %v3847, %v3849
    %v3851 = vrot.slane %v3843, %v3850
    %v3853 = vunpack.c.l.s4 1934713408
    %v3854 = vunpack.c.0.s8 %v3853
    %v3855 = vlaneseq
    %v3856 = vshrl.u32 %v3855, 7
    %v3857 = vsub.s32 %v3854, %v3856
    %v3858 = vrot.slane %v3844, %v3857
    %v3859 = vcombine.low %v3803, %v3819
    %v3860 = vcombine.high %v3803, %v3819
    %v3862 = vunpack.c.l.s4 1934713408
    %v3863 = vunpack.c.0.s8 %v3862
    %v3864 = vlaneseq
    %v3865 = vshrl.u32 %v3864, 7
    %v3866 = vsub.s32 %v3863, %v3865
    %v3867 = vrot.slane %v3859, %v3866
    %v3869 = vunpack.c.l.s4 1934713408
    %v3870 = vunpack.c.0.s8 %v3869
    %v3871 = vlaneseq
    %v3872 = vshrl.u32 %v3871, 7
    %v3873 = vsub.s32 %v3870, %v3872
    %v3874 = vrot.slane %v3860, %v3873
    %v3875 = vcombine.low %v3810, %v3826
    %v3876 = vcombine.high %v3810, %v3826
    %v3878 = vunpack.c.l.s4 1934713408
    %v3879 = vunpack.c.0.s8 %v3878
    %v3880 = vlaneseq
    %v3881 = vshrl.u32 %v3880, 7
    %v3882 = vsub.s32 %v3879, %v3881
    %v3883 = vrot.slane %v3875, %v3882
    %v3885 = vunpack.c.l.s4 1934713408
    %v3886 = vunpack.c.0.s8 %v3885
    %v3887 = vlaneseq
    %v3888 = vshrl.u32 %v3887, 7
    %v3889 = vsub.s32 %v3886, %v3888
    %v3890 = vrot.slane %v3876, %v3889
    %v3891 = vcombine.low %v3835, %v3867
    %v3892 = vcombine.high %v3835, %v3867
    %v3893 = vcombine.low %v3842, %v3874
    %v3894 = vcombine.high %v3842, %v3874
    %v3895 = vcombine.low %v3851, %v3883
    %v3896 = vcombine.high %v3851, %v3883
    %v3897 = vcombine.low %v3858, %v3890
    %v3898 = vcombine.high %v3858, %v3890
    %v3899 = vcombine.low %v3716, %v3720
    %v3900 = vcombine.high %v3716, %v3720
    %v3902 = vunpack.c.l.s4 1983009808
    %v3903 = vunpack.c.0.s8 %v3902
    %v3904 = vlaneseq
    %v3905 = vshrl.u32 %v3904, 7
    %v3906 = vsub.s32 %v3903, %v3905
    %v3907 = vrot.slane %v3899, %v3906
    %v3909 = vunpack.c.l.s4 1983009808
    %v3910 = vunpack.c.0.s8 %v3909
    %v3911 = vlaneseq
    %v3912 = vshrl.u32 %v3911, 7
    %v3913 = vsub.s32 %v3910, %v3912
    %v3914 = vrot.slane %v3900, %v3913
    %v3915 = vcombine.low %v3718, %v3722
    %v3916 = vcombine.high %v3718, %v3722
    %v3918 = vunpack.c.l.s4 1983009808
    %v3919 = vunpack.c.0.s8 %v3918
    %v3920 = vlaneseq
    %v3921 = vshrl.u32 %v3920, 7
    %v3922 = vsub.s32 %v3919, %v3921
    %v3923 = vrot.slane %v3915, %v3922
    %v3925 = vunpack.c.l.s4 1983009808
    %v3926 = vunpack.c.0.s8 %v3925
    %v3927 = vlaneseq
    %v3928 = vshrl.u32 %v3927, 7
    %v3929 = vsub.s32 %v3926, %v3928
    %v3930 = vrot.slane %v3916, %v3929
    %v3931 = vcombine.low %v3724, %v3728
    %v3932 = vcombine.high %v3724, %v3728
    %v3934 = vunpack.c.l.s4 1983009808
    %v3935 = vunpack.c.0.s8 %v3934
    %v3936 = vlaneseq
    %v3937 = vshrl.u32 %v3936, 7
    %v3938 = vsub.s32 %v3935, %v3937
    %v3939 = vrot.slane %v3931, %v3938
    %v3941 = vunpack.c.l.s4 1983009808
    %v3942 = vunpack.c.0.s8 %v3941
    %v3943 = vlaneseq
    %v3944 = vshrl.u32 %v3943, 7
    %v3945 = vsub.s32 %v3942, %v3944
    %v3946 = vrot.slane %v3932, %v3945
    %v3947 = vcombine.low %v3726, %v3730
    %v3948 = vcombine.high %v3726, %v3730
    %v3950 = vunpack.c.l.s4 1983009808
    %v3951 = vunpack.c.0.s8 %v3950
    %v3952 = vlaneseq
    %v3953 = vshrl.u32 %v3952, 7
    %v3954 = vsub.s32 %v3951, %v3953
    %v3955 = vrot.slane %v3947, %v3954
    %v3957 = vunpack.c.l.s4 1983009808
    %v3958 = vunpack.c.0.s8 %v3957
    %v3959 = vlaneseq
    %v3960 = vshrl.u32 %v3959, 7
    %v3961 = vsub.s32 %v3958, %v3960
    %v3962 = vrot.slane %v3948, %v3961
    %v3963 = vcombine.low %v3907, %v3923
    %v3964 = vcombine.high %v3907, %v3923
    %v3966 = vunpack.c.l.s4 1934713408
    %v3967 = vunpack.c.0.s8 %v3966
    %v3968 = vlaneseq
    %v3969 = vshrl.u32 %v3968, 7
    %v3970 = vsub.s32 %v3967, %v3969
    %v3971 = vrot.slane %v3963, %v3970
    %v3973 = vunpack.c.l.s4 1934713408
    %v3974 = vunpack.c.0.s8 %v3973
    %v3975 = vlaneseq
    %v3976 = vshrl.u32 %v3975, 7
    %v3977 = vsub.s32 %v3974, %v3976
    %v3978 = vrot.slane %v3964, %v3977
    %v3979 = vcombine.low %v3914, %v3930
    %v3980 = vcombine.high %v3914, %v3930
    %v3982 = vunpack.c.l.s4 1934713408
    %v3983 = vunpack.c.0.s8 %v3982
    %v3984 = vlaneseq
    %v3985 = vshrl.u32 %v3984, 7
    %v3986 = vsub.s32 %v3983, %v3985
    %v3987 = vrot.slane %v3979, %v3986
    %v3989 = vunpack.c.l.s4 1934713408
    %v3990 = vunpack.c.0.s8 %v3989
    %v3991 = vlaneseq
    %v3992 = vshrl.u32 %v3991, 7
    %v3993 = vsub.s32 %v3990, %v3992
    %v3994 = vrot.slane %v3980, %v3993
    %v3995 = vcombine.low %v3939, %v3955
    %v3996 = vcombine.high %v3939, %v3955
    %v3998 = vunpack.c.l.s4 1934713408
    %v3999 = vunpack.c.0.s8 %v3998
    %v4000 = vlaneseq
    %v4001 = vshrl.u32 %v4000, 7
    %v4002 = vsub.s32 %v3999, %v4001
    %v4003 = vrot.slane %v3995, %v4002
    %v4005 = vunpack.c.l.s4 1934713408
    %v4006 = vunpack.c.0.s8 %v4005
    %v4007 = vlaneseq
    %v4008 = vshrl.u32 %v4007, 7
    %v4009 = vsub.s32 %v4006, %v4008
    %v4010 = vrot.slane %v3996, %v4009
    %v4011 = vcombine.low %v3946, %v3962
    %v4012 = vcombine.high %v3946, %v3962
    %v4014 = vunpack.c.l.s4 1934713408
    %v4015 = vunpack.c.0.s8 %v4014
    %v4016 = vlaneseq
    %v4017 = vshrl.u32 %v4016, 7
    %v4018 = vsub.s32 %v4015, %v4017
    %v4019 = vrot.slane %v4011, %v4018
    %v4021 = vunpack.c.l.s4 1934713408
    %v4022 = vunpack.c.0.s8 %v4021
    %v4023 = vlaneseq
    %v4024 = vshrl.u32 %v4023, 7
    %v4025 = vsub.s32 %v4022, %v4024
    %v4026 = vrot.slane %v4012, %v4025
    %v4027 = vcombine.low %v3971, %v4003
    %v4028 = vcombine.high %v3971, %v4003
    %v4029 = vcombine.low %v3978, %v4010
    %v4030 = vcombine.high %v3978, %v4010
    %v4031 = vcombine.low %v3987, %v4019
    %v4032 = vcombine.high %v3987, %v4019
    %v4033 = vcombine.low %v3994, %v4026
    %v4034 = vcombine.high %v3994, %v4026
    %v4035 = vcombine.low %v3731, %v3735
    %v4036 = vcombine.high %v3731, %v3735
    %v4038 = vunpack.c.l.s4 1983009808
    %v4039 = vunpack.c.0.s8 %v4038
    %v4040 = vlaneseq
    %v4041 = vshrl.u32 %v4040, 7
    %v4042 = vsub.s32 %v4039, %v4041
    %v4043 = vrot.slane %v4035, %v4042
    %v4045 = vunpack.c.l.s4 1983009808
    %v4046 = vunpack.c.0.s8 %v4045
    %v4047 = vlaneseq
    %v4048 = vshrl.u32 %v4047, 7
    %v4049 = vsub.s32 %v4046, %v4048
    %v4050 = vrot.slane %v4036, %v4049
    %v4051 = vcombine.low %v3733, %v3737
    %v4052 = vcombine.high %v3733, %v3737
    %v4054 = vunpack.c.l.s4 1983009808
    %v4055 = vunpack.c.0.s8 %v4054
    %v4056 = vlaneseq
    %v4057 = vshrl.u32 %v4056, 7
    %v4058 = vsub.s32 %v4055, %v4057
    %v4059 = vrot.slane %v4051, %v4058
    %v4061 = vunpack.c.l.s4 1983009808
    %v4062 = vunpack.c.0.s8 %v4061
    %v4063 = vlaneseq
    %v4064 = vshrl.u32 %v4063, 7
    %v4065 = vsub.s32 %v4062, %v4064
    %v4066 = vrot.slane %v4052, %v4065
    %v4067 = vcombine.low %v3739, %v3743
    %v4068 = vcombine.high %v3739, %v3743
    %v4070 = vunpack.c.l.s4 1983009808
    %v4071 = vunpack.c.0.s8 %v4070
    %v4072 = vlaneseq
    %v4073 = vshrl.u32 %v4072, 7
    %v4074 = vsub.s32 %v4071, %v4073
    %v4075 = vrot.slane %v4067, %v4074
    %v4077 = vunpack.c.l.s4 1983009808
    %v4078 = vunpack.c.0.s8 %v4077
    %v4079 = vlaneseq
    %v4080 = vshrl.u32 %v4079, 7
    %v4081 = vsub.s32 %v4078, %v4080
    %v4082 = vrot.slane %v4068, %v4081
    %v4083 = vcombine.low %v3741, %v3745
    %v4084 = vcombine.high %v3741, %v3745
    %v4086 = vunpack.c.l.s4 1983009808
    %v4087 = vunpack.c.0.s8 %v4086
    %v4088 = vlaneseq
    %v4089 = vshrl.u32 %v4088, 7
    %v4090 = vsub.s32 %v4087, %v4089
    %v4091 = vrot.slane %v4083, %v4090
    %v4093 = vunpack.c.l.s4 1983009808
    %v4094 = vunpack.c.0.s8 %v4093
    %v4095 = vlaneseq
    %v4096 = vshrl.u32 %v4095, 7
    %v4097 = vsub.s32 %v4094, %v4096
    %v4098 = vrot.slane %v4084, %v4097
    %v4099 = vcombine.low %v4043, %v4059
    %v4100 = vcombine.high %v4043, %v4059
    %v4102 = vunpack.c.l.s4 1934713408
    %v4103 = vunpack.c.0.s8 %v4102
    %v4104 = vlaneseq
    %v4105 = vshrl.u32 %v4104, 7
    %v4106 = vsub.s32 %v4103, %v4105
    %v4107 = vrot.slane %v4099, %v4106
    %v4109 = vunpack.c.l.s4 1934713408
    %v4110 = vunpack.c.0.s8 %v4109
    %v4111 = vlaneseq
    %v4112 = vshrl.u32 %v4111, 7
    %v4113 = vsub.s32 %v4110, %v4112
    %v4114 = vrot.slane %v4100, %v4113
    %v4115 = vcombine.low %v4050, %v4066
    %v4116 = vcombine.high %v4050, %v4066
    %v4118 = vunpack.c.l.s4 1934713408
    %v4119 = vunpack.c.0.s8 %v4118
    %v4120 = vlaneseq
    %v4121 = vshrl.u32 %v4120, 7
    %v4122 = vsub.s32 %v4119, %v4121
    %v4123 = vrot.slane %v4115, %v4122
    %v4125 = vunpack.c.l.s4 1934713408
    %v4126 = vunpack.c.0.s8 %v4125
    %v4127 = vlaneseq
    %v4128 = vshrl.u32 %v4127, 7
    %v4129 = vsub.s32 %v4126, %v4128
    %v4130 = vrot.slane %v4116, %v4129
    %v4131 = vcombine.low %v4075, %v4091
    %v4132 = vcombine.high %v4075, %v4091
    %v4134 = vunpack.c.l.s4 1934713408
    %v4135 = vunpack.c.0.s8 %v4134
    %v4136 = vlaneseq
    %v4137 = vshrl.u32 %v4136, 7
    %v4138 = vsub.s32 %v4135, %v4137
    %v4139 = vrot.slane %v4131, %v4138
    %v4141 = vunpack.c.l.s4 1934713408
    %v4142 = vunpack.c.0.s8 %v4141
    %v4143 = vlaneseq
    %v4144 = vshrl.u32 %v4143, 7
    %v4145 = vsub.s32 %v4142, %v4144
    %v4146 = vrot.slane %v4132, %v4145
    %v4147 = vcombine.low %v4082, %v4098
    %v4148 = vcombine.high %v4082, %v4098
    %v4150 = vunpack.c.l.s4 1934713408
    %v4151 = vunpack.c.0.s8 %v4150
    %v4152 = vlaneseq
    %v4153 = vshrl.u32 %v4152, 7
    %v4154 = vsub.s32 %v4151, %v4153
    %v4155 = vrot.slane %v4147, %v4154
    %v4157 = vunpack.c.l.s4 1934713408
    %v4158 = vunpack.c.0.s8 %v4157
    %v4159 = vlaneseq
    %v4160 = vshrl.u32 %v4159, 7
    %v4161 = vsub.s32 %v4158, %v4160
    %v4162 = vrot.slane %v4148, %v4161
    %v4163 = vcombine.low %v4107, %v4139
    %v4164 = vcombine.high %v4107, %v4139
    %v4165 = vcombine.low %v4114, %v4146
    %v4166 = vcombine.high %v4114, %v4146
    %v4167 = vcombine.low %v4123, %v4155
    %v4168 = vcombine.high %v4123, %v4155
    %v4169 = vcombine.low %v4130, %v4162
    %v4170 = vcombine.high %v4130, %v4162
    %v4171 = vcombine.low %v3732, %v3736
    %v4172 = vcombine.high %v3732, %v3736
    %v4174 = vunpack.c.l.s4 1983009808
    %v4175 = vunpack.c.0.s8 %v4174
    %v4176 = vlaneseq
    %v4177 = vshrl.u32 %v4176, 7
    %v4178 = vsub.s32 %v4175, %v4177
    %v4179 = vrot.slane %v4171, %v4178
    %v4181 = vunpack.c.l.s4 1983009808
    %v4182 = vunpack.c.0.s8 %v4181
    %v4183 = vlaneseq
    %v4184 = vshrl.u32 %v4183, 7
    %v4185 = vsub.s32 %v4182, %v4184
    %v4186 = vrot.slane %v4172, %v4185
    %v4187 = vcombine.low %v3734, %v3738
    %v4188 = vcombine.high %v3734, %v3738
    %v4190 = vunpack.c.l.s4 1983009808
    %v4191 = vunpack.c.0.s8 %v4190
    %v4192 = vlaneseq
    %v4193 = vshrl.u32 %v4192, 7
    %v4194 = vsub.s32 %v4191, %v4193
    %v4195 = vrot.slane %v4187, %v4194
    %v4197 = vunpack.c.l.s4 1983009808
    %v4198 = vunpack.c.0.s8 %v4197
    %v4199 = vlaneseq
    %v4200 = vshrl.u32 %v4199, 7
    %v4201 = vsub.s32 %v4198, %v4200
    %v4202 = vrot.slane %v4188, %v4201
    %v4203 = vcombine.low %v3740, %v3744
    %v4204 = vcombine.high %v3740, %v3744
    %v4206 = vunpack.c.l.s4 1983009808
    %v4207 = vunpack.c.0.s8 %v4206
    %v4208 = vlaneseq
    %v4209 = vshrl.u32 %v4208, 7
    %v4210 = vsub.s32 %v4207, %v4209
    %v4211 = vrot.slane %v4203, %v4210
    %v4213 = vunpack.c.l.s4 1983009808
    %v4214 = vunpack.c.0.s8 %v4213
    %v4215 = vlaneseq
    %v4216 = vshrl.u32 %v4215, 7
    %v4217 = vsub.s32 %v4214, %v4216
    %v4218 = vrot.slane %v4204, %v4217
    %v4219 = vcombine.low %v3742, %v3746
    %v4220 = vcombine.high %v3742, %v3746
    %v4222 = vunpack.c.l.s4 1983009808
    %v4223 = vunpack.c.0.s8 %v4222
    %v4224 = vlaneseq
    %v4225 = vshrl.u32 %v4224, 7
    %v4226 = vsub.s32 %v4223, %v4225
    %v4227 = vrot.slane %v4219, %v4226
    %v4229 = vunpack.c.l.s4 1983009808
    %v4230 = vunpack.c.0.s8 %v4229
    %v4231 = vlaneseq
    %v4232 = vshrl.u32 %v4231, 7
    %v4233 = vsub.s32 %v4230, %v4232
    %v4234 = vrot.slane %v4220, %v4233
    %v4235 = vcombine.low %v4179, %v4195
    %v4236 = vcombine.high %v4179, %v4195
    %v4238 = vunpack.c.l.s4 1934713408
    %v4239 = vunpack.c.0.s8 %v4238
    %v4240 = vlaneseq
    %v4241 = vshrl.u32 %v4240, 7
    %v4242 = vsub.s32 %v4239, %v4241
    %v4243 = vrot.slane %v4235, %v4242
    %v4245 = vunpack.c.l.s4 1934713408
    %v4246 = vunpack.c.0.s8 %v4245
    %v4247 = vlaneseq
    %v4248 = vshrl.u32 %v4247, 7
    %v4249 = vsub.s32 %v4246, %v4248
    %v4250 = vrot.slane %v4236, %v4249
    %v4251 = vcombine.low %v4186, %v4202
    %v4252 = vcombine.high %v4186, %v4202
    %v4254 = vunpack.c.l.s4 1934713408
    %v4255 = vunpack.c.0.s8 %v4254
    %v4256 = vlaneseq
    %v4257 = vshrl.u32 %v4256, 7
    %v4258 = vsub.s32 %v4255, %v4257
    %v4259 = vrot.slane %v4251, %v4258
    %v4261 = vunpack.c.l.s4 1934713408
    %v4262 = vunpack.c.0.s8 %v4261
    %v4263 = vlaneseq
    %v4264 = vshrl.u32 %v4263, 7
    %v4265 = vsub.s32 %v4262, %v4264
    %v4266 = vrot.slane %v4252, %v4265
    %v4267 = vcombine.low %v4211, %v4227
    %v4268 = vcombine.high %v4211, %v4227
    %v4270 = vunpack.c.l.s4 1934713408
    %v4271 = vunpack.c.0.s8 %v4270
    %v4272 = vlaneseq
    %v4273 = vshrl.u32 %v4272, 7
    %v4274 = vsub.s32 %v4271, %v4273
    %v4275 = vrot.slane %v4267, %v4274
    %v4277 = vunpack.c.l.s4 1934713408
    %v4278 = vunpack.c.0.s8 %v4277
    %v4279 = vlaneseq
    %v4280 = vshrl.u32 %v4279, 7
    %v4281 = vsub.s32 %v4278, %v4280
    %v4282 = vrot.slane %v4268, %v4281
    %v4283 = vcombine.low %v4218, %v4234
    %v4284 = vcombine.high %v4218, %v4234
    %v4286 = vunpack.c.l.s4 1934713408
    %v4287 = vunpack.c.0.s8 %v4286
    %v4288 = vlaneseq
    %v4289 = vshrl.u32 %v4288, 7
    %v4290 = vsub.s32 %v4287, %v4289
    %v4291 = vrot.slane %v4283, %v4290
    %v4293 = vunpack.c.l.s4 1934713408
    %v4294 = vunpack.c.0.s8 %v4293
    %v4295 = vlaneseq
    %v4296 = vshrl.u32 %v4295, 7
    %v4297 = vsub.s32 %v4294, %v4296
    %v4298 = vrot.slane %v4284, %v4297
    %v4299 = vcombine.low %v4243, %v4275
    %v4300 = vcombine.high %v4243, %v4275
    %v4301 = vcombine.low %v4250, %v4282
    %v4302 = vcombine.high %v4250, %v4282
    %v4303 = vcombine.low %v4259, %v4291
    %v4304 = vcombine.high %v4259, %v4291
    %v4305 = vcombine.low %v4266, %v4298
    %v4306 = vcombine.high %v4266, %v4298
    %v4307 = vcombine.low %v3747, %v3751
    %v4308 = vcombine.high %v3747, %v3751
    %v4310 = vunpack.c.l.s4 1983009808
    %v4311 = vunpack.c.0.s8 %v4310
    %v4312 = vlaneseq
    %v4313 = vshrl.u32 %v4312, 7
    %v4314 = vsub.s32 %v4311, %v4313
    %v4315 = vrot.slane %v4307, %v4314
    %v4317 = vunpack.c.l.s4 1983009808
    %v4318 = vunpack.c.0.s8 %v4317
    %v4319 = vlaneseq
    %v4320 = vshrl.u32 %v4319, 7
    %v4321 = vsub.s32 %v4318, %v4320
    %v4322 = vrot.slane %v4308, %v4321
    %v4323 = vcombine.low %v3749, %v3753
    %v4324 = vcombine.high %v3749, %v3753
    %v4326 = vunpack.c.l.s4 1983009808
    %v4327 = vunpack.c.0.s8 %v4326
    %v4328 = vlaneseq
    %v4329 = vshrl.u32 %v4328, 7
    %v4330 = vsub.s32 %v4327, %v4329
    %v4331 = vrot.slane %v4323, %v4330
    %v4333 = vunpack.c.l.s4 1983009808
    %v4334 = vunpack.c.0.s8 %v4333
    %v4335 = vlaneseq
    %v4336 = vshrl.u32 %v4335, 7
    %v4337 = vsub.s32 %v4334, %v4336
    %v4338 = vrot.slane %v4324, %v4337
    %v4339 = vcombine.low %v3755, %v3759
    %v4340 = vcombine.high %v3755, %v3759
    %v4342 = vunpack.c.l.s4 1983009808
    %v4343 = vunpack.c.0.s8 %v4342
    %v4344 = vlaneseq
    %v4345 = vshrl.u32 %v4344, 7
    %v4346 = vsub.s32 %v4343, %v4345
    %v4347 = vrot.slane %v4339, %v4346
    %v4349 = vunpack.c.l.s4 1983009808
    %v4350 = vunpack.c.0.s8 %v4349
    %v4351 = vlaneseq
    %v4352 = vshrl.u32 %v4351, 7
    %v4353 = vsub.s32 %v4350, %v4352
    %v4354 = vrot.slane %v4340, %v4353
    %v4355 = vcombine.low %v3757, %v3761
    %v4356 = vcombine.high %v3757, %v3761
    %v4358 = vunpack.c.l.s4 1983009808
    %v4359 = vunpack.c.0.s8 %v4358
    %v4360 = vlaneseq
    %v4361 = vshrl.u32 %v4360, 7
    %v4362 = vsub.s32 %v4359, %v4361
    %v4363 = vrot.slane %v4355, %v4362
    %v4365 = vunpack.c.l.s4 1983009808
    %v4366 = vunpack.c.0.s8 %v4365
    %v4367 = vlaneseq
    %v4368 = vshrl.u32 %v4367, 7
    %v4369 = vsub.s32 %v4366, %v4368
    %v4370 = vrot.slane %v4356, %v4369
    %v4371 = vcombine.low %v4315, %v4331
    %v4372 = vcombine.high %v4315, %v4331
    %v4374 = vunpack.c.l.s4 1934713408
    %v4375 = vunpack.c.0.s8 %v4374
    %v4376 = vlaneseq
    %v4377 = vshrl.u32 %v4376, 7
    %v4378 = vsub.s32 %v4375, %v4377
    %v4379 = vrot.slane %v4371, %v4378
    %v4381 = vunpack.c.l.s4 1934713408
    %v4382 = vunpack.c.0.s8 %v4381
    %v4383 = vlaneseq
    %v4384 = vshrl.u32 %v4383, 7
    %v4385 = vsub.s32 %v4382, %v4384
    %v4386 = vrot.slane %v4372, %v4385
    %v4387 = vcombine.low %v4322, %v4338
    %v4388 = vcombine.high %v4322, %v4338
    %v4390 = vunpack.c.l.s4 1934713408
    %v4391 = vunpack.c.0.s8 %v4390
    %v4392 = vlaneseq
    %v4393 = vshrl.u32 %v4392, 7
    %v4394 = vsub.s32 %v4391, %v4393
    %v4395 = vrot.slane %v4387, %v4394
    %v4397 = vunpack.c.l.s4 1934713408
    %v4398 = vunpack.c.0.s8 %v4397
    %v4399 = vlaneseq
    %v4400 = vshrl.u32 %v4399, 7
    %v4401 = vsub.s32 %v4398, %v4400
    %v4402 = vrot.slane %v4388, %v4401
    %v4403 = vcombine.low %v4347, %v4363
    %v4404 = vcombine.high %v4347, %v4363
    %v4406 = vunpack.c.l.s4 1934713408
    %v4407 = vunpack.c.0.s8 %v4406
    %v4408 = vlaneseq
    %v4409 = vshrl.u32 %v4408, 7
    %v4410 = vsub.s32 %v4407, %v4409
    %v4411 = vrot.slane %v4403, %v4410
    %v4413 = vunpack.c.l.s4 1934713408
    %v4414 = vunpack.c.0.s8 %v4413
    %v4415 = vlaneseq
    %v4416 = vshrl.u32 %v4415, 7
    %v4417 = vsub.s32 %v4414, %v4416
    %v4418 = vrot.slane %v4404, %v4417
    %v4419 = vcombine.low %v4354, %v4370
    %v4420 = vcombine.high %v4354, %v4370
    %v4422 = vunpack.c.l.s4 1934713408
    %v4423 = vunpack.c.0.s8 %v4422
    %v4424 = vlaneseq
    %v4425 = vshrl.u32 %v4424, 7
    %v4426 = vsub.s32 %v4423, %v4425
    %v4427 = vrot.slane %v4419, %v4426
    %v4429 = vunpack.c.l.s4 1934713408
    %v4430 = vunpack.c.0.s8 %v4429
    %v4431 = vlaneseq
    %v4432 = vshrl.u32 %v4431, 7
    %v4433 = vsub.s32 %v4430, %v4432
    %v4434 = vrot.slane %v4420, %v4433
    %v4435 = vcombine.low %v4379, %v4411
    %v4436 = vcombine.high %v4379, %v4411
    %v4437 = vcombine.low %v4386, %v4418
    %v4438 = vcombine.high %v4386, %v4418
    %v4439 = vcombine.low %v4395, %v4427
    %v4440 = vcombine.high %v4395, %v4427
    %v4441 = vcombine.low %v4402, %v4434
    %v4442 = vcombine.high %v4402, %v4434
    %v4443 = vcombine.low %v3748, %v3752
    %v4444 = vcombine.high %v3748, %v3752
    %v4446 = vunpack.c.l.s4 1983009808
    %v4447 = vunpack.c.0.s8 %v4446
    %v4448 = vlaneseq
    %v4449 = vshrl.u32 %v4448, 7
    %v4450 = vsub.s32 %v4447, %v4449
    %v4451 = vrot.slane %v4443, %v4450
    %v4453 = vunpack.c.l.s4 1983009808
    %v4454 = vunpack.c.0.s8 %v4453
    %v4455 = vlaneseq
    %v4456 = vshrl.u32 %v4455, 7
    %v4457 = vsub.s32 %v4454, %v4456
    %v4458 = vrot.slane %v4444, %v4457
    %v4459 = vcombine.low %v3750, %v3754
    %v4460 = vcombine.high %v3750, %v3754
    %v4462 = vunpack.c.l.s4 1983009808
    %v4463 = vunpack.c.0.s8 %v4462
    %v4464 = vlaneseq
    %v4465 = vshrl.u32 %v4464, 7
    %v4466 = vsub.s32 %v4463, %v4465
    %v4467 = vrot.slane %v4459, %v4466
    %v4469 = vunpack.c.l.s4 1983009808
    %v4470 = vunpack.c.0.s8 %v4469
    %v4471 = vlaneseq
    %v4472 = vshrl.u32 %v4471, 7
    %v4473 = vsub.s32 %v4470, %v4472
    %v4474 = vrot.slane %v4460, %v4473
    %v4475 = vcombine.low %v3756, %v3760
    %v4476 = vcombine.high %v3756, %v3760
    %v4478 = vunpack.c.l.s4 1983009808
    %v4479 = vunpack.c.0.s8 %v4478
    %v4480 = vlaneseq
    %v4481 = vshrl.u32 %v4480, 7
    %v4482 = vsub.s32 %v4479, %v4481
    %v4483 = vrot.slane %v4475, %v4482
    %v4485 = vunpack.c.l.s4 1983009808
    %v4486 = vunpack.c.0.s8 %v4485
    %v4487 = vlaneseq
    %v4488 = vshrl.u32 %v4487, 7
    %v4489 = vsub.s32 %v4486, %v4488
    %v4490 = vrot.slane %v4476, %v4489
    %v4491 = vcombine.low %v3758, %v3762
    %v4492 = vcombine.high %v3758, %v3762
    %v4494 = vunpack.c.l.s4 1983009808
    %v4495 = vunpack.c.0.s8 %v4494
    %v4496 = vlaneseq
    %v4497 = vshrl.u32 %v4496, 7
    %v4498 = vsub.s32 %v4495, %v4497
    %v4499 = vrot.slane %v4491, %v4498
    %v4501 = vunpack.c.l.s4 1983009808
    %v4502 = vunpack.c.0.s8 %v4501
    %v4503 = vlaneseq
    %v4504 = vshrl.u32 %v4503, 7
    %v4505 = vsub.s32 %v4502, %v4504
    %v4506 = vrot.slane %v4492, %v4505
    %v4507 = vcombine.low %v4451, %v4467
    %v4508 = vcombine.high %v4451, %v4467
    %v4510 = vunpack.c.l.s4 1934713408
    %v4511 = vunpack.c.0.s8 %v4510
    %v4512 = vlaneseq
    %v4513 = vshrl.u32 %v4512, 7
    %v4514 = vsub.s32 %v4511, %v4513
    %v4515 = vrot.slane %v4507, %v4514
    %v4517 = vunpack.c.l.s4 1934713408
    %v4518 = vunpack.c.0.s8 %v4517
    %v4519 = vlaneseq
    %v4520 = vshrl.u32 %v4519, 7
    %v4521 = vsub.s32 %v4518, %v4520
    %v4522 = vrot.slane %v4508, %v4521
    %v4523 = vcombine.low %v4458, %v4474
    %v4524 = vcombine.high %v4458, %v4474
    %v4526 = vunpack.c.l.s4 1934713408
    %v4527 = vunpack.c.0.s8 %v4526
    %v4528 = vlaneseq
    %v4529 = vshrl.u32 %v4528, 7
    %v4530 = vsub.s32 %v4527, %v4529
    %v4531 = vrot.slane %v4523, %v4530
    %v4533 = vunpack.c.l.s4 1934713408
    %v4534 = vunpack.c.0.s8 %v4533
    %v4535 = vlaneseq
    %v4536 = vshrl.u32 %v4535, 7
    %v4537 = vsub.s32 %v4534, %v4536
    %v4538 = vrot.slane %v4524, %v4537
    %v4539 = vcombine.low %v4483, %v4499
    %v4540 = vcombine.high %v4483, %v4499
    %v4542 = vunpack.c.l.s4 1934713408
    %v4543 = vunpack.c.0.s8 %v4542
    %v4544 = vlaneseq
    %v4545 = vshrl.u32 %v4544, 7
    %v4546 = vsub.s32 %v4543, %v4545
    %v4547 = vrot.slane %v4539, %v4546
    %v4549 = vunpack.c.l.s4 1934713408
    %v4550 = vunpack.c.0.s8 %v4549
    %v4551 = vlaneseq
    %v4552 = vshrl.u32 %v4551, 7
    %v4553 = vsub.s32 %v4550, %v4552
    %v4554 = vrot.slane %v4540, %v4553
    %v4555 = vcombine.low %v4490, %v4506
    %v4556 = vcombine.high %v4490, %v4506
    %v4558 = vunpack.c.l.s4 1934713408
    %v4559 = vunpack.c.0.s8 %v4558
    %v4560 = vlaneseq
    %v4561 = vshrl.u32 %v4560, 7
    %v4562 = vsub.s32 %v4559, %v4561
    %v4563 = vrot.slane %v4555, %v4562
    %v4565 = vunpack.c.l.s4 1934713408
    %v4566 = vunpack.c.0.s8 %v4565
    %v4567 = vlaneseq
    %v4568 = vshrl.u32 %v4567, 7
    %v4569 = vsub.s32 %v4566, %v4568
    %v4570 = vrot.slane %v4556, %v4569
    %v4571 = vcombine.low %v4515, %v4547
    %v4572 = vcombine.high %v4515, %v4547
    %v4573 = vcombine.low %v4522, %v4554
    %v4574 = vcombine.high %v4522, %v4554
    %v4575 = vcombine.low %v4531, %v4563
    %v4576 = vcombine.high %v4531, %v4563
    %v4577 = vcombine.low %v4538, %v4570
    %v4578 = vcombine.high %v4538, %v4570
    %v4581 = vpack.i.b16 %v4027, %v3891
    %v4583 = vshrl.u32 %v3891, 16
    %v4584 = vshrl.u32 %v4027, 16
    %v4585 = vpack.i.b16 %v4584, %v4583
    %v4589 = vpack.i.b16 %v4028, %v3892
    %v4591 = vshrl.u32 %v3892, 16
    %v4592 = vshrl.u32 %v4028, 16
    %v4593 = vpack.i.b16 %v4592, %v4591
    %v4597 = vpack.i.b16 %v4029, %v3893
    %v4599 = vshrl.u32 %v3893, 16
    %v4600 = vshrl.u32 %v4029, 16
    %v4601 = vpack.i.b16 %v4600, %v4599
    %v4605 = vpack.i.b16 %v4030, %v3894
    %v4607 = vshrl.u32 %v3894, 16
    %v4608 = vshrl.u32 %v4030, 16
    %v4609 = vpack.i.b16 %v4608, %v4607
    %v4613 = vpack.i.b16 %v4031, %v3895
    %v4615 = vshrl.u32 %v3895, 16
    %v4616 = vshrl.u32 %v4031, 16
    %v4617 = vpack.i.b16 %v4616, %v4615
    %v4621 = vpack.i.b16 %v4032, %v3896
    %v4623 = vshrl.u32 %v3896, 16
    %v4624 = vshrl.u32 %v4032, 16
    %v4625 = vpack.i.b16 %v4624, %v4623
    %v4629 = vpack.i.b16 %v4033, %v3897
    %v4631 = vshrl.u32 %v3897, 16
    %v4632 = vshrl.u32 %v4033, 16
    %v4633 = vpack.i.b16 %v4632, %v4631
    %v4637 = vpack.i.b16 %v4034, %v3898
    %v4639 = vshrl.u32 %v3898, 16
    %v4640 = vshrl.u32 %v4034, 16
    %v4641 = vpack.i.b16 %v4640, %v4639
    %v4645 = vpack.i.b16 %v4299, %v4163
    %v4647 = vshrl.u32 %v4163, 16
    %v4648 = vshrl.u32 %v4299, 16
    %v4649 = vpack.i.b16 %v4648, %v4647
    %v4653 = vpack.i.b16 %v4300, %v4164
    %v4655 = vshrl.u32 %v4164, 16
    %v4656 = vshrl.u32 %v4300, 16
    %v4657 = vpack.i.b16 %v4656, %v4655
    %v4661 = vpack.i.b16 %v4301, %v4165
    %v4663 = vshrl.u32 %v4165, 16
    %v4664 = vshrl.u32 %v4301, 16
    %v4665 = vpack.i.b16 %v4664, %v4663
    %v4669 = vpack.i.b16 %v4302, %v4166
    %v4671 = vshrl.u32 %v4166, 16
    %v4672 = vshrl.u32 %v4302, 16
    %v4673 = vpack.i.b16 %v4672, %v4671
    %v4677 = vpack.i.b16 %v4303, %v4167
    %v4679 = vshrl.u32 %v4167, 16
    %v4680 = vshrl.u32 %v4303, 16
    %v4681 = vpack.i.b16 %v4680, %v4679
    %v4685 = vpack.i.b16 %v4304, %v4168
    %v4687 = vshrl.u32 %v4168, 16
    %v4688 = vshrl.u32 %v4304, 16
    %v4689 = vpack.i.b16 %v4688, %v4687
    %v4693 = vpack.i.b16 %v4305, %v4169
    %v4695 = vshrl.u32 %v4169, 16
    %v4696 = vshrl.u32 %v4305, 16
    %v4697 = vpack.i.b16 %v4696, %v4695
    %v4701 = vpack.i.b16 %v4306, %v4170
    %v4703 = vshrl.u32 %v4170, 16
    %v4704 = vshrl.u32 %v4306, 16
    %v4705 = vpack.i.b16 %v4704, %v4703
    %v4709 = vpack.i.b16 %v4571, %v4435
    %v4711 = vshrl.u32 %v4435, 16
    %v4712 = vshrl.u32 %v4571, 16
    %v4713 = vpack.i.b16 %v4712, %v4711
    %v4717 = vpack.i.b16 %v4572, %v4436
    %v4719 = vshrl.u32 %v4436, 16
    %v4720 = vshrl.u32 %v4572, 16
    %v4721 = vpack.i.b16 %v4720, %v4719
    %v4725 = vpack.i.b16 %v4573, %v4437
    %v4727 = vshrl.u32 %v4437, 16
    %v4728 = vshrl.u32 %v4573, 16
    %v4729 = vpack.i.b16 %v4728, %v4727
    %v4733 = vpack.i.b16 %v4574, %v4438
    %v4735 = vshrl.u32 %v4438, 16
    %v4736 = vshrl.u32 %v4574, 16
    %v4737 = vpack.i.b16 %v4736, %v4735
    %v4741 = vpack.i.b16 %v4575, %v4439
    %v4743 = vshrl.u32 %v4439, 16
    %v4744 = vshrl.u32 %v4575, 16
    %v4745 = vpack.i.b16 %v4744, %v4743
    %v4749 = vpack.i.b16 %v4576, %v4440
    %v4751 = vshrl.u32 %v4440, 16
    %v4752 = vshrl.u32 %v4576, 16
    %v4753 = vpack.i.b16 %v4752, %v4751
    %v4757 = vpack.i.b16 %v4577, %v4441
    %v4759 = vshrl.u32 %v4441, 16
    %v4760 = vshrl.u32 %v4577, 16
    %v4761 = vpack.i.b16 %v4760, %v4759
    %v4765 = vpack.i.b16 %v4578, %v4442
    %v4767 = vshrl.u32 %v4442, 16
    %v4768 = vshrl.u32 %v4578, 16
    %v4769 = vpack.i.b16 %v4768, %v4767
    %v4771 = vld [vmem:[%s1] sm:$0xf]
    %v4772 = vld [vmem:[%s2] sm:$0xff]
    %4774 = vset.pattern.permute.xlu0 0
    %4775 = vperm.xlu0 %4774, %v4772
    %v4776 = vpop.permute.xlu0 %4775
    %v4779 = vsel %vm1438, %v4771, 0
    %4781 = vmatprep.subr.bf16.mxu0 %v4585
    %4782 = vmatpush1.bf16.msra.mxu0 %v4581
    %4783 = vmatprep.subr.bf16.mxu0 %v4649
    %4784 = vmatpush1.bf16.msra.mxu0 %v4645
    %4785 = vmatprep.subr.bf16.mxu0 %v4713
    %4786 = vmatpush1.bf16.msra.mxu0 %v4709
    %4787 = vmatprep.subr.bf16.mxu0 0
    %4788 = vmatpush1.bf16.msra.mxu0 0
    %4789 = vmatprep.subr.bf16.mxu0 0
    %4790 = vmatpush1.bf16.msra.mxu0 0
    %4791 = vmatprep.subr.bf16.mxu0 0
    %4792 = vmatpush1.bf16.msra.mxu0 0
    %4793 = vmatprep.subr.bf16.mxu0 0
    %4794 = vmatpush1.bf16.msra.mxu0 0
    %4795 = vmatprep.subr.bf16.mxu0 0
    %4796 = vmatpush1.bf16.msra.mxu0 0
    %4797 = vmatprep.subr.bf16.mxu0 0
    %4798 = vmatpush1.bf16.msra.mxu0 0
    %4799 = vmatprep.subr.bf16.mxu0 0
    %4800 = vmatpush1.bf16.msra.mxu0 0
    %4801 = vmatprep.subr.bf16.mxu0 0
    %4802 = vmatpush1.bf16.msra.mxu0 0
    %4803 = vmatprep.subr.bf16.mxu0 0
    %4804 = vmatpush1.bf16.msra.mxu0 0
    %4805 = vmatprep.subr.bf16.mxu0 0
    %4806 = vmatpush1.bf16.msra.mxu0 0
    %4807 = vmatprep.subr.bf16.mxu0 0
    %4808 = vmatpush1.bf16.msra.mxu0 0
    %4809 = vmatprep.subr.bf16.mxu0 0
    %4810 = vmatpush1.bf16.msra.mxu0 0
    %4811 = vmatprep.subr.bf16.mxu0 0
    %4812 = vmatpush1.bf16.msra.mxu0 0
    %4813 = vmatprep.mubr.bf16.mxu0 0
    %4814 = vmatmul.mubr.bf16.gmra.mrb[0].mxu0 %v4779
    %v4815 = vpop.f32.mrb[0].mxu0
    %v4816 = vadd.f32 %v4776, %v4815
    %v4817 = vpop.f32.mrb[0].mxu0
    %v4818 = vadd.f32 %v4776, %v4817
    %v4819 = vpop.f32.mrb[0].mxu0
    %v4820 = vpop.f32.mrb[0].mxu0
    %4821 = vdwg.mxu0
    %4822 = vmatprep.subr.bf16.mxu0 %v4593
    %4823 = vmatpush1.bf16.msra.mxu0 %v4589
    %4824 = vmatprep.subr.bf16.mxu0 %v4657
    %4825 = vmatpush1.bf16.msra.mxu0 %v4653
    %4826 = vmatprep.subr.bf16.mxu0 %v4721
    %4827 = vmatpush1.bf16.msra.mxu0 %v4717
    %4828 = vmatprep.subr.bf16.mxu0 0
    %4829 = vmatpush1.bf16.msra.mxu0 0
    %4830 = vmatprep.subr.bf16.mxu0 0
    %4831 = vmatpush1.bf16.msra.mxu0 0
    %4832 = vmatprep.subr.bf16.mxu0 0
    %4833 = vmatpush1.bf16.msra.mxu0 0
    %4834 = vmatprep.subr.bf16.mxu0 0
    %4835 = vmatpush1.bf16.msra.mxu0 0
    %4836 = vmatprep.subr.bf16.mxu0 0
    %4837 = vmatpush1.bf16.msra.mxu0 0
    %4838 = vmatprep.subr.bf16.mxu0 0
    %4839 = vmatpush1.bf16.msra.mxu0 0
    %4840 = vmatprep.subr.bf16.mxu0 0
    %4841 = vmatpush1.bf16.msra.mxu0 0
    %4842 = vmatprep.subr.bf16.mxu0 0
    %4843 = vmatpush1.bf16.msra.mxu0 0
    %4844 = vmatprep.subr.bf16.mxu0 0
    %4845 = vmatpush1.bf16.msra.mxu0 0
    %4846 = vmatprep.subr.bf16.mxu0 0
    %4847 = vmatpush1.bf16.msra.mxu0 0
    %4848 = vmatprep.subr.bf16.mxu0 0
    %4849 = vmatpush1.bf16.msra.mxu0 0
    %4850 = vmatprep.subr.bf16.mxu0 0
    %4851 = vmatpush1.bf16.msra.mxu0 0
    %4852 = vmatprep.subr.bf16.mxu0 0
    %4853 = vmatpush1.bf16.msra.mxu0 0
    %4854 = vmatprep.mubr.bf16.mxu0 0
    %4855 = vmatmul.mubr.bf16.gmra.mrb[0].mxu0 %v4779
    %v4856 = vpop.f32.mrb[0].mxu0
    %v4857 = vadd.f32 %v4776, %v4856
    %v4858 = vpop.f32.mrb[0].mxu0
    %v4859 = vadd.f32 %v4776, %v4858
    %v4860 = vpop.f32.mrb[0].mxu0
    %v4861 = vpop.f32.mrb[0].mxu0
    %4862 = vdwg.mxu0
    %4863 = vmatprep.subr.bf16.mxu0 %v4601
    %4864 = vmatpush1.bf16.msra.mxu0 %v4597
    %4865 = vmatprep.subr.bf16.mxu0 %v4665
    %4866 = vmatpush1.bf16.msra.mxu0 %v4661
    %4867 = vmatprep.subr.bf16.mxu0 %v4729
    %4868 = vmatpush1.bf16.msra.mxu0 %v4725
    %4869 = vmatprep.subr.bf16.mxu0 0
    %4870 = vmatpush1.bf16.msra.mxu0 0
    %4871 = vmatprep.subr.bf16.mxu0 0
    %4872 = vmatpush1.bf16.msra.mxu0 0
    %4873 = vmatprep.subr.bf16.mxu0 0
    %4874 = vmatpush1.bf16.msra.mxu0 0
    %4875 = vmatprep.subr.bf16.mxu0 0
    %4876 = vmatpush1.bf16.msra.mxu0 0
    %4877 = vmatprep.subr.bf16.mxu0 0
    %4878 = vmatpush1.bf16.msra.mxu0 0
    %4879 = vmatprep.subr.bf16.mxu0 0
    %4880 = vmatpush1.bf16.msra.mxu0 0
    %4881 = vmatprep.subr.bf16.mxu0 0
    %4882 = vmatpush1.bf16.msra.mxu0 0
    %4883 = vmatprep.subr.bf16.mxu0 0
    %4884 = vmatpush1.bf16.msra.mxu0 0
    %4885 = vmatprep.subr.bf16.mxu0 0
    %4886 = vmatpush1.bf16.msra.mxu0 0
    %4887 = vmatprep.subr.bf16.mxu0 0
    %4888 = vmatpush1.bf16.msra.mxu0 0
    %4889 = vmatprep.subr.bf16.mxu0 0
    %4890 = vmatpush1.bf16.msra.mxu0 0
    %4891 = vmatprep.subr.bf16.mxu0 0
    %4892 = vmatpush1.bf16.msra.mxu0 0
    %4893 = vmatprep.subr.bf16.mxu0 0
    %4894 = vmatpush1.bf16.msra.mxu0 0
    %4895 = vmatprep.mubr.bf16.mxu0 0
    %4896 = vmatmul.mubr.bf16.gmra.mrb[0].mxu0 %v4779
    %v4897 = vpop.f32.mrb[0].mxu0
    %v4898 = vadd.f32 %v4776, %v4897
    %v4899 = vpop.f32.mrb[0].mxu0
    %v4900 = vadd.f32 %v4776, %v4899
    %v4901 = vpop.f32.mrb[0].mxu0
    %v4902 = vpop.f32.mrb[0].mxu0
    %4903 = vdwg.mxu0
    %4904 = vmatprep.subr.bf16.mxu0 %v4609
    %4905 = vmatpush1.bf16.msra.mxu0 %v4605
    %4906 = vmatprep.subr.bf16.mxu0 %v4673
    %4907 = vmatpush1.bf16.msra.mxu0 %v4669
    %4908 = vmatprep.subr.bf16.mxu0 %v4737
    %4909 = vmatpush1.bf16.msra.mxu0 %v4733
    %4910 = vmatprep.subr.bf16.mxu0 0
    %4911 = vmatpush1.bf16.msra.mxu0 0
    %4912 = vmatprep.subr.bf16.mxu0 0
    %4913 = vmatpush1.bf16.msra.mxu0 0
    %4914 = vmatprep.subr.bf16.mxu0 0
    %4915 = vmatpush1.bf16.msra.mxu0 0
    %4916 = vmatprep.subr.bf16.mxu0 0
    %4917 = vmatpush1.bf16.msra.mxu0 0
    %4918 = vmatprep.subr.bf16.mxu0 0
    %4919 = vmatpush1.bf16.msra.mxu0 0
    %4920 = vmatprep.subr.bf16.mxu0 0
    %4921 = vmatpush1.bf16.msra.mxu0 0
    %4922 = vmatprep.subr.bf16.mxu0 0
    %4923 = vmatpush1.bf16.msra.mxu0 0
    %4924 = vmatprep.subr.bf16.mxu0 0
    %4925 = vmatpush1.bf16.msra.mxu0 0
    %4926 = vmatprep.subr.bf16.mxu0 0
    %4927 = vmatpush1.bf16.msra.mxu0 0
    %4928 = vmatprep.subr.bf16.mxu0 0
    %4929 = vmatpush1.bf16.msra.mxu0 0
    %4930 = vmatprep.subr.bf16.mxu0 0
    %4931 = vmatpush1.bf16.msra.mxu0 0
    %4932 = vmatprep.subr.bf16.mxu0 0
    %4933 = vmatpush1.bf16.msra.mxu0 0
    %4934 = vmatprep.subr.bf16.mxu0 0
    %4935 = vmatpush1.bf16.msra.mxu0 0
    %4936 = vmatprep.mubr.bf16.mxu0 0
    %4937 = vmatmul.mubr.bf16.gmra.mrb[0].mxu0 %v4779
    %v4938 = vpop.f32.mrb[0].mxu0
    %v4939 = vadd.f32 %v4776, %v4938
    %v4940 = vpop.f32.mrb[0].mxu0
    %v4941 = vadd.f32 %v4776, %v4940
    %v4942 = vpop.f32.mrb[0].mxu0
    %v4943 = vpop.f32.mrb[0].mxu0
    %4944 = vdwg.mxu0
    %4945 = vmatprep.subr.bf16.mxu0 %v4617
    %4946 = vmatpush1.bf16.msra.mxu0 %v4613
    %4947 = vmatprep.subr.bf16.mxu0 %v4681
    %4948 = vmatpush1.bf16.msra.mxu0 %v4677
    %4949 = vmatprep.subr.bf16.mxu0 %v4745
    %4950 = vmatpush1.bf16.msra.mxu0 %v4741
    %4951 = vmatprep.subr.bf16.mxu0 0
    %4952 = vmatpush1.bf16.msra.mxu0 0
    %4953 = vmatprep.subr.bf16.mxu0 0
    %4954 = vmatpush1.bf16.msra.mxu0 0
    %4955 = vmatprep.subr.bf16.mxu0 0
    %4956 = vmatpush1.bf16.msra.mxu0 0
    %4957 = vmatprep.subr.bf16.mxu0 0
    %4958 = vmatpush1.bf16.msra.mxu0 0
    %4959 = vmatprep.subr.bf16.mxu0 0
    %4960 = vmatpush1.bf16.msra.mxu0 0
    %4961 = vmatprep.subr.bf16.mxu0 0
    %4962 = vmatpush1.bf16.msra.mxu0 0
    %4963 = vmatprep.subr.bf16.mxu0 0
    %4964 = vmatpush1.bf16.msra.mxu0 0
    %4965 = vmatprep.subr.bf16.mxu0 0
    %4966 = vmatpush1.bf16.msra.mxu0 0
    %4967 = vmatprep.subr.bf16.mxu0 0
    %4968 = vmatpush1.bf16.msra.mxu0 0
    %4969 = vmatprep.subr.bf16.mxu0 0
    %4970 = vmatpush1.bf16.msra.mxu0 0
    %4971 = vmatprep.subr.bf16.mxu0 0
    %4972 = vmatpush1.bf16.msra.mxu0 0
    %4973 = vmatprep.subr.bf16.mxu0 0
    %4974 = vmatpush1.bf16.msra.mxu0 0
    %4975 = vmatprep.subr.bf16.mxu0 0
    %4976 = vmatpush1.bf16.msra.mxu0 0
    %4977 = vmatprep.mubr.bf16.mxu0 0
    %4978 = vmatmul.mubr.bf16.gmra.mrb[0].mxu0 %v4779
    %v4979 = vpop.f32.mrb[0].mxu0
    %v4980 = vadd.f32 %v4776, %v4979
    %v4981 = vpop.f32.mrb[0].mxu0
    %v4982 = vadd.f32 %v4776, %v4981
    %v4983 = vpop.f32.mrb[0].mxu0
    %v4984 = vpop.f32.mrb[0].mxu0
    %4985 = vdwg.mxu0
    %4986 = vmatprep.subr.bf16.mxu0 %v4625
    %4987 = vmatpush1.bf16.msra.mxu0 %v4621
    %4988 = vmatprep.subr.bf16.mxu0 %v4689
    %4989 = vmatpush1.bf16.msra.mxu0 %v4685
    %4990 = vmatprep.subr.bf16.mxu0 %v4753
    %4991 = vmatpush1.bf16.msra.mxu0 %v4749
    %4992 = vmatprep.subr.bf16.mxu0 0
    %4993 = vmatpush1.bf16.msra.mxu0 0
    %4994 = vmatprep.subr.bf16.mxu0 0
    %4995 = vmatpush1.bf16.msra.mxu0 0
    %4996 = vmatprep.subr.bf16.mxu0 0
    %4997 = vmatpush1.bf16.msra.mxu0 0
    %4998 = vmatprep.subr.bf16.mxu0 0
    %4999 = vmatpush1.bf16.msra.mxu0 0
    %5000 = vmatprep.subr.bf16.mxu0 0
    %5001 = vmatpush1.bf16.msra.mxu0 0
    %5002 = vmatprep.subr.bf16.mxu0 0
    %5003 = vmatpush1.bf16.msra.mxu0 0
    %5004 = vmatprep.subr.bf16.mxu0 0
    %5005 = vmatpush1.bf16.msra.mxu0 0
    %5006 = vmatprep.subr.bf16.mxu0 0
    %5007 = vmatpush1.bf16.msra.mxu0 0
    %5008 = vmatprep.subr.bf16.mxu0 0
    %5009 = vmatpush1.bf16.msra.mxu0 0
    %5010 = vmatprep.subr.bf16.mxu0 0
    %5011 = vmatpush1.bf16.msra.mxu0 0
    %5012 = vmatprep.subr.bf16.mxu0 0
    %5013 = vmatpush1.bf16.msra.mxu0 0
    %5014 = vmatprep.subr.bf16.mxu0 0
    %5015 = vmatpush1.bf16.msra.mxu0 0
    %5016 = vmatprep.subr.bf16.mxu0 0
    %5017 = vmatpush1.bf16.msra.mxu0 0
    %5018 = vmatprep.mubr.bf16.mxu0 0
    %5019 = vmatmul.mubr.bf16.gmra.mrb[0].mxu0 %v4779
    %v5020 = vpop.f32.mrb[0].mxu0
    %v5021 = vadd.f32 %v4776, %v5020
    %v5022 = vpop.f32.mrb[0].mxu0
    %v5023 = vadd.f32 %v4776, %v5022
    %v5024 = vpop.f32.mrb[0].mxu0
    %v5025 = vpop.f32.mrb[0].mxu0
    %5026 = vdwg.mxu0
    %5027 = vmatprep.subr.bf16.mxu0 %v4633
    %5028 = vmatpush1.bf16.msra.mxu0 %v4629
    %5029 = vmatprep.subr.bf16.mxu0 %v4697
    %5030 = vmatpush1.bf16.msra.mxu0 %v4693
    %5031 = vmatprep.subr.bf16.mxu0 %v4761
    %5032 = vmatpush1.bf16.msra.mxu0 %v4757
    %5033 = vmatprep.subr.bf16.mxu0 0
    %5034 = vmatpush1.bf16.msra.mxu0 0
    %5035 = vmatprep.subr.bf16.mxu0 0
    %5036 = vmatpush1.bf16.msra.mxu0 0
    %5037 = vmatprep.subr.bf16.mxu0 0
    %5038 = vmatpush1.bf16.msra.mxu0 0
    %5039 = vmatprep.subr.bf16.mxu0 0
    %5040 = vmatpush1.bf16.msra.mxu0 0
    %5041 = vmatprep.subr.bf16.mxu0 0
    %5042 = vmatpush1.bf16.msra.mxu0 0
    %5043 = vmatprep.subr.bf16.mxu0 0
    %5044 = vmatpush1.bf16.msra.mxu0 0
    %5045 = vmatprep.subr.bf16.mxu0 0
    %5046 = vmatpush1.bf16.msra.mxu0 0
    %5047 = vmatprep.subr.bf16.mxu0 0
    %5048 = vmatpush1.bf16.msra.mxu0 0
    %5049 = vmatprep.subr.bf16.mxu0 0
    %5050 = vmatpush1.bf16.msra.mxu0 0
    %5051 = vmatprep.subr.bf16.mxu0 0
    %5052 = vmatpush1.bf16.msra.mxu0 0
    %5053 = vmatprep.subr.bf16.mxu0 0
    %5054 = vmatpush1.bf16.msra.mxu0 0
    %5055 = vmatprep.subr.bf16.mxu0 0
    %5056 = vmatpush1.bf16.msra.mxu0 0
    %5057 = vmatprep.subr.bf16.mxu0 0
    %5058 = vmatpush1.bf16.msra.mxu0 0
    %5059 = vmatprep.mubr.bf16.mxu0 0
    %5060 = vmatmul.mubr.bf16.gmra.mrb[0].mxu0 %v4779
    %v5061 = vpop.f32.mrb[0].mxu0
    %v5062 = vadd.f32 %v4776, %v5061
    %v5063 = vpop.f32.mrb[0].mxu0
    %v5064 = vadd.f32 %v4776, %v5063
    %v5065 = vpop.f32.mrb[0].mxu0
    %v5066 = vpop.f32.mrb[0].mxu0
    %5067 = vdwg.mxu0
    %5068 = vmatprep.subr.bf16.mxu0 %v4641
    %5069 = vmatpush1.bf16.msra.mxu0 %v4637
    %5070 = vmatprep.subr.bf16.mxu0 %v4705
    %5071 = vmatpush1.bf16.msra.mxu0 %v4701
    %5072 = vmatprep.subr.bf16.mxu0 %v4769
    %5073 = vmatpush1.bf16.msra.mxu0 %v4765
    %5074 = vmatprep.subr.bf16.mxu0 0
    %5075 = vmatpush1.bf16.msra.mxu0 0
    %5076 = vmatprep.subr.bf16.mxu0 0
    %5077 = vmatpush1.bf16.msra.mxu0 0
    %5078 = vmatprep.subr.bf16.mxu0 0
    %5079 = vmatpush1.bf16.msra.mxu0 0
    %5080 = vmatprep.subr.bf16.mxu0 0
    %5081 = vmatpush1.bf16.msra.mxu0 0
    %5082 = vmatprep.subr.bf16.mxu0 0
    %5083 = vmatpush1.bf16.msra.mxu0 0
    %5084 = vmatprep.subr.bf16.mxu0 0
    %5085 = vmatpush1.bf16.msra.mxu0 0
    %5086 = vmatprep.subr.bf16.mxu0 0
    %5087 = vmatpush1.bf16.msra.mxu0 0
    %5088 = vmatprep.subr.bf16.mxu0 0
    %5089 = vmatpush1.bf16.msra.mxu0 0
    %5090 = vmatprep.subr.bf16.mxu0 0
    %5091 = vmatpush1.bf16.msra.mxu0 0
    %5092 = vmatprep.subr.bf16.mxu0 0
    %5093 = vmatpush1.bf16.msra.mxu0 0
    %5094 = vmatprep.subr.bf16.mxu0 0
    %5095 = vmatpush1.bf16.msra.mxu0 0
    %5096 = vmatprep.subr.bf16.mxu0 0
    %5097 = vmatpush1.bf16.msra.mxu0 0
    %5098 = vmatprep.subr.bf16.mxu0 0
    %5099 = vmatpush1.bf16.msra.mxu0 0
    %5100 = vmatprep.mubr.bf16.mxu0 0
    %5101 = vmatmul.mubr.bf16.gmra.mrb[0].mxu0 %v4779
    %v5102 = vpop.f32.mrb[0].mxu0
    %v5103 = vadd.f32 %v4776, %v5102
    %v5104 = vpop.f32.mrb[0].mxu0
    %v5105 = vadd.f32 %v4776, %v5104
    %v5106 = vpop.f32.mrb[0].mxu0
    %v5107 = vpop.f32.mrb[0].mxu0
    %5108 = vdwg.mxu0
    %s5109 = scalar_lea.vmem [#allocation3], 256
    %5110 = vst [vmem:[%s5109] sm:$0xff] %v4816
    %5111 = vst [vmem:[%s5109 + $0x8] sm:$0xff] %v4818
    %5112 = vst [vmem:[%s5109 + $0x10] sm:$0xff] %v4857
    %5113 = vst [vmem:[%s5109 + $0x18] sm:$0xff] %v4859
    %5114 = vst [vmem:[%s5109 + $0x20] sm:$0xff] %v4898
    %5115 = vst [vmem:[%s5109 + $0x28] sm:$0xff] %v4900
    %5116 = vst [vmem:[%s5109 + $0x30] sm:$0xff] %v4939
    %5117 = vst [vmem:[%s5109 + $0x38] sm:$0xff] %v4941
    %5118 = vst [vmem:[%s5109 + $0x40] sm:$0xff] %v4980
    %5119 = vst [vmem:[%s5109 + $0x48] sm:$0xff] %v4982
    %5120 = vst [vmem:[%s5109 + $0x50] sm:$0xff] %v5021
    %5121 = vst [vmem:[%s5109 + $0x58] sm:$0xff] %v5023
    %5122 = vst [vmem:[%s5109 + $0x60] sm:$0xff] %v5062
    %5123 = vst [vmem:[%s5109 + $0x68] sm:$0xff] %v5064
    %5124 = vst [vmem:[%s5109 + $0x70] sm:$0xff] %v5103
    %5125 = vst [vmem:[%s5109 + $0x78] sm:$0xff] %v5105
    %v5126 = vld [vmem:[%s3454 + $0x10] sm:$0xff]
    %v5127 = vld [vmem:[%s3454 + $0x18] sm:$0xff]
    %v5128 = vld [vmem:[%s3454 + $0x20] sm:$0x7]
    %v5129 = vpack.c.bf16 %v5127, %v5126
    %5130 = vst.msk [vmem:[#allocation2] sm:$0xff] %vm68, %v5129
    %v5131 = vpack.c.bf16 %v5128, %v5128
    %v5133 = vshrl.u32 %v5129, 16
    %v5135 = vshll.u32 %v5129, 16
    %v5137 = vrot.slane %v5135, 1
    %v5138 = vor.u32 %v5133, %v5137
    %v5140 = vshll.u32 %v5131, 16
    %v5142 = vrot.slane %v5140, 1
    %v5143 = vsel %vm71, %v5138, %v5142
    %5145 = vst.msk [vmem:[%s85] sm:$0xff] %vm68, %v5143
    %v5148 = vrot.slane %v5129, 1
    %v5149 = vrot.slane %v5131, 1
    %v5150 = vsel %vm89, %v5148, %v5149
    %5152 = vst.msk [vmem:[%s94] sm:$0xff] %vm68, %v5150
    %v5153 = vrot.slane %v5133, 1
    %v5154 = vrot.slane %v5135, 2
    %v5155 = vor.u32 %v5153, %v5154
    %v5156 = vshrl.u32 %v5131, 16
    %v5158 = vrot.slane %v5156, 1
    %v5159 = vrot.slane %v5140, 2
    %v5160 = vor.u32 %v5158, %v5159
    %v5161 = vsel %vm96, %v5155, %v5160
    %5163 = vst.msk [vmem:[%s107] sm:$0xff] %vm68, %v5161
    %5164 = vrot.lane.b32.xlu0 %v5129, 127
    %v5165 = vpop.permute.xlu0 %5164
    %5167 = vst.msk [vmem:[%s112] sm:$0xff] %vm68, %v5165
    %5168 = vrot.lane.b32.xlu0 %v5143, 127
    %v5169 = vpop.permute.xlu0 %5168
    %5171 = vst.msk [vmem:[%s117] sm:$0xff] %vm68, %v5169
    %5172 = vrot.lane.b32.xlu0 %v5150, 127
    %v5173 = vpop.permute.xlu0 %5172
    %5175 = vst.msk [vmem:[%s122] sm:$0xff] %vm68, %v5173
    %5176 = vrot.lane.b32.xlu0 %v5161, 127
    %v5177 = vpop.permute.xlu0 %5176
    %5179 = vst.msk [vmem:[%s127] sm:$0xff] %vm68, %v5177
    %5180 = vrot.lane.b32.xlu0 %v5129, 126
    %v5181 = vpop.permute.xlu0 %5180
    %5183 = vst.msk [vmem:[%s132] sm:$0xff] %vm68, %v5181
    %5184 = vrot.lane.b32.xlu0 %v5143, 126
    %v5185 = vpop.permute.xlu0 %5184
    %5187 = vst.msk [vmem:[%s137] sm:$0xff] %vm68, %v5185
    %5188 = vrot.lane.b32.xlu0 %v5150, 126
    %v5189 = vpop.permute.xlu0 %5188
    %5191 = vst.msk [vmem:[%s142] sm:$0xff] %vm68, %v5189
    %5192 = vrot.lane.b32.xlu0 %v5161, 126
    %v5193 = vpop.permute.xlu0 %5192
    %5195 = vst.msk [vmem:[%s147] sm:$0xff] %vm68, %v5193
    %5196 = vrot.lane.b32.xlu0 %v5129, 125
    %v5197 = vpop.permute.xlu0 %5196
    %5199 = vst.msk [vmem:[%s152] sm:$0xff] %vm68, %v5197
    %5200 = vrot.lane.b32.xlu0 %v5143, 125
    %v5201 = vpop.permute.xlu0 %5200
    %5203 = vst.msk [vmem:[%s157] sm:$0xff] %vm68, %v5201
    %5204 = vrot.lane.b32.xlu0 %v5150, 125
    %v5205 = vpop.permute.xlu0 %5204
    %5207 = vst.msk [vmem:[%s162] sm:$0xff] %vm68, %v5205
    %5208 = vrot.lane.b32.xlu0 %v5161, 125
    %v5209 = vpop.permute.xlu0 %5208
    %5211 = vst.msk [vmem:[%s167] sm:$0xff] %vm68, %v5209
    %v5212 = vld [vmem:[%s3541 + $0x10] sm:$0xff]
    %v5213 = vld [vmem:[%s3541 + $0x18] sm:$0xff]
    %v5214 = vld [vmem:[%s3541 + $0x20] sm:$0x7]
    %v5215 = vpack.c.bf16 %v5213, %v5212
    %5216 = vst.msk [vmem:[%s174] sm:$0xff] %vm68, %v5215
    %v5217 = vpack.c.bf16 %v5214, %v5214
    %v5219 = vshrl.u32 %v5215, 16
    %v5221 = vshll.u32 %v5215, 16
    %v5223 = vrot.slane %v5221, 1
    %v5224 = vor.u32 %v5219, %v5223
    %v5226 = vshll.u32 %v5217, 16
    %v5228 = vrot.slane %v5226, 1
    %v5229 = vsel %vm71, %v5224, %v5228
    %5231 = vst.msk [vmem:[%s190] sm:$0xff] %vm68, %v5229
    %v5234 = vrot.slane %v5215, 1
    %v5235 = vrot.slane %v5217, 1
    %v5236 = vsel %vm89, %v5234, %v5235
    %5238 = vst.msk [vmem:[%s198] sm:$0xff] %vm68, %v5236
    %v5239 = vrot.slane %v5219, 1
    %v5240 = vrot.slane %v5221, 2
    %v5241 = vor.u32 %v5239, %v5240
    %v5242 = vshrl.u32 %v5217, 16
    %v5244 = vrot.slane %v5242, 1
    %v5245 = vrot.slane %v5226, 2
    %v5246 = vor.u32 %v5244, %v5245
    %v5247 = vsel %vm96, %v5241, %v5246
    %5249 = vst.msk [vmem:[%s210] sm:$0xff] %vm68, %v5247
    %5250 = vrot.lane.b32.xlu0 %v5215, 127
    %v5251 = vpop.permute.xlu0 %5250
    %5253 = vst.msk [vmem:[%s215] sm:$0xff] %vm68, %v5251
    %5254 = vrot.lane.b32.xlu0 %v5229, 127
    %v5255 = vpop.permute.xlu0 %5254
    %5257 = vst.msk [vmem:[%s220] sm:$0xff] %vm68, %v5255
    %5258 = vrot.lane.b32.xlu0 %v5236, 127
    %v5259 = vpop.permute.xlu0 %5258
    %5261 = vst.msk [vmem:[%s225] sm:$0xff] %vm68, %v5259
    %5262 = vrot.lane.b32.xlu0 %v5247, 127
    %v5263 = vpop.permute.xlu0 %5262
    %5265 = vst.msk [vmem:[%s230] sm:$0xff] %vm68, %v5263
    %5266 = vrot.lane.b32.xlu0 %v5215, 126
    %v5267 = vpop.permute.xlu0 %5266
    %5269 = vst.msk [vmem:[%s235] sm:$0xff] %vm68, %v5267
    %5270 = vrot.lane.b32.xlu0 %v5229, 126
    %v5271 = vpop.permute.xlu0 %5270
    %5273 = vst.msk [vmem:[%s240] sm:$0xff] %vm68, %v5271
    %5274 = vrot.lane.b32.xlu0 %v5236, 126
    %v5275 = vpop.permute.xlu0 %5274
    %5277 = vst.msk [vmem:[%s245] sm:$0xff] %vm68, %v5275
    %5278 = vrot.lane.b32.xlu0 %v5247, 126
    %v5279 = vpop.permute.xlu0 %5278
    %5281 = vst.msk [vmem:[%s250] sm:$0xff] %vm68, %v5279
    %5282 = vrot.lane.b32.xlu0 %v5215, 125
    %v5283 = vpop.permute.xlu0 %5282
    %5285 = vst.msk [vmem:[%s255] sm:$0xff] %vm68, %v5283
    %5286 = vrot.lane.b32.xlu0 %v5229, 125
    %v5287 = vpop.permute.xlu0 %5286
    %5289 = vst.msk [vmem:[%s260] sm:$0xff] %vm68, %v5287
    %5290 = vrot.lane.b32.xlu0 %v5236, 125
    %v5291 = vpop.permute.xlu0 %5290
    %5293 = vst.msk [vmem:[%s265] sm:$0xff] %vm68, %v5291
    %5294 = vrot.lane.b32.xlu0 %v5247, 125
    %v5295 = vpop.permute.xlu0 %5294
    %5297 = vst.msk [vmem:[%s270] sm:$0xff] %vm68, %v5295
    %v5298 = vld [vmem:[%s3628 + $0x10] sm:$0xff]
    %v5299 = vld [vmem:[%s3628 + $0x18] sm:$0xff]
    %v5300 = vld [vmem:[%s3628 + $0x20] sm:$0x7]
    %v5301 = vpack.c.bf16 %v5299, %v5298
    %5302 = vst.msk [vmem:[%s277] sm:$0xff] %vm68, %v5301
    %v5303 = vpack.c.bf16 %v5300, %v5300
    %v5305 = vshrl.u32 %v5301, 16
    %v5307 = vshll.u32 %v5301, 16
    %v5309 = vrot.slane %v5307, 1
    %v5310 = vor.u32 %v5305, %v5309
    %v5312 = vshll.u32 %v5303, 16
    %v5314 = vrot.slane %v5312, 1
    %v5315 = vsel %vm71, %v5310, %v5314
    %5317 = vst.msk [vmem:[%s293] sm:$0xff] %vm68, %v5315
    %v5320 = vrot.slane %v5301, 1
    %v5321 = vrot.slane %v5303, 1
    %v5322 = vsel %vm89, %v5320, %v5321
    %5324 = vst.msk [vmem:[%s301] sm:$0xff] %vm68, %v5322
    %v5325 = vrot.slane %v5305, 1
    %v5326 = vrot.slane %v5307, 2
    %v5327 = vor.u32 %v5325, %v5326
    %v5328 = vshrl.u32 %v5303, 16
    %v5330 = vrot.slane %v5328, 1
    %v5331 = vrot.slane %v5312, 2
    %v5332 = vor.u32 %v5330, %v5331
    %v5333 = vsel %vm96, %v5327, %v5332
    %5335 = vst.msk [vmem:[%s313] sm:$0xff] %vm68, %v5333
    %5336 = vrot.lane.b32.xlu0 %v5301, 127
    %v5337 = vpop.permute.xlu0 %5336
    %5339 = vst.msk [vmem:[%s318] sm:$0xff] %vm68, %v5337
    %5340 = vrot.lane.b32.xlu0 %v5315, 127
    %v5341 = vpop.permute.xlu0 %5340
    %5343 = vst.msk [vmem:[%s323] sm:$0xff] %vm68, %v5341
    %5344 = vrot.lane.b32.xlu0 %v5322, 127
    %v5345 = vpop.permute.xlu0 %5344
    %5347 = vst.msk [vmem:[%s328] sm:$0xff] %vm68, %v5345
    %5348 = vrot.lane.b32.xlu0 %v5333, 127
    %v5349 = vpop.permute.xlu0 %5348
    %5351 = vst.msk [vmem:[%s333] sm:$0xff] %vm68, %v5349
    %5352 = vrot.lane.b32.xlu0 %v5301, 126
    %v5353 = vpop.permute.xlu0 %5352
    %5355 = vst.msk [vmem:[%s338] sm:$0xff] %vm68, %v5353
    %5356 = vrot.lane.b32.xlu0 %v5315, 126
    %v5357 = vpop.permute.xlu0 %5356
    %5359 = vst.msk [vmem:[%s343] sm:$0xff] %vm68, %v5357
    %5360 = vrot.lane.b32.xlu0 %v5322, 126
    %v5361 = vpop.permute.xlu0 %5360
    %5363 = vst.msk [vmem:[%s348] sm:$0xff] %vm68, %v5361
    %5364 = vrot.lane.b32.xlu0 %v5333, 126
    %v5365 = vpop.permute.xlu0 %5364
    %5367 = vst.msk [vmem:[%s353] sm:$0xff] %vm68, %v5365
    %5368 = vrot.lane.b32.xlu0 %v5301, 125
    %v5369 = vpop.permute.xlu0 %5368
    %5371 = vst.msk [vmem:[%s358] sm:$0xff] %vm68, %v5369
    %5372 = vrot.lane.b32.xlu0 %v5315, 125
    %v5373 = vpop.permute.xlu0 %5372
    %5375 = vst.msk [vmem:[%s363] sm:$0xff] %vm68, %v5373
    %5376 = vrot.lane.b32.xlu0 %v5322, 125
    %v5377 = vpop.permute.xlu0 %5376
    %5379 = vst.msk [vmem:[%s368] sm:$0xff] %vm68, %v5377
    %5380 = vrot.lane.b32.xlu0 %v5333, 125
    %v5381 = vpop.permute.xlu0 %5380
    %5383 = vst.msk [vmem:[%s373] sm:$0xff] %vm68, %v5381
    %v5384 = vld [vmem:[#allocation2] sm:$0xff]
    %v5385 = vld [vmem:[#allocation2 + $0x8] sm:$0xff]
    %v5386 = vld [vmem:[#allocation2 + $0x10] sm:$0xff]
    %v5387 = vld [vmem:[#allocation2 + $0x18] sm:$0xff]
    %v5388 = vld [vmem:[#allocation2 + $0x20] sm:$0xff]
    %v5389 = vld [vmem:[#allocation2 + $0x28] sm:$0xff]
    %v5390 = vld [vmem:[#allocation2 + $0x30] sm:$0xff]
    %v5391 = vld [vmem:[#allocation2 + $0x38] sm:$0xff]
    %v5392 = vld [vmem:[#allocation2 + $0x40] sm:$0xff]
    %v5393 = vld [vmem:[#allocation2 + $0x48] sm:$0xff]
    %v5394 = vld [vmem:[#allocation2 + $0x50] sm:$0xff]
    %v5395 = vld [vmem:[#allocation2 + $0x58] sm:$0xff]
    %v5396 = vld [vmem:[#allocation2 + $0x60] sm:$0xff]
    %v5397 = vld [vmem:[#allocation2 + $0x68] sm:$0xff]
    %v5398 = vld [vmem:[#allocation2 + $0x70] sm:$0xff]
    %v5399 = vld [vmem:[#allocation2 + $0x78] sm:$0xff]
    %v5400 = vld [vmem:[#allocation2 + $0x80] sm:$0xff]
    %v5401 = vld [vmem:[#allocation2 + $0x88] sm:$0xff]
    %v5402 = vld [vmem:[#allocation2 + $0x90] sm:$0xff]
    %v5403 = vld [vmem:[#allocation2 + $0x98] sm:$0xff]
    %v5404 = vld [vmem:[#allocation2 + $0xa0] sm:$0xff]
    %v5405 = vld [vmem:[#allocation2 + $0xa8] sm:$0xff]
    %v5406 = vld [vmem:[#allocation2 + $0xb0] sm:$0xff]
    %v5407 = vld [vmem:[#allocation2 + $0xb8] sm:$0xff]
    %v5408 = vld [vmem:[#allocation2 + $0xc0] sm:$0xff]
    %v5409 = vld [vmem:[#allocation2 + $0xc8] sm:$0xff]
    %v5410 = vld [vmem:[#allocation2 + $0xd0] sm:$0xff]
    %v5411 = vld [vmem:[#allocation2 + $0xd8] sm:$0xff]
    %v5412 = vld [vmem:[#allocation2 + $0xe0] sm:$0xff]
    %v5413 = vld [vmem:[#allocation2 + $0xe8] sm:$0xff]
    %v5414 = vld [vmem:[#allocation2 + $0xf0] sm:$0xff]
    %v5415 = vld [vmem:[#allocation2 + $0xf8] sm:$0xff]
    %v5416 = vld [vmem:[#allocation2 + $0x100] sm:$0xff]
    %v5417 = vld [vmem:[#allocation2 + $0x108] sm:$0xff]
    %v5418 = vld [vmem:[#allocation2 + $0x110] sm:$0xff]
    %v5419 = vld [vmem:[#allocation2 + $0x118] sm:$0xff]
    %v5420 = vld [vmem:[#allocation2 + $0x120] sm:$0xff]
    %v5421 = vld [vmem:[#allocation2 + $0x128] sm:$0xff]
    %v5422 = vld [vmem:[#allocation2 + $0x130] sm:$0xff]
    %v5423 = vld [vmem:[#allocation2 + $0x138] sm:$0xff]
    %v5424 = vld [vmem:[#allocation2 + $0x140] sm:$0xff]
    %v5425 = vld [vmem:[#allocation2 + $0x148] sm:$0xff]
    %v5426 = vld [vmem:[#allocation2 + $0x150] sm:$0xff]
    %v5427 = vld [vmem:[#allocation2 + $0x158] sm:$0xff]
    %v5428 = vld [vmem:[#allocation2 + $0x160] sm:$0xff]
    %v5429 = vld [vmem:[#allocation2 + $0x168] sm:$0xff]
    %v5430 = vld [vmem:[#allocation2 + $0x170] sm:$0xff]
    %v5431 = vld [vmem:[#allocation2 + $0x178] sm:$0xff]
    %v5432 = vcombine.low %v5384, %v5388
    %v5433 = vcombine.high %v5384, %v5388
    %v5435 = vunpack.c.l.s4 1983009808
    %v5436 = vunpack.c.0.s8 %v5435
    %v5437 = vlaneseq
    %v5438 = vshrl.u32 %v5437, 7
    %v5439 = vsub.s32 %v5436, %v5438
    %v5440 = vrot.slane %v5432, %v5439
    %v5442 = vunpack.c.l.s4 1983009808
    %v5443 = vunpack.c.0.s8 %v5442
    %v5444 = vlaneseq
    %v5445 = vshrl.u32 %v5444, 7
    %v5446 = vsub.s32 %v5443, %v5445
    %v5447 = vrot.slane %v5433, %v5446
    %v5448 = vcombine.low %v5386, %v5390
    %v5449 = vcombine.high %v5386, %v5390
    %v5451 = vunpack.c.l.s4 1983009808
    %v5452 = vunpack.c.0.s8 %v5451
    %v5453 = vlaneseq
    %v5454 = vshrl.u32 %v5453, 7
    %v5455 = vsub.s32 %v5452, %v5454
    %v5456 = vrot.slane %v5448, %v5455
    %v5458 = vunpack.c.l.s4 1983009808
    %v5459 = vunpack.c.0.s8 %v5458
    %v5460 = vlaneseq
    %v5461 = vshrl.u32 %v5460, 7
    %v5462 = vsub.s32 %v5459, %v5461
    %v5463 = vrot.slane %v5449, %v5462
    %v5464 = vcombine.low %v5392, %v5396
    %v5465 = vcombine.high %v5392, %v5396
    %v5467 = vunpack.c.l.s4 1983009808
    %v5468 = vunpack.c.0.s8 %v5467
    %v5469 = vlaneseq
    %v5470 = vshrl.u32 %v5469, 7
    %v5471 = vsub.s32 %v5468, %v5470
    %v5472 = vrot.slane %v5464, %v5471
    %v5474 = vunpack.c.l.s4 1983009808
    %v5475 = vunpack.c.0.s8 %v5474
    %v5476 = vlaneseq
    %v5477 = vshrl.u32 %v5476, 7
    %v5478 = vsub.s32 %v5475, %v5477
    %v5479 = vrot.slane %v5465, %v5478
    %v5480 = vcombine.low %v5394, %v5398
    %v5481 = vcombine.high %v5394, %v5398
    %v5483 = vunpack.c.l.s4 1983009808
    %v5484 = vunpack.c.0.s8 %v5483
    %v5485 = vlaneseq
    %v5486 = vshrl.u32 %v5485, 7
    %v5487 = vsub.s32 %v5484, %v5486
    %v5488 = vrot.slane %v5480, %v5487
    %v5490 = vunpack.c.l.s4 1983009808
    %v5491 = vunpack.c.0.s8 %v5490
    %v5492 = vlaneseq
    %v5493 = vshrl.u32 %v5492, 7
    %v5494 = vsub.s32 %v5491, %v5493
    %v5495 = vrot.slane %v5481, %v5494
    %v5496 = vcombine.low %v5440, %v5456
    %v5497 = vcombine.high %v5440, %v5456
    %v5499 = vunpack.c.l.s4 1934713408
    %v5500 = vunpack.c.0.s8 %v5499
    %v5501 = vlaneseq
    %v5502 = vshrl.u32 %v5501, 7
    %v5503 = vsub.s32 %v5500, %v5502
    %v5504 = vrot.slane %v5496, %v5503
    %v5506 = vunpack.c.l.s4 1934713408
    %v5507 = vunpack.c.0.s8 %v5506
    %v5508 = vlaneseq
    %v5509 = vshrl.u32 %v5508, 7
    %v5510 = vsub.s32 %v5507, %v5509
    %v5511 = vrot.slane %v5497, %v5510
    %v5512 = vcombine.low %v5447, %v5463
    %v5513 = vcombine.high %v5447, %v5463
    %v5515 = vunpack.c.l.s4 1934713408
    %v5516 = vunpack.c.0.s8 %v5515
    %v5517 = vlaneseq
    %v5518 = vshrl.u32 %v5517, 7
    %v5519 = vsub.s32 %v5516, %v5518
    %v5520 = vrot.slane %v5512, %v5519
    %v5522 = vunpack.c.l.s4 1934713408
    %v5523 = vunpack.c.0.s8 %v5522
    %v5524 = vlaneseq
    %v5525 = vshrl.u32 %v5524, 7
    %v5526 = vsub.s32 %v5523, %v5525
    %v5527 = vrot.slane %v5513, %v5526
    %v5528 = vcombine.low %v5472, %v5488
    %v5529 = vcombine.high %v5472, %v5488
    %v5531 = vunpack.c.l.s4 1934713408
    %v5532 = vunpack.c.0.s8 %v5531
    %v5533 = vlaneseq
    %v5534 = vshrl.u32 %v5533, 7
    %v5535 = vsub.s32 %v5532, %v5534
    %v5536 = vrot.slane %v5528, %v5535
    %v5538 = vunpack.c.l.s4 1934713408
    %v5539 = vunpack.c.0.s8 %v5538
    %v5540 = vlaneseq
    %v5541 = vshrl.u32 %v5540, 7
    %v5542 = vsub.s32 %v5539, %v5541
    %v5543 = vrot.slane %v5529, %v5542
    %v5544 = vcombine.low %v5479, %v5495
    %v5545 = vcombine.high %v5479, %v5495
    %v5547 = vunpack.c.l.s4 1934713408
    %v5548 = vunpack.c.0.s8 %v5547
    %v5549 = vlaneseq
    %v5550 = vshrl.u32 %v5549, 7
    %v5551 = vsub.s32 %v5548, %v5550
    %v5552 = vrot.slane %v5544, %v5551
    %v5554 = vunpack.c.l.s4 1934713408
    %v5555 = vunpack.c.0.s8 %v5554
    %v5556 = vlaneseq
    %v5557 = vshrl.u32 %v5556, 7
    %v5558 = vsub.s32 %v5555, %v5557
    %v5559 = vrot.slane %v5545, %v5558
    %v5560 = vcombine.low %v5504, %v5536
    %v5561 = vcombine.high %v5504, %v5536
    %v5562 = vcombine.low %v5511, %v5543
    %v5563 = vcombine.high %v5511, %v5543
    %v5564 = vcombine.low %v5520, %v5552
    %v5565 = vcombine.high %v5520, %v5552
    %v5566 = vcombine.low %v5527, %v5559
    %v5567 = vcombine.high %v5527, %v5559
    %v5568 = vcombine.low %v5385, %v5389
    %v5569 = vcombine.high %v5385, %v5389
    %v5571 = vunpack.c.l.s4 1983009808
    %v5572 = vunpack.c.0.s8 %v5571
    %v5573 = vlaneseq
    %v5574 = vshrl.u32 %v5573, 7
    %v5575 = vsub.s32 %v5572, %v5574
    %v5576 = vrot.slane %v5568, %v5575
    %v5578 = vunpack.c.l.s4 1983009808
    %v5579 = vunpack.c.0.s8 %v5578
    %v5580 = vlaneseq
    %v5581 = vshrl.u32 %v5580, 7
    %v5582 = vsub.s32 %v5579, %v5581
    %v5583 = vrot.slane %v5569, %v5582
    %v5584 = vcombine.low %v5387, %v5391
    %v5585 = vcombine.high %v5387, %v5391
    %v5587 = vunpack.c.l.s4 1983009808
    %v5588 = vunpack.c.0.s8 %v5587
    %v5589 = vlaneseq
    %v5590 = vshrl.u32 %v5589, 7
    %v5591 = vsub.s32 %v5588, %v5590
    %v5592 = vrot.slane %v5584, %v5591
    %v5594 = vunpack.c.l.s4 1983009808
    %v5595 = vunpack.c.0.s8 %v5594
    %v5596 = vlaneseq
    %v5597 = vshrl.u32 %v5596, 7
    %v5598 = vsub.s32 %v5595, %v5597
    %v5599 = vrot.slane %v5585, %v5598
    %v5600 = vcombine.low %v5393, %v5397
    %v5601 = vcombine.high %v5393, %v5397
    %v5603 = vunpack.c.l.s4 1983009808
    %v5604 = vunpack.c.0.s8 %v5603
    %v5605 = vlaneseq
    %v5606 = vshrl.u32 %v5605, 7
    %v5607 = vsub.s32 %v5604, %v5606
    %v5608 = vrot.slane %v5600, %v5607
    %v5610 = vunpack.c.l.s4 1983009808
    %v5611 = vunpack.c.0.s8 %v5610
    %v5612 = vlaneseq
    %v5613 = vshrl.u32 %v5612, 7
    %v5614 = vsub.s32 %v5611, %v5613
    %v5615 = vrot.slane %v5601, %v5614
    %v5616 = vcombine.low %v5395, %v5399
    %v5617 = vcombine.high %v5395, %v5399
    %v5619 = vunpack.c.l.s4 1983009808
    %v5620 = vunpack.c.0.s8 %v5619
    %v5621 = vlaneseq
    %v5622 = vshrl.u32 %v5621, 7
    %v5623 = vsub.s32 %v5620, %v5622
    %v5624 = vrot.slane %v5616, %v5623
    %v5626 = vunpack.c.l.s4 1983009808
    %v5627 = vunpack.c.0.s8 %v5626
    %v5628 = vlaneseq
    %v5629 = vshrl.u32 %v5628, 7
    %v5630 = vsub.s32 %v5627, %v5629
    %v5631 = vrot.slane %v5617, %v5630
    %v5632 = vcombine.low %v5576, %v5592
    %v5633 = vcombine.high %v5576, %v5592
    %v5635 = vunpack.c.l.s4 1934713408
    %v5636 = vunpack.c.0.s8 %v5635
    %v5637 = vlaneseq
    %v5638 = vshrl.u32 %v5637, 7
    %v5639 = vsub.s32 %v5636, %v5638
    %v5640 = vrot.slane %v5632, %v5639
    %v5642 = vunpack.c.l.s4 1934713408
    %v5643 = vunpack.c.0.s8 %v5642
    %v5644 = vlaneseq
    %v5645 = vshrl.u32 %v5644, 7
    %v5646 = vsub.s32 %v5643, %v5645
    %v5647 = vrot.slane %v5633, %v5646
    %v5648 = vcombine.low %v5583, %v5599
    %v5649 = vcombine.high %v5583, %v5599
    %v5651 = vunpack.c.l.s4 1934713408
    %v5652 = vunpack.c.0.s8 %v5651
    %v5653 = vlaneseq
    %v5654 = vshrl.u32 %v5653, 7
    %v5655 = vsub.s32 %v5652, %v5654
    %v5656 = vrot.slane %v5648, %v5655
    %v5658 = vunpack.c.l.s4 1934713408
    %v5659 = vunpack.c.0.s8 %v5658
    %v5660 = vlaneseq
    %v5661 = vshrl.u32 %v5660, 7
    %v5662 = vsub.s32 %v5659, %v5661
    %v5663 = vrot.slane %v5649, %v5662
    %v5664 = vcombine.low %v5608, %v5624
    %v5665 = vcombine.high %v5608, %v5624
    %v5667 = vunpack.c.l.s4 1934713408
    %v5668 = vunpack.c.0.s8 %v5667
    %v5669 = vlaneseq
    %v5670 = vshrl.u32 %v5669, 7
    %v5671 = vsub.s32 %v5668, %v5670
    %v5672 = vrot.slane %v5664, %v5671
    %v5674 = vunpack.c.l.s4 1934713408
    %v5675 = vunpack.c.0.s8 %v5674
    %v5676 = vlaneseq
    %v5677 = vshrl.u32 %v5676, 7
    %v5678 = vsub.s32 %v5675, %v5677
    %v5679 = vrot.slane %v5665, %v5678
    %v5680 = vcombine.low %v5615, %v5631
    %v5681 = vcombine.high %v5615, %v5631
    %v5683 = vunpack.c.l.s4 1934713408
    %v5684 = vunpack.c.0.s8 %v5683
    %v5685 = vlaneseq
    %v5686 = vshrl.u32 %v5685, 7
    %v5687 = vsub.s32 %v5684, %v5686
    %v5688 = vrot.slane %v5680, %v5687
    %v5690 = vunpack.c.l.s4 1934713408
    %v5691 = vunpack.c.0.s8 %v5690
    %v5692 = vlaneseq
    %v5693 = vshrl.u32 %v5692, 7
    %v5694 = vsub.s32 %v5691, %v5693
    %v5695 = vrot.slane %v5681, %v5694
    %v5696 = vcombine.low %v5640, %v5672
    %v5697 = vcombine.high %v5640, %v5672
    %v5698 = vcombine.low %v5647, %v5679
    %v5699 = vcombine.high %v5647, %v5679
    %v5700 = vcombine.low %v5656, %v5688
    %v5701 = vcombine.high %v5656, %v5688
    %v5702 = vcombine.low %v5663, %v5695
    %v5703 = vcombine.high %v5663, %v5695
    %v5704 = vcombine.low %v5400, %v5404
    %v5705 = vcombine.high %v5400, %v5404
    %v5707 = vunpack.c.l.s4 1983009808
    %v5708 = vunpack.c.0.s8 %v5707
    %v5709 = vlaneseq
    %v5710 = vshrl.u32 %v5709, 7
    %v5711 = vsub.s32 %v5708, %v5710
    %v5712 = vrot.slane %v5704, %v5711
    %v5714 = vunpack.c.l.s4 1983009808
    %v5715 = vunpack.c.0.s8 %v5714
    %v5716 = vlaneseq
    %v5717 = vshrl.u32 %v5716, 7
    %v5718 = vsub.s32 %v5715, %v5717
    %v5719 = vrot.slane %v5705, %v5718
    %v5720 = vcombine.low %v5402, %v5406
    %v5721 = vcombine.high %v5402, %v5406
    %v5723 = vunpack.c.l.s4 1983009808
    %v5724 = vunpack.c.0.s8 %v5723
    %v5725 = vlaneseq
    %v5726 = vshrl.u32 %v5725, 7
    %v5727 = vsub.s32 %v5724, %v5726
    %v5728 = vrot.slane %v5720, %v5727
    %v5730 = vunpack.c.l.s4 1983009808
    %v5731 = vunpack.c.0.s8 %v5730
    %v5732 = vlaneseq
    %v5733 = vshrl.u32 %v5732, 7
    %v5734 = vsub.s32 %v5731, %v5733
    %v5735 = vrot.slane %v5721, %v5734
    %v5736 = vcombine.low %v5408, %v5412
    %v5737 = vcombine.high %v5408, %v5412
    %v5739 = vunpack.c.l.s4 1983009808
    %v5740 = vunpack.c.0.s8 %v5739
    %v5741 = vlaneseq
    %v5742 = vshrl.u32 %v5741, 7
    %v5743 = vsub.s32 %v5740, %v5742
    %v5744 = vrot.slane %v5736, %v5743
    %v5746 = vunpack.c.l.s4 1983009808
    %v5747 = vunpack.c.0.s8 %v5746
    %v5748 = vlaneseq
    %v5749 = vshrl.u32 %v5748, 7
    %v5750 = vsub.s32 %v5747, %v5749
    %v5751 = vrot.slane %v5737, %v5750
    %v5752 = vcombine.low %v5410, %v5414
    %v5753 = vcombine.high %v5410, %v5414
    %v5755 = vunpack.c.l.s4 1983009808
    %v5756 = vunpack.c.0.s8 %v5755
    %v5757 = vlaneseq
    %v5758 = vshrl.u32 %v5757, 7
    %v5759 = vsub.s32 %v5756, %v5758
    %v5760 = vrot.slane %v5752, %v5759
    %v5762 = vunpack.c.l.s4 1983009808
    %v5763 = vunpack.c.0.s8 %v5762
    %v5764 = vlaneseq
    %v5765 = vshrl.u32 %v5764, 7
    %v5766 = vsub.s32 %v5763, %v5765
    %v5767 = vrot.slane %v5753, %v5766
    %v5768 = vcombine.low %v5712, %v5728
    %v5769 = vcombine.high %v5712, %v5728
    %v5771 = vunpack.c.l.s4 1934713408
    %v5772 = vunpack.c.0.s8 %v5771
    %v5773 = vlaneseq
    %v5774 = vshrl.u32 %v5773, 7
    %v5775 = vsub.s32 %v5772, %v5774
    %v5776 = vrot.slane %v5768, %v5775
    %v5778 = vunpack.c.l.s4 1934713408
    %v5779 = vunpack.c.0.s8 %v5778
    %v5780 = vlaneseq
    %v5781 = vshrl.u32 %v5780, 7
    %v5782 = vsub.s32 %v5779, %v5781
    %v5783 = vrot.slane %v5769, %v5782
    %v5784 = vcombine.low %v5719, %v5735
    %v5785 = vcombine.high %v5719, %v5735
    %v5787 = vunpack.c.l.s4 1934713408
    %v5788 = vunpack.c.0.s8 %v5787
    %v5789 = vlaneseq
    %v5790 = vshrl.u32 %v5789, 7
    %v5791 = vsub.s32 %v5788, %v5790
    %v5792 = vrot.slane %v5784, %v5791
    %v5794 = vunpack.c.l.s4 1934713408
    %v5795 = vunpack.c.0.s8 %v5794
    %v5796 = vlaneseq
    %v5797 = vshrl.u32 %v5796, 7
    %v5798 = vsub.s32 %v5795, %v5797
    %v5799 = vrot.slane %v5785, %v5798
    %v5800 = vcombine.low %v5744, %v5760
    %v5801 = vcombine.high %v5744, %v5760
    %v5803 = vunpack.c.l.s4 1934713408
    %v5804 = vunpack.c.0.s8 %v5803
    %v5805 = vlaneseq
    %v5806 = vshrl.u32 %v5805, 7
    %v5807 = vsub.s32 %v5804, %v5806
    %v5808 = vrot.slane %v5800, %v5807
    %v5810 = vunpack.c.l.s4 1934713408
    %v5811 = vunpack.c.0.s8 %v5810
    %v5812 = vlaneseq
    %v5813 = vshrl.u32 %v5812, 7
    %v5814 = vsub.s32 %v5811, %v5813
    %v5815 = vrot.slane %v5801, %v5814
    %v5816 = vcombine.low %v5751, %v5767
    %v5817 = vcombine.high %v5751, %v5767
    %v5819 = vunpack.c.l.s4 1934713408
    %v5820 = vunpack.c.0.s8 %v5819
    %v5821 = vlaneseq
    %v5822 = vshrl.u32 %v5821, 7
    %v5823 = vsub.s32 %v5820, %v5822
    %v5824 = vrot.slane %v5816, %v5823
    %v5826 = vunpack.c.l.s4 1934713408
    %v5827 = vunpack.c.0.s8 %v5826
    %v5828 = vlaneseq
    %v5829 = vshrl.u32 %v5828, 7
    %v5830 = vsub.s32 %v5827, %v5829
    %v5831 = vrot.slane %v5817, %v5830
    %v5832 = vcombine.low %v5776, %v5808
    %v5833 = vcombine.high %v5776, %v5808
    %v5834 = vcombine.low %v5783, %v5815
    %v5835 = vcombine.high %v5783, %v5815
    %v5836 = vcombine.low %v5792, %v5824
    %v5837 = vcombine.high %v5792, %v5824
    %v5838 = vcombine.low %v5799, %v5831
    %v5839 = vcombine.high %v5799, %v5831
    %v5840 = vcombine.low %v5401, %v5405
    %v5841 = vcombine.high %v5401, %v5405
    %v5843 = vunpack.c.l.s4 1983009808
    %v5844 = vunpack.c.0.s8 %v5843
    %v5845 = vlaneseq
    %v5846 = vshrl.u32 %v5845, 7
    %v5847 = vsub.s32 %v5844, %v5846
    %v5848 = vrot.slane %v5840, %v5847
    %v5850 = vunpack.c.l.s4 1983009808
    %v5851 = vunpack.c.0.s8 %v5850
    %v5852 = vlaneseq
    %v5853 = vshrl.u32 %v5852, 7
    %v5854 = vsub.s32 %v5851, %v5853
    %v5855 = vrot.slane %v5841, %v5854
    %v5856 = vcombine.low %v5403, %v5407
    %v5857 = vcombine.high %v5403, %v5407
    %v5859 = vunpack.c.l.s4 1983009808
    %v5860 = vunpack.c.0.s8 %v5859
    %v5861 = vlaneseq
    %v5862 = vshrl.u32 %v5861, 7
    %v5863 = vsub.s32 %v5860, %v5862
    %v5864 = vrot.slane %v5856, %v5863
    %v5866 = vunpack.c.l.s4 1983009808
    %v5867 = vunpack.c.0.s8 %v5866
    %v5868 = vlaneseq
    %v5869 = vshrl.u32 %v5868, 7
    %v5870 = vsub.s32 %v5867, %v5869
    %v5871 = vrot.slane %v5857, %v5870
    %v5872 = vcombine.low %v5409, %v5413
    %v5873 = vcombine.high %v5409, %v5413
    %v5875 = vunpack.c.l.s4 1983009808
    %v5876 = vunpack.c.0.s8 %v5875
    %v5877 = vlaneseq
    %v5878 = vshrl.u32 %v5877, 7
    %v5879 = vsub.s32 %v5876, %v5878
    %v5880 = vrot.slane %v5872, %v5879
    %v5882 = vunpack.c.l.s4 1983009808
    %v5883 = vunpack.c.0.s8 %v5882
    %v5884 = vlaneseq
    %v5885 = vshrl.u32 %v5884, 7
    %v5886 = vsub.s32 %v5883, %v5885
    %v5887 = vrot.slane %v5873, %v5886
    %v5888 = vcombine.low %v5411, %v5415
    %v5889 = vcombine.high %v5411, %v5415
    %v5891 = vunpack.c.l.s4 1983009808
    %v5892 = vunpack.c.0.s8 %v5891
    %v5893 = vlaneseq
    %v5894 = vshrl.u32 %v5893, 7
    %v5895 = vsub.s32 %v5892, %v5894
    %v5896 = vrot.slane %v5888, %v5895
    %v5898 = vunpack.c.l.s4 1983009808
    %v5899 = vunpack.c.0.s8 %v5898
    %v5900 = vlaneseq
    %v5901 = vshrl.u32 %v5900, 7
    %v5902 = vsub.s32 %v5899, %v5901
    %v5903 = vrot.slane %v5889, %v5902
    %v5904 = vcombine.low %v5848, %v5864
    %v5905 = vcombine.high %v5848, %v5864
    %v5907 = vunpack.c.l.s4 1934713408
    %v5908 = vunpack.c.0.s8 %v5907
    %v5909 = vlaneseq
    %v5910 = vshrl.u32 %v5909, 7
    %v5911 = vsub.s32 %v5908, %v5910
    %v5912 = vrot.slane %v5904, %v5911
    %v5914 = vunpack.c.l.s4 1934713408
    %v5915 = vunpack.c.0.s8 %v5914
    %v5916 = vlaneseq
    %v5917 = vshrl.u32 %v5916, 7
    %v5918 = vsub.s32 %v5915, %v5917
    %v5919 = vrot.slane %v5905, %v5918
    %v5920 = vcombine.low %v5855, %v5871
    %v5921 = vcombine.high %v5855, %v5871
    %v5923 = vunpack.c.l.s4 1934713408
    %v5924 = vunpack.c.0.s8 %v5923
    %v5925 = vlaneseq
    %v5926 = vshrl.u32 %v5925, 7
    %v5927 = vsub.s32 %v5924, %v5926
    %v5928 = vrot.slane %v5920, %v5927
    %v5930 = vunpack.c.l.s4 1934713408
    %v5931 = vunpack.c.0.s8 %v5930
    %v5932 = vlaneseq
    %v5933 = vshrl.u32 %v5932, 7
    %v5934 = vsub.s32 %v5931, %v5933
    %v5935 = vrot.slane %v5921, %v5934
    %v5936 = vcombine.low %v5880, %v5896
    %v5937 = vcombine.high %v5880, %v5896
    %v5939 = vunpack.c.l.s4 1934713408
    %v5940 = vunpack.c.0.s8 %v5939
    %v5941 = vlaneseq
    %v5942 = vshrl.u32 %v5941, 7
    %v5943 = vsub.s32 %v5940, %v5942
    %v5944 = vrot.slane %v5936, %v5943
    %v5946 = vunpack.c.l.s4 1934713408
    %v5947 = vunpack.c.0.s8 %v5946
    %v5948 = vlaneseq
    %v5949 = vshrl.u32 %v5948, 7
    %v5950 = vsub.s32 %v5947, %v5949
    %v5951 = vrot.slane %v5937, %v5950
    %v5952 = vcombine.low %v5887, %v5903
    %v5953 = vcombine.high %v5887, %v5903
    %v5955 = vunpack.c.l.s4 1934713408
    %v5956 = vunpack.c.0.s8 %v5955
    %v5957 = vlaneseq
    %v5958 = vshrl.u32 %v5957, 7
    %v5959 = vsub.s32 %v5956, %v5958
    %v5960 = vrot.slane %v5952, %v5959
    %v5962 = vunpack.c.l.s4 1934713408
    %v5963 = vunpack.c.0.s8 %v5962
    %v5964 = vlaneseq
    %v5965 = vshrl.u32 %v5964, 7
    %v5966 = vsub.s32 %v5963, %v5965
    %v5967 = vrot.slane %v5953, %v5966
    %v5968 = vcombine.low %v5912, %v5944
    %v5969 = vcombine.high %v5912, %v5944
    %v5970 = vcombine.low %v5919, %v5951
    %v5971 = vcombine.high %v5919, %v5951
    %v5972 = vcombine.low %v5928, %v5960
    %v5973 = vcombine.high %v5928, %v5960
    %v5974 = vcombine.low %v5935, %v5967
    %v5975 = vcombine.high %v5935, %v5967
    %v5976 = vcombine.low %v5416, %v5420
    %v5977 = vcombine.high %v5416, %v5420
    %v5979 = vunpack.c.l.s4 1983009808
    %v5980 = vunpack.c.0.s8 %v5979
    %v5981 = vlaneseq
    %v5982 = vshrl.u32 %v5981, 7
    %v5983 = vsub.s32 %v5980, %v5982
    %v5984 = vrot.slane %v5976, %v5983
    %v5986 = vunpack.c.l.s4 1983009808
    %v5987 = vunpack.c.0.s8 %v5986
    %v5988 = vlaneseq
    %v5989 = vshrl.u32 %v5988, 7
    %v5990 = vsub.s32 %v5987, %v5989
    %v5991 = vrot.slane %v5977, %v5990
    %v5992 = vcombine.low %v5418, %v5422
    %v5993 = vcombine.high %v5418, %v5422
    %v5995 = vunpack.c.l.s4 1983009808
    %v5996 = vunpack.c.0.s8 %v5995
    %v5997 = vlaneseq
    %v5998 = vshrl.u32 %v5997, 7
    %v5999 = vsub.s32 %v5996, %v5998
    %v6000 = vrot.slane %v5992, %v5999
    %v6002 = vunpack.c.l.s4 1983009808
    %v6003 = vunpack.c.0.s8 %v6002
    %v6004 = vlaneseq
    %v6005 = vshrl.u32 %v6004, 7
    %v6006 = vsub.s32 %v6003, %v6005
    %v6007 = vrot.slane %v5993, %v6006
    %v6008 = vcombine.low %v5424, %v5428
    %v6009 = vcombine.high %v5424, %v5428
    %v6011 = vunpack.c.l.s4 1983009808
    %v6012 = vunpack.c.0.s8 %v6011
    %v6013 = vlaneseq
    %v6014 = vshrl.u32 %v6013, 7
    %v6015 = vsub.s32 %v6012, %v6014
    %v6016 = vrot.slane %v6008, %v6015
    %v6018 = vunpack.c.l.s4 1983009808
    %v6019 = vunpack.c.0.s8 %v6018
    %v6020 = vlaneseq
    %v6021 = vshrl.u32 %v6020, 7
    %v6022 = vsub.s32 %v6019, %v6021
    %v6023 = vrot.slane %v6009, %v6022
    %v6024 = vcombine.low %v5426, %v5430
    %v6025 = vcombine.high %v5426, %v5430
    %v6027 = vunpack.c.l.s4 1983009808
    %v6028 = vunpack.c.0.s8 %v6027
    %v6029 = vlaneseq
    %v6030 = vshrl.u32 %v6029, 7
    %v6031 = vsub.s32 %v6028, %v6030
    %v6032 = vrot.slane %v6024, %v6031
    %v6034 = vunpack.c.l.s4 1983009808
    %v6035 = vunpack.c.0.s8 %v6034
    %v6036 = vlaneseq
    %v6037 = vshrl.u32 %v6036, 7
    %v6038 = vsub.s32 %v6035, %v6037
    %v6039 = vrot.slane %v6025, %v6038
    %v6040 = vcombine.low %v5984, %v6000
    %v6041 = vcombine.high %v5984, %v6000
    %v6043 = vunpack.c.l.s4 1934713408
    %v6044 = vunpack.c.0.s8 %v6043
    %v6045 = vlaneseq
    %v6046 = vshrl.u32 %v6045, 7
    %v6047 = vsub.s32 %v6044, %v6046
    %v6048 = vrot.slane %v6040, %v6047
    %v6050 = vunpack.c.l.s4 1934713408
    %v6051 = vunpack.c.0.s8 %v6050
    %v6052 = vlaneseq
    %v6053 = vshrl.u32 %v6052, 7
    %v6054 = vsub.s32 %v6051, %v6053
    %v6055 = vrot.slane %v6041, %v6054
    %v6056 = vcombine.low %v5991, %v6007
    %v6057 = vcombine.high %v5991, %v6007
    %v6059 = vunpack.c.l.s4 1934713408
    %v6060 = vunpack.c.0.s8 %v6059
    %v6061 = vlaneseq
    %v6062 = vshrl.u32 %v6061, 7
    %v6063 = vsub.s32 %v6060, %v6062
    %v6064 = vrot.slane %v6056, %v6063
    %v6066 = vunpack.c.l.s4 1934713408
    %v6067 = vunpack.c.0.s8 %v6066
    %v6068 = vlaneseq
    %v6069 = vshrl.u32 %v6068, 7
    %v6070 = vsub.s32 %v6067, %v6069
    %v6071 = vrot.slane %v6057, %v6070
    %v6072 = vcombine.low %v6016, %v6032
    %v6073 = vcombine.high %v6016, %v6032
    %v6075 = vunpack.c.l.s4 1934713408
    %v6076 = vunpack.c.0.s8 %v6075
    %v6077 = vlaneseq
    %v6078 = vshrl.u32 %v6077, 7
    %v6079 = vsub.s32 %v6076, %v6078
    %v6080 = vrot.slane %v6072, %v6079
    %v6082 = vunpack.c.l.s4 1934713408
    %v6083 = vunpack.c.0.s8 %v6082
    %v6084 = vlaneseq
    %v6085 = vshrl.u32 %v6084, 7
    %v6086 = vsub.s32 %v6083, %v6085
    %v6087 = vrot.slane %v6073, %v6086
    %v6088 = vcombine.low %v6023, %v6039
    %v6089 = vcombine.high %v6023, %v6039
    %v6091 = vunpack.c.l.s4 1934713408
    %v6092 = vunpack.c.0.s8 %v6091
    %v6093 = vlaneseq
    %v6094 = vshrl.u32 %v6093, 7
    %v6095 = vsub.s32 %v6092, %v6094
    %v6096 = vrot.slane %v6088, %v6095
    %v6098 = vunpack.c.l.s4 1934713408
    %v6099 = vunpack.c.0.s8 %v6098
    %v6100 = vlaneseq
    %v6101 = vshrl.u32 %v6100, 7
    %v6102 = vsub.s32 %v6099, %v6101
    %v6103 = vrot.slane %v6089, %v6102
    %v6104 = vcombine.low %v6048, %v6080
    %v6105 = vcombine.high %v6048, %v6080
    %v6106 = vcombine.low %v6055, %v6087
    %v6107 = vcombine.high %v6055, %v6087
    %v6108 = vcombine.low %v6064, %v6096
    %v6109 = vcombine.high %v6064, %v6096
    %v6110 = vcombine.low %v6071, %v6103
    %v6111 = vcombine.high %v6071, %v6103
    %v6112 = vcombine.low %v5417, %v5421
    %v6113 = vcombine.high %v5417, %v5421
    %v6115 = vunpack.c.l.s4 1983009808
    %v6116 = vunpack.c.0.s8 %v6115
    %v6117 = vlaneseq
    %v6118 = vshrl.u32 %v6117, 7
    %v6119 = vsub.s32 %v6116, %v6118
    %v6120 = vrot.slane %v6112, %v6119
    %v6122 = vunpack.c.l.s4 1983009808
    %v6123 = vunpack.c.0.s8 %v6122
    %v6124 = vlaneseq
    %v6125 = vshrl.u32 %v6124, 7
    %v6126 = vsub.s32 %v6123, %v6125
    %v6127 = vrot.slane %v6113, %v6126
    %v6128 = vcombine.low %v5419, %v5423
    %v6129 = vcombine.high %v5419, %v5423
    %v6131 = vunpack.c.l.s4 1983009808
    %v6132 = vunpack.c.0.s8 %v6131
    %v6133 = vlaneseq
    %v6134 = vshrl.u32 %v6133, 7
    %v6135 = vsub.s32 %v6132, %v6134
    %v6136 = vrot.slane %v6128, %v6135
    %v6138 = vunpack.c.l.s4 1983009808
    %v6139 = vunpack.c.0.s8 %v6138
    %v6140 = vlaneseq
    %v6141 = vshrl.u32 %v6140, 7
    %v6142 = vsub.s32 %v6139, %v6141
    %v6143 = vrot.slane %v6129, %v6142
    %v6144 = vcombine.low %v5425, %v5429
    %v6145 = vcombine.high %v5425, %v5429
    %v6147 = vunpack.c.l.s4 1983009808
    %v6148 = vunpack.c.0.s8 %v6147
    %v6149 = vlaneseq
    %v6150 = vshrl.u32 %v6149, 7
    %v6151 = vsub.s32 %v6148, %v6150
    %v6152 = vrot.slane %v6144, %v6151
    %v6154 = vunpack.c.l.s4 1983009808
    %v6155 = vunpack.c.0.s8 %v6154
    %v6156 = vlaneseq
    %v6157 = vshrl.u32 %v6156, 7
    %v6158 = vsub.s32 %v6155, %v6157
    %v6159 = vrot.slane %v6145, %v6158
    %v6160 = vcombine.low %v5427, %v5431
    %v6161 = vcombine.high %v5427, %v5431
    %v6163 = vunpack.c.l.s4 1983009808
    %v6164 = vunpack.c.0.s8 %v6163
    %v6165 = vlaneseq
    %v6166 = vshrl.u32 %v6165, 7
    %v6167 = vsub.s32 %v6164, %v6166
    %v6168 = vrot.slane %v6160, %v6167
    %v6170 = vunpack.c.l.s4 1983009808
    %v6171 = vunpack.c.0.s8 %v6170
    %v6172 = vlaneseq
    %v6173 = vshrl.u32 %v6172, 7
    %v6174 = vsub.s32 %v6171, %v6173
    %v6175 = vrot.slane %v6161, %v6174
    %v6176 = vcombine.low %v6120, %v6136
    %v6177 = vcombine.high %v6120, %v6136
    %v6179 = vunpack.c.l.s4 1934713408
    %v6180 = vunpack.c.0.s8 %v6179
    %v6181 = vlaneseq
    %v6182 = vshrl.u32 %v6181, 7
    %v6183 = vsub.s32 %v6180, %v6182
    %v6184 = vrot.slane %v6176, %v6183
    %v6186 = vunpack.c.l.s4 1934713408
    %v6187 = vunpack.c.0.s8 %v6186
    %v6188 = vlaneseq
    %v6189 = vshrl.u32 %v6188, 7
    %v6190 = vsub.s32 %v6187, %v6189
    %v6191 = vrot.slane %v6177, %v6190
    %v6192 = vcombine.low %v6127, %v6143
    %v6193 = vcombine.high %v6127, %v6143
    %v6195 = vunpack.c.l.s4 1934713408
    %v6196 = vunpack.c.0.s8 %v6195
    %v6197 = vlaneseq
    %v6198 = vshrl.u32 %v6197, 7
    %v6199 = vsub.s32 %v6196, %v6198
    %v6200 = vrot.slane %v6192, %v6199
    %v6202 = vunpack.c.l.s4 1934713408
    %v6203 = vunpack.c.0.s8 %v6202
    %v6204 = vlaneseq
    %v6205 = vshrl.u32 %v6204, 7
    %v6206 = vsub.s32 %v6203, %v6205
    %v6207 = vrot.slane %v6193, %v6206
    %v6208 = vcombine.low %v6152, %v6168
    %v6209 = vcombine.high %v6152, %v6168
    %v6211 = vunpack.c.l.s4 1934713408
    %v6212 = vunpack.c.0.s8 %v6211
    %v6213 = vlaneseq
    %v6214 = vshrl.u32 %v6213, 7
    %v6215 = vsub.s32 %v6212, %v6214
    %v6216 = vrot.slane %v6208, %v6215
    %v6218 = vunpack.c.l.s4 1934713408
    %v6219 = vunpack.c.0.s8 %v6218
    %v6220 = vlaneseq
    %v6221 = vshrl.u32 %v6220, 7
    %v6222 = vsub.s32 %v6219, %v6221
    %v6223 = vrot.slane %v6209, %v6222
    %v6224 = vcombine.low %v6159, %v6175
    %v6225 = vcombine.high %v6159, %v6175
    %v6227 = vunpack.c.l.s4 1934713408
    %v6228 = vunpack.c.0.s8 %v6227
    %v6229 = vlaneseq
    %v6230 = vshrl.u32 %v6229, 7
    %v6231 = vsub.s32 %v6228, %v6230
    %v6232 = vrot.slane %v6224, %v6231
    %v6234 = vunpack.c.l.s4 1934713408
    %v6235 = vunpack.c.0.s8 %v6234
    %v6236 = vlaneseq
    %v6237 = vshrl.u32 %v6236, 7
    %v6238 = vsub.s32 %v6235, %v6237
    %v6239 = vrot.slane %v6225, %v6238
    %v6240 = vcombine.low %v6184, %v6216
    %v6241 = vcombine.high %v6184, %v6216
    %v6242 = vcombine.low %v6191, %v6223
    %v6243 = vcombine.high %v6191, %v6223
    %v6244 = vcombine.low %v6200, %v6232
    %v6245 = vcombine.high %v6200, %v6232
    %v6246 = vcombine.low %v6207, %v6239
    %v6247 = vcombine.high %v6207, %v6239
    %v6250 = vpack.i.b16 %v5696, %v5560
    %v6252 = vshrl.u32 %v5560, 16
    %v6253 = vshrl.u32 %v5696, 16
    %v6254 = vpack.i.b16 %v6253, %v6252
    %v6258 = vpack.i.b16 %v5697, %v5561
    %v6260 = vshrl.u32 %v5561, 16
    %v6261 = vshrl.u32 %v5697, 16
    %v6262 = vpack.i.b16 %v6261, %v6260
    %v6266 = vpack.i.b16 %v5698, %v5562
    %v6268 = vshrl.u32 %v5562, 16
    %v6269 = vshrl.u32 %v5698, 16
    %v6270 = vpack.i.b16 %v6269, %v6268
    %v6274 = vpack.i.b16 %v5699, %v5563
    %v6276 = vshrl.u32 %v5563, 16
    %v6277 = vshrl.u32 %v5699, 16
    %v6278 = vpack.i.b16 %v6277, %v6276
    %v6282 = vpack.i.b16 %v5700, %v5564
    %v6284 = vshrl.u32 %v5564, 16
    %v6285 = vshrl.u32 %v5700, 16
    %v6286 = vpack.i.b16 %v6285, %v6284
    %v6290 = vpack.i.b16 %v5701, %v5565
    %v6292 = vshrl.u32 %v5565, 16
    %v6293 = vshrl.u32 %v5701, 16
    %v6294 = vpack.i.b16 %v6293, %v6292
    %v6298 = vpack.i.b16 %v5702, %v5566
    %v6300 = vshrl.u32 %v5566, 16
    %v6301 = vshrl.u32 %v5702, 16
    %v6302 = vpack.i.b16 %v6301, %v6300
    %v6306 = vpack.i.b16 %v5703, %v5567
    %v6308 = vshrl.u32 %v5567, 16
    %v6309 = vshrl.u32 %v5703, 16
    %v6310 = vpack.i.b16 %v6309, %v6308
    %v6314 = vpack.i.b16 %v5968, %v5832
    %v6316 = vshrl.u32 %v5832, 16
    %v6317 = vshrl.u32 %v5968, 16
    %v6318 = vpack.i.b16 %v6317, %v6316
    %v6322 = vpack.i.b16 %v5969, %v5833
    %v6324 = vshrl.u32 %v5833, 16
    %v6325 = vshrl.u32 %v5969, 16
    %v6326 = vpack.i.b16 %v6325, %v6324
    %v6330 = vpack.i.b16 %v5970, %v5834
    %v6332 = vshrl.u32 %v5834, 16
    %v6333 = vshrl.u32 %v5970, 16
    %v6334 = vpack.i.b16 %v6333, %v6332
    %v6338 = vpack.i.b16 %v5971, %v5835
    %v6340 = vshrl.u32 %v5835, 16
    %v6341 = vshrl.u32 %v5971, 16
    %v6342 = vpack.i.b16 %v6341, %v6340
    %v6346 = vpack.i.b16 %v5972, %v5836
    %v6348 = vshrl.u32 %v5836, 16
    %v6349 = vshrl.u32 %v5972, 16
    %v6350 = vpack.i.b16 %v6349, %v6348
    %v6354 = vpack.i.b16 %v5973, %v5837
    %v6356 = vshrl.u32 %v5837, 16
    %v6357 = vshrl.u32 %v5973, 16
    %v6358 = vpack.i.b16 %v6357, %v6356
    %v6362 = vpack.i.b16 %v5974, %v5838
    %v6364 = vshrl.u32 %v5838, 16
    %v6365 = vshrl.u32 %v5974, 16
    %v6366 = vpack.i.b16 %v6365, %v6364
    %v6370 = vpack.i.b16 %v5975, %v5839
    %v6372 = vshrl.u32 %v5839, 16
    %v6373 = vshrl.u32 %v5975, 16
    %v6374 = vpack.i.b16 %v6373, %v6372
    %v6378 = vpack.i.b16 %v6240, %v6104
    %v6380 = vshrl.u32 %v6104, 16
    %v6381 = vshrl.u32 %v6240, 16
    %v6382 = vpack.i.b16 %v6381, %v6380
    %v6386 = vpack.i.b16 %v6241, %v6105
    %v6388 = vshrl.u32 %v6105, 16
    %v6389 = vshrl.u32 %v6241, 16
    %v6390 = vpack.i.b16 %v6389, %v6388
    %v6394 = vpack.i.b16 %v6242, %v6106
    %v6396 = vshrl.u32 %v6106, 16
    %v6397 = vshrl.u32 %v6242, 16
    %v6398 = vpack.i.b16 %v6397, %v6396
    %v6402 = vpack.i.b16 %v6243, %v6107
    %v6404 = vshrl.u32 %v6107, 16
    %v6405 = vshrl.u32 %v6243, 16
    %v6406 = vpack.i.b16 %v6405, %v6404
    %v6410 = vpack.i.b16 %v6244, %v6108
    %v6412 = vshrl.u32 %v6108, 16
    %v6413 = vshrl.u32 %v6244, 16
    %v6414 = vpack.i.b16 %v6413, %v6412
    %v6418 = vpack.i.b16 %v6245, %v6109
    %v6420 = vshrl.u32 %v6109, 16
    %v6421 = vshrl.u32 %v6245, 16
    %v6422 = vpack.i.b16 %v6421, %v6420
    %v6426 = vpack.i.b16 %v6246, %v6110
    %v6428 = vshrl.u32 %v6110, 16
    %v6429 = vshrl.u32 %v6246, 16
    %v6430 = vpack.i.b16 %v6429, %v6428
    %v6434 = vpack.i.b16 %v6247, %v6111
    %v6436 = vshrl.u32 %v6111, 16
    %v6437 = vshrl.u32 %v6247, 16
    %v6438 = vpack.i.b16 %v6437, %v6436
    %v6440 = vld [vmem:[%s1] sm:$0xf]
    %v6441 = vld [vmem:[%s2] sm:$0xff]
    %6443 = vset.pattern.permute.xlu0 0
    %6444 = vperm.xlu0 %6443, %v6441
    %v6445 = vpop.permute.xlu0 %6444
    %v6448 = vsel %vm1438, %v6440, 0
    %6450 = vmatprep.subr.bf16.mxu0 %v6254
    %6451 = vmatpush1.bf16.msra.mxu0 %v6250
    %6452 = vmatprep.subr.bf16.mxu0 %v6318
    %6453 = vmatpush1.bf16.msra.mxu0 %v6314
    %6454 = vmatprep.subr.bf16.mxu0 %v6382
    %6455 = vmatpush1.bf16.msra.mxu0 %v6378
    %6456 = vmatprep.subr.bf16.mxu0 0
    %6457 = vmatpush1.bf16.msra.mxu0 0
    %6458 = vmatprep.subr.bf16.mxu0 0
    %6459 = vmatpush1.bf16.msra.mxu0 0
    %6460 = vmatprep.subr.bf16.mxu0 0
    %6461 = vmatpush1.bf16.msra.mxu0 0
    %6462 = vmatprep.subr.bf16.mxu0 0
    %6463 = vmatpush1.bf16.msra.mxu0 0
    %6464 = vmatprep.subr.bf16.mxu0 0
    %6465 = vmatpush1.bf16.msra.mxu0 0
    %6466 = vmatprep.subr.bf16.mxu0 0
    %6467 = vmatpush1.bf16.msra.mxu0 0
    %6468 = vmatprep.subr.bf16.mxu0 0
    %6469 = vmatpush1.bf16.msra.mxu0 0
    %6470 = vmatprep.subr.bf16.mxu0 0
    %6471 = vmatpush1.bf16.msra.mxu0 0
    %6472 = vmatprep.subr.bf16.mxu0 0
    %6473 = vmatpush1.bf16.msra.mxu0 0
    %6474 = vmatprep.subr.bf16.mxu0 0
    %6475 = vmatpush1.bf16.msra.mxu0 0
    %6476 = vmatprep.subr.bf16.mxu0 0
    %6477 = vmatpush1.bf16.msra.mxu0 0
    %6478 = vmatprep.subr.bf16.mxu0 0
    %6479 = vmatpush1.bf16.msra.mxu0 0
    %6480 = vmatprep.subr.bf16.mxu0 0
    %6481 = vmatpush1.bf16.msra.mxu0 0
    %6482 = vmatprep.mubr.bf16.mxu0 0
    %6483 = vmatmul.mubr.bf16.gmra.mrb[0].mxu0 %v6448
    %v6484 = vpop.f32.mrb[0].mxu0
    %v6485 = vadd.f32 %v6445, %v6484
    %v6486 = vpop.f32.mrb[0].mxu0
    %v6487 = vadd.f32 %v6445, %v6486
    %v6488 = vpop.f32.mrb[0].mxu0
    %v6489 = vpop.f32.mrb[0].mxu0
    %6490 = vdwg.mxu0
    %6491 = vmatprep.subr.bf16.mxu0 %v6262
    %6492 = vmatpush1.bf16.msra.mxu0 %v6258
    %6493 = vmatprep.subr.bf16.mxu0 %v6326
    %6494 = vmatpush1.bf16.msra.mxu0 %v6322
    %6495 = vmatprep.subr.bf16.mxu0 %v6390
    %6496 = vmatpush1.bf16.msra.mxu0 %v6386
    %6497 = vmatprep.subr.bf16.mxu0 0
    %6498 = vmatpush1.bf16.msra.mxu0 0
    %6499 = vmatprep.subr.bf16.mxu0 0
    %6500 = vmatpush1.bf16.msra.mxu0 0
    %6501 = vmatprep.subr.bf16.mxu0 0
    %6502 = vmatpush1.bf16.msra.mxu0 0
    %6503 = vmatprep.subr.bf16.mxu0 0
    %6504 = vmatpush1.bf16.msra.mxu0 0
    %6505 = vmatprep.subr.bf16.mxu0 0
    %6506 = vmatpush1.bf16.msra.mxu0 0
    %6507 = vmatprep.subr.bf16.mxu0 0
    %6508 = vmatpush1.bf16.msra.mxu0 0
    %6509 = vmatprep.subr.bf16.mxu0 0
    %6510 = vmatpush1.bf16.msra.mxu0 0
    %6511 = vmatprep.subr.bf16.mxu0 0
    %6512 = vmatpush1.bf16.msra.mxu0 0
    %6513 = vmatprep.subr.bf16.mxu0 0
    %6514 = vmatpush1.bf16.msra.mxu0 0
    %6515 = vmatprep.subr.bf16.mxu0 0
    %6516 = vmatpush1.bf16.msra.mxu0 0
    %6517 = vmatprep.subr.bf16.mxu0 0
    %6518 = vmatpush1.bf16.msra.mxu0 0
    %6519 = vmatprep.subr.bf16.mxu0 0
    %6520 = vmatpush1.bf16.msra.mxu0 0
    %6521 = vmatprep.subr.bf16.mxu0 0
    %6522 = vmatpush1.bf16.msra.mxu0 0
    %6523 = vmatprep.mubr.bf16.mxu0 0
    %6524 = vmatmul.mubr.bf16.gmra.mrb[0].mxu0 %v6448
    %v6525 = vpop.f32.mrb[0].mxu0
    %v6526 = vadd.f32 %v6445, %v6525
    %v6527 = vpop.f32.mrb[0].mxu0
    %v6528 = vadd.f32 %v6445, %v6527
    %v6529 = vpop.f32.mrb[0].mxu0
    %v6530 = vpop.f32.mrb[0].mxu0
    %6531 = vdwg.mxu0
    %6532 = vmatprep.subr.bf16.mxu0 %v6270
    %6533 = vmatpush1.bf16.msra.mxu0 %v6266
    %6534 = vmatprep.subr.bf16.mxu0 %v6334
    %6535 = vmatpush1.bf16.msra.mxu0 %v6330
    %6536 = vmatprep.subr.bf16.mxu0 %v6398
    %6537 = vmatpush1.bf16.msra.mxu0 %v6394
    %6538 = vmatprep.subr.bf16.mxu0 0
    %6539 = vmatpush1.bf16.msra.mxu0 0
    %6540 = vmatprep.subr.bf16.mxu0 0
    %6541 = vmatpush1.bf16.msra.mxu0 0
    %6542 = vmatprep.subr.bf16.mxu0 0
    %6543 = vmatpush1.bf16.msra.mxu0 0
    %6544 = vmatprep.subr.bf16.mxu0 0
    %6545 = vmatpush1.bf16.msra.mxu0 0
    %6546 = vmatprep.subr.bf16.mxu0 0
    %6547 = vmatpush1.bf16.msra.mxu0 0
    %6548 = vmatprep.subr.bf16.mxu0 0
    %6549 = vmatpush1.bf16.msra.mxu0 0
    %6550 = vmatprep.subr.bf16.mxu0 0
    %6551 = vmatpush1.bf16.msra.mxu0 0
    %6552 = vmatprep.subr.bf16.mxu0 0
    %6553 = vmatpush1.bf16.msra.mxu0 0
    %6554 = vmatprep.subr.bf16.mxu0 0
    %6555 = vmatpush1.bf16.msra.mxu0 0
    %6556 = vmatprep.subr.bf16.mxu0 0
    %6557 = vmatpush1.bf16.msra.mxu0 0
    %6558 = vmatprep.subr.bf16.mxu0 0
    %6559 = vmatpush1.bf16.msra.mxu0 0
    %6560 = vmatprep.subr.bf16.mxu0 0
    %6561 = vmatpush1.bf16.msra.mxu0 0
    %6562 = vmatprep.subr.bf16.mxu0 0
    %6563 = vmatpush1.bf16.msra.mxu0 0
    %6564 = vmatprep.mubr.bf16.mxu0 0
    %6565 = vmatmul.mubr.bf16.gmra.mrb[0].mxu0 %v6448
    %v6566 = vpop.f32.mrb[0].mxu0
    %v6567 = vadd.f32 %v6445, %v6566
    %v6568 = vpop.f32.mrb[0].mxu0
    %v6569 = vadd.f32 %v6445, %v6568
    %v6570 = vpop.f32.mrb[0].mxu0
    %v6571 = vpop.f32.mrb[0].mxu0
    %6572 = vdwg.mxu0
    %6573 = vmatprep.subr.bf16.mxu0 %v6278
    %6574 = vmatpush1.bf16.msra.mxu0 %v6274
    %6575 = vmatprep.subr.bf16.mxu0 %v6342
    %6576 = vmatpush1.bf16.msra.mxu0 %v6338
    %6577 = vmatprep.subr.bf16.mxu0 %v6406
    %6578 = vmatpush1.bf16.msra.mxu0 %v6402
    %6579 = vmatprep.subr.bf16.mxu0 0
    %6580 = vmatpush1.bf16.msra.mxu0 0
    %6581 = vmatprep.subr.bf16.mxu0 0
    %6582 = vmatpush1.bf16.msra.mxu0 0
    %6583 = vmatprep.subr.bf16.mxu0 0
    %6584 = vmatpush1.bf16.msra.mxu0 0
    %6585 = vmatprep.subr.bf16.mxu0 0
    %6586 = vmatpush1.bf16.msra.mxu0 0
    %6587 = vmatprep.subr.bf16.mxu0 0
    %6588 = vmatpush1.bf16.msra.mxu0 0
    %6589 = vmatprep.subr.bf16.mxu0 0
    %6590 = vmatpush1.bf16.msra.mxu0 0
    %6591 = vmatprep.subr.bf16.mxu0 0
    %6592 = vmatpush1.bf16.msra.mxu0 0
    %6593 = vmatprep.subr.bf16.mxu0 0
    %6594 = vmatpush1.bf16.msra.mxu0 0
    %6595 = vmatprep.subr.bf16.mxu0 0
    %6596 = vmatpush1.bf16.msra.mxu0 0
    %6597 = vmatprep.subr.bf16.mxu0 0
    %6598 = vmatpush1.bf16.msra.mxu0 0
    %6599 = vmatprep.subr.bf16.mxu0 0
    %6600 = vmatpush1.bf16.msra.mxu0 0
    %6601 = vmatprep.subr.bf16.mxu0 0
    %6602 = vmatpush1.bf16.msra.mxu0 0
    %6603 = vmatprep.subr.bf16.mxu0 0
    %6604 = vmatpush1.bf16.msra.mxu0 0
    %6605 = vmatprep.mubr.bf16.mxu0 0
    %6606 = vmatmul.mubr.bf16.gmra.mrb[0].mxu0 %v6448
    %v6607 = vpop.f32.mrb[0].mxu0
    %v6608 = vadd.f32 %v6445, %v6607
    %v6609 = vpop.f32.mrb[0].mxu0
    %v6610 = vadd.f32 %v6445, %v6609
    %v6611 = vpop.f32.mrb[0].mxu0
    %v6612 = vpop.f32.mrb[0].mxu0
    %6613 = vdwg.mxu0
    %6614 = vmatprep.subr.bf16.mxu0 %v6286
    %6615 = vmatpush1.bf16.msra.mxu0 %v6282
    %6616 = vmatprep.subr.bf16.mxu0 %v6350
    %6617 = vmatpush1.bf16.msra.mxu0 %v6346
    %6618 = vmatprep.subr.bf16.mxu0 %v6414
    %6619 = vmatpush1.bf16.msra.mxu0 %v6410
    %6620 = vmatprep.subr.bf16.mxu0 0
    %6621 = vmatpush1.bf16.msra.mxu0 0
    %6622 = vmatprep.subr.bf16.mxu0 0
    %6623 = vmatpush1.bf16.msra.mxu0 0
    %6624 = vmatprep.subr.bf16.mxu0 0
    %6625 = vmatpush1.bf16.msra.mxu0 0
    %6626 = vmatprep.subr.bf16.mxu0 0
    %6627 = vmatpush1.bf16.msra.mxu0 0
    %6628 = vmatprep.subr.bf16.mxu0 0
    %6629 = vmatpush1.bf16.msra.mxu0 0
    %6630 = vmatprep.subr.bf16.mxu0 0
    %6631 = vmatpush1.bf16.msra.mxu0 0
    %6632 = vmatprep.subr.bf16.mxu0 0
    %6633 = vmatpush1.bf16.msra.mxu0 0
    %6634 = vmatprep.subr.bf16.mxu0 0
    %6635 = vmatpush1.bf16.msra.mxu0 0
    %6636 = vmatprep.subr.bf16.mxu0 0
    %6637 = vmatpush1.bf16.msra.mxu0 0
    %6638 = vmatprep.subr.bf16.mxu0 0
    %6639 = vmatpush1.bf16.msra.mxu0 0
    %6640 = vmatprep.subr.bf16.mxu0 0
    %6641 = vmatpush1.bf16.msra.mxu0 0
    %6642 = vmatprep.subr.bf16.mxu0 0
    %6643 = vmatpush1.bf16.msra.mxu0 0
    %6644 = vmatprep.subr.bf16.mxu0 0
    %6645 = vmatpush1.bf16.msra.mxu0 0
    %6646 = vmatprep.mubr.bf16.mxu0 0
    %6647 = vmatmul.mubr.bf16.gmra.mrb[0].mxu0 %v6448
    %v6648 = vpop.f32.mrb[0].mxu0
    %v6649 = vadd.f32 %v6445, %v6648
    %v6650 = vpop.f32.mrb[0].mxu0
    %v6651 = vadd.f32 %v6445, %v6650
    %v6652 = vpop.f32.mrb[0].mxu0
    %v6653 = vpop.f32.mrb[0].mxu0
    %6654 = vdwg.mxu0
    %6655 = vmatprep.subr.bf16.mxu0 %v6294
    %6656 = vmatpush1.bf16.msra.mxu0 %v6290
    %6657 = vmatprep.subr.bf16.mxu0 %v6358
    %6658 = vmatpush1.bf16.msra.mxu0 %v6354
    %6659 = vmatprep.subr.bf16.mxu0 %v6422
    %6660 = vmatpush1.bf16.msra.mxu0 %v6418
    %6661 = vmatprep.subr.bf16.mxu0 0
    %6662 = vmatpush1.bf16.msra.mxu0 0
    %6663 = vmatprep.subr.bf16.mxu0 0
    %6664 = vmatpush1.bf16.msra.mxu0 0
    %6665 = vmatprep.subr.bf16.mxu0 0
    %6666 = vmatpush1.bf16.msra.mxu0 0
    %6667 = vmatprep.subr.bf16.mxu0 0
    %6668 = vmatpush1.bf16.msra.mxu0 0
    %6669 = vmatprep.subr.bf16.mxu0 0
    %6670 = vmatpush1.bf16.msra.mxu0 0
    %6671 = vmatprep.subr.bf16.mxu0 0
    %6672 = vmatpush1.bf16.msra.mxu0 0
    %6673 = vmatprep.subr.bf16.mxu0 0
    %6674 = vmatpush1.bf16.msra.mxu0 0
    %6675 = vmatprep.subr.bf16.mxu0 0
    %6676 = vmatpush1.bf16.msra.mxu0 0
    %6677 = vmatprep.subr.bf16.mxu0 0
    %6678 = vmatpush1.bf16.msra.mxu0 0
    %6679 = vmatprep.subr.bf16.mxu0 0
    %6680 = vmatpush1.bf16.msra.mxu0 0
    %6681 = vmatprep.subr.bf16.mxu0 0
    %6682 = vmatpush1.bf16.msra.mxu0 0
    %6683 = vmatprep.subr.bf16.mxu0 0
    %6684 = vmatpush1.bf16.msra.mxu0 0
    %6685 = vmatprep.subr.bf16.mxu0 0
    %6686 = vmatpush1.bf16.msra.mxu0 0
    %6687 = vmatprep.mubr.bf16.mxu0 0
    %6688 = vmatmul.mubr.bf16.gmra.mrb[0].mxu0 %v6448
    %v6689 = vpop.f32.mrb[0].mxu0
    %v6690 = vadd.f32 %v6445, %v6689
    %v6691 = vpop.f32.mrb[0].mxu0
    %v6692 = vadd.f32 %v6445, %v6691
    %v6693 = vpop.f32.mrb[0].mxu0
    %v6694 = vpop.f32.mrb[0].mxu0
    %6695 = vdwg.mxu0
    %6696 = vmatprep.subr.bf16.mxu0 %v6302
    %6697 = vmatpush1.bf16.msra.mxu0 %v6298
    %6698 = vmatprep.subr.bf16.mxu0 %v6366
    %6699 = vmatpush1.bf16.msra.mxu0 %v6362
    %6700 = vmatprep.subr.bf16.mxu0 %v6430
    %6701 = vmatpush1.bf16.msra.mxu0 %v6426
    %6702 = vmatprep.subr.bf16.mxu0 0
    %6703 = vmatpush1.bf16.msra.mxu0 0
    %6704 = vmatprep.subr.bf16.mxu0 0
    %6705 = vmatpush1.bf16.msra.mxu0 0
    %6706 = vmatprep.subr.bf16.mxu0 0
    %6707 = vmatpush1.bf16.msra.mxu0 0
    %6708 = vmatprep.subr.bf16.mxu0 0
    %6709 = vmatpush1.bf16.msra.mxu0 0
    %6710 = vmatprep.subr.bf16.mxu0 0
    %6711 = vmatpush1.bf16.msra.mxu0 0
    %6712 = vmatprep.subr.bf16.mxu0 0
    %6713 = vmatpush1.bf16.msra.mxu0 0
    %6714 = vmatprep.subr.bf16.mxu0 0
    %6715 = vmatpush1.bf16.msra.mxu0 0
    %6716 = vmatprep.subr.bf16.mxu0 0
    %6717 = vmatpush1.bf16.msra.mxu0 0
    %6718 = vmatprep.subr.bf16.mxu0 0
    %6719 = vmatpush1.bf16.msra.mxu0 0
    %6720 = vmatprep.subr.bf16.mxu0 0
    %6721 = vmatpush1.bf16.msra.mxu0 0
    %6722 = vmatprep.subr.bf16.mxu0 0
    %6723 = vmatpush1.bf16.msra.mxu0 0
    %6724 = vmatprep.subr.bf16.mxu0 0
    %6725 = vmatpush1.bf16.msra.mxu0 0
    %6726 = vmatprep.subr.bf16.mxu0 0
    %6727 = vmatpush1.bf16.msra.mxu0 0
    %6728 = vmatprep.mubr.bf16.mxu0 0
    %6729 = vmatmul.mubr.bf16.gmra.mrb[0].mxu0 %v6448
    %v6730 = vpop.f32.mrb[0].mxu0
    %v6731 = vadd.f32 %v6445, %v6730
    %v6732 = vpop.f32.mrb[0].mxu0
    %v6733 = vadd.f32 %v6445, %v6732
    %v6734 = vpop.f32.mrb[0].mxu0
    %v6735 = vpop.f32.mrb[0].mxu0
    %6736 = vdwg.mxu0
    %6737 = vmatprep.subr.bf16.mxu0 %v6310
    %6738 = vmatpush1.bf16.msra.mxu0 %v6306
    %6739 = vmatprep.subr.bf16.mxu0 %v6374
    %6740 = vmatpush1.bf16.msra.mxu0 %v6370
    %6741 = vmatprep.subr.bf16.mxu0 %v6438
    %6742 = vmatpush1.bf16.msra.mxu0 %v6434
    %6743 = vmatprep.subr.bf16.mxu0 0
    %6744 = vmatpush1.bf16.msra.mxu0 0
    %6745 = vmatprep.subr.bf16.mxu0 0
    %6746 = vmatpush1.bf16.msra.mxu0 0
    %6747 = vmatprep.subr.bf16.mxu0 0
    %6748 = vmatpush1.bf16.msra.mxu0 0
    %6749 = vmatprep.subr.bf16.mxu0 0
    %6750 = vmatpush1.bf16.msra.mxu0 0
    %6751 = vmatprep.subr.bf16.mxu0 0
    %6752 = vmatpush1.bf16.msra.mxu0 0
    %6753 = vmatprep.subr.bf16.mxu0 0
    %6754 = vmatpush1.bf16.msra.mxu0 0
    %6755 = vmatprep.subr.bf16.mxu0 0
    %6756 = vmatpush1.bf16.msra.mxu0 0
    %6757 = vmatprep.subr.bf16.mxu0 0
    %6758 = vmatpush1.bf16.msra.mxu0 0
    %6759 = vmatprep.subr.bf16.mxu0 0
    %6760 = vmatpush1.bf16.msra.mxu0 0
    %6761 = vmatprep.subr.bf16.mxu0 0
    %6762 = vmatpush1.bf16.msra.mxu0 0
    %6763 = vmatprep.subr.bf16.mxu0 0
    %6764 = vmatpush1.bf16.msra.mxu0 0
    %6765 = vmatprep.subr.bf16.mxu0 0
    %6766 = vmatpush1.bf16.msra.mxu0 0
    %6767 = vmatprep.subr.bf16.mxu0 0
    %6768 = vmatpush1.bf16.msra.mxu0 0
    %6769 = vmatprep.mubr.bf16.mxu0 0
    %6770 = vmatmul.mubr.bf16.gmra.mrb[0].mxu0 %v6448
    %v6771 = vpop.f32.mrb[0].mxu0
    %v6772 = vadd.f32 %v6445, %v6771
    %v6773 = vpop.f32.mrb[0].mxu0
    %v6774 = vadd.f32 %v6445, %v6773
    %v6775 = vpop.f32.mrb[0].mxu0
    %v6776 = vpop.f32.mrb[0].mxu0
    %6777 = vdwg.mxu0
    %6778 = vst [vmem:[%s5109 + $0x80] sm:$0xff] %v6485
    %6779 = vst [vmem:[%s5109 + $0x88] sm:$0xff] %v6487
    %6780 = vst [vmem:[%s5109 + $0x90] sm:$0xff] %v6526
    %6781 = vst [vmem:[%s5109 + $0x98] sm:$0xff] %v6528
    %6782 = vst [vmem:[%s5109 + $0xa0] sm:$0xff] %v6567
    %6783 = vst [vmem:[%s5109 + $0xa8] sm:$0xff] %v6569
    %6784 = vst [vmem:[%s5109 + $0xb0] sm:$0xff] %v6608
    %6785 = vst [vmem:[%s5109 + $0xb8] sm:$0xff] %v6610
    %6786 = vst [vmem:[%s5109 + $0xc0] sm:$0xff] %v6649
    %6787 = vst [vmem:[%s5109 + $0xc8] sm:$0xff] %v6651
    %6788 = vst [vmem:[%s5109 + $0xd0] sm:$0xff] %v6690
    %6789 = vst [vmem:[%s5109 + $0xd8] sm:$0xff] %v6692
    %6790 = vst [vmem:[%s5109 + $0xe0] sm:$0xff] %v6731
    %6791 = vst [vmem:[%s5109 + $0xe8] sm:$0xff] %v6733
    %6792 = vst [vmem:[%s5109 + $0xf0] sm:$0xff] %v6772
    %6793 = vst [vmem:[%s5109 + $0xf8] sm:$0xff] %v6774
    // Predicated region
    $region14: #{tpu_custom_call.1} parent=1 // pred_check
      _
    $region15: #{tpu_custom_call.1} parent=1 // pred_check_branch
      %6795 = sbr.rel (0) target = $region17
    $region16: #{tpu_custom_call.1} parent=1 // pred_region
      %s6797 = ssub.s32 8192, 8192
      %6798 = vsyncadd [#allocation4], %s6797
      %s6799 = sshll.u32 [#allocation3], 4
      %s6800 = int_to_ptr.vmem [resolvable:$true] %s6799
      %6805 = dma.vmem_to_hbm [thread:$0]  %s6800, 8192, %s3, [#allocation4], 4096, 4096, 256
    $region17: #{tpu_custom_call.1} parent=1 // pred_fallthru
      _
    // Predicated region
    $region18: #{tpu_custom_call.1} parent=1 // pred_check
      _
    $region19: #{tpu_custom_call.1} parent=1 // pred_check_branch
      %6807 = sbr.rel (0) target = $region21
    $region20: #{tpu_custom_call.1} parent=1 // pred_region
      %6808 = dma.done [#allocation4], 8192
    $region21: #{tpu_custom_call.1} parent=1 // pred_fallthru
      _
    %6809 = vsyncpa [#allocation4], 1

</llo_original>
